<compile_context>
chip_gen: v7x
topology: tpu7x:2x2x1
jax: 0.10.0
libtpu: 0.0.40
codegen_flags: <defaults>
</compile_context>

<pallas_src>
import jax
import jax.numpy as jnp
from jax.experimental import pallas as pl
from jax.experimental.pallas import tpu as pltpu

# Module hyper-parameters (from RNDModel.__init__)
OUTPUT_SIZE = 5
N_LAYERS = 2          # two hidden layers of width SIZE, tanh activations
SIZE = 400
HPAD = 512            # hidden width padded 400 -> 512 (lane/MXU friendly)
NPAD = 128            # output dim padded 5 -> 128 (zero cols; lane-dense epilogue)


def _pad2d(a, rows, cols):
    r, c = a.shape
    return jnp.pad(a, ((0, rows - r), (0, cols - c)))


# -----------------------------------------------------------------------------
# Kernel
# -----------------------------------------------------------------------------
def rnd_kernel(x_ref,
               w1_ref, b1_ref,          # fused layer 1 of both nets (f32)
               w2f_ref, b2f_ref,        # layer 2 of f        (bf16 / f32 bias)
               w2h_ref, b2h_ref,        # layer 2 of f_hat    (bf16 / f32 bias)
               w3_ref, b3_ref,          # fused layer 3 + subtraction (bf16)
               err_ref):
    f32 = jnp.float32
    cdt = w2f_ref.dtype                 # bf16 matmul-operand dtype

    # ---- Layer 1 (both nets fused), bf16x2 split for f32-level fidelity. ----
    x = x_ref[...]                      # (bm, ob_dim) f32
    w1 = w1_ref[...]                    # (ob_dim, 2*HPAD) f32
    x_hi = x.astype(cdt)
    x_lo = (x - x_hi.astype(f32)).astype(cdt)
    w1_hi = w1.astype(cdt)
    w1_lo = (w1 - w1_hi.astype(f32)).astype(cdt)
    z1 = (jnp.dot(x_hi, w1_hi, preferred_element_type=f32)
          + jnp.dot(x_hi, w1_lo, preferred_element_type=f32)
          + jnp.dot(x_lo, w1_hi, preferred_element_type=f32)
          + b1_ref[...])
    h1 = jnp.tanh(z1).astype(cdt)       # (bm, 2*HPAD) bf16
    h1f = h1[:, :HPAD]                  # lane-aligned static slices
    h1h = h1[:, HPAD:]

    # ---- Layer 2, one matmul per net (bf16 operands, f32 accumulate). ----
    h2f = jnp.tanh(jnp.dot(h1f, w2f_ref[...], preferred_element_type=f32)
                   + b2f_ref[...]).astype(cdt)
    h2h = jnp.tanh(jnp.dot(h1h, w2h_ref[...], preferred_element_type=f32)
                   + b2h_ref[...]).astype(cdt)

    # ---- Fused layer 3 + subtraction: w3 = [fw3; -hw3], b3 = fb3 - hb3 ----
    # Split into two dots on statically aligned ref slices (no concat temp).
    d = (jnp.dot(h2f, w3_ref[:HPAD, :], preferred_element_type=f32)
         + jnp.dot(h2h, w3_ref[HPAD:, :], preferred_element_type=f32)
         + b3_ref[...])                 # (bm, NPAD); cols >= 5 are exactly zero

    # torch.norm(..., dim=1): per-row L2 norm, stored lane-dense as (1, bm).
    err_ref[...] = jnp.sqrt(jnp.sum(d * d, axis=1)).reshape(err_ref.shape)


# -----------------------------------------------------------------------------
# Parameter preparation (fusion + padding + dtype)
# -----------------------------------------------------------------------------
def prepare_params(f_params, f_hat_params, *, compute_dtype=jnp.bfloat16):
    """Pad hidden width to HPAD and output width to NPAD, fuse layer-1 and
    layer-3 (with the f - f_hat subtraction) across the two nets.
    Layer-1 weights stay f32 (split to bf16x2 inside the kernel); layer-2/3
    weights are bf16; all biases stay f32."""
    fw1, fb1, fw2, fb2, fw3, fb3 = f_params
    hw1, hb1, hw2, hb2, hw3, hb3 = f_hat_params
    ob_dim = fw1.shape[0]

    w1 = jnp.concatenate([_pad2d(fw1, ob_dim, HPAD),
                          _pad2d(hw1, ob_dim, HPAD)], axis=1)        # (ob, 2H)
    b1 = jnp.concatenate([_pad2d(fb1, 1, HPAD),
                          _pad2d(hb1, 1, HPAD)], axis=1)             # (1, 2H)
    w2f = _pad2d(fw2, HPAD, HPAD)
    b2f = _pad2d(fb2, 1, HPAD)
    w2h = _pad2d(hw2, HPAD, HPAD)
    b2h = _pad2d(hb2, 1, HPAD)
    w3 = jnp.concatenate([_pad2d(fw3, HPAD, NPAD),
                          -_pad2d(hw3, HPAD, NPAD)], axis=0)         # (2H, NPAD)
    b3 = _pad2d(fb3 - hb3, 1, NPAD)                                  # (1, NPAD)

    c = lambda w: w.astype(compute_dtype)
    f32 = lambda b: b.astype(jnp.float32)
    return (f32(w1), f32(b1),
            c(w2f), f32(b2f),
            c(w2h), f32(b2h),
            c(w3), f32(b3))


# -----------------------------------------------------------------------------
# Wrapper
# -----------------------------------------------------------------------------
def rnd_forward(ob_no, f_params, f_hat_params, *, block_m=None,
                compute_dtype=jnp.bfloat16):
    """Returns error of shape (N,) = ||f(ob) - f_hat(ob)||_2 per row."""
    n, ob_dim = ob_no.shape
    params = prepare_params(f_params, f_hat_params, compute_dtype=compute_dtype)

    if block_m is None:
        # >=2 grid steps (v7x has 2 TensorCores), <=1024 rows/step (VMEM),
        # >=128 so the lane-dense output block is a whole number of lane tiles.
        block_m = int(min(1024, max(128, pl.next_power_of_2(pl.cdiv(n, 2)))))

    n_blocks = pl.cdiv(n, block_m)
    n_pad = n_blocks * block_m
    x = ob_no.astype(jnp.float32)
    if n_pad != n:
        x = jnp.pad(x, ((0, n_pad - n), (0, 0)))

    x_spec = pl.BlockSpec((block_m, ob_dim), lambda i: (i, 0))
    out_spec = pl.BlockSpec((1, block_m), lambda i: (0, i))   # lane-dense output

    def full_spec(p):
        # Weights resident in VMEM; constant index_map -> fetched once.
        return pl.BlockSpec(p.shape, lambda i: (0, 0))

    in_specs = [x_spec] + [full_spec(p) for p in params]

    param_bytes = sum(int(p.size) * p.dtype.itemsize for p in params)
    flops = 2 * n_pad * (3 * ob_dim * 2 * HPAD      # bf16x2 layer 1 (3 dots)
                         + 2 * HPAD * HPAD          # layer 2, both nets
                         + 2 * HPAD * NPAD)         # fused layer 3
    cost = pl.CostEstimate(
        flops=int(flops),
        transcendentals=int(n_pad * 4 * HPAD),
        bytes_accessed=int(x.size * 4 + n_pad * 4 + param_bytes),
    )

    err = pl.pallas_call(
        rnd_kernel,
        out_shape=jax.ShapeDtypeStruct((1, n_pad), jnp.float32),
        grid=(n_blocks,),
        in_specs=in_specs,
        out_specs=out_spec,
        compiler_params=pltpu.CompilerParams(
            dimension_semantics=("parallel",),
            vmem_limit_bytes=32 * 1024 * 1024),
        cost_estimate=cost,
    )(x, *params)
    return err[0, :n]


# -----------------------------------------------------------------------------
# Pure-JAX references & init
# -----------------------------------------------------------------------------
def _mlp_f32(x, w1, b1, w2, b2, w3, b3):
    hp = jax.lax.Precision.HIGHEST      # true f32 matmuls, like the torch model
    h = jnp.tanh(jnp.dot(x, w1, precision=hp) + b1)
    h = jnp.tanh(jnp.dot(h, w2, precision=hp) + b2)
    return jnp.dot(h, w3, precision=hp) + b3


def rnd_reference(ob_no, f_params, f_hat_params):
    """Full-f32 reference of the PyTorch forward."""
    f_out = _mlp_f32(ob_no, *f_params)
    f_hat_out = _mlp_f32(ob_no, *f_hat_params)
    return jnp.linalg.norm(f_out - f_hat_out, axis=1)


def rnd_reference_prepared(ob_no, f_params, f_hat_params,
                           compute_dtype=jnp.bfloat16):
    """Mirrors the kernel's fused/padded/split math in plain jnp (tight check)."""
    w1, b1, w2f, b2f, w2h, b2h, w3, b3 = prepare_params(
        f_params, f_hat_params, compute_dtype=compute_dtype)
    f32 = jnp.float32
    x = ob_no.astype(f32)
    x_hi = x.astype(compute_dtype)
    x_lo = (x - x_hi.astype(f32)).astype(compute_dtype)
    w1_hi = w1.astype(compute_dtype)
    w1_lo = (w1 - w1_hi.astype(f32)).astype(compute_dtype)
    z1 = (jnp.dot(x_hi, w1_hi, preferred_element_type=f32)
          + jnp.dot(x_hi, w1_lo, preferred_element_type=f32)
          + jnp.dot(x_lo, w1_hi, preferred_element_type=f32) + b1)
    h1 = jnp.tanh(z1).astype(compute_dtype)
    h2f = jnp.tanh(jnp.dot(h1[:, :HPAD], w2f,
                           preferred_element_type=f32) + b2f).astype(compute_dtype)
    h2h = jnp.tanh(jnp.dot(h1[:, HPAD:], w2h,
                           preferred_element_type=f32) + b2h).astype(compute_dtype)
    d = (jnp.dot(h2f, w3[:HPAD, :], preferred_element_type=f32)
         + jnp.dot(h2h, w3[HPAD:, :], preferred_element_type=f32) + b3)
    return jnp.sqrt(jnp.sum(d * d, axis=1))


def init_mlp_params(key, ob_dim, init_method):
    """Synthetic init matching build_mlp layer shapes; weights stored (in, out).
    'uniform' ~ init_method_1 (U[0,1)), 'normal' ~ init_method_2 (std normal)."""
    dims = [(ob_dim, SIZE), (SIZE, SIZE), (SIZE, OUTPUT_SIZE)]
    params = []
    for (din, dout) in dims:
        key, kw, kb = jax.random.split(key, 3)
        if init_method == "uniform":
            w = jax.random.uniform(kw, (din, dout), dtype=jnp.float32)
            b = jax.random.uniform(kb, (1, dout), dtype=jnp.float32)
        else:
            w = jax.random.normal(kw, (din, dout), dtype=jnp.float32)
            b = jax.random.normal(kb, (1, dout), dtype=jnp.float32)
        params += [w, b]
    return tuple(params)


# TODO(synk): update() / Adam optimizer step is training logic, not part of the
# forward pass, and is intentionally not translated.

if __name__ == "__main__":
    batch = 300        # not a multiple of block_m -> exercises padding; grid = 2
    ob_dim = 16

    key = jax.random.PRNGKey(0)
    k_x, k_f, k_h = jax.random.split(key, 3)

    ob_no = jax.random.normal(k_x, (batch, ob_dim), dtype=jnp.float32)
    f_params = init_mlp_params(k_f, ob_dim, "uniform")      # init_method_1
    f_hat_params = init_mlp_params(k_h, ob_dim, "normal")   # init_method_2

    err = rnd_forward(ob_no, f_params, f_hat_params)
    err = jax.block_until_ready(err)
    assert err.shape == (batch,), err.shape

    # Tight gating check: identical fused/padded/split math in plain JAX.
    ref_tight = rnd_reference_prepared(ob_no, f_params, f_hat_params)
    assert jnp.allclose(err, ref_tight, rtol=1e-2, atol=1e-1), (
        err[:5], ref_tight[:5])

    # Fidelity check against the full-f32 PyTorch-equivalent forward.
    ref_f32 = rnd_reference(ob_no, f_params, f_hat_params)
    assert jnp.allclose(err, ref_f32, rtol=5e-2, atol=1.0), (
        err[:5], ref_f32[:5])

    print("KERNEL_OK")
</pallas_src>

<mosaic_0001>
module attributes {stable_mosaic.version = 11 : i64} {
  func.func @rnd_kernel(%arg0: i32, %arg1: memref<256x16xf32, #tpu.memory_space<vmem>>, %arg2: memref<16x1024xf32, #tpu.memory_space<vmem>>, %arg3: memref<1x1024xf32, #tpu.memory_space<vmem>>, %arg4: memref<512x512xbf16, #tpu.memory_space<vmem>>, %arg5: memref<1x512xf32, #tpu.memory_space<vmem>>, %arg6: memref<512x512xbf16, #tpu.memory_space<vmem>>, %arg7: memref<1x512xf32, #tpu.memory_space<vmem>>, %arg8: memref<1024x128xbf16, #tpu.memory_space<vmem>>, %arg9: memref<1x128xf32, #tpu.memory_space<vmem>>, %arg10: memref<1x256xf32, #tpu.memory_space<vmem>>) attributes {dimension_semantics = [#tpu.dimension_semantics<parallel>], iteration_bounds = array<i64: 2>, scalar_prefetch = 0 : i64, scratch_operands = 0 : i64, tpu.core_type = #tpu.core_type<tc>, window_params = [{transform_indices = @transform_0, window_bounds = array<i64: 256, 16>}, {pipeline_mode = #tpu.pipeline_mode<synchronous>, transform_indices = @transform_1, window_bounds = array<i64: 16, 1024>}, {pipeline_mode = #tpu.pipeline_mode<synchronous>, transform_indices = @transform_2, window_bounds = array<i64: 1, 1024>}, {pipeline_mode = #tpu.pipeline_mode<synchronous>, transform_indices = @transform_3, window_bounds = array<i64: 512, 512>}, {pipeline_mode = #tpu.pipeline_mode<synchronous>, transform_indices = @transform_4, window_bounds = array<i64: 1, 512>}, {pipeline_mode = #tpu.pipeline_mode<synchronous>, transform_indices = @transform_5, window_bounds = array<i64: 512, 512>}, {pipeline_mode = #tpu.pipeline_mode<synchronous>, transform_indices = @transform_6, window_bounds = array<i64: 1, 512>}, {pipeline_mode = #tpu.pipeline_mode<synchronous>, transform_indices = @transform_7, window_bounds = array<i64: 1024, 128>}, {pipeline_mode = #tpu.pipeline_mode<synchronous>, transform_indices = @transform_8, window_bounds = array<i64: 1, 128>}, {transform_indices = @transform_9, window_bounds = array<i64: 1, 256>}]} {
    %c0 = arith.constant 0 : index
    %c0_0 = arith.constant 0 : index
    %0 = vector.load %arg1[%c0, %c0_0] : memref<256x16xf32, #tpu.memory_space<vmem>>, vector<256x16xf32>
    %c0_1 = arith.constant 0 : index
    %c0_2 = arith.constant 0 : index
    %1 = vector.load %arg2[%c0_1, %c0_2] : memref<16x1024xf32, #tpu.memory_space<vmem>>, vector<16x1024xf32>
    %2 = arith.truncf %0 : vector<256x16xf32> to vector<256x16xbf16>
    %3 = arith.extf %2 : vector<256x16xbf16> to vector<256x16xf32>
    %4 = arith.subf %0, %3 : vector<256x16xf32>
    %5 = arith.truncf %4 : vector<256x16xf32> to vector<256x16xbf16>
    %6 = arith.truncf %1 : vector<16x1024xf32> to vector<16x1024xbf16>
    %7 = arith.extf %6 : vector<16x1024xbf16> to vector<16x1024xf32>
    %8 = arith.subf %1, %7 : vector<16x1024xf32>
    %9 = arith.truncf %8 : vector<16x1024xf32> to vector<16x1024xbf16>
    %cst = arith.constant dense<0.000000e+00> : vector<256x1024xf32>
    %10 = tpu.matmul %2, %6, %cst {dimension_numbers = #tpu.dot_dimension_numbers<[1], [0], [0], [1], [0, 0, 1, 1], [], []>} : vector<256x16xbf16>, vector<16x1024xbf16>, vector<256x1024xf32> -> vector<256x1024xf32>
    %cst_3 = arith.constant dense<0.000000e+00> : vector<256x1024xf32>
    %11 = tpu.matmul %2, %9, %cst_3 {dimension_numbers = #tpu.dot_dimension_numbers<[1], [0], [0], [1], [0, 0, 1, 1], [], []>} : vector<256x16xbf16>, vector<16x1024xbf16>, vector<256x1024xf32> -> vector<256x1024xf32>
    %12 = arith.addf %10, %11 : vector<256x1024xf32>
    %cst_4 = arith.constant dense<0.000000e+00> : vector<256x1024xf32>
    %13 = tpu.matmul %5, %6, %cst_4 {dimension_numbers = #tpu.dot_dimension_numbers<[1], [0], [0], [1], [0, 0, 1, 1], [], []>} : vector<256x16xbf16>, vector<16x1024xbf16>, vector<256x1024xf32> -> vector<256x1024xf32>
    %14 = arith.addf %12, %13 : vector<256x1024xf32>
    %c0_5 = arith.constant 0 : index
    %c0_6 = arith.constant 0 : index
    %15 = vector.load %arg3[%c0_5, %c0_6] : memref<1x1024xf32, #tpu.memory_space<vmem>>, vector<1x1024xf32>
    %16 = vector.broadcast %15 : vector<1x1024xf32> to vector<256x1024xf32>
    %17 = arith.addf %14, %16 : vector<256x1024xf32>
    %18 = math.tanh %17 : vector<256x1024xf32>
    %19 = arith.truncf %18 : vector<256x1024xf32> to vector<256x1024xbf16>
    %20 = vector.extract_strided_slice %19 {offsets = [0, 0], sizes = [256, 512], strides = [1, 1]} : vector<256x1024xbf16> to vector<256x512xbf16>
    %21 = vector.extract_strided_slice %19 {offsets = [0, 512], sizes = [256, 512], strides = [1, 1]} : vector<256x1024xbf16> to vector<256x512xbf16>
    %c0_7 = arith.constant 0 : index
    %c0_8 = arith.constant 0 : index
    %22 = vector.load %arg4[%c0_7, %c0_8] : memref<512x512xbf16, #tpu.memory_space<vmem>>, vector<512x512xbf16>
    %cst_9 = arith.constant dense<0.000000e+00> : vector<256x512xf32>
    %23 = tpu.matmul %20, %22, %cst_9 {dimension_numbers = #tpu.dot_dimension_numbers<[1], [0], [0], [1], [0, 0, 1, 1], [], []>} : vector<256x512xbf16>, vector<512x512xbf16>, vector<256x512xf32> -> vector<256x512xf32>
    %c0_10 = arith.constant 0 : index
    %c0_11 = arith.constant 0 : index
    %24 = vector.load %arg5[%c0_10, %c0_11] : memref<1x512xf32, #tpu.memory_space<vmem>>, vector<1x512xf32>
    %25 = vector.broadcast %24 : vector<1x512xf32> to vector<256x512xf32>
    %26 = arith.addf %23, %25 : vector<256x512xf32>
    %27 = math.tanh %26 : vector<256x512xf32>
    %28 = arith.truncf %27 : vector<256x512xf32> to vector<256x512xbf16>
    %c0_12 = arith.constant 0 : index
    %c0_13 = arith.constant 0 : index
    %29 = vector.load %arg6[%c0_12, %c0_13] : memref<512x512xbf16, #tpu.memory_space<vmem>>, vector<512x512xbf16>
    %cst_14 = arith.constant dense<0.000000e+00> : vector<256x512xf32>
    %30 = tpu.matmul %21, %29, %cst_14 {dimension_numbers = #tpu.dot_dimension_numbers<[1], [0], [0], [1], [0, 0, 1, 1], [], []>} : vector<256x512xbf16>, vector<512x512xbf16>, vector<256x512xf32> -> vector<256x512xf32>
    %c0_15 = arith.constant 0 : index
    %c0_16 = arith.constant 0 : index
    %31 = vector.load %arg7[%c0_15, %c0_16] : memref<1x512xf32, #tpu.memory_space<vmem>>, vector<1x512xf32>
    %32 = vector.broadcast %31 : vector<1x512xf32> to vector<256x512xf32>
    %33 = arith.addf %30, %32 : vector<256x512xf32>
    %34 = math.tanh %33 : vector<256x512xf32>
    %35 = arith.truncf %34 : vector<256x512xf32> to vector<256x512xbf16>
    %c0_17 = arith.constant 0 : index
    %c0_18 = arith.constant 0 : index
    %36 = vector.load %arg8[%c0_17, %c0_18] : memref<1024x128xbf16, #tpu.memory_space<vmem>>, vector<512x128xbf16>
    %cst_19 = arith.constant dense<0.000000e+00> : vector<256x128xf32>
    %37 = tpu.matmul %28, %36, %cst_19 {dimension_numbers = #tpu.dot_dimension_numbers<[1], [0], [0], [1], [0, 0, 1, 1], [], []>} : vector<256x512xbf16>, vector<512x128xbf16>, vector<256x128xf32> -> vector<256x128xf32>
    %c512 = arith.constant 512 : index
    %c0_20 = arith.constant 0 : index
    %38 = vector.load %arg8[%c512, %c0_20] : memref<1024x128xbf16, #tpu.memory_space<vmem>>, vector<512x128xbf16>
    %cst_21 = arith.constant dense<0.000000e+00> : vector<256x128xf32>
    %39 = tpu.matmul %35, %38, %cst_21 {dimension_numbers = #tpu.dot_dimension_numbers<[1], [0], [0], [1], [0, 0, 1, 1], [], []>} : vector<256x512xbf16>, vector<512x128xbf16>, vector<256x128xf32> -> vector<256x128xf32>
    %40 = arith.addf %37, %39 : vector<256x128xf32>
    %c0_22 = arith.constant 0 : index
    %c0_23 = arith.constant 0 : index
    %41 = vector.load %arg9[%c0_22, %c0_23] : memref<1x128xf32, #tpu.memory_space<vmem>>, vector<1x128xf32>
    %42 = vector.broadcast %41 : vector<1x128xf32> to vector<256x128xf32>
    %43 = arith.addf %40, %42 : vector<256x128xf32>
    %44 = arith.mulf %43, %43 : vector<256x128xf32>
    %cst_24 = arith.constant dense<0.000000e+00> : vector<256xf32>
    %45 = vector.multi_reduction <add>, %44, %cst_24 [1] : vector<256x128xf32> to vector<256xf32>
    %46 = math.sqrt %45 : vector<256xf32>
    %47 = vector.shape_cast %46 : vector<256xf32> to vector<1x256xf32>
    %c0_25 = arith.constant 0 : index
    %c0_26 = arith.constant 0 : index
    %48 = vector.load %arg10[%c0_25, %c0_26] : memref<1x256xf32, #tpu.memory_space<vmem>>, vector<1x256xf32>
    tpu.vector_store %arg10[%c0_25, %c0_26], %47 {strides = array<i32>} : memref<1x256xf32, #tpu.memory_space<vmem>>, vector<1x256xf32>,
    return
  }
  func.func @transform_0(%arg0: i32) -> (i32, i32) {
    %c0_i32 = arith.constant 0 : i32
    %c0_i32_0 = arith.constant 0 : i32
    return %arg0, %c0_i32 : i32, i32
  }
  func.func @transform_1(%arg0: i32) -> (i32, i32) {
    %c0_i32 = arith.constant 0 : i32
    %c0_i32_0 = arith.constant 0 : i32
    %c0_i32_1 = arith.constant 0 : i32
    return %c0_i32, %c0_i32_0 : i32, i32
  }
  func.func @transform_2(%arg0: i32) -> (i32, i32) {
    %c0_i32 = arith.constant 0 : i32
    %c0_i32_0 = arith.constant 0 : i32
    %c0_i32_1 = arith.constant 0 : i32
    return %c0_i32, %c0_i32_0 : i32, i32
  }
  func.func @transform_3(%arg0: i32) -> (i32, i32) {
    %c0_i32 = arith.constant 0 : i32
    %c0_i32_0 = arith.constant 0 : i32
    %c0_i32_1 = arith.constant 0 : i32
    return %c0_i32, %c0_i32_0 : i32, i32
  }
  func.func @transform_4(%arg0: i32) -> (i32, i32) {
    %c0_i32 = arith.constant 0 : i32
    %c0_i32_0 = arith.constant 0 : i32
    %c0_i32_1 = arith.constant 0 : i32
    return %c0_i32, %c0_i32_0 : i32, i32
  }
  func.func @transform_5(%arg0: i32) -> (i32, i32) {
    %c0_i32 = arith.constant 0 : i32
    %c0_i32_0 = arith.constant 0 : i32
    %c0_i32_1 = arith.constant 0 : i32
    return %c0_i32, %c0_i32_0 : i32, i32
  }
  func.func @transform_6(%arg0: i32) -> (i32, i32) {
    %c0_i32 = arith.constant 0 : i32
    %c0_i32_0 = arith.constant 0 : i32
    %c0_i32_1 = arith.constant 0 : i32
    return %c0_i32, %c0_i32_0 : i32, i32
  }
  func.func @transform_7(%arg0: i32) -> (i32, i32) {
    %c0_i32 = arith.constant 0 : i32
    %c0_i32_0 = arith.constant 0 : i32
    %c0_i32_1 = arith.constant 0 : i32
    return %c0_i32, %c0_i32_0 : i32, i32
  }
  func.func @transform_8(%arg0: i32) -> (i32, i32) {
    %c0_i32 = arith.constant 0 : i32
    %c0_i32_0 = arith.constant 0 : i32
    %c0_i32_1 = arith.constant 0 : i32
    return %c0_i32, %c0_i32_0 : i32, i32
  }
  func.func @transform_9(%arg0: i32) -> (i32, i32) {
    %c0_i32 = arith.constant 0 : i32
    %c0_i32_0 = arith.constant 0 : i32
    return %c0_i32, %arg0 : i32, i32
  }
}

</mosaic_0001>

<llo_original>
// kernel: tpu_custom_call.1
$region0: #{tpu_custom_call.1}
  #allocation0 [shape = 'u32[]', space=smem, size = 0x4, offset = 0x4, fixed_abs, tag = 'smem constant byte address 0x4 - core index']
  #allocation1 [shape = 'u32[144,128]{1,0:T(1,128)}', space=vmem, size = 0x12000, scoped, tag = 'internal scratch']
  %s0 = inlined_call_operand.vmem [shape: f32[512,16], index: 0, kind: input, shape index: {}]
  %s1 = inlined_call_operand.hbm [shape: f32[16,1024], index: 1, kind: input, shape index: {}]
  %s2 = inlined_call_operand.vmem [shape: f32[1,1024], index: 2, kind: input, shape index: {}]
  %s3 = inlined_call_operand.hbm [shape: bf16[512,512], index: 3, kind: input, shape index: {}]
  %s4 = inlined_call_operand.vmem [shape: f32[1,512], index: 4, kind: input, shape index: {}]
  %s5 = inlined_call_operand.hbm [shape: bf16[512,512], index: 5, kind: input, shape index: {}]
  %s6 = inlined_call_operand.vmem [shape: f32[1,512], index: 6, kind: input, shape index: {}]
  %s7 = inlined_call_operand.vmem [shape: bf16[1024,128], index: 7, kind: input, shape index: {}]
  %s8 = inlined_call_operand.vmem [shape: f32[1,128], index: 8, kind: input, shape index: {}]
  %s9 = inlined_call_operand.hbm [shape: f32[1,512], index: 9, kind: output, shape index: {}]
  %s10 = sld [smem:[#allocation0]]
  $region81: #{tpu_custom_call.1} parent=0
    _
  %s12 = ssub.s32 1, %s10
  %s13 = scalar_select 0, %s12, %s10
  $region1: #{tpu_custom_call.1} parent=0
    #allocation2 [shape = 'u8[65536]{0}', space=vmem, size = 0x10000, scoped, tag = 'input window, operand 1, single buffered']
    #allocation3 [shape = 's32[2]{0}', space=sflag, size = 0x8, scoped, tag = 'scoped memory for tpu_custom_call.1']
    #allocation4 [shape = 's32[2]{0}', space=sflag, size = 0x8, scoped, tag = 'scoped memory for tpu_custom_call.1']
    #allocation5 [shape = 'u8[524288]{0}', space=vmem, size = 0x80000, scoped, tag = 'input window, operand 3, single buffered']
    #allocation6 [shape = 's32[1]{0}', space=sflag, size = 0x4, scoped, tag = 'scoped memory for tpu_custom_call.1']
    #allocation7 [shape = 'u8[524288]{0}', space=vmem, size = 0x80000, scoped, tag = 'input window, operand 5, single buffered']
    #allocation8 [shape = 'u8[2048]{0}', space=vmem, size = 0x800, scoped, tag = 'output window, operand 0']
    %14 = vsyncpa [#allocation3], 0
    %15 = vsyncpa [#allocation6], 0
    %16 = vsyncpa [#allocation4], 0
    %s17 = scalar_lea.sflag [#allocation4], 1
    %18 = vsyncpa %s17, 0
    loop: start=0, step=1, limit=4
    $region2: #{tpu_custom_call.1} parent=1 // loop_pre_header
      _
    $region3: #{tpu_custom_call.1} parent=1 // loop_header
      %s20 = sphi 0, %s24
      %p21 = scmp.ge.s32.totalorder %s20, 4
      %s30 = sphi 0, %s32
      %s33 = sphi 0, %s30
      %s34 = sphi 0, %s33
      %s50 = sphi 0, %s34
      %s54 = sphi 0, %s54
      %s56 = sphi 0, %s54
      %s57 = sphi 0, %s56
      %s71 = sphi 0, %s57
      %s75 = sphi 0, %s75
      %s77 = sphi 0, %s75
      %s78 = sphi 0, %s77
      %s92 = sphi 0, %s78
      %s96 = sphi 0, %s96
      %s98 = sphi 0, %s96
      %s99 = sphi 0, %s98
      %s113 = sphi 0, %s99
      %s117 = sphi 0, %s117
      %s119 = sphi 0, %s117
      %s120 = sphi 0, %s119
      %s134 = sphi 0, %s120
      %s138 = sphi 0, %s138
      %s140 = sphi 0, %s138
      %s141 = sphi 0, %s140
      %s155 = sphi 0, %s141
      %s159 = sphi 0, %s159
      %s161 = sphi 0, %s159
      %s162 = sphi 0, %s161
      %s176 = sphi 0, %s162
      %s180 = sphi 0, %s180
      %s182 = sphi 0, %s180
      %s183 = sphi 0, %s182
      %s197 = sphi 0, %s183
      %s201 = sphi 0, %s201
      %s203 = sphi 0, %s201
      %s204 = sphi 0, %s203
      %s218 = sphi 0, %s204
      %s224 = sphi 0, %s226
      %s227 = sphi 0, %s224
      %s228 = sphi 0, %s227
      %s244 = sphi 0, %s228
    $region4: #{tpu_custom_call.1} parent=1 // loop_header_branch
      %23 = sbr.rel (%p21) target = $region8
    $region5: #{tpu_custom_call.1} parent=1 // loop_body
      %s25 = ssub.s32 %s20, 1
      %s26 = ssub.s32 %s20, 2
      %s27 = sadd.s32 %s20, 1
      %s28 = ssub.s32 %s20, %s27
      %p29 = scmp.eq.s32.totalorder %s28, 0
      %s31 = sadd.s32 %s30, 1
      %s32 = scalar_select %p29, %s30, %s31
      %p35 = pneg %p29
      %p36 = scmp.eq.s32.totalorder %s20, 1
      %p37 = por %p35, %p36
      %p38 = scmp.ne.s32.totalorder %s30, %s33
      %p39 = scmp.eq.s32.totalorder %s20, 0
      %p40 = por %p38, %p39
      %p41 = scmp.ne.s32.totalorder %s30, %s33
      %p42 = scmp.eq.s32.totalorder %s25, 1
      %p43 = por %p41, %p42
      %p44 = scmp.ne.s32.totalorder %s33, %s34
      %p45 = scmp.eq.s32.totalorder %s25, 0
      %p46 = por %p44, %p45
      %p47 = scmp.ne.s32.totalorder %s33, %s34
      %p48 = scmp.eq.s32.totalorder %s26, 1
      %p49 = por %p47, %p48
      %p51 = scmp.ne.s32.totalorder %s34, %s50
      %p52 = scmp.eq.s32.totalorder %s26, 0
      %p53 = por %p51, %p52
      %s55 = sadd.s32 %s54, 1
      %p58 = scmp.eq.s32.totalorder %s20, 1
      %p59 = scmp.ne.s32.totalorder %s54, %s56
      %p60 = scmp.eq.s32.totalorder %s20, 0
      %p61 = por %p59, %p60
      %p62 = scmp.ne.s32.totalorder %s54, %s56
      %p63 = scmp.eq.s32.totalorder %s25, 1
      %p64 = por %p62, %p63
      %p65 = scmp.ne.s32.totalorder %s56, %s57
      %p66 = scmp.eq.s32.totalorder %s25, 0
      %p67 = por %p65, %p66
      %p68 = scmp.ne.s32.totalorder %s56, %s57
      %p69 = scmp.eq.s32.totalorder %s26, 1
      %p70 = por %p68, %p69
      %p72 = scmp.ne.s32.totalorder %s57, %s71
      %p73 = scmp.eq.s32.totalorder %s26, 0
      %p74 = por %p72, %p73
      %s76 = sadd.s32 %s75, 1
      %p79 = scmp.eq.s32.totalorder %s20, 1
      %p80 = scmp.ne.s32.totalorder %s75, %s77
      %p81 = scmp.eq.s32.totalorder %s20, 0
      %p82 = por %p80, %p81
      %p83 = scmp.ne.s32.totalorder %s75, %s77
      %p84 = scmp.eq.s32.totalorder %s25, 1
      %p85 = por %p83, %p84
      %p86 = scmp.ne.s32.totalorder %s77, %s78
      %p87 = scmp.eq.s32.totalorder %s25, 0
      %p88 = por %p86, %p87
      %p89 = scmp.ne.s32.totalorder %s77, %s78
      %p90 = scmp.eq.s32.totalorder %s26, 1
      %p91 = por %p89, %p90
      %p93 = scmp.ne.s32.totalorder %s78, %s92
      %p94 = scmp.eq.s32.totalorder %s26, 0
      %p95 = por %p93, %p94
      %s97 = sadd.s32 %s96, 1
      %p100 = scmp.eq.s32.totalorder %s20, 1
      %p101 = scmp.ne.s32.totalorder %s96, %s98
      %p102 = scmp.eq.s32.totalorder %s20, 0
      %p103 = por %p101, %p102
      %p104 = scmp.ne.s32.totalorder %s96, %s98
      %p105 = scmp.eq.s32.totalorder %s25, 1
      %p106 = por %p104, %p105
      %p107 = scmp.ne.s32.totalorder %s98, %s99
      %p108 = scmp.eq.s32.totalorder %s25, 0
      %p109 = por %p107, %p108
      %p110 = scmp.ne.s32.totalorder %s98, %s99
      %p111 = scmp.eq.s32.totalorder %s26, 1
      %p112 = por %p110, %p111
      %p114 = scmp.ne.s32.totalorder %s99, %s113
      %p115 = scmp.eq.s32.totalorder %s26, 0
      %p116 = por %p114, %p115
      %s118 = sadd.s32 %s117, 1
      %p121 = scmp.eq.s32.totalorder %s20, 1
      %p122 = scmp.ne.s32.totalorder %s117, %s119
      %p123 = scmp.eq.s32.totalorder %s20, 0
      %p124 = por %p122, %p123
      %p125 = scmp.ne.s32.totalorder %s117, %s119
      %p126 = scmp.eq.s32.totalorder %s25, 1
      %p127 = por %p125, %p126
      %p128 = scmp.ne.s32.totalorder %s119, %s120
      %p129 = scmp.eq.s32.totalorder %s25, 0
      %p130 = por %p128, %p129
      %p131 = scmp.ne.s32.totalorder %s119, %s120
      %p132 = scmp.eq.s32.totalorder %s26, 1
      %p133 = por %p131, %p132
      %p135 = scmp.ne.s32.totalorder %s120, %s134
      %p136 = scmp.eq.s32.totalorder %s26, 0
      %p137 = por %p135, %p136
      %s139 = sadd.s32 %s138, 1
      %p142 = scmp.eq.s32.totalorder %s20, 1
      %p143 = scmp.ne.s32.totalorder %s138, %s140
      %p144 = scmp.eq.s32.totalorder %s20, 0
      %p145 = por %p143, %p144
      %p146 = scmp.ne.s32.totalorder %s138, %s140
      %p147 = scmp.eq.s32.totalorder %s25, 1
      %p148 = por %p146, %p147
      %p149 = scmp.ne.s32.totalorder %s140, %s141
      %p150 = scmp.eq.s32.totalorder %s25, 0
      %p151 = por %p149, %p150
      %p152 = scmp.ne.s32.totalorder %s140, %s141
      %p153 = scmp.eq.s32.totalorder %s26, 1
      %p154 = por %p152, %p153
      %p156 = scmp.ne.s32.totalorder %s141, %s155
      %p157 = scmp.eq.s32.totalorder %s26, 0
      %p158 = por %p156, %p157
      %s160 = sadd.s32 %s159, 1
      %p163 = scmp.eq.s32.totalorder %s20, 1
      %p164 = scmp.ne.s32.totalorder %s159, %s161
      %p165 = scmp.eq.s32.totalorder %s20, 0
      %p166 = por %p164, %p165
      %p167 = scmp.ne.s32.totalorder %s159, %s161
      %p168 = scmp.eq.s32.totalorder %s25, 1
      %p169 = por %p167, %p168
      %p170 = scmp.ne.s32.totalorder %s161, %s162
      %p171 = scmp.eq.s32.totalorder %s25, 0
      %p172 = por %p170, %p171
      %p173 = scmp.ne.s32.totalorder %s161, %s162
      %p174 = scmp.eq.s32.totalorder %s26, 1
      %p175 = por %p173, %p174
      %p177 = scmp.ne.s32.totalorder %s162, %s176
      %p178 = scmp.eq.s32.totalorder %s26, 0
      %p179 = por %p177, %p178
      %s181 = sadd.s32 %s180, 1
      %p184 = scmp.eq.s32.totalorder %s20, 1
      %p185 = scmp.ne.s32.totalorder %s180, %s182
      %p186 = scmp.eq.s32.totalorder %s20, 0
      %p187 = por %p185, %p186
      %p188 = scmp.ne.s32.totalorder %s180, %s182
      %p189 = scmp.eq.s32.totalorder %s25, 1
      %p190 = por %p188, %p189
      %p191 = scmp.ne.s32.totalorder %s182, %s183
      %p192 = scmp.eq.s32.totalorder %s25, 0
      %p193 = por %p191, %p192
      %p194 = scmp.ne.s32.totalorder %s182, %s183
      %p195 = scmp.eq.s32.totalorder %s26, 1
      %p196 = por %p194, %p195
      %p198 = scmp.ne.s32.totalorder %s183, %s197
      %p199 = scmp.eq.s32.totalorder %s26, 0
      %p200 = por %p198, %p199
      %s202 = sadd.s32 %s201, 1
      %p205 = scmp.eq.s32.totalorder %s20, 1
      %p206 = scmp.ne.s32.totalorder %s201, %s203
      %p207 = scmp.eq.s32.totalorder %s20, 0
      %p208 = por %p206, %p207
      %p209 = scmp.ne.s32.totalorder %s201, %s203
      %p210 = scmp.eq.s32.totalorder %s25, 1
      %p211 = por %p209, %p210
      %p212 = scmp.ne.s32.totalorder %s203, %s204
      %p213 = scmp.eq.s32.totalorder %s25, 0
      %p214 = por %p212, %p213
      %p215 = scmp.ne.s32.totalorder %s203, %s204
      %p216 = scmp.eq.s32.totalorder %s26, 1
      %p217 = por %p215, %p216
      %p219 = scmp.ne.s32.totalorder %s204, %s218
      %p220 = scmp.eq.s32.totalorder %s26, 0
      %p221 = por %p219, %p220
      %s222 = ssub.s32 %s20, %s27
      %p223 = scmp.eq.s32.totalorder %s222, 0
      %s225 = sadd.s32 %s224, 1
      %s226 = scalar_select %p223, %s224, %s225
      %p229 = pneg %p223
      %p230 = scmp.eq.s32.totalorder %s20, 1
      %p231 = por %p229, %p230
      %p232 = scmp.ne.s32.totalorder %s224, %s227
      %p233 = scmp.eq.s32.totalorder %s20, 0
      %p234 = por %p232, %p233
      %p235 = scmp.ne.s32.totalorder %s224, %s227
      %p236 = scmp.eq.s32.totalorder %s25, 1
      %p237 = por %p235, %p236
      %p238 = scmp.ne.s32.totalorder %s227, %s228
      %p239 = scmp.eq.s32.totalorder %s25, 0
      %p240 = por %p238, %p239
      %p241 = scmp.ne.s32.totalorder %s227, %s228
      %p242 = scmp.eq.s32.totalorder %s26, 1
      %p243 = por %p241, %p242
      %p245 = scmp.ne.s32.totalorder %s228, %s244
      %p246 = scmp.eq.s32.totalorder %s26, 0
      %p247 = por %p245, %p246
      %p248 = scmp.le.s32.totalorder 1, %s20
      %p249 = scmp.lt.s32.totalorder %s20, 3
      %p250 = pnand %p248, %p249
      %p251 = pneg %p250
      // Predicated region
      $region9: #{tpu_custom_call.1} parent=5 // pred_check
        _
      $region10: #{tpu_custom_call.1} parent=5 // pred_check_branch
        %253 = sbr.rel (%p250) target = $region12
      $region11: #{tpu_custom_call.1} parent=5 // pred_region
        %s254 = ssub.s32 %s20, 1
        // Predicated region
        $region13: #{tpu_custom_call.1} parent=11 // pred_check
          %p255 = pneg %p67
        $region14: #{tpu_custom_call.1} parent=11 // pred_check_branch
          %257 = sbr.rel (%p255) target = $region16
        $region15: #{tpu_custom_call.1} parent=11 // pred_region
          %s259 = ssub.s32 2048, 2048
          %260 = vsyncadd [#allocation3], %s259
          %s261 = sshll.u32 [#allocation2], 4
          %s262 = int_to_ptr.vmem [resolvable:$true] %s261
          %267 = dma.hbm_to_vmem [thread:$0]  %s1, 2048, %s262, [#allocation3], 1024, 1024, 64
        $region16: #{tpu_custom_call.1} parent=11 // pred_fallthru
          _
        // Predicated region
        $region17: #{tpu_custom_call.1} parent=11 // pred_check
          %p268 = pneg %p88
        $region18: #{tpu_custom_call.1} parent=11 // pred_check_branch
          %270 = sbr.rel (%p268) target = $region20
        $region19: #{tpu_custom_call.1} parent=11 // pred_region
          _
        $region20: #{tpu_custom_call.1} parent=11 // pred_fallthru
          _
        // Predicated region
        $region21: #{tpu_custom_call.1} parent=11 // pred_check
          %p271 = pneg %p109
        $region22: #{tpu_custom_call.1} parent=11 // pred_check_branch
          %273 = sbr.rel (%p271) target = $region24
        $region23: #{tpu_custom_call.1} parent=11 // pred_region
          %s275 = ssub.s32 16384, 16384
          %276 = vsyncadd [#allocation6], %s275
          %s277 = sshll.u32 [#allocation5], 4
          %s278 = int_to_ptr.vmem [resolvable:$true] %s277
          %283 = dma.hbm_to_vmem [thread:$0]  %s3, 16384, %s278, [#allocation6], 256, 256, 16
        $region24: #{tpu_custom_call.1} parent=11 // pred_fallthru
          _
        // Predicated region
        $region25: #{tpu_custom_call.1} parent=11 // pred_check
          %p284 = pneg %p130
        $region26: #{tpu_custom_call.1} parent=11 // pred_check_branch
          %286 = sbr.rel (%p284) target = $region28
        $region27: #{tpu_custom_call.1} parent=11 // pred_region
          _
        $region28: #{tpu_custom_call.1} parent=11 // pred_fallthru
          _
        // Predicated region
        $region29: #{tpu_custom_call.1} parent=11 // pred_check
          %p287 = pneg %p151
        $region30: #{tpu_custom_call.1} parent=11 // pred_check_branch
          %289 = sbr.rel (%p287) target = $region32
        $region31: #{tpu_custom_call.1} parent=11 // pred_region
          %s291 = ssub.s32 16384, 16384
          %292 = vsyncadd [#allocation6], %s291
          %s293 = sshll.u32 [#allocation7], 4
          %s294 = int_to_ptr.vmem [resolvable:$true] %s293
          %299 = dma.hbm_to_vmem [thread:$0]  %s5, 16384, %s294, [#allocation6], 256, 256, 16
        $region32: #{tpu_custom_call.1} parent=11 // pred_fallthru
          _
        // Predicated region
        $region33: #{tpu_custom_call.1} parent=11 // pred_check
          %p300 = pneg %p172
        $region34: #{tpu_custom_call.1} parent=11 // pred_check_branch
          %302 = sbr.rel (%p300) target = $region36
        $region35: #{tpu_custom_call.1} parent=11 // pred_region
          _
        $region36: #{tpu_custom_call.1} parent=11 // pred_fallthru
          _
        // Predicated region
        $region37: #{tpu_custom_call.1} parent=11 // pred_check
          %p303 = pneg %p193
        $region38: #{tpu_custom_call.1} parent=11 // pred_check_branch
          %305 = sbr.rel (%p303) target = $region40
        $region39: #{tpu_custom_call.1} parent=11 // pred_region
          _
        $region40: #{tpu_custom_call.1} parent=11 // pred_fallthru
          _
        // Predicated region
        $region41: #{tpu_custom_call.1} parent=11 // pred_check
          %p306 = pneg %p214
        $region42: #{tpu_custom_call.1} parent=11 // pred_check_branch
          %308 = sbr.rel (%p306) target = $region44
        $region43: #{tpu_custom_call.1} parent=11 // pred_region
          _
        $region44: #{tpu_custom_call.1} parent=11 // pred_fallthru
          _
      $region12: #{tpu_custom_call.1} parent=5 // pred_fallthru
        _
      %p309 = scmp.lt.s32.totalorder %s20, 2
      // Predicated region
      $region45: #{tpu_custom_call.1} parent=5 // pred_check
        %p310 = pneg %p309
      $region46: #{tpu_custom_call.1} parent=5 // pred_check_branch
        %312 = sbr.rel (%p310) target = $region48
      $region47: #{tpu_custom_call.1} parent=5 // pred_region
        // Predicated region
        $region49: #{tpu_custom_call.1} parent=47 // pred_check
          %p313 = pneg %p40
        $region50: #{tpu_custom_call.1} parent=47 // pred_check_branch
          %315 = sbr.rel (%p313) target = $region52
        $region51: #{tpu_custom_call.1} parent=47 // pred_region
          %s316 = smul.u32 32, %s20
          %p317 = scmp.lt.s32.totalorder %s316, 63
          %s318 = scalar_select %p317, %s316, 63
          %s319 = smul.addr %s318, 8
          %s320 = scalar_lea.vmem %s0, %s319
          %s321 = smul.u32 32, %s20
        $region52: #{tpu_custom_call.1} parent=47 // pred_fallthru
          _
      $region48: #{tpu_custom_call.1} parent=5 // pred_fallthru
        _
      %p322 = scmp.le.s32.totalorder 1, %s20
      %p323 = scmp.lt.s32.totalorder %s20, 3
      %p324 = pnand %p322, %p323
      %p325 = pneg %p324
      // Predicated region
      $region53: #{tpu_custom_call.1} parent=5 // pred_check
        _
      $region54: #{tpu_custom_call.1} parent=5 // pred_check_branch
        %327 = sbr.rel (%p324) target = $region56
      $region55: #{tpu_custom_call.1} parent=5 // pred_region
        %s328 = ssub.s32 %s20, 1
        // Predicated region
        $region57: #{tpu_custom_call.1} parent=55 // pred_check
          %p329 = pneg %p67
        $region58: #{tpu_custom_call.1} parent=55 // pred_check_branch
          %331 = sbr.rel (%p329) target = $region60
        $region59: #{tpu_custom_call.1} parent=55 // pred_region
          %332 = dma.done [#allocation3], 2048
        $region60: #{tpu_custom_call.1} parent=55 // pred_fallthru
          _
        // Predicated region
        $region61: #{tpu_custom_call.1} parent=55 // pred_check
          %p333 = pneg %p109
        $region62: #{tpu_custom_call.1} parent=55 // pred_check_branch
          %335 = sbr.rel (%p333) target = $region64
        $region63: #{tpu_custom_call.1} parent=55 // pred_region
          %336 = dma.done [#allocation6], 16384
        $region64: #{tpu_custom_call.1} parent=55 // pred_fallthru
          _
        // Predicated region
        $region65: #{tpu_custom_call.1} parent=55 // pred_check
          %p337 = pneg %p151
        $region66: #{tpu_custom_call.1} parent=55 // pred_check_branch
          %339 = sbr.rel (%p337) target = $region68
        $region67: #{tpu_custom_call.1} parent=55 // pred_region
          %340 = dma.done [#allocation6], 16384
        $region68: #{tpu_custom_call.1} parent=55 // pred_fallthru
          _
        %s341 = smul.u32 32, %s25
        %p342 = scmp.lt.s32.totalorder %s341, 63
        %s343 = scalar_select %p342, %s341, 63
        %s344 = smul.addr %s343, 8
        %s345 = scalar_lea.vmem %s0, %s344
        %p346 = pneg %p46
        %p347 = pneg %p43
        %p348 = pneg %p67
        %p349 = pneg %p64
        %p350 = pneg %p88
        %p351 = pneg %p85
        %p352 = pneg %p109
        %p353 = pneg %p106
        %p354 = pneg %p130
        %p355 = pneg %p127
        %p356 = pneg %p151
        %p357 = pneg %p148
        %p358 = pneg %p172
        %p359 = pneg %p169
        %p360 = pneg %p193
        %p361 = pneg %p190
        %p362 = pneg %p214
        %p363 = pneg %p211
        %p364 = pneg %p240
        %p365 = pneg %p237
        %s366 = sand.u32 %s227, 1
        %s367 = scalar_lea.sflag [#allocation4], %s366
        %s368 = sand.u32 %s227, 1
        %s369 = smul.addr %s368, 2
        %s370 = scalar_lea.vmem [#allocation8], %s369
        %s371 = smul.u32 32, %s25
        %p372 = scmp.lt.s32.totalorder %s371, 63
        %s373 = scalar_select %p372, %s371, 63
        %s374 = smul.addr %s373, 8
        %s375 = scalar_lea.vmem %s0, %s374
        %s376 = smul.u32 32, %s25
        %s377 = smul.u32 2, %s25
        %v379 = vld [vmem:[%s375] sm:$0xff]
        %v380 = vld [vmem:[%s375 + $0x8] sm:$0xff]
        %v381 = vld [vmem:[%s375 + $0x10] sm:$0xff]
        %v382 = vld [vmem:[%s375 + $0x18] sm:$0xff]
        %v383 = vld [vmem:[%s375 + $0x20] sm:$0xff]
        %v384 = vld [vmem:[%s375 + $0x28] sm:$0xff]
        %v385 = vld [vmem:[%s375 + $0x30] sm:$0xff]
        %v386 = vld [vmem:[%s375 + $0x38] sm:$0xff]
        %v387 = vld [vmem:[%s375 + $0x40] sm:$0xff]
        %v388 = vld [vmem:[%s375 + $0x48] sm:$0xff]
        %v389 = vld [vmem:[%s375 + $0x50] sm:$0xff]
        %v390 = vld [vmem:[%s375 + $0x58] sm:$0xff]
        %v391 = vld [vmem:[%s375 + $0x60] sm:$0xff]
        %v392 = vld [vmem:[%s375 + $0x68] sm:$0xff]
        %v393 = vld [vmem:[%s375 + $0x70] sm:$0xff]
        %v394 = vld [vmem:[%s375 + $0x78] sm:$0xff]
        %v395 = vld [vmem:[%s375 + $0x80] sm:$0xff]
        %v396 = vld [vmem:[%s375 + $0x88] sm:$0xff]
        %v397 = vld [vmem:[%s375 + $0x90] sm:$0xff]
        %v398 = vld [vmem:[%s375 + $0x98] sm:$0xff]
        %v399 = vld [vmem:[%s375 + $0xa0] sm:$0xff]
        %v400 = vld [vmem:[%s375 + $0xa8] sm:$0xff]
        %v401 = vld [vmem:[%s375 + $0xb0] sm:$0xff]
        %v402 = vld [vmem:[%s375 + $0xb8] sm:$0xff]
        %v403 = vld [vmem:[%s375 + $0xc0] sm:$0xff]
        %v404 = vld [vmem:[%s375 + $0xc8] sm:$0xff]
        %v405 = vld [vmem:[%s375 + $0xd0] sm:$0xff]
        %v406 = vld [vmem:[%s375 + $0xd8] sm:$0xff]
        %v407 = vld [vmem:[%s375 + $0xe0] sm:$0xff]
        %v408 = vld [vmem:[%s375 + $0xe8] sm:$0xff]
        %v409 = vld [vmem:[%s375 + $0xf0] sm:$0xff]
        %v410 = vld [vmem:[%s375 + $0xf8] sm:$0xff]
        %v411 = vld [vmem:[#allocation2] sm:$0xff]
        %v412 = vld [vmem:[#allocation2 + $0x8] sm:$0xff]
        %v413 = vld [vmem:[#allocation2 + $0x10] sm:$0xff]
        %v414 = vld [vmem:[#allocation2 + $0x18] sm:$0xff]
        %v415 = vld [vmem:[#allocation2 + $0x20] sm:$0xff]
        %v416 = vld [vmem:[#allocation2 + $0x28] sm:$0xff]
        %v417 = vld [vmem:[#allocation2 + $0x30] sm:$0xff]
        %v418 = vld [vmem:[#allocation2 + $0x38] sm:$0xff]
        %v419 = vld [vmem:[#allocation2 + $0x40] sm:$0xff]
        %v420 = vld [vmem:[#allocation2 + $0x48] sm:$0xff]
        %v421 = vld [vmem:[#allocation2 + $0x50] sm:$0xff]
        %v422 = vld [vmem:[#allocation2 + $0x58] sm:$0xff]
        %v423 = vld [vmem:[#allocation2 + $0x60] sm:$0xff]
        %v424 = vld [vmem:[#allocation2 + $0x68] sm:$0xff]
        %v425 = vld [vmem:[#allocation2 + $0x70] sm:$0xff]
        %v426 = vld [vmem:[#allocation2 + $0x78] sm:$0xff]
        %v427 = vpack.c.bf16 %v380, %v379
        %v428 = vpack.c.bf16 %v382, %v381
        %v429 = vpack.c.bf16 %v384, %v383
        %v430 = vpack.c.bf16 %v386, %v385
        %v431 = vpack.c.bf16 %v388, %v387
        %v432 = vpack.c.bf16 %v390, %v389
        %v433 = vpack.c.bf16 %v392, %v391
        %v434 = vpack.c.bf16 %v394, %v393
        %v435 = vpack.c.bf16 %v396, %v395
        %v436 = vpack.c.bf16 %v398, %v397
        %v437 = vpack.c.bf16 %v400, %v399
        %v438 = vpack.c.bf16 %v402, %v401
        %v439 = vpack.c.bf16 %v404, %v403
        %v440 = vpack.c.bf16 %v406, %v405
        %v441 = vpack.c.bf16 %v408, %v407
        %v442 = vpack.c.bf16 %v410, %v409
        %v443 = vunpack.c.l.bf16 %v427
        %v444 = vunpack.c.h.bf16 %v427
        %v445 = vunpack.c.l.bf16 %v428
        %v446 = vunpack.c.h.bf16 %v428
        %v447 = vunpack.c.l.bf16 %v429
        %v448 = vunpack.c.h.bf16 %v429
        %v449 = vunpack.c.l.bf16 %v430
        %v450 = vunpack.c.h.bf16 %v430
        %v451 = vunpack.c.l.bf16 %v431
        %v452 = vunpack.c.h.bf16 %v431
        %v453 = vunpack.c.l.bf16 %v432
        %v454 = vunpack.c.h.bf16 %v432
        %v455 = vunpack.c.l.bf16 %v433
        %v456 = vunpack.c.h.bf16 %v433
        %v457 = vunpack.c.l.bf16 %v434
        %v458 = vunpack.c.h.bf16 %v434
        %v459 = vunpack.c.l.bf16 %v435
        %v460 = vunpack.c.h.bf16 %v435
        %v461 = vunpack.c.l.bf16 %v436
        %v462 = vunpack.c.h.bf16 %v436
        %v463 = vunpack.c.l.bf16 %v437
        %v464 = vunpack.c.h.bf16 %v437
        %v465 = vunpack.c.l.bf16 %v438
        %v466 = vunpack.c.h.bf16 %v438
        %v467 = vunpack.c.l.bf16 %v439
        %v468 = vunpack.c.h.bf16 %v439
        %v469 = vunpack.c.l.bf16 %v440
        %v470 = vunpack.c.h.bf16 %v440
        %v471 = vunpack.c.l.bf16 %v441
        %v472 = vunpack.c.h.bf16 %v441
        %v473 = vunpack.c.l.bf16 %v442
        %v474 = vunpack.c.h.bf16 %v442
        %v475 = vsub.f32 %v379, %v443
        %v476 = vsub.f32 %v380, %v444
        %v477 = vsub.f32 %v381, %v445
        %v478 = vsub.f32 %v382, %v446
        %v479 = vsub.f32 %v383, %v447
        %v480 = vsub.f32 %v384, %v448
        %v481 = vsub.f32 %v385, %v449
        %v482 = vsub.f32 %v386, %v450
        %v483 = vsub.f32 %v387, %v451
        %v484 = vsub.f32 %v388, %v452
        %v485 = vsub.f32 %v389, %v453
        %v486 = vsub.f32 %v390, %v454
        %v487 = vsub.f32 %v391, %v455
        %v488 = vsub.f32 %v392, %v456
        %v489 = vsub.f32 %v393, %v457
        %v490 = vsub.f32 %v394, %v458
        %v491 = vsub.f32 %v395, %v459
        %v492 = vsub.f32 %v396, %v460
        %v493 = vsub.f32 %v397, %v461
        %v494 = vsub.f32 %v398, %v462
        %v495 = vsub.f32 %v399, %v463
        %v496 = vsub.f32 %v400, %v464
        %v497 = vsub.f32 %v401, %v465
        %v498 = vsub.f32 %v402, %v466
        %v499 = vsub.f32 %v403, %v467
        %v500 = vsub.f32 %v404, %v468
        %v501 = vsub.f32 %v405, %v469
        %v502 = vsub.f32 %v406, %v470
        %v503 = vsub.f32 %v407, %v471
        %v504 = vsub.f32 %v408, %v472
        %v505 = vsub.f32 %v409, %v473
        %v506 = vsub.f32 %v410, %v474
        %v507 = vpack.c.bf16 %v476, %v475
        %v508 = vpack.c.bf16 %v478, %v477
        %v509 = vpack.c.bf16 %v480, %v479
        %v510 = vpack.c.bf16 %v482, %v481
        %v511 = vpack.c.bf16 %v484, %v483
        %v512 = vpack.c.bf16 %v486, %v485
        %v513 = vpack.c.bf16 %v488, %v487
        %v514 = vpack.c.bf16 %v490, %v489
        %v515 = vpack.c.bf16 %v492, %v491
        %v516 = vpack.c.bf16 %v494, %v493
        %v517 = vpack.c.bf16 %v496, %v495
        %v518 = vpack.c.bf16 %v498, %v497
        %v519 = vpack.c.bf16 %v500, %v499
        %v520 = vpack.c.bf16 %v502, %v501
        %v521 = vpack.c.bf16 %v504, %v503
        %v522 = vpack.c.bf16 %v506, %v505
        %v523 = vpack.c.bf16 %v419, %v411
        %v524 = vpack.c.bf16 %v420, %v412
        %v525 = vpack.c.bf16 %v421, %v413
        %v526 = vpack.c.bf16 %v422, %v414
        %v527 = vpack.c.bf16 %v423, %v415
        %v528 = vpack.c.bf16 %v424, %v416
        %v529 = vpack.c.bf16 %v425, %v417
        %v530 = vpack.c.bf16 %v426, %v418
        %v531 = vunpack.c.l.bf16 %v523
        %v532 = vunpack.c.l.bf16 %v524
        %v533 = vunpack.c.l.bf16 %v525
        %v534 = vunpack.c.l.bf16 %v526
        %v535 = vunpack.c.l.bf16 %v527
        %v536 = vunpack.c.l.bf16 %v528
        %v537 = vunpack.c.l.bf16 %v529
        %v538 = vunpack.c.l.bf16 %v530
        %v539 = vunpack.c.h.bf16 %v523
        %v540 = vunpack.c.h.bf16 %v524
        %v541 = vunpack.c.h.bf16 %v525
        %v542 = vunpack.c.h.bf16 %v526
        %v543 = vunpack.c.h.bf16 %v527
        %v544 = vunpack.c.h.bf16 %v528
        %v545 = vunpack.c.h.bf16 %v529
        %v546 = vunpack.c.h.bf16 %v530
        %v547 = vsub.f32 %v411, %v531
        %v548 = vsub.f32 %v412, %v532
        %v549 = vsub.f32 %v413, %v533
        %v550 = vsub.f32 %v414, %v534
        %v551 = vsub.f32 %v415, %v535
        %v552 = vsub.f32 %v416, %v536
        %v553 = vsub.f32 %v417, %v537
        %v554 = vsub.f32 %v418, %v538
        %v555 = vsub.f32 %v419, %v539
        %v556 = vsub.f32 %v420, %v540
        %v557 = vsub.f32 %v421, %v541
        %v558 = vsub.f32 %v422, %v542
        %v559 = vsub.f32 %v423, %v543
        %v560 = vsub.f32 %v424, %v544
        %v561 = vsub.f32 %v425, %v545
        %v562 = vsub.f32 %v426, %v546
        %v563 = vpack.c.bf16 %v555, %v547
        %v564 = vpack.c.bf16 %v556, %v548
        %v565 = vpack.c.bf16 %v557, %v549
        %v566 = vpack.c.bf16 %v558, %v550
        %v567 = vpack.c.bf16 %v559, %v551
        %v568 = vpack.c.bf16 %v560, %v552
        %v569 = vpack.c.bf16 %v561, %v553
        %v570 = vpack.c.bf16 %v562, %v554
        %vm571 = vcmask 130048
        %v573 = vsel %vm571, %v427, 0
        %v576 = vsel %vm571, %v428, 0
        %v579 = vsel %vm571, %v429, 0
        %v582 = vsel %vm571, %v430, 0
        %v585 = vsel %vm571, %v431, 0
        %v588 = vsel %vm571, %v432, 0
        %v591 = vsel %vm571, %v433, 0
        %v594 = vsel %vm571, %v434, 0
        %v597 = vsel %vm571, %v435, 0
        %v600 = vsel %vm571, %v436, 0
        %v603 = vsel %vm571, %v437, 0
        %v606 = vsel %vm571, %v438, 0
        %v609 = vsel %vm571, %v439, 0
        %v612 = vsel %vm571, %v440, 0
        %v615 = vsel %vm571, %v441, 0
        %v618 = vsel %vm571, %v442, 0
        %620 = vmatprep.subr.bf16.mxu0 %v564
        %621 = vmatpush1.bf16.msra.mxu0 %v563
        %622 = vmatprep.subr.bf16.mxu0 0
        %623 = vmatpush1.bf16.msra.mxu0 0
        %624 = vmatprep.subr.bf16.mxu0 0
        %625 = vmatpush1.bf16.msra.mxu0 0
        %626 = vmatprep.subr.bf16.mxu0 0
        %627 = vmatpush1.bf16.msra.mxu0 0
        %628 = vmatprep.subr.bf16.mxu0 0
        %629 = vmatpush1.bf16.msra.mxu0 0
        %630 = vmatprep.subr.bf16.mxu0 0
        %631 = vmatpush1.bf16.msra.mxu0 0
        %632 = vmatprep.subr.bf16.mxu0 0
        %633 = vmatpush1.bf16.msra.mxu0 0
        %634 = vmatprep.subr.bf16.mxu0 0
        %635 = vmatpush1.bf16.msra.mxu0 0
        %636 = vmatprep.subr.bf16.mxu0 0
        %637 = vmatpush1.bf16.msra.mxu0 0
        %638 = vmatprep.subr.bf16.mxu0 0
        %639 = vmatpush1.bf16.msra.mxu0 0
        %640 = vmatprep.subr.bf16.mxu0 0
        %641 = vmatpush1.bf16.msra.mxu0 0
        %642 = vmatprep.subr.bf16.mxu0 0
        %643 = vmatpush1.bf16.msra.mxu0 0
        %644 = vmatprep.subr.bf16.mxu0 0
        %645 = vmatpush1.bf16.msra.mxu0 0
        %646 = vmatprep.subr.bf16.mxu0 0
        %647 = vmatpush1.bf16.msra.mxu0 0
        %648 = vmatprep.subr.bf16.mxu0 0
        %649 = vmatpush1.bf16.msra.mxu0 0
        %650 = vmatprep.subr.bf16.mxu0 0
        %651 = vmatpush1.bf16.msra.mxu0 0
        %652 = vmatprep.mubr.bf16.mxu0 0
        %653 = vmatmul.mubr.bf16.gmra.mrb[0].mxu0 %v573
        %v654 = vpop.f32.mrb[0].mxu0
        %v655 = vadd.f32 0.0, %v654
        %v656 = vpop.f32.mrb[0].mxu0
        %v657 = vadd.f32 0.0, %v656
        %v658 = vpop.f32.mrb[0].mxu0
        %v659 = vadd.f32 0.0, %v658
        %v660 = vpop.f32.mrb[0].mxu0
        %v661 = vadd.f32 0.0, %v660
        %662 = vmatprep.mubr.bf16.mxu0 0
        %663 = vmatmul.mubr.bf16.gmra.mrb[0].mxu0 %v576
        %v664 = vpop.f32.mrb[0].mxu0
        %v665 = vadd.f32 0.0, %v664
        %v666 = vpop.f32.mrb[0].mxu0
        %v667 = vadd.f32 0.0, %v666
        %v668 = vpop.f32.mrb[0].mxu0
        %v669 = vadd.f32 0.0, %v668
        %v670 = vpop.f32.mrb[0].mxu0
        %v671 = vadd.f32 0.0, %v670
        %672 = vmatprep.mubr.bf16.mxu0 0
        %673 = vmatmul.mubr.bf16.gmra.mrb[0].mxu0 %v579
        %v674 = vpop.f32.mrb[0].mxu0
        %v675 = vadd.f32 0.0, %v674
        %v676 = vpop.f32.mrb[0].mxu0
        %v677 = vadd.f32 0.0, %v676
        %v678 = vpop.f32.mrb[0].mxu0
        %v679 = vadd.f32 0.0, %v678
        %v680 = vpop.f32.mrb[0].mxu0
        %v681 = vadd.f32 0.0, %v680
        %682 = vmatprep.mubr.bf16.mxu0 0
        %683 = vmatmul.mubr.bf16.gmra.mrb[0].mxu0 %v582
        %v684 = vpop.f32.mrb[0].mxu0
        %v685 = vadd.f32 0.0, %v684
        %v686 = vpop.f32.mrb[0].mxu0
        %v687 = vadd.f32 0.0, %v686
        %v688 = vpop.f32.mrb[0].mxu0
        %v689 = vadd.f32 0.0, %v688
        %v690 = vpop.f32.mrb[0].mxu0
        %v691 = vadd.f32 0.0, %v690
        %692 = vmatprep.mubr.bf16.mxu0 0
        %693 = vmatmul.mubr.bf16.gmra.mrb[0].mxu0 %v585
        %v694 = vpop.f32.mrb[0].mxu0
        %v695 = vadd.f32 0.0, %v694
        %v696 = vpop.f32.mrb[0].mxu0
        %v697 = vadd.f32 0.0, %v696
        %v698 = vpop.f32.mrb[0].mxu0
        %v699 = vadd.f32 0.0, %v698
        %v700 = vpop.f32.mrb[0].mxu0
        %v701 = vadd.f32 0.0, %v700
        %702 = vmatprep.mubr.bf16.mxu0 0
        %703 = vmatmul.mubr.bf16.gmra.mrb[0].mxu0 %v588
        %v704 = vpop.f32.mrb[0].mxu0
        %v705 = vadd.f32 0.0, %v704
        %v706 = vpop.f32.mrb[0].mxu0
        %v707 = vadd.f32 0.0, %v706
        %v708 = vpop.f32.mrb[0].mxu0
        %v709 = vadd.f32 0.0, %v708
        %v710 = vpop.f32.mrb[0].mxu0
        %v711 = vadd.f32 0.0, %v710
        %712 = vmatprep.mubr.bf16.mxu0 0
        %713 = vmatmul.mubr.bf16.gmra.mrb[0].mxu0 %v591
        %v714 = vpop.f32.mrb[0].mxu0
        %v715 = vadd.f32 0.0, %v714
        %v716 = vpop.f32.mrb[0].mxu0
        %v717 = vadd.f32 0.0, %v716
        %v718 = vpop.f32.mrb[0].mxu0
        %v719 = vadd.f32 0.0, %v718
        %v720 = vpop.f32.mrb[0].mxu0
        %v721 = vadd.f32 0.0, %v720
        %722 = vmatprep.mubr.bf16.mxu0 0
        %723 = vmatmul.mubr.bf16.gmra.mrb[0].mxu0 %v594
        %v724 = vpop.f32.mrb[0].mxu0
        %v725 = vadd.f32 0.0, %v724
        %v726 = vpop.f32.mrb[0].mxu0
        %v727 = vadd.f32 0.0, %v726
        %v728 = vpop.f32.mrb[0].mxu0
        %v729 = vadd.f32 0.0, %v728
        %v730 = vpop.f32.mrb[0].mxu0
        %v731 = vadd.f32 0.0, %v730
        %732 = vmatprep.mubr.bf16.mxu0 0
        %733 = vmatmul.mubr.bf16.gmra.mrb[0].mxu0 %v597
        %v734 = vpop.f32.mrb[0].mxu0
        %v735 = vadd.f32 0.0, %v734
        %v736 = vpop.f32.mrb[0].mxu0
        %v737 = vadd.f32 0.0, %v736
        %v738 = vpop.f32.mrb[0].mxu0
        %v739 = vadd.f32 0.0, %v738
        %v740 = vpop.f32.mrb[0].mxu0
        %v741 = vadd.f32 0.0, %v740
        %742 = vmatprep.mubr.bf16.mxu0 0
        %743 = vmatmul.mubr.bf16.gmra.mrb[0].mxu0 %v600
        %v744 = vpop.f32.mrb[0].mxu0
        %v745 = vadd.f32 0.0, %v744
        %v746 = vpop.f32.mrb[0].mxu0
        %v747 = vadd.f32 0.0, %v746
        %v748 = vpop.f32.mrb[0].mxu0
        %v749 = vadd.f32 0.0, %v748
        %v750 = vpop.f32.mrb[0].mxu0
        %v751 = vadd.f32 0.0, %v750
        %752 = vmatprep.mubr.bf16.mxu0 0
        %753 = vmatmul.mubr.bf16.gmra.mrb[0].mxu0 %v603
        %v754 = vpop.f32.mrb[0].mxu0
        %v755 = vadd.f32 0.0, %v754
        %v756 = vpop.f32.mrb[0].mxu0
        %v757 = vadd.f32 0.0, %v756
        %v758 = vpop.f32.mrb[0].mxu0
        %v759 = vadd.f32 0.0, %v758
        %v760 = vpop.f32.mrb[0].mxu0
        %v761 = vadd.f32 0.0, %v760
        %762 = vmatprep.mubr.bf16.mxu0 0
        %763 = vmatmul.mubr.bf16.gmra.mrb[0].mxu0 %v606
        %v764 = vpop.f32.mrb[0].mxu0
        %v765 = vadd.f32 0.0, %v764
        %v766 = vpop.f32.mrb[0].mxu0
        %v767 = vadd.f32 0.0, %v766
        %v768 = vpop.f32.mrb[0].mxu0
        %v769 = vadd.f32 0.0, %v768
        %v770 = vpop.f32.mrb[0].mxu0
        %v771 = vadd.f32 0.0, %v770
        %772 = vmatprep.mubr.bf16.mxu0 0
        %773 = vmatmul.mubr.bf16.gmra.mrb[0].mxu0 %v609
        %v774 = vpop.f32.mrb[0].mxu0
        %v775 = vadd.f32 0.0, %v774
        %v776 = vpop.f32.mrb[0].mxu0
        %v777 = vadd.f32 0.0, %v776
        %v778 = vpop.f32.mrb[0].mxu0
        %v779 = vadd.f32 0.0, %v778
        %v780 = vpop.f32.mrb[0].mxu0
        %v781 = vadd.f32 0.0, %v780
        %782 = vmatprep.mubr.bf16.mxu0 0
        %783 = vmatmul.mubr.bf16.gmra.mrb[0].mxu0 %v612
        %v784 = vpop.f32.mrb[0].mxu0
        %v785 = vadd.f32 0.0, %v784
        %v786 = vpop.f32.mrb[0].mxu0
        %v787 = vadd.f32 0.0, %v786
        %v788 = vpop.f32.mrb[0].mxu0
        %v789 = vadd.f32 0.0, %v788
        %v790 = vpop.f32.mrb[0].mxu0
        %v791 = vadd.f32 0.0, %v790
        %792 = vmatprep.mubr.bf16.mxu0 0
        %793 = vmatmul.mubr.bf16.gmra.mrb[0].mxu0 %v615
        %v794 = vpop.f32.mrb[0].mxu0
        %v795 = vadd.f32 0.0, %v794
        %v796 = vpop.f32.mrb[0].mxu0
        %v797 = vadd.f32 0.0, %v796
        %v798 = vpop.f32.mrb[0].mxu0
        %v799 = vadd.f32 0.0, %v798
        %v800 = vpop.f32.mrb[0].mxu0
        %v801 = vadd.f32 0.0, %v800
        %802 = vmatprep.mubr.bf16.mxu0 0
        %803 = vmatmul.mubr.bf16.gmra.mrb[0].mxu0 %v618
        %v804 = vpop.f32.mrb[0].mxu0
        %v805 = vadd.f32 0.0, %v804
        %v806 = vpop.f32.mrb[0].mxu0
        %v807 = vadd.f32 0.0, %v806
        %v808 = vpop.f32.mrb[0].mxu0
        %v809 = vadd.f32 0.0, %v808
        %v810 = vpop.f32.mrb[0].mxu0
        %v811 = vadd.f32 0.0, %v810
        %812 = vdwg.mxu0
        %813 = vmatprep.subr.bf16.mxu0 %v566
        %814 = vmatpush1.bf16.msra.mxu0 %v565
        %815 = vmatprep.subr.bf16.mxu0 0
        %816 = vmatpush1.bf16.msra.mxu0 0
        %817 = vmatprep.subr.bf16.mxu0 0
        %818 = vmatpush1.bf16.msra.mxu0 0
        %819 = vmatprep.subr.bf16.mxu0 0
        %820 = vmatpush1.bf16.msra.mxu0 0
        %821 = vmatprep.subr.bf16.mxu0 0
        %822 = vmatpush1.bf16.msra.mxu0 0
        %823 = vmatprep.subr.bf16.mxu0 0
        %824 = vmatpush1.bf16.msra.mxu0 0
        %825 = vmatprep.subr.bf16.mxu0 0
        %826 = vmatpush1.bf16.msra.mxu0 0
        %827 = vmatprep.subr.bf16.mxu0 0
        %828 = vmatpush1.bf16.msra.mxu0 0
        %829 = vmatprep.subr.bf16.mxu0 0
        %830 = vmatpush1.bf16.msra.mxu0 0
        %831 = vmatprep.subr.bf16.mxu0 0
        %832 = vmatpush1.bf16.msra.mxu0 0
        %833 = vmatprep.subr.bf16.mxu0 0
        %834 = vmatpush1.bf16.msra.mxu0 0
        %835 = vmatprep.subr.bf16.mxu0 0
        %836 = vmatpush1.bf16.msra.mxu0 0
        %837 = vmatprep.subr.bf16.mxu0 0
        %838 = vmatpush1.bf16.msra.mxu0 0
        %839 = vmatprep.subr.bf16.mxu0 0
        %840 = vmatpush1.bf16.msra.mxu0 0
        %841 = vmatprep.subr.bf16.mxu0 0
        %842 = vmatpush1.bf16.msra.mxu0 0
        %843 = vmatprep.subr.bf16.mxu0 0
        %844 = vmatpush1.bf16.msra.mxu0 0
        %845 = vmatprep.mubr.bf16.mxu0 0
        %846 = vmatmul.mubr.bf16.gmra.mrb[0].mxu0 %v573
        %v847 = vpop.f32.mrb[0].mxu0
        %v848 = vadd.f32 0.0, %v847
        %v849 = vpop.f32.mrb[0].mxu0
        %v850 = vadd.f32 0.0, %v849
        %v851 = vpop.f32.mrb[0].mxu0
        %v852 = vadd.f32 0.0, %v851
        %v853 = vpop.f32.mrb[0].mxu0
        %v854 = vadd.f32 0.0, %v853
        %855 = vmatprep.mubr.bf16.mxu0 0
        %856 = vmatmul.mubr.bf16.gmra.mrb[0].mxu0 %v576
        %v857 = vpop.f32.mrb[0].mxu0
        %v858 = vadd.f32 0.0, %v857
        %v859 = vpop.f32.mrb[0].mxu0
        %v860 = vadd.f32 0.0, %v859
        %v861 = vpop.f32.mrb[0].mxu0
        %v862 = vadd.f32 0.0, %v861
        %v863 = vpop.f32.mrb[0].mxu0
        %v864 = vadd.f32 0.0, %v863
        %865 = vmatprep.mubr.bf16.mxu0 0
        %866 = vmatmul.mubr.bf16.gmra.mrb[0].mxu0 %v579
        %v867 = vpop.f32.mrb[0].mxu0
        %v868 = vadd.f32 0.0, %v867
        %v869 = vpop.f32.mrb[0].mxu0
        %v870 = vadd.f32 0.0, %v869
        %v871 = vpop.f32.mrb[0].mxu0
        %v872 = vadd.f32 0.0, %v871
        %v873 = vpop.f32.mrb[0].mxu0
        %v874 = vadd.f32 0.0, %v873
        %875 = vmatprep.mubr.bf16.mxu0 0
        %876 = vmatmul.mubr.bf16.gmra.mrb[0].mxu0 %v582
        %v877 = vpop.f32.mrb[0].mxu0
        %v878 = vadd.f32 0.0, %v877
        %v879 = vpop.f32.mrb[0].mxu0
        %v880 = vadd.f32 0.0, %v879
        %v881 = vpop.f32.mrb[0].mxu0
        %v882 = vadd.f32 0.0, %v881
        %v883 = vpop.f32.mrb[0].mxu0
        %v884 = vadd.f32 0.0, %v883
        %885 = vmatprep.mubr.bf16.mxu0 0
        %886 = vmatmul.mubr.bf16.gmra.mrb[0].mxu0 %v585
        %v887 = vpop.f32.mrb[0].mxu0
        %v888 = vadd.f32 0.0, %v887
        %v889 = vpop.f32.mrb[0].mxu0
        %v890 = vadd.f32 0.0, %v889
        %v891 = vpop.f32.mrb[0].mxu0
        %v892 = vadd.f32 0.0, %v891
        %v893 = vpop.f32.mrb[0].mxu0
        %v894 = vadd.f32 0.0, %v893
        %895 = vmatprep.mubr.bf16.mxu0 0
        %896 = vmatmul.mubr.bf16.gmra.mrb[0].mxu0 %v588
        %v897 = vpop.f32.mrb[0].mxu0
        %v898 = vadd.f32 0.0, %v897
        %v899 = vpop.f32.mrb[0].mxu0
        %v900 = vadd.f32 0.0, %v899
        %v901 = vpop.f32.mrb[0].mxu0
        %v902 = vadd.f32 0.0, %v901
        %v903 = vpop.f32.mrb[0].mxu0
        %v904 = vadd.f32 0.0, %v903
        %905 = vmatprep.mubr.bf16.mxu0 0
        %906 = vmatmul.mubr.bf16.gmra.mrb[0].mxu0 %v591
        %v907 = vpop.f32.mrb[0].mxu0
        %v908 = vadd.f32 0.0, %v907
        %v909 = vpop.f32.mrb[0].mxu0
        %v910 = vadd.f32 0.0, %v909
        %v911 = vpop.f32.mrb[0].mxu0
        %v912 = vadd.f32 0.0, %v911
        %v913 = vpop.f32.mrb[0].mxu0
        %v914 = vadd.f32 0.0, %v913
        %915 = vmatprep.mubr.bf16.mxu0 0
        %916 = vmatmul.mubr.bf16.gmra.mrb[0].mxu0 %v594
        %v917 = vpop.f32.mrb[0].mxu0
        %v918 = vadd.f32 0.0, %v917
        %v919 = vpop.f32.mrb[0].mxu0
        %v920 = vadd.f32 0.0, %v919
        %v921 = vpop.f32.mrb[0].mxu0
        %v922 = vadd.f32 0.0, %v921
        %v923 = vpop.f32.mrb[0].mxu0
        %v924 = vadd.f32 0.0, %v923
        %925 = vmatprep.mubr.bf16.mxu0 0
        %926 = vmatmul.mubr.bf16.gmra.mrb[0].mxu0 %v597
        %v927 = vpop.f32.mrb[0].mxu0
        %v928 = vadd.f32 0.0, %v927
        %v929 = vpop.f32.mrb[0].mxu0
        %v930 = vadd.f32 0.0, %v929
        %v931 = vpop.f32.mrb[0].mxu0
        %v932 = vadd.f32 0.0, %v931
        %v933 = vpop.f32.mrb[0].mxu0
        %v934 = vadd.f32 0.0, %v933
        %935 = vmatprep.mubr.bf16.mxu0 0
        %936 = vmatmul.mubr.bf16.gmra.mrb[0].mxu0 %v600
        %v937 = vpop.f32.mrb[0].mxu0
        %v938 = vadd.f32 0.0, %v937
        %v939 = vpop.f32.mrb[0].mxu0
        %v940 = vadd.f32 0.0, %v939
        %v941 = vpop.f32.mrb[0].mxu0
        %v942 = vadd.f32 0.0, %v941
        %v943 = vpop.f32.mrb[0].mxu0
        %v944 = vadd.f32 0.0, %v943
        %945 = vmatprep.mubr.bf16.mxu0 0
        %946 = vmatmul.mubr.bf16.gmra.mrb[0].mxu0 %v603
        %v947 = vpop.f32.mrb[0].mxu0
        %v948 = vadd.f32 0.0, %v947
        %v949 = vpop.f32.mrb[0].mxu0
        %v950 = vadd.f32 0.0, %v949
        %v951 = vpop.f32.mrb[0].mxu0
        %v952 = vadd.f32 0.0, %v951
        %v953 = vpop.f32.mrb[0].mxu0
        %v954 = vadd.f32 0.0, %v953
        %955 = vmatprep.mubr.bf16.mxu0 0
        %956 = vmatmul.mubr.bf16.gmra.mrb[0].mxu0 %v606
        %v957 = vpop.f32.mrb[0].mxu0
        %v958 = vadd.f32 0.0, %v957
        %v959 = vpop.f32.mrb[0].mxu0
        %v960 = vadd.f32 0.0, %v959
        %v961 = vpop.f32.mrb[0].mxu0
        %v962 = vadd.f32 0.0, %v961
        %v963 = vpop.f32.mrb[0].mxu0
        %v964 = vadd.f32 0.0, %v963
        %965 = vmatprep.mubr.bf16.mxu0 0
        %966 = vmatmul.mubr.bf16.gmra.mrb[0].mxu0 %v609
        %v967 = vpop.f32.mrb[0].mxu0
        %v968 = vadd.f32 0.0, %v967
        %v969 = vpop.f32.mrb[0].mxu0
        %v970 = vadd.f32 0.0, %v969
        %v971 = vpop.f32.mrb[0].mxu0
        %v972 = vadd.f32 0.0, %v971
        %v973 = vpop.f32.mrb[0].mxu0
        %v974 = vadd.f32 0.0, %v973
        %975 = vmatprep.mubr.bf16.mxu0 0
        %976 = vmatmul.mubr.bf16.gmra.mrb[0].mxu0 %v612
        %v977 = vpop.f32.mrb[0].mxu0
        %v978 = vadd.f32 0.0, %v977
        %v979 = vpop.f32.mrb[0].mxu0
        %v980 = vadd.f32 0.0, %v979
        %v981 = vpop.f32.mrb[0].mxu0
        %v982 = vadd.f32 0.0, %v981
        %v983 = vpop.f32.mrb[0].mxu0
        %v984 = vadd.f32 0.0, %v983
        %985 = vmatprep.mubr.bf16.mxu0 0
        %986 = vmatmul.mubr.bf16.gmra.mrb[0].mxu0 %v615
        %v987 = vpop.f32.mrb[0].mxu0
        %v988 = vadd.f32 0.0, %v987
        %v989 = vpop.f32.mrb[0].mxu0
        %v990 = vadd.f32 0.0, %v989
        %v991 = vpop.f32.mrb[0].mxu0
        %v992 = vadd.f32 0.0, %v991
        %v993 = vpop.f32.mrb[0].mxu0
        %v994 = vadd.f32 0.0, %v993
        %995 = vmatprep.mubr.bf16.mxu0 0
        %996 = vmatmul.mubr.bf16.gmra.mrb[0].mxu0 %v618
        %v997 = vpop.f32.mrb[0].mxu0
        %v998 = vadd.f32 0.0, %v997
        %v999 = vpop.f32.mrb[0].mxu0
        %v1000 = vadd.f32 0.0, %v999
        %v1001 = vpop.f32.mrb[0].mxu0
        %v1002 = vadd.f32 0.0, %v1001
        %v1003 = vpop.f32.mrb[0].mxu0
        %v1004 = vadd.f32 0.0, %v1003
        %1005 = vdwg.mxu0
        %1006 = vmatprep.subr.bf16.mxu0 %v568
        %1007 = vmatpush1.bf16.msra.mxu0 %v567
        %1008 = vmatprep.subr.bf16.mxu0 0
        %1009 = vmatpush1.bf16.msra.mxu0 0
        %1010 = vmatprep.subr.bf16.mxu0 0
        %1011 = vmatpush1.bf16.msra.mxu0 0
        %1012 = vmatprep.subr.bf16.mxu0 0
        %1013 = vmatpush1.bf16.msra.mxu0 0
        %1014 = vmatprep.subr.bf16.mxu0 0
        %1015 = vmatpush1.bf16.msra.mxu0 0
        %1016 = vmatprep.subr.bf16.mxu0 0
        %1017 = vmatpush1.bf16.msra.mxu0 0
        %1018 = vmatprep.subr.bf16.mxu0 0
        %1019 = vmatpush1.bf16.msra.mxu0 0
        %1020 = vmatprep.subr.bf16.mxu0 0
        %1021 = vmatpush1.bf16.msra.mxu0 0
        %1022 = vmatprep.subr.bf16.mxu0 0
        %1023 = vmatpush1.bf16.msra.mxu0 0
        %1024 = vmatprep.subr.bf16.mxu0 0
        %1025 = vmatpush1.bf16.msra.mxu0 0
        %1026 = vmatprep.subr.bf16.mxu0 0
        %1027 = vmatpush1.bf16.msra.mxu0 0
        %1028 = vmatprep.subr.bf16.mxu0 0
        %1029 = vmatpush1.bf16.msra.mxu0 0
        %1030 = vmatprep.subr.bf16.mxu0 0
        %1031 = vmatpush1.bf16.msra.mxu0 0
        %1032 = vmatprep.subr.bf16.mxu0 0
        %1033 = vmatpush1.bf16.msra.mxu0 0
        %1034 = vmatprep.subr.bf16.mxu0 0
        %1035 = vmatpush1.bf16.msra.mxu0 0
        %1036 = vmatprep.subr.bf16.mxu0 0
        %1037 = vmatpush1.bf16.msra.mxu0 0
        %1038 = vmatprep.mubr.bf16.mxu0 0
        %1039 = vmatmul.mubr.bf16.gmra.mrb[0].mxu0 %v573
        %v1040 = vpop.f32.mrb[0].mxu0
        %v1041 = vadd.f32 0.0, %v1040
        %v1042 = vpop.f32.mrb[0].mxu0
        %v1043 = vadd.f32 0.0, %v1042
        %v1044 = vpop.f32.mrb[0].mxu0
        %v1045 = vadd.f32 0.0, %v1044
        %v1046 = vpop.f32.mrb[0].mxu0
        %v1047 = vadd.f32 0.0, %v1046
        %1048 = vmatprep.mubr.bf16.mxu0 0
        %1049 = vmatmul.mubr.bf16.gmra.mrb[0].mxu0 %v576
        %v1050 = vpop.f32.mrb[0].mxu0
        %v1051 = vadd.f32 0.0, %v1050
        %v1052 = vpop.f32.mrb[0].mxu0
        %v1053 = vadd.f32 0.0, %v1052
        %v1054 = vpop.f32.mrb[0].mxu0
        %v1055 = vadd.f32 0.0, %v1054
        %v1056 = vpop.f32.mrb[0].mxu0
        %v1057 = vadd.f32 0.0, %v1056
        %1058 = vmatprep.mubr.bf16.mxu0 0
        %1059 = vmatmul.mubr.bf16.gmra.mrb[0].mxu0 %v579
        %v1060 = vpop.f32.mrb[0].mxu0
        %v1061 = vadd.f32 0.0, %v1060
        %v1062 = vpop.f32.mrb[0].mxu0
        %v1063 = vadd.f32 0.0, %v1062
        %v1064 = vpop.f32.mrb[0].mxu0
        %v1065 = vadd.f32 0.0, %v1064
        %v1066 = vpop.f32.mrb[0].mxu0
        %v1067 = vadd.f32 0.0, %v1066
        %1068 = vmatprep.mubr.bf16.mxu0 0
        %1069 = vmatmul.mubr.bf16.gmra.mrb[0].mxu0 %v582
        %v1070 = vpop.f32.mrb[0].mxu0
        %v1071 = vadd.f32 0.0, %v1070
        %v1072 = vpop.f32.mrb[0].mxu0
        %v1073 = vadd.f32 0.0, %v1072
        %v1074 = vpop.f32.mrb[0].mxu0
        %v1075 = vadd.f32 0.0, %v1074
        %v1076 = vpop.f32.mrb[0].mxu0
        %v1077 = vadd.f32 0.0, %v1076
        %1078 = vmatprep.mubr.bf16.mxu0 0
        %1079 = vmatmul.mubr.bf16.gmra.mrb[0].mxu0 %v585
        %v1080 = vpop.f32.mrb[0].mxu0
        %v1081 = vadd.f32 0.0, %v1080
        %v1082 = vpop.f32.mrb[0].mxu0
        %v1083 = vadd.f32 0.0, %v1082
        %v1084 = vpop.f32.mrb[0].mxu0
        %v1085 = vadd.f32 0.0, %v1084
        %v1086 = vpop.f32.mrb[0].mxu0
        %v1087 = vadd.f32 0.0, %v1086
        %1088 = vmatprep.mubr.bf16.mxu0 0
        %1089 = vmatmul.mubr.bf16.gmra.mrb[0].mxu0 %v588
        %v1090 = vpop.f32.mrb[0].mxu0
        %v1091 = vadd.f32 0.0, %v1090
        %v1092 = vpop.f32.mrb[0].mxu0
        %v1093 = vadd.f32 0.0, %v1092
        %v1094 = vpop.f32.mrb[0].mxu0
        %v1095 = vadd.f32 0.0, %v1094
        %v1096 = vpop.f32.mrb[0].mxu0
        %v1097 = vadd.f32 0.0, %v1096
        %1098 = vmatprep.mubr.bf16.mxu0 0
        %1099 = vmatmul.mubr.bf16.gmra.mrb[0].mxu0 %v591
        %v1100 = vpop.f32.mrb[0].mxu0
        %v1101 = vadd.f32 0.0, %v1100
        %v1102 = vpop.f32.mrb[0].mxu0
        %v1103 = vadd.f32 0.0, %v1102
        %v1104 = vpop.f32.mrb[0].mxu0
        %v1105 = vadd.f32 0.0, %v1104
        %v1106 = vpop.f32.mrb[0].mxu0
        %v1107 = vadd.f32 0.0, %v1106
        %1108 = vmatprep.mubr.bf16.mxu0 0
        %1109 = vmatmul.mubr.bf16.gmra.mrb[0].mxu0 %v594
        %v1110 = vpop.f32.mrb[0].mxu0
        %v1111 = vadd.f32 0.0, %v1110
        %v1112 = vpop.f32.mrb[0].mxu0
        %v1113 = vadd.f32 0.0, %v1112
        %v1114 = vpop.f32.mrb[0].mxu0
        %v1115 = vadd.f32 0.0, %v1114
        %v1116 = vpop.f32.mrb[0].mxu0
        %v1117 = vadd.f32 0.0, %v1116
        %1118 = vmatprep.mubr.bf16.mxu0 0
        %1119 = vmatmul.mubr.bf16.gmra.mrb[0].mxu0 %v597
        %v1120 = vpop.f32.mrb[0].mxu0
        %v1121 = vadd.f32 0.0, %v1120
        %v1122 = vpop.f32.mrb[0].mxu0
        %v1123 = vadd.f32 0.0, %v1122
        %v1124 = vpop.f32.mrb[0].mxu0
        %v1125 = vadd.f32 0.0, %v1124
        %v1126 = vpop.f32.mrb[0].mxu0
        %v1127 = vadd.f32 0.0, %v1126
        %1128 = vmatprep.mubr.bf16.mxu0 0
        %1129 = vmatmul.mubr.bf16.gmra.mrb[0].mxu0 %v600
        %v1130 = vpop.f32.mrb[0].mxu0
        %v1131 = vadd.f32 0.0, %v1130
        %v1132 = vpop.f32.mrb[0].mxu0
        %v1133 = vadd.f32 0.0, %v1132
        %v1134 = vpop.f32.mrb[0].mxu0
        %v1135 = vadd.f32 0.0, %v1134
        %v1136 = vpop.f32.mrb[0].mxu0
        %v1137 = vadd.f32 0.0, %v1136
        %1138 = vmatprep.mubr.bf16.mxu0 0
        %1139 = vmatmul.mubr.bf16.gmra.mrb[0].mxu0 %v603
        %v1140 = vpop.f32.mrb[0].mxu0
        %v1141 = vadd.f32 0.0, %v1140
        %v1142 = vpop.f32.mrb[0].mxu0
        %v1143 = vadd.f32 0.0, %v1142
        %v1144 = vpop.f32.mrb[0].mxu0
        %v1145 = vadd.f32 0.0, %v1144
        %v1146 = vpop.f32.mrb[0].mxu0
        %v1147 = vadd.f32 0.0, %v1146
        %1148 = vmatprep.mubr.bf16.mxu0 0
        %1149 = vmatmul.mubr.bf16.gmra.mrb[0].mxu0 %v606
        %v1150 = vpop.f32.mrb[0].mxu0
        %v1151 = vadd.f32 0.0, %v1150
        %v1152 = vpop.f32.mrb[0].mxu0
        %v1153 = vadd.f32 0.0, %v1152
        %v1154 = vpop.f32.mrb[0].mxu0
        %v1155 = vadd.f32 0.0, %v1154
        %v1156 = vpop.f32.mrb[0].mxu0
        %v1157 = vadd.f32 0.0, %v1156
        %1158 = vmatprep.mubr.bf16.mxu0 0
        %1159 = vmatmul.mubr.bf16.gmra.mrb[0].mxu0 %v609
        %v1160 = vpop.f32.mrb[0].mxu0
        %v1161 = vadd.f32 0.0, %v1160
        %v1162 = vpop.f32.mrb[0].mxu0
        %v1163 = vadd.f32 0.0, %v1162
        %v1164 = vpop.f32.mrb[0].mxu0
        %v1165 = vadd.f32 0.0, %v1164
        %v1166 = vpop.f32.mrb[0].mxu0
        %v1167 = vadd.f32 0.0, %v1166
        %1168 = vmatprep.mubr.bf16.mxu0 0
        %1169 = vmatmul.mubr.bf16.gmra.mrb[0].mxu0 %v612
        %v1170 = vpop.f32.mrb[0].mxu0
        %v1171 = vadd.f32 0.0, %v1170
        %v1172 = vpop.f32.mrb[0].mxu0
        %v1173 = vadd.f32 0.0, %v1172
        %v1174 = vpop.f32.mrb[0].mxu0
        %v1175 = vadd.f32 0.0, %v1174
        %v1176 = vpop.f32.mrb[0].mxu0
        %v1177 = vadd.f32 0.0, %v1176
        %1178 = vmatprep.mubr.bf16.mxu0 0
        %1179 = vmatmul.mubr.bf16.gmra.mrb[0].mxu0 %v615
        %v1180 = vpop.f32.mrb[0].mxu0
        %v1181 = vadd.f32 0.0, %v1180
        %v1182 = vpop.f32.mrb[0].mxu0
        %v1183 = vadd.f32 0.0, %v1182
        %v1184 = vpop.f32.mrb[0].mxu0
        %v1185 = vadd.f32 0.0, %v1184
        %v1186 = vpop.f32.mrb[0].mxu0
        %v1187 = vadd.f32 0.0, %v1186
        %1188 = vmatprep.mubr.bf16.mxu0 0
        %1189 = vmatmul.mubr.bf16.gmra.mrb[0].mxu0 %v618
        %v1190 = vpop.f32.mrb[0].mxu0
        %v1191 = vadd.f32 0.0, %v1190
        %v1192 = vpop.f32.mrb[0].mxu0
        %v1193 = vadd.f32 0.0, %v1192
        %v1194 = vpop.f32.mrb[0].mxu0
        %v1195 = vadd.f32 0.0, %v1194
        %v1196 = vpop.f32.mrb[0].mxu0
        %v1197 = vadd.f32 0.0, %v1196
        %1198 = vdwg.mxu0
        %1199 = vmatprep.subr.bf16.mxu0 %v570
        %1200 = vmatpush1.bf16.msra.mxu0 %v569
        %1201 = vmatprep.subr.bf16.mxu0 0
        %1202 = vmatpush1.bf16.msra.mxu0 0
        %1203 = vmatprep.subr.bf16.mxu0 0
        %1204 = vmatpush1.bf16.msra.mxu0 0
        %1205 = vmatprep.subr.bf16.mxu0 0
        %1206 = vmatpush1.bf16.msra.mxu0 0
        %1207 = vmatprep.subr.bf16.mxu0 0
        %1208 = vmatpush1.bf16.msra.mxu0 0
        %1209 = vmatprep.subr.bf16.mxu0 0
        %1210 = vmatpush1.bf16.msra.mxu0 0
        %1211 = vmatprep.subr.bf16.mxu0 0
        %1212 = vmatpush1.bf16.msra.mxu0 0
        %1213 = vmatprep.subr.bf16.mxu0 0
        %1214 = vmatpush1.bf16.msra.mxu0 0
        %1215 = vmatprep.subr.bf16.mxu0 0
        %1216 = vmatpush1.bf16.msra.mxu0 0
        %1217 = vmatprep.subr.bf16.mxu0 0
        %1218 = vmatpush1.bf16.msra.mxu0 0
        %1219 = vmatprep.subr.bf16.mxu0 0
        %1220 = vmatpush1.bf16.msra.mxu0 0
        %1221 = vmatprep.subr.bf16.mxu0 0
        %1222 = vmatpush1.bf16.msra.mxu0 0
        %1223 = vmatprep.subr.bf16.mxu0 0
        %1224 = vmatpush1.bf16.msra.mxu0 0
        %1225 = vmatprep.subr.bf16.mxu0 0
        %1226 = vmatpush1.bf16.msra.mxu0 0
        %1227 = vmatprep.subr.bf16.mxu0 0
        %1228 = vmatpush1.bf16.msra.mxu0 0
        %1229 = vmatprep.subr.bf16.mxu0 0
        %1230 = vmatpush1.bf16.msra.mxu0 0
        %1231 = vmatprep.mubr.bf16.mxu0 0
        %1232 = vmatmul.mubr.bf16.gmra.mrb[0].mxu0 %v573
        %v1233 = vpop.f32.mrb[0].mxu0
        %v1234 = vadd.f32 0.0, %v1233
        %v1235 = vpop.f32.mrb[0].mxu0
        %v1236 = vadd.f32 0.0, %v1235
        %v1237 = vpop.f32.mrb[0].mxu0
        %v1238 = vadd.f32 0.0, %v1237
        %v1239 = vpop.f32.mrb[0].mxu0
        %v1240 = vadd.f32 0.0, %v1239
        %1241 = vmatprep.mubr.bf16.mxu0 0
        %1242 = vmatmul.mubr.bf16.gmra.mrb[0].mxu0 %v576
        %v1243 = vpop.f32.mrb[0].mxu0
        %v1244 = vadd.f32 0.0, %v1243
        %v1245 = vpop.f32.mrb[0].mxu0
        %v1246 = vadd.f32 0.0, %v1245
        %v1247 = vpop.f32.mrb[0].mxu0
        %v1248 = vadd.f32 0.0, %v1247
        %v1249 = vpop.f32.mrb[0].mxu0
        %v1250 = vadd.f32 0.0, %v1249
        %1251 = vmatprep.mubr.bf16.mxu0 0
        %1252 = vmatmul.mubr.bf16.gmra.mrb[0].mxu0 %v579
        %v1253 = vpop.f32.mrb[0].mxu0
        %v1254 = vadd.f32 0.0, %v1253
        %v1255 = vpop.f32.mrb[0].mxu0
        %v1256 = vadd.f32 0.0, %v1255
        %v1257 = vpop.f32.mrb[0].mxu0
        %v1258 = vadd.f32 0.0, %v1257
        %v1259 = vpop.f32.mrb[0].mxu0
        %v1260 = vadd.f32 0.0, %v1259
        %1261 = vmatprep.mubr.bf16.mxu0 0
        %1262 = vmatmul.mubr.bf16.gmra.mrb[0].mxu0 %v582
        %v1263 = vpop.f32.mrb[0].mxu0
        %v1264 = vadd.f32 0.0, %v1263
        %v1265 = vpop.f32.mrb[0].mxu0
        %v1266 = vadd.f32 0.0, %v1265
        %v1267 = vpop.f32.mrb[0].mxu0
        %v1268 = vadd.f32 0.0, %v1267
        %v1269 = vpop.f32.mrb[0].mxu0
        %v1270 = vadd.f32 0.0, %v1269
        %1271 = vmatprep.mubr.bf16.mxu0 0
        %1272 = vmatmul.mubr.bf16.gmra.mrb[0].mxu0 %v585
        %v1273 = vpop.f32.mrb[0].mxu0
        %v1274 = vadd.f32 0.0, %v1273
        %v1275 = vpop.f32.mrb[0].mxu0
        %v1276 = vadd.f32 0.0, %v1275
        %v1277 = vpop.f32.mrb[0].mxu0
        %v1278 = vadd.f32 0.0, %v1277
        %v1279 = vpop.f32.mrb[0].mxu0
        %v1280 = vadd.f32 0.0, %v1279
        %1281 = vmatprep.mubr.bf16.mxu0 0
        %1282 = vmatmul.mubr.bf16.gmra.mrb[0].mxu0 %v588
        %v1283 = vpop.f32.mrb[0].mxu0
        %v1284 = vadd.f32 0.0, %v1283
        %v1285 = vpop.f32.mrb[0].mxu0
        %v1286 = vadd.f32 0.0, %v1285
        %v1287 = vpop.f32.mrb[0].mxu0
        %v1288 = vadd.f32 0.0, %v1287
        %v1289 = vpop.f32.mrb[0].mxu0
        %v1290 = vadd.f32 0.0, %v1289
        %1291 = vmatprep.mubr.bf16.mxu0 0
        %1292 = vmatmul.mubr.bf16.gmra.mrb[0].mxu0 %v591
        %v1293 = vpop.f32.mrb[0].mxu0
        %v1294 = vadd.f32 0.0, %v1293
        %v1295 = vpop.f32.mrb[0].mxu0
        %v1296 = vadd.f32 0.0, %v1295
        %v1297 = vpop.f32.mrb[0].mxu0
        %v1298 = vadd.f32 0.0, %v1297
        %v1299 = vpop.f32.mrb[0].mxu0
        %v1300 = vadd.f32 0.0, %v1299
        %1301 = vmatprep.mubr.bf16.mxu0 0
        %1302 = vmatmul.mubr.bf16.gmra.mrb[0].mxu0 %v594
        %v1303 = vpop.f32.mrb[0].mxu0
        %v1304 = vadd.f32 0.0, %v1303
        %v1305 = vpop.f32.mrb[0].mxu0
        %v1306 = vadd.f32 0.0, %v1305
        %v1307 = vpop.f32.mrb[0].mxu0
        %v1308 = vadd.f32 0.0, %v1307
        %v1309 = vpop.f32.mrb[0].mxu0
        %v1310 = vadd.f32 0.0, %v1309
        %1311 = vmatprep.mubr.bf16.mxu0 0
        %1312 = vmatmul.mubr.bf16.gmra.mrb[0].mxu0 %v597
        %v1313 = vpop.f32.mrb[0].mxu0
        %v1314 = vadd.f32 0.0, %v1313
        %v1315 = vpop.f32.mrb[0].mxu0
        %v1316 = vadd.f32 0.0, %v1315
        %v1317 = vpop.f32.mrb[0].mxu0
        %v1318 = vadd.f32 0.0, %v1317
        %v1319 = vpop.f32.mrb[0].mxu0
        %v1320 = vadd.f32 0.0, %v1319
        %1321 = vmatprep.mubr.bf16.mxu0 0
        %1322 = vmatmul.mubr.bf16.gmra.mrb[0].mxu0 %v600
        %v1323 = vpop.f32.mrb[0].mxu0
        %v1324 = vadd.f32 0.0, %v1323
        %v1325 = vpop.f32.mrb[0].mxu0
        %v1326 = vadd.f32 0.0, %v1325
        %v1327 = vpop.f32.mrb[0].mxu0
        %v1328 = vadd.f32 0.0, %v1327
        %v1329 = vpop.f32.mrb[0].mxu0
        %v1330 = vadd.f32 0.0, %v1329
        %1331 = vmatprep.mubr.bf16.mxu0 0
        %1332 = vmatmul.mubr.bf16.gmra.mrb[0].mxu0 %v603
        %v1333 = vpop.f32.mrb[0].mxu0
        %v1334 = vadd.f32 0.0, %v1333
        %v1335 = vpop.f32.mrb[0].mxu0
        %v1336 = vadd.f32 0.0, %v1335
        %v1337 = vpop.f32.mrb[0].mxu0
        %v1338 = vadd.f32 0.0, %v1337
        %v1339 = vpop.f32.mrb[0].mxu0
        %v1340 = vadd.f32 0.0, %v1339
        %1341 = vmatprep.mubr.bf16.mxu0 0
        %1342 = vmatmul.mubr.bf16.gmra.mrb[0].mxu0 %v606
        %v1343 = vpop.f32.mrb[0].mxu0
        %v1344 = vadd.f32 0.0, %v1343
        %v1345 = vpop.f32.mrb[0].mxu0
        %v1346 = vadd.f32 0.0, %v1345
        %v1347 = vpop.f32.mrb[0].mxu0
        %v1348 = vadd.f32 0.0, %v1347
        %v1349 = vpop.f32.mrb[0].mxu0
        %v1350 = vadd.f32 0.0, %v1349
        %1351 = vmatprep.mubr.bf16.mxu0 0
        %1352 = vmatmul.mubr.bf16.gmra.mrb[0].mxu0 %v609
        %v1353 = vpop.f32.mrb[0].mxu0
        %v1354 = vadd.f32 0.0, %v1353
        %v1355 = vpop.f32.mrb[0].mxu0
        %v1356 = vadd.f32 0.0, %v1355
        %v1357 = vpop.f32.mrb[0].mxu0
        %v1358 = vadd.f32 0.0, %v1357
        %v1359 = vpop.f32.mrb[0].mxu0
        %v1360 = vadd.f32 0.0, %v1359
        %1361 = vmatprep.mubr.bf16.mxu0 0
        %1362 = vmatmul.mubr.bf16.gmra.mrb[0].mxu0 %v612
        %v1363 = vpop.f32.mrb[0].mxu0
        %v1364 = vadd.f32 0.0, %v1363
        %v1365 = vpop.f32.mrb[0].mxu0
        %v1366 = vadd.f32 0.0, %v1365
        %v1367 = vpop.f32.mrb[0].mxu0
        %v1368 = vadd.f32 0.0, %v1367
        %v1369 = vpop.f32.mrb[0].mxu0
        %v1370 = vadd.f32 0.0, %v1369
        %1371 = vmatprep.mubr.bf16.mxu0 0
        %1372 = vmatmul.mubr.bf16.gmra.mrb[0].mxu0 %v615
        %v1373 = vpop.f32.mrb[0].mxu0
        %v1374 = vadd.f32 0.0, %v1373
        %v1375 = vpop.f32.mrb[0].mxu0
        %v1376 = vadd.f32 0.0, %v1375
        %v1377 = vpop.f32.mrb[0].mxu0
        %v1378 = vadd.f32 0.0, %v1377
        %v1379 = vpop.f32.mrb[0].mxu0
        %v1380 = vadd.f32 0.0, %v1379
        %1381 = vmatprep.mubr.bf16.mxu0 0
        %1382 = vmatmul.mubr.bf16.gmra.mrb[0].mxu0 %v618
        %v1383 = vpop.f32.mrb[0].mxu0
        %v1384 = vadd.f32 0.0, %v1383
        %v1385 = vpop.f32.mrb[0].mxu0
        %v1386 = vadd.f32 0.0, %v1385
        %v1387 = vpop.f32.mrb[0].mxu0
        %v1388 = vadd.f32 0.0, %v1387
        %v1389 = vpop.f32.mrb[0].mxu0
        %v1390 = vadd.f32 0.0, %v1389
        %1391 = vdwg.mxu0
        %1392 = vmatprep.subr.bf16.mxu0 %v524
        %1393 = vmatpush1.bf16.msra.mxu0 %v523
        %1394 = vmatprep.subr.bf16.mxu0 0
        %1395 = vmatpush1.bf16.msra.mxu0 0
        %1396 = vmatprep.subr.bf16.mxu0 0
        %1397 = vmatpush1.bf16.msra.mxu0 0
        %1398 = vmatprep.subr.bf16.mxu0 0
        %1399 = vmatpush1.bf16.msra.mxu0 0
        %1400 = vmatprep.subr.bf16.mxu0 0
        %1401 = vmatpush1.bf16.msra.mxu0 0
        %1402 = vmatprep.subr.bf16.mxu0 0
        %1403 = vmatpush1.bf16.msra.mxu0 0
        %1404 = vmatprep.subr.bf16.mxu0 0
        %1405 = vmatpush1.bf16.msra.mxu0 0
        %1406 = vmatprep.subr.bf16.mxu0 0
        %1407 = vmatpush1.bf16.msra.mxu0 0
        %1408 = vmatprep.subr.bf16.mxu0 0
        %1409 = vmatpush1.bf16.msra.mxu0 0
        %1410 = vmatprep.subr.bf16.mxu0 0
        %1411 = vmatpush1.bf16.msra.mxu0 0
        %1412 = vmatprep.subr.bf16.mxu0 0
        %1413 = vmatpush1.bf16.msra.mxu0 0
        %1414 = vmatprep.subr.bf16.mxu0 0
        %1415 = vmatpush1.bf16.msra.mxu0 0
        %1416 = vmatprep.subr.bf16.mxu0 0
        %1417 = vmatpush1.bf16.msra.mxu0 0
        %1418 = vmatprep.subr.bf16.mxu0 0
        %1419 = vmatpush1.bf16.msra.mxu0 0
        %1420 = vmatprep.subr.bf16.mxu0 0
        %1421 = vmatpush1.bf16.msra.mxu0 0
        %1422 = vmatprep.subr.bf16.mxu0 0
        %1423 = vmatpush1.bf16.msra.mxu0 0
        %1424 = vmatprep.mubr.bf16.mxu0 0
        %1425 = vmatmul.mubr.bf16.gmra.mrb[0].mxu0 %v573
        %v1426 = vpop.f32.mrb[0].mxu0
        %v1427 = vadd.f32 %v655, %v1426
        %v1428 = vpop.f32.mrb[0].mxu0
        %v1429 = vadd.f32 %v657, %v1428
        %v1430 = vpop.f32.mrb[0].mxu0
        %v1431 = vadd.f32 %v659, %v1430
        %v1432 = vpop.f32.mrb[0].mxu0
        %v1433 = vadd.f32 %v661, %v1432
        %1434 = vmatprep.mubr.bf16.mxu0 0
        %1435 = vmatmul.mubr.bf16.gmra.mrb[0].mxu0 %v576
        %v1436 = vpop.f32.mrb[0].mxu0
        %v1437 = vadd.f32 %v665, %v1436
        %v1438 = vpop.f32.mrb[0].mxu0
        %v1439 = vadd.f32 %v667, %v1438
        %v1440 = vpop.f32.mrb[0].mxu0
        %v1441 = vadd.f32 %v669, %v1440
        %v1442 = vpop.f32.mrb[0].mxu0
        %v1443 = vadd.f32 %v671, %v1442
        %1444 = vmatprep.mubr.bf16.mxu0 0
        %1445 = vmatmul.mubr.bf16.gmra.mrb[0].mxu0 %v579
        %v1446 = vpop.f32.mrb[0].mxu0
        %v1447 = vadd.f32 %v675, %v1446
        %v1448 = vpop.f32.mrb[0].mxu0
        %v1449 = vadd.f32 %v677, %v1448
        %v1450 = vpop.f32.mrb[0].mxu0
        %v1451 = vadd.f32 %v679, %v1450
        %v1452 = vpop.f32.mrb[0].mxu0
        %v1453 = vadd.f32 %v681, %v1452
        %1454 = vmatprep.mubr.bf16.mxu0 0
        %1455 = vmatmul.mubr.bf16.gmra.mrb[0].mxu0 %v582
        %v1456 = vpop.f32.mrb[0].mxu0
        %v1457 = vadd.f32 %v685, %v1456
        %v1458 = vpop.f32.mrb[0].mxu0
        %v1459 = vadd.f32 %v687, %v1458
        %v1460 = vpop.f32.mrb[0].mxu0
        %v1461 = vadd.f32 %v689, %v1460
        %v1462 = vpop.f32.mrb[0].mxu0
        %v1463 = vadd.f32 %v691, %v1462
        %1464 = vmatprep.mubr.bf16.mxu0 0
        %1465 = vmatmul.mubr.bf16.gmra.mrb[0].mxu0 %v585
        %v1466 = vpop.f32.mrb[0].mxu0
        %v1467 = vadd.f32 %v695, %v1466
        %v1468 = vpop.f32.mrb[0].mxu0
        %v1469 = vadd.f32 %v697, %v1468
        %v1470 = vpop.f32.mrb[0].mxu0
        %v1471 = vadd.f32 %v699, %v1470
        %v1472 = vpop.f32.mrb[0].mxu0
        %v1473 = vadd.f32 %v701, %v1472
        %1474 = vmatprep.mubr.bf16.mxu0 0
        %1475 = vmatmul.mubr.bf16.gmra.mrb[0].mxu0 %v588
        %v1476 = vpop.f32.mrb[0].mxu0
        %v1477 = vadd.f32 %v705, %v1476
        %v1478 = vpop.f32.mrb[0].mxu0
        %v1479 = vadd.f32 %v707, %v1478
        %v1480 = vpop.f32.mrb[0].mxu0
        %v1481 = vadd.f32 %v709, %v1480
        %v1482 = vpop.f32.mrb[0].mxu0
        %v1483 = vadd.f32 %v711, %v1482
        %1484 = vmatprep.mubr.bf16.mxu0 0
        %1485 = vmatmul.mubr.bf16.gmra.mrb[0].mxu0 %v591
        %v1486 = vpop.f32.mrb[0].mxu0
        %v1487 = vadd.f32 %v715, %v1486
        %v1488 = vpop.f32.mrb[0].mxu0
        %v1489 = vadd.f32 %v717, %v1488
        %v1490 = vpop.f32.mrb[0].mxu0
        %v1491 = vadd.f32 %v719, %v1490
        %v1492 = vpop.f32.mrb[0].mxu0
        %v1493 = vadd.f32 %v721, %v1492
        %1494 = vmatprep.mubr.bf16.mxu0 0
        %1495 = vmatmul.mubr.bf16.gmra.mrb[0].mxu0 %v594
        %v1496 = vpop.f32.mrb[0].mxu0
        %v1497 = vadd.f32 %v725, %v1496
        %v1498 = vpop.f32.mrb[0].mxu0
        %v1499 = vadd.f32 %v727, %v1498
        %v1500 = vpop.f32.mrb[0].mxu0
        %v1501 = vadd.f32 %v729, %v1500
        %v1502 = vpop.f32.mrb[0].mxu0
        %v1503 = vadd.f32 %v731, %v1502
        %1504 = vmatprep.mubr.bf16.mxu0 0
        %1505 = vmatmul.mubr.bf16.gmra.mrb[0].mxu0 %v597
        %v1506 = vpop.f32.mrb[0].mxu0
        %v1507 = vadd.f32 %v735, %v1506
        %v1508 = vpop.f32.mrb[0].mxu0
        %v1509 = vadd.f32 %v737, %v1508
        %v1510 = vpop.f32.mrb[0].mxu0
        %v1511 = vadd.f32 %v739, %v1510
        %v1512 = vpop.f32.mrb[0].mxu0
        %v1513 = vadd.f32 %v741, %v1512
        %1514 = vmatprep.mubr.bf16.mxu0 0
        %1515 = vmatmul.mubr.bf16.gmra.mrb[0].mxu0 %v600
        %v1516 = vpop.f32.mrb[0].mxu0
        %v1517 = vadd.f32 %v745, %v1516
        %v1518 = vpop.f32.mrb[0].mxu0
        %v1519 = vadd.f32 %v747, %v1518
        %v1520 = vpop.f32.mrb[0].mxu0
        %v1521 = vadd.f32 %v749, %v1520
        %v1522 = vpop.f32.mrb[0].mxu0
        %v1523 = vadd.f32 %v751, %v1522
        %1524 = vmatprep.mubr.bf16.mxu0 0
        %1525 = vmatmul.mubr.bf16.gmra.mrb[0].mxu0 %v603
        %v1526 = vpop.f32.mrb[0].mxu0
        %v1527 = vadd.f32 %v755, %v1526
        %v1528 = vpop.f32.mrb[0].mxu0
        %v1529 = vadd.f32 %v757, %v1528
        %v1530 = vpop.f32.mrb[0].mxu0
        %v1531 = vadd.f32 %v759, %v1530
        %v1532 = vpop.f32.mrb[0].mxu0
        %v1533 = vadd.f32 %v761, %v1532
        %1534 = vmatprep.mubr.bf16.mxu0 0
        %1535 = vmatmul.mubr.bf16.gmra.mrb[0].mxu0 %v606
        %v1536 = vpop.f32.mrb[0].mxu0
        %v1537 = vadd.f32 %v765, %v1536
        %v1538 = vpop.f32.mrb[0].mxu0
        %v1539 = vadd.f32 %v767, %v1538
        %v1540 = vpop.f32.mrb[0].mxu0
        %v1541 = vadd.f32 %v769, %v1540
        %v1542 = vpop.f32.mrb[0].mxu0
        %v1543 = vadd.f32 %v771, %v1542
        %1544 = vmatprep.mubr.bf16.mxu0 0
        %1545 = vmatmul.mubr.bf16.gmra.mrb[0].mxu0 %v609
        %v1546 = vpop.f32.mrb[0].mxu0
        %v1547 = vadd.f32 %v775, %v1546
        %v1548 = vpop.f32.mrb[0].mxu0
        %v1549 = vadd.f32 %v777, %v1548
        %v1550 = vpop.f32.mrb[0].mxu0
        %v1551 = vadd.f32 %v779, %v1550
        %v1552 = vpop.f32.mrb[0].mxu0
        %v1553 = vadd.f32 %v781, %v1552
        %1554 = vmatprep.mubr.bf16.mxu0 0
        %1555 = vmatmul.mubr.bf16.gmra.mrb[0].mxu0 %v612
        %v1556 = vpop.f32.mrb[0].mxu0
        %v1557 = vadd.f32 %v785, %v1556
        %v1558 = vpop.f32.mrb[0].mxu0
        %v1559 = vadd.f32 %v787, %v1558
        %v1560 = vpop.f32.mrb[0].mxu0
        %v1561 = vadd.f32 %v789, %v1560
        %v1562 = vpop.f32.mrb[0].mxu0
        %v1563 = vadd.f32 %v791, %v1562
        %1564 = vmatprep.mubr.bf16.mxu0 0
        %1565 = vmatmul.mubr.bf16.gmra.mrb[0].mxu0 %v615
        %v1566 = vpop.f32.mrb[0].mxu0
        %v1567 = vadd.f32 %v795, %v1566
        %v1568 = vpop.f32.mrb[0].mxu0
        %v1569 = vadd.f32 %v797, %v1568
        %v1570 = vpop.f32.mrb[0].mxu0
        %v1571 = vadd.f32 %v799, %v1570
        %v1572 = vpop.f32.mrb[0].mxu0
        %v1573 = vadd.f32 %v801, %v1572
        %1574 = vmatprep.mubr.bf16.mxu0 0
        %1575 = vmatmul.mubr.bf16.gmra.mrb[0].mxu0 %v618
        %v1576 = vpop.f32.mrb[0].mxu0
        %v1577 = vadd.f32 %v805, %v1576
        %v1578 = vpop.f32.mrb[0].mxu0
        %v1579 = vadd.f32 %v807, %v1578
        %v1580 = vpop.f32.mrb[0].mxu0
        %v1581 = vadd.f32 %v809, %v1580
        %v1582 = vpop.f32.mrb[0].mxu0
        %v1583 = vadd.f32 %v811, %v1582
        %1584 = vdwg.mxu0
        %1585 = vmatprep.subr.bf16.mxu0 %v526
        %1586 = vmatpush1.bf16.msra.mxu0 %v525
        %1587 = vmatprep.subr.bf16.mxu0 0
        %1588 = vmatpush1.bf16.msra.mxu0 0
        %1589 = vmatprep.subr.bf16.mxu0 0
        %1590 = vmatpush1.bf16.msra.mxu0 0
        %1591 = vmatprep.subr.bf16.mxu0 0
        %1592 = vmatpush1.bf16.msra.mxu0 0
        %1593 = vmatprep.subr.bf16.mxu0 0
        %1594 = vmatpush1.bf16.msra.mxu0 0
        %1595 = vmatprep.subr.bf16.mxu0 0
        %1596 = vmatpush1.bf16.msra.mxu0 0
        %1597 = vmatprep.subr.bf16.mxu0 0
        %1598 = vmatpush1.bf16.msra.mxu0 0
        %1599 = vmatprep.subr.bf16.mxu0 0
        %1600 = vmatpush1.bf16.msra.mxu0 0
        %1601 = vmatprep.subr.bf16.mxu0 0
        %1602 = vmatpush1.bf16.msra.mxu0 0
        %1603 = vmatprep.subr.bf16.mxu0 0
        %1604 = vmatpush1.bf16.msra.mxu0 0
        %1605 = vmatprep.subr.bf16.mxu0 0
        %1606 = vmatpush1.bf16.msra.mxu0 0
        %1607 = vmatprep.subr.bf16.mxu0 0
        %1608 = vmatpush1.bf16.msra.mxu0 0
        %1609 = vmatprep.subr.bf16.mxu0 0
        %1610 = vmatpush1.bf16.msra.mxu0 0
        %1611 = vmatprep.subr.bf16.mxu0 0
        %1612 = vmatpush1.bf16.msra.mxu0 0
        %1613 = vmatprep.subr.bf16.mxu0 0
        %1614 = vmatpush1.bf16.msra.mxu0 0
        %1615 = vmatprep.subr.bf16.mxu0 0
        %1616 = vmatpush1.bf16.msra.mxu0 0
        %1617 = vmatprep.mubr.bf16.mxu0 0
        %1618 = vmatmul.mubr.bf16.gmra.mrb[0].mxu0 %v573
        %v1619 = vpop.f32.mrb[0].mxu0
        %v1620 = vadd.f32 %v848, %v1619
        %v1621 = vpop.f32.mrb[0].mxu0
        %v1622 = vadd.f32 %v850, %v1621
        %v1623 = vpop.f32.mrb[0].mxu0
        %v1624 = vadd.f32 %v852, %v1623
        %v1625 = vpop.f32.mrb[0].mxu0
        %v1626 = vadd.f32 %v854, %v1625
        %1627 = vmatprep.mubr.bf16.mxu0 0
        %1628 = vmatmul.mubr.bf16.gmra.mrb[0].mxu0 %v576
        %v1629 = vpop.f32.mrb[0].mxu0
        %v1630 = vadd.f32 %v858, %v1629
        %v1631 = vpop.f32.mrb[0].mxu0
        %v1632 = vadd.f32 %v860, %v1631
        %v1633 = vpop.f32.mrb[0].mxu0
        %v1634 = vadd.f32 %v862, %v1633
        %v1635 = vpop.f32.mrb[0].mxu0
        %v1636 = vadd.f32 %v864, %v1635
        %1637 = vmatprep.mubr.bf16.mxu0 0
        %1638 = vmatmul.mubr.bf16.gmra.mrb[0].mxu0 %v579
        %v1639 = vpop.f32.mrb[0].mxu0
        %v1640 = vadd.f32 %v868, %v1639
        %v1641 = vpop.f32.mrb[0].mxu0
        %v1642 = vadd.f32 %v870, %v1641
        %v1643 = vpop.f32.mrb[0].mxu0
        %v1644 = vadd.f32 %v872, %v1643
        %v1645 = vpop.f32.mrb[0].mxu0
        %v1646 = vadd.f32 %v874, %v1645
        %1647 = vmatprep.mubr.bf16.mxu0 0
        %1648 = vmatmul.mubr.bf16.gmra.mrb[0].mxu0 %v582
        %v1649 = vpop.f32.mrb[0].mxu0
        %v1650 = vadd.f32 %v878, %v1649
        %v1651 = vpop.f32.mrb[0].mxu0
        %v1652 = vadd.f32 %v880, %v1651
        %v1653 = vpop.f32.mrb[0].mxu0
        %v1654 = vadd.f32 %v882, %v1653
        %v1655 = vpop.f32.mrb[0].mxu0
        %v1656 = vadd.f32 %v884, %v1655
        %1657 = vmatprep.mubr.bf16.mxu0 0
        %1658 = vmatmul.mubr.bf16.gmra.mrb[0].mxu0 %v585
        %v1659 = vpop.f32.mrb[0].mxu0
        %v1660 = vadd.f32 %v888, %v1659
        %v1661 = vpop.f32.mrb[0].mxu0
        %v1662 = vadd.f32 %v890, %v1661
        %v1663 = vpop.f32.mrb[0].mxu0
        %v1664 = vadd.f32 %v892, %v1663
        %v1665 = vpop.f32.mrb[0].mxu0
        %v1666 = vadd.f32 %v894, %v1665
        %1667 = vmatprep.mubr.bf16.mxu0 0
        %1668 = vmatmul.mubr.bf16.gmra.mrb[0].mxu0 %v588
        %v1669 = vpop.f32.mrb[0].mxu0
        %v1670 = vadd.f32 %v898, %v1669
        %v1671 = vpop.f32.mrb[0].mxu0
        %v1672 = vadd.f32 %v900, %v1671
        %v1673 = vpop.f32.mrb[0].mxu0
        %v1674 = vadd.f32 %v902, %v1673
        %v1675 = vpop.f32.mrb[0].mxu0
        %v1676 = vadd.f32 %v904, %v1675
        %1677 = vmatprep.mubr.bf16.mxu0 0
        %1678 = vmatmul.mubr.bf16.gmra.mrb[0].mxu0 %v591
        %v1679 = vpop.f32.mrb[0].mxu0
        %v1680 = vadd.f32 %v908, %v1679
        %v1681 = vpop.f32.mrb[0].mxu0
        %v1682 = vadd.f32 %v910, %v1681
        %v1683 = vpop.f32.mrb[0].mxu0
        %v1684 = vadd.f32 %v912, %v1683
        %v1685 = vpop.f32.mrb[0].mxu0
        %v1686 = vadd.f32 %v914, %v1685
        %1687 = vmatprep.mubr.bf16.mxu0 0
        %1688 = vmatmul.mubr.bf16.gmra.mrb[0].mxu0 %v594
        %v1689 = vpop.f32.mrb[0].mxu0
        %v1690 = vadd.f32 %v918, %v1689
        %v1691 = vpop.f32.mrb[0].mxu0
        %v1692 = vadd.f32 %v920, %v1691
        %v1693 = vpop.f32.mrb[0].mxu0
        %v1694 = vadd.f32 %v922, %v1693
        %v1695 = vpop.f32.mrb[0].mxu0
        %v1696 = vadd.f32 %v924, %v1695
        %1697 = vmatprep.mubr.bf16.mxu0 0
        %1698 = vmatmul.mubr.bf16.gmra.mrb[0].mxu0 %v597
        %v1699 = vpop.f32.mrb[0].mxu0
        %v1700 = vadd.f32 %v928, %v1699
        %v1701 = vpop.f32.mrb[0].mxu0
        %v1702 = vadd.f32 %v930, %v1701
        %v1703 = vpop.f32.mrb[0].mxu0
        %v1704 = vadd.f32 %v932, %v1703
        %v1705 = vpop.f32.mrb[0].mxu0
        %v1706 = vadd.f32 %v934, %v1705
        %1707 = vmatprep.mubr.bf16.mxu0 0
        %1708 = vmatmul.mubr.bf16.gmra.mrb[0].mxu0 %v600
        %v1709 = vpop.f32.mrb[0].mxu0
        %v1710 = vadd.f32 %v938, %v1709
        %v1711 = vpop.f32.mrb[0].mxu0
        %v1712 = vadd.f32 %v940, %v1711
        %v1713 = vpop.f32.mrb[0].mxu0
        %v1714 = vadd.f32 %v942, %v1713
        %v1715 = vpop.f32.mrb[0].mxu0
        %v1716 = vadd.f32 %v944, %v1715
        %1717 = vmatprep.mubr.bf16.mxu0 0
        %1718 = vmatmul.mubr.bf16.gmra.mrb[0].mxu0 %v603
        %v1719 = vpop.f32.mrb[0].mxu0
        %v1720 = vadd.f32 %v948, %v1719
        %v1721 = vpop.f32.mrb[0].mxu0
        %v1722 = vadd.f32 %v950, %v1721
        %v1723 = vpop.f32.mrb[0].mxu0
        %v1724 = vadd.f32 %v952, %v1723
        %v1725 = vpop.f32.mrb[0].mxu0
        %v1726 = vadd.f32 %v954, %v1725
        %1727 = vmatprep.mubr.bf16.mxu0 0
        %1728 = vmatmul.mubr.bf16.gmra.mrb[0].mxu0 %v606
        %v1729 = vpop.f32.mrb[0].mxu0
        %v1730 = vadd.f32 %v958, %v1729
        %v1731 = vpop.f32.mrb[0].mxu0
        %v1732 = vadd.f32 %v960, %v1731
        %v1733 = vpop.f32.mrb[0].mxu0
        %v1734 = vadd.f32 %v962, %v1733
        %v1735 = vpop.f32.mrb[0].mxu0
        %v1736 = vadd.f32 %v964, %v1735
        %1737 = vmatprep.mubr.bf16.mxu0 0
        %1738 = vmatmul.mubr.bf16.gmra.mrb[0].mxu0 %v609
        %v1739 = vpop.f32.mrb[0].mxu0
        %v1740 = vadd.f32 %v968, %v1739
        %v1741 = vpop.f32.mrb[0].mxu0
        %v1742 = vadd.f32 %v970, %v1741
        %v1743 = vpop.f32.mrb[0].mxu0
        %v1744 = vadd.f32 %v972, %v1743
        %v1745 = vpop.f32.mrb[0].mxu0
        %v1746 = vadd.f32 %v974, %v1745
        %1747 = vmatprep.mubr.bf16.mxu0 0
        %1748 = vmatmul.mubr.bf16.gmra.mrb[0].mxu0 %v612
        %v1749 = vpop.f32.mrb[0].mxu0
        %v1750 = vadd.f32 %v978, %v1749
        %v1751 = vpop.f32.mrb[0].mxu0
        %v1752 = vadd.f32 %v980, %v1751
        %v1753 = vpop.f32.mrb[0].mxu0
        %v1754 = vadd.f32 %v982, %v1753
        %v1755 = vpop.f32.mrb[0].mxu0
        %v1756 = vadd.f32 %v984, %v1755
        %1757 = vmatprep.mubr.bf16.mxu0 0
        %1758 = vmatmul.mubr.bf16.gmra.mrb[0].mxu0 %v615
        %v1759 = vpop.f32.mrb[0].mxu0
        %v1760 = vadd.f32 %v988, %v1759
        %v1761 = vpop.f32.mrb[0].mxu0
        %v1762 = vadd.f32 %v990, %v1761
        %v1763 = vpop.f32.mrb[0].mxu0
        %v1764 = vadd.f32 %v992, %v1763
        %v1765 = vpop.f32.mrb[0].mxu0
        %v1766 = vadd.f32 %v994, %v1765
        %1767 = vmatprep.mubr.bf16.mxu0 0
        %1768 = vmatmul.mubr.bf16.gmra.mrb[0].mxu0 %v618
        %v1769 = vpop.f32.mrb[0].mxu0
        %v1770 = vadd.f32 %v998, %v1769
        %v1771 = vpop.f32.mrb[0].mxu0
        %v1772 = vadd.f32 %v1000, %v1771
        %v1773 = vpop.f32.mrb[0].mxu0
        %v1774 = vadd.f32 %v1002, %v1773
        %v1775 = vpop.f32.mrb[0].mxu0
        %v1776 = vadd.f32 %v1004, %v1775
        %1777 = vdwg.mxu0
        %1778 = vmatprep.subr.bf16.mxu0 %v528
        %1779 = vmatpush1.bf16.msra.mxu0 %v527
        %1780 = vmatprep.subr.bf16.mxu0 0
        %1781 = vmatpush1.bf16.msra.mxu0 0
        %1782 = vmatprep.subr.bf16.mxu0 0
        %1783 = vmatpush1.bf16.msra.mxu0 0
        %1784 = vmatprep.subr.bf16.mxu0 0
        %1785 = vmatpush1.bf16.msra.mxu0 0
        %1786 = vmatprep.subr.bf16.mxu0 0
        %1787 = vmatpush1.bf16.msra.mxu0 0
        %1788 = vmatprep.subr.bf16.mxu0 0
        %1789 = vmatpush1.bf16.msra.mxu0 0
        %1790 = vmatprep.subr.bf16.mxu0 0
        %1791 = vmatpush1.bf16.msra.mxu0 0
        %1792 = vmatprep.subr.bf16.mxu0 0
        %1793 = vmatpush1.bf16.msra.mxu0 0
        %1794 = vmatprep.subr.bf16.mxu0 0
        %1795 = vmatpush1.bf16.msra.mxu0 0
        %1796 = vmatprep.subr.bf16.mxu0 0
        %1797 = vmatpush1.bf16.msra.mxu0 0
        %1798 = vmatprep.subr.bf16.mxu0 0
        %1799 = vmatpush1.bf16.msra.mxu0 0
        %1800 = vmatprep.subr.bf16.mxu0 0
        %1801 = vmatpush1.bf16.msra.mxu0 0
        %1802 = vmatprep.subr.bf16.mxu0 0
        %1803 = vmatpush1.bf16.msra.mxu0 0
        %1804 = vmatprep.subr.bf16.mxu0 0
        %1805 = vmatpush1.bf16.msra.mxu0 0
        %1806 = vmatprep.subr.bf16.mxu0 0
        %1807 = vmatpush1.bf16.msra.mxu0 0
        %1808 = vmatprep.subr.bf16.mxu0 0
        %1809 = vmatpush1.bf16.msra.mxu0 0
        %1810 = vmatprep.mubr.bf16.mxu0 0
        %1811 = vmatmul.mubr.bf16.gmra.mrb[0].mxu0 %v573
        %v1812 = vpop.f32.mrb[0].mxu0
        %v1813 = vadd.f32 %v1041, %v1812
        %v1814 = vpop.f32.mrb[0].mxu0
        %v1815 = vadd.f32 %v1043, %v1814
        %v1816 = vpop.f32.mrb[0].mxu0
        %v1817 = vadd.f32 %v1045, %v1816
        %v1818 = vpop.f32.mrb[0].mxu0
        %v1819 = vadd.f32 %v1047, %v1818
        %1820 = vmatprep.mubr.bf16.mxu0 0
        %1821 = vmatmul.mubr.bf16.gmra.mrb[0].mxu0 %v576
        %v1822 = vpop.f32.mrb[0].mxu0
        %v1823 = vadd.f32 %v1051, %v1822
        %v1824 = vpop.f32.mrb[0].mxu0
        %v1825 = vadd.f32 %v1053, %v1824
        %v1826 = vpop.f32.mrb[0].mxu0
        %v1827 = vadd.f32 %v1055, %v1826
        %v1828 = vpop.f32.mrb[0].mxu0
        %v1829 = vadd.f32 %v1057, %v1828
        %1830 = vmatprep.mubr.bf16.mxu0 0
        %1831 = vmatmul.mubr.bf16.gmra.mrb[0].mxu0 %v579
        %v1832 = vpop.f32.mrb[0].mxu0
        %v1833 = vadd.f32 %v1061, %v1832
        %v1834 = vpop.f32.mrb[0].mxu0
        %v1835 = vadd.f32 %v1063, %v1834
        %v1836 = vpop.f32.mrb[0].mxu0
        %v1837 = vadd.f32 %v1065, %v1836
        %v1838 = vpop.f32.mrb[0].mxu0
        %v1839 = vadd.f32 %v1067, %v1838
        %1840 = vmatprep.mubr.bf16.mxu0 0
        %1841 = vmatmul.mubr.bf16.gmra.mrb[0].mxu0 %v582
        %v1842 = vpop.f32.mrb[0].mxu0
        %v1843 = vadd.f32 %v1071, %v1842
        %v1844 = vpop.f32.mrb[0].mxu0
        %v1845 = vadd.f32 %v1073, %v1844
        %v1846 = vpop.f32.mrb[0].mxu0
        %v1847 = vadd.f32 %v1075, %v1846
        %v1848 = vpop.f32.mrb[0].mxu0
        %v1849 = vadd.f32 %v1077, %v1848
        %1850 = vmatprep.mubr.bf16.mxu0 0
        %1851 = vmatmul.mubr.bf16.gmra.mrb[0].mxu0 %v585
        %v1852 = vpop.f32.mrb[0].mxu0
        %v1853 = vadd.f32 %v1081, %v1852
        %v1854 = vpop.f32.mrb[0].mxu0
        %v1855 = vadd.f32 %v1083, %v1854
        %v1856 = vpop.f32.mrb[0].mxu0
        %v1857 = vadd.f32 %v1085, %v1856
        %v1858 = vpop.f32.mrb[0].mxu0
        %v1859 = vadd.f32 %v1087, %v1858
        %1860 = vmatprep.mubr.bf16.mxu0 0
        %1861 = vmatmul.mubr.bf16.gmra.mrb[0].mxu0 %v588
        %v1862 = vpop.f32.mrb[0].mxu0
        %v1863 = vadd.f32 %v1091, %v1862
        %v1864 = vpop.f32.mrb[0].mxu0
        %v1865 = vadd.f32 %v1093, %v1864
        %v1866 = vpop.f32.mrb[0].mxu0
        %v1867 = vadd.f32 %v1095, %v1866
        %v1868 = vpop.f32.mrb[0].mxu0
        %v1869 = vadd.f32 %v1097, %v1868
        %1870 = vmatprep.mubr.bf16.mxu0 0
        %1871 = vmatmul.mubr.bf16.gmra.mrb[0].mxu0 %v591
        %v1872 = vpop.f32.mrb[0].mxu0
        %v1873 = vadd.f32 %v1101, %v1872
        %v1874 = vpop.f32.mrb[0].mxu0
        %v1875 = vadd.f32 %v1103, %v1874
        %v1876 = vpop.f32.mrb[0].mxu0
        %v1877 = vadd.f32 %v1105, %v1876
        %v1878 = vpop.f32.mrb[0].mxu0
        %v1879 = vadd.f32 %v1107, %v1878
        %1880 = vmatprep.mubr.bf16.mxu0 0
        %1881 = vmatmul.mubr.bf16.gmra.mrb[0].mxu0 %v594
        %v1882 = vpop.f32.mrb[0].mxu0
        %v1883 = vadd.f32 %v1111, %v1882
        %v1884 = vpop.f32.mrb[0].mxu0
        %v1885 = vadd.f32 %v1113, %v1884
        %v1886 = vpop.f32.mrb[0].mxu0
        %v1887 = vadd.f32 %v1115, %v1886
        %v1888 = vpop.f32.mrb[0].mxu0
        %v1889 = vadd.f32 %v1117, %v1888
        %1890 = vmatprep.mubr.bf16.mxu0 0
        %1891 = vmatmul.mubr.bf16.gmra.mrb[0].mxu0 %v597
        %v1892 = vpop.f32.mrb[0].mxu0
        %v1893 = vadd.f32 %v1121, %v1892
        %v1894 = vpop.f32.mrb[0].mxu0
        %v1895 = vadd.f32 %v1123, %v1894
        %v1896 = vpop.f32.mrb[0].mxu0
        %v1897 = vadd.f32 %v1125, %v1896
        %v1898 = vpop.f32.mrb[0].mxu0
        %v1899 = vadd.f32 %v1127, %v1898
        %1900 = vmatprep.mubr.bf16.mxu0 0
        %1901 = vmatmul.mubr.bf16.gmra.mrb[0].mxu0 %v600
        %v1902 = vpop.f32.mrb[0].mxu0
        %v1903 = vadd.f32 %v1131, %v1902
        %v1904 = vpop.f32.mrb[0].mxu0
        %v1905 = vadd.f32 %v1133, %v1904
        %v1906 = vpop.f32.mrb[0].mxu0
        %v1907 = vadd.f32 %v1135, %v1906
        %v1908 = vpop.f32.mrb[0].mxu0
        %v1909 = vadd.f32 %v1137, %v1908
        %1910 = vmatprep.mubr.bf16.mxu0 0
        %1911 = vmatmul.mubr.bf16.gmra.mrb[0].mxu0 %v603
        %v1912 = vpop.f32.mrb[0].mxu0
        %v1913 = vadd.f32 %v1141, %v1912
        %v1914 = vpop.f32.mrb[0].mxu0
        %v1915 = vadd.f32 %v1143, %v1914
        %v1916 = vpop.f32.mrb[0].mxu0
        %v1917 = vadd.f32 %v1145, %v1916
        %v1918 = vpop.f32.mrb[0].mxu0
        %v1919 = vadd.f32 %v1147, %v1918
        %1920 = vmatprep.mubr.bf16.mxu0 0
        %1921 = vmatmul.mubr.bf16.gmra.mrb[0].mxu0 %v606
        %v1922 = vpop.f32.mrb[0].mxu0
        %v1923 = vadd.f32 %v1151, %v1922
        %v1924 = vpop.f32.mrb[0].mxu0
        %v1925 = vadd.f32 %v1153, %v1924
        %v1926 = vpop.f32.mrb[0].mxu0
        %v1927 = vadd.f32 %v1155, %v1926
        %v1928 = vpop.f32.mrb[0].mxu0
        %v1929 = vadd.f32 %v1157, %v1928
        %1930 = vmatprep.mubr.bf16.mxu0 0
        %1931 = vmatmul.mubr.bf16.gmra.mrb[0].mxu0 %v609
        %v1932 = vpop.f32.mrb[0].mxu0
        %v1933 = vadd.f32 %v1161, %v1932
        %v1934 = vpop.f32.mrb[0].mxu0
        %v1935 = vadd.f32 %v1163, %v1934
        %v1936 = vpop.f32.mrb[0].mxu0
        %v1937 = vadd.f32 %v1165, %v1936
        %v1938 = vpop.f32.mrb[0].mxu0
        %v1939 = vadd.f32 %v1167, %v1938
        %1940 = vmatprep.mubr.bf16.mxu0 0
        %1941 = vmatmul.mubr.bf16.gmra.mrb[0].mxu0 %v612
        %v1942 = vpop.f32.mrb[0].mxu0
        %v1943 = vadd.f32 %v1171, %v1942
        %v1944 = vpop.f32.mrb[0].mxu0
        %v1945 = vadd.f32 %v1173, %v1944
        %v1946 = vpop.f32.mrb[0].mxu0
        %v1947 = vadd.f32 %v1175, %v1946
        %v1948 = vpop.f32.mrb[0].mxu0
        %v1949 = vadd.f32 %v1177, %v1948
        %1950 = vmatprep.mubr.bf16.mxu0 0
        %1951 = vmatmul.mubr.bf16.gmra.mrb[0].mxu0 %v615
        %v1952 = vpop.f32.mrb[0].mxu0
        %v1953 = vadd.f32 %v1181, %v1952
        %v1954 = vpop.f32.mrb[0].mxu0
        %v1955 = vadd.f32 %v1183, %v1954
        %v1956 = vpop.f32.mrb[0].mxu0
        %v1957 = vadd.f32 %v1185, %v1956
        %v1958 = vpop.f32.mrb[0].mxu0
        %v1959 = vadd.f32 %v1187, %v1958
        %1960 = vmatprep.mubr.bf16.mxu0 0
        %1961 = vmatmul.mubr.bf16.gmra.mrb[0].mxu0 %v618
        %v1962 = vpop.f32.mrb[0].mxu0
        %v1963 = vadd.f32 %v1191, %v1962
        %v1964 = vpop.f32.mrb[0].mxu0
        %v1965 = vadd.f32 %v1193, %v1964
        %v1966 = vpop.f32.mrb[0].mxu0
        %v1967 = vadd.f32 %v1195, %v1966
        %v1968 = vpop.f32.mrb[0].mxu0
        %v1969 = vadd.f32 %v1197, %v1968
        %1970 = vdwg.mxu0
        %1971 = vmatprep.subr.bf16.mxu0 %v530
        %1972 = vmatpush1.bf16.msra.mxu0 %v529
        %1973 = vmatprep.subr.bf16.mxu0 0
        %1974 = vmatpush1.bf16.msra.mxu0 0
        %1975 = vmatprep.subr.bf16.mxu0 0
        %1976 = vmatpush1.bf16.msra.mxu0 0
        %1977 = vmatprep.subr.bf16.mxu0 0
        %1978 = vmatpush1.bf16.msra.mxu0 0
        %1979 = vmatprep.subr.bf16.mxu0 0
        %1980 = vmatpush1.bf16.msra.mxu0 0
        %1981 = vmatprep.subr.bf16.mxu0 0
        %1982 = vmatpush1.bf16.msra.mxu0 0
        %1983 = vmatprep.subr.bf16.mxu0 0
        %1984 = vmatpush1.bf16.msra.mxu0 0
        %1985 = vmatprep.subr.bf16.mxu0 0
        %1986 = vmatpush1.bf16.msra.mxu0 0
        %1987 = vmatprep.subr.bf16.mxu0 0
        %1988 = vmatpush1.bf16.msra.mxu0 0
        %1989 = vmatprep.subr.bf16.mxu0 0
        %1990 = vmatpush1.bf16.msra.mxu0 0
        %1991 = vmatprep.subr.bf16.mxu0 0
        %1992 = vmatpush1.bf16.msra.mxu0 0
        %1993 = vmatprep.subr.bf16.mxu0 0
        %1994 = vmatpush1.bf16.msra.mxu0 0
        %1995 = vmatprep.subr.bf16.mxu0 0
        %1996 = vmatpush1.bf16.msra.mxu0 0
        %1997 = vmatprep.subr.bf16.mxu0 0
        %1998 = vmatpush1.bf16.msra.mxu0 0
        %1999 = vmatprep.subr.bf16.mxu0 0
        %2000 = vmatpush1.bf16.msra.mxu0 0
        %2001 = vmatprep.subr.bf16.mxu0 0
        %2002 = vmatpush1.bf16.msra.mxu0 0
        %2003 = vmatprep.mubr.bf16.mxu0 0
        %2004 = vmatmul.mubr.bf16.gmra.mrb[0].mxu0 %v573
        %v2005 = vpop.f32.mrb[0].mxu0
        %v2006 = vadd.f32 %v1234, %v2005
        %v2007 = vpop.f32.mrb[0].mxu0
        %v2008 = vadd.f32 %v1236, %v2007
        %v2009 = vpop.f32.mrb[0].mxu0
        %v2010 = vadd.f32 %v1238, %v2009
        %v2011 = vpop.f32.mrb[0].mxu0
        %v2012 = vadd.f32 %v1240, %v2011
        %2013 = vmatprep.mubr.bf16.mxu0 0
        %2014 = vmatmul.mubr.bf16.gmra.mrb[0].mxu0 %v576
        %v2015 = vpop.f32.mrb[0].mxu0
        %v2016 = vadd.f32 %v1244, %v2015
        %v2017 = vpop.f32.mrb[0].mxu0
        %v2018 = vadd.f32 %v1246, %v2017
        %v2019 = vpop.f32.mrb[0].mxu0
        %v2020 = vadd.f32 %v1248, %v2019
        %v2021 = vpop.f32.mrb[0].mxu0
        %v2022 = vadd.f32 %v1250, %v2021
        %2023 = vmatprep.mubr.bf16.mxu0 0
        %2024 = vmatmul.mubr.bf16.gmra.mrb[0].mxu0 %v579
        %v2025 = vpop.f32.mrb[0].mxu0
        %v2026 = vadd.f32 %v1254, %v2025
        %v2027 = vpop.f32.mrb[0].mxu0
        %v2028 = vadd.f32 %v1256, %v2027
        %v2029 = vpop.f32.mrb[0].mxu0
        %v2030 = vadd.f32 %v1258, %v2029
        %v2031 = vpop.f32.mrb[0].mxu0
        %v2032 = vadd.f32 %v1260, %v2031
        %2033 = vmatprep.mubr.bf16.mxu0 0
        %2034 = vmatmul.mubr.bf16.gmra.mrb[0].mxu0 %v582
        %v2035 = vpop.f32.mrb[0].mxu0
        %v2036 = vadd.f32 %v1264, %v2035
        %v2037 = vpop.f32.mrb[0].mxu0
        %v2038 = vadd.f32 %v1266, %v2037
        %v2039 = vpop.f32.mrb[0].mxu0
        %v2040 = vadd.f32 %v1268, %v2039
        %v2041 = vpop.f32.mrb[0].mxu0
        %v2042 = vadd.f32 %v1270, %v2041
        %2043 = vmatprep.mubr.bf16.mxu0 0
        %2044 = vmatmul.mubr.bf16.gmra.mrb[0].mxu0 %v585
        %v2045 = vpop.f32.mrb[0].mxu0
        %v2046 = vadd.f32 %v1274, %v2045
        %v2047 = vpop.f32.mrb[0].mxu0
        %v2048 = vadd.f32 %v1276, %v2047
        %v2049 = vpop.f32.mrb[0].mxu0
        %v2050 = vadd.f32 %v1278, %v2049
        %v2051 = vpop.f32.mrb[0].mxu0
        %v2052 = vadd.f32 %v1280, %v2051
        %2053 = vmatprep.mubr.bf16.mxu0 0
        %2054 = vmatmul.mubr.bf16.gmra.mrb[0].mxu0 %v588
        %v2055 = vpop.f32.mrb[0].mxu0
        %v2056 = vadd.f32 %v1284, %v2055
        %v2057 = vpop.f32.mrb[0].mxu0
        %v2058 = vadd.f32 %v1286, %v2057
        %v2059 = vpop.f32.mrb[0].mxu0
        %v2060 = vadd.f32 %v1288, %v2059
        %v2061 = vpop.f32.mrb[0].mxu0
        %v2062 = vadd.f32 %v1290, %v2061
        %2063 = vmatprep.mubr.bf16.mxu0 0
        %2064 = vmatmul.mubr.bf16.gmra.mrb[0].mxu0 %v591
        %v2065 = vpop.f32.mrb[0].mxu0
        %v2066 = vadd.f32 %v1294, %v2065
        %v2067 = vpop.f32.mrb[0].mxu0
        %v2068 = vadd.f32 %v1296, %v2067
        %v2069 = vpop.f32.mrb[0].mxu0
        %v2070 = vadd.f32 %v1298, %v2069
        %v2071 = vpop.f32.mrb[0].mxu0
        %v2072 = vadd.f32 %v1300, %v2071
        %2073 = vmatprep.mubr.bf16.mxu0 0
        %2074 = vmatmul.mubr.bf16.gmra.mrb[0].mxu0 %v594
        %v2075 = vpop.f32.mrb[0].mxu0
        %v2076 = vadd.f32 %v1304, %v2075
        %v2077 = vpop.f32.mrb[0].mxu0
        %v2078 = vadd.f32 %v1306, %v2077
        %v2079 = vpop.f32.mrb[0].mxu0
        %v2080 = vadd.f32 %v1308, %v2079
        %v2081 = vpop.f32.mrb[0].mxu0
        %v2082 = vadd.f32 %v1310, %v2081
        %2083 = vmatprep.mubr.bf16.mxu0 0
        %2084 = vmatmul.mubr.bf16.gmra.mrb[0].mxu0 %v597
        %v2085 = vpop.f32.mrb[0].mxu0
        %v2086 = vadd.f32 %v1314, %v2085
        %v2087 = vpop.f32.mrb[0].mxu0
        %v2088 = vadd.f32 %v1316, %v2087
        %v2089 = vpop.f32.mrb[0].mxu0
        %v2090 = vadd.f32 %v1318, %v2089
        %v2091 = vpop.f32.mrb[0].mxu0
        %v2092 = vadd.f32 %v1320, %v2091
        %2093 = vmatprep.mubr.bf16.mxu0 0
        %2094 = vmatmul.mubr.bf16.gmra.mrb[0].mxu0 %v600
        %v2095 = vpop.f32.mrb[0].mxu0
        %v2096 = vadd.f32 %v1324, %v2095
        %v2097 = vpop.f32.mrb[0].mxu0
        %v2098 = vadd.f32 %v1326, %v2097
        %v2099 = vpop.f32.mrb[0].mxu0
        %v2100 = vadd.f32 %v1328, %v2099
        %v2101 = vpop.f32.mrb[0].mxu0
        %v2102 = vadd.f32 %v1330, %v2101
        %2103 = vmatprep.mubr.bf16.mxu0 0
        %2104 = vmatmul.mubr.bf16.gmra.mrb[0].mxu0 %v603
        %v2105 = vpop.f32.mrb[0].mxu0
        %v2106 = vadd.f32 %v1334, %v2105
        %v2107 = vpop.f32.mrb[0].mxu0
        %v2108 = vadd.f32 %v1336, %v2107
        %v2109 = vpop.f32.mrb[0].mxu0
        %v2110 = vadd.f32 %v1338, %v2109
        %v2111 = vpop.f32.mrb[0].mxu0
        %v2112 = vadd.f32 %v1340, %v2111
        %2113 = vmatprep.mubr.bf16.mxu0 0
        %2114 = vmatmul.mubr.bf16.gmra.mrb[0].mxu0 %v606
        %v2115 = vpop.f32.mrb[0].mxu0
        %v2116 = vadd.f32 %v1344, %v2115
        %v2117 = vpop.f32.mrb[0].mxu0
        %v2118 = vadd.f32 %v1346, %v2117
        %v2119 = vpop.f32.mrb[0].mxu0
        %v2120 = vadd.f32 %v1348, %v2119
        %v2121 = vpop.f32.mrb[0].mxu0
        %v2122 = vadd.f32 %v1350, %v2121
        %2123 = vmatprep.mubr.bf16.mxu0 0
        %2124 = vmatmul.mubr.bf16.gmra.mrb[0].mxu0 %v609
        %v2125 = vpop.f32.mrb[0].mxu0
        %v2126 = vadd.f32 %v1354, %v2125
        %v2127 = vpop.f32.mrb[0].mxu0
        %v2128 = vadd.f32 %v1356, %v2127
        %v2129 = vpop.f32.mrb[0].mxu0
        %v2130 = vadd.f32 %v1358, %v2129
        %v2131 = vpop.f32.mrb[0].mxu0
        %v2132 = vadd.f32 %v1360, %v2131
        %2133 = vmatprep.mubr.bf16.mxu0 0
        %2134 = vmatmul.mubr.bf16.gmra.mrb[0].mxu0 %v612
        %v2135 = vpop.f32.mrb[0].mxu0
        %v2136 = vadd.f32 %v1364, %v2135
        %v2137 = vpop.f32.mrb[0].mxu0
        %v2138 = vadd.f32 %v1366, %v2137
        %v2139 = vpop.f32.mrb[0].mxu0
        %v2140 = vadd.f32 %v1368, %v2139
        %v2141 = vpop.f32.mrb[0].mxu0
        %v2142 = vadd.f32 %v1370, %v2141
        %2143 = vmatprep.mubr.bf16.mxu0 0
        %2144 = vmatmul.mubr.bf16.gmra.mrb[0].mxu0 %v615
        %v2145 = vpop.f32.mrb[0].mxu0
        %v2146 = vadd.f32 %v1374, %v2145
        %v2147 = vpop.f32.mrb[0].mxu0
        %v2148 = vadd.f32 %v1376, %v2147
        %v2149 = vpop.f32.mrb[0].mxu0
        %v2150 = vadd.f32 %v1378, %v2149
        %v2151 = vpop.f32.mrb[0].mxu0
        %v2152 = vadd.f32 %v1380, %v2151
        %2153 = vmatprep.mubr.bf16.mxu0 0
        %2154 = vmatmul.mubr.bf16.gmra.mrb[0].mxu0 %v618
        %v2155 = vpop.f32.mrb[0].mxu0
        %v2156 = vadd.f32 %v1384, %v2155
        %v2157 = vpop.f32.mrb[0].mxu0
        %v2158 = vadd.f32 %v1386, %v2157
        %v2159 = vpop.f32.mrb[0].mxu0
        %v2160 = vadd.f32 %v1388, %v2159
        %v2161 = vpop.f32.mrb[0].mxu0
        %v2162 = vadd.f32 %v1390, %v2161
        %2163 = vdwg.mxu0
        %v2165 = vsel %vm571, %v507, 0
        %v2168 = vsel %vm571, %v508, 0
        %v2171 = vsel %vm571, %v509, 0
        %v2174 = vsel %vm571, %v510, 0
        %v2177 = vsel %vm571, %v511, 0
        %v2180 = vsel %vm571, %v512, 0
        %v2183 = vsel %vm571, %v513, 0
        %v2186 = vsel %vm571, %v514, 0
        %v2189 = vsel %vm571, %v515, 0
        %v2192 = vsel %vm571, %v516, 0
        %v2195 = vsel %vm571, %v517, 0
        %v2198 = vsel %vm571, %v518, 0
        %v2201 = vsel %vm571, %v519, 0
        %v2204 = vsel %vm571, %v520, 0
        %v2207 = vsel %vm571, %v521, 0
        %v2210 = vsel %vm571, %v522, 0
        %2212 = vmatprep.subr.bf16.mxu0 %v524
        %2213 = vmatpush1.bf16.msra.mxu0 %v523
        %2214 = vmatprep.subr.bf16.mxu0 0
        %2215 = vmatpush1.bf16.msra.mxu0 0
        %2216 = vmatprep.subr.bf16.mxu0 0
        %2217 = vmatpush1.bf16.msra.mxu0 0
        %2218 = vmatprep.subr.bf16.mxu0 0
        %2219 = vmatpush1.bf16.msra.mxu0 0
        %2220 = vmatprep.subr.bf16.mxu0 0
        %2221 = vmatpush1.bf16.msra.mxu0 0
        %2222 = vmatprep.subr.bf16.mxu0 0
        %2223 = vmatpush1.bf16.msra.mxu0 0
        %2224 = vmatprep.subr.bf16.mxu0 0
        %2225 = vmatpush1.bf16.msra.mxu0 0
        %2226 = vmatprep.subr.bf16.mxu0 0
        %2227 = vmatpush1.bf16.msra.mxu0 0
        %2228 = vmatprep.subr.bf16.mxu0 0
        %2229 = vmatpush1.bf16.msra.mxu0 0
        %2230 = vmatprep.subr.bf16.mxu0 0
        %2231 = vmatpush1.bf16.msra.mxu0 0
        %2232 = vmatprep.subr.bf16.mxu0 0
        %2233 = vmatpush1.bf16.msra.mxu0 0
        %2234 = vmatprep.subr.bf16.mxu0 0
        %2235 = vmatpush1.bf16.msra.mxu0 0
        %2236 = vmatprep.subr.bf16.mxu0 0
        %2237 = vmatpush1.bf16.msra.mxu0 0
        %2238 = vmatprep.subr.bf16.mxu0 0
        %2239 = vmatpush1.bf16.msra.mxu0 0
        %2240 = vmatprep.subr.bf16.mxu0 0
        %2241 = vmatpush1.bf16.msra.mxu0 0
        %2242 = vmatprep.subr.bf16.mxu0 0
        %2243 = vmatpush1.bf16.msra.mxu0 0
        %2244 = vmatprep.mubr.bf16.mxu0 0
        %2245 = vmatmul.mubr.bf16.gmra.mrb[0].mxu0 %v2165
        %v2246 = vpop.f32.mrb[0].mxu0
        %v2247 = vadd.f32 0.0, %v2246
        %v2248 = vpop.f32.mrb[0].mxu0
        %v2249 = vadd.f32 0.0, %v2248
        %v2250 = vpop.f32.mrb[0].mxu0
        %v2251 = vadd.f32 0.0, %v2250
        %v2252 = vpop.f32.mrb[0].mxu0
        %v2253 = vadd.f32 0.0, %v2252
        %2254 = vmatprep.mubr.bf16.mxu0 0
        %2255 = vmatmul.mubr.bf16.gmra.mrb[0].mxu0 %v2168
        %v2256 = vpop.f32.mrb[0].mxu0
        %v2257 = vadd.f32 0.0, %v2256
        %v2258 = vpop.f32.mrb[0].mxu0
        %v2259 = vadd.f32 0.0, %v2258
        %v2260 = vpop.f32.mrb[0].mxu0
        %v2261 = vadd.f32 0.0, %v2260
        %v2262 = vpop.f32.mrb[0].mxu0
        %v2263 = vadd.f32 0.0, %v2262
        %2264 = vmatprep.mubr.bf16.mxu0 0
        %2265 = vmatmul.mubr.bf16.gmra.mrb[0].mxu0 %v2171
        %v2266 = vpop.f32.mrb[0].mxu0
        %v2267 = vadd.f32 0.0, %v2266
        %v2268 = vpop.f32.mrb[0].mxu0
        %v2269 = vadd.f32 0.0, %v2268
        %v2270 = vpop.f32.mrb[0].mxu0
        %v2271 = vadd.f32 0.0, %v2270
        %v2272 = vpop.f32.mrb[0].mxu0
        %v2273 = vadd.f32 0.0, %v2272
        %2274 = vmatprep.mubr.bf16.mxu0 0
        %2275 = vmatmul.mubr.bf16.gmra.mrb[0].mxu0 %v2174
        %v2276 = vpop.f32.mrb[0].mxu0
        %v2277 = vadd.f32 0.0, %v2276
        %v2278 = vpop.f32.mrb[0].mxu0
        %v2279 = vadd.f32 0.0, %v2278
        %v2280 = vpop.f32.mrb[0].mxu0
        %v2281 = vadd.f32 0.0, %v2280
        %v2282 = vpop.f32.mrb[0].mxu0
        %v2283 = vadd.f32 0.0, %v2282
        %2284 = vmatprep.mubr.bf16.mxu0 0
        %2285 = vmatmul.mubr.bf16.gmra.mrb[0].mxu0 %v2177
        %v2286 = vpop.f32.mrb[0].mxu0
        %v2287 = vadd.f32 0.0, %v2286
        %v2288 = vpop.f32.mrb[0].mxu0
        %v2289 = vadd.f32 0.0, %v2288
        %v2290 = vpop.f32.mrb[0].mxu0
        %v2291 = vadd.f32 0.0, %v2290
        %v2292 = vpop.f32.mrb[0].mxu0
        %v2293 = vadd.f32 0.0, %v2292
        %2294 = vmatprep.mubr.bf16.mxu0 0
        %2295 = vmatmul.mubr.bf16.gmra.mrb[0].mxu0 %v2180
        %v2296 = vpop.f32.mrb[0].mxu0
        %v2297 = vadd.f32 0.0, %v2296
        %v2298 = vpop.f32.mrb[0].mxu0
        %v2299 = vadd.f32 0.0, %v2298
        %v2300 = vpop.f32.mrb[0].mxu0
        %v2301 = vadd.f32 0.0, %v2300
        %v2302 = vpop.f32.mrb[0].mxu0
        %v2303 = vadd.f32 0.0, %v2302
        %2304 = vmatprep.mubr.bf16.mxu0 0
        %2305 = vmatmul.mubr.bf16.gmra.mrb[0].mxu0 %v2183
        %v2306 = vpop.f32.mrb[0].mxu0
        %v2307 = vadd.f32 0.0, %v2306
        %v2308 = vpop.f32.mrb[0].mxu0
        %v2309 = vadd.f32 0.0, %v2308
        %v2310 = vpop.f32.mrb[0].mxu0
        %v2311 = vadd.f32 0.0, %v2310
        %v2312 = vpop.f32.mrb[0].mxu0
        %v2313 = vadd.f32 0.0, %v2312
        %2314 = vmatprep.mubr.bf16.mxu0 0
        %2315 = vmatmul.mubr.bf16.gmra.mrb[0].mxu0 %v2186
        %v2316 = vpop.f32.mrb[0].mxu0
        %v2317 = vadd.f32 0.0, %v2316
        %v2318 = vpop.f32.mrb[0].mxu0
        %v2319 = vadd.f32 0.0, %v2318
        %v2320 = vpop.f32.mrb[0].mxu0
        %v2321 = vadd.f32 0.0, %v2320
        %v2322 = vpop.f32.mrb[0].mxu0
        %v2323 = vadd.f32 0.0, %v2322
        %2324 = vmatprep.mubr.bf16.mxu0 0
        %2325 = vmatmul.mubr.bf16.gmra.mrb[0].mxu0 %v2189
        %v2326 = vpop.f32.mrb[0].mxu0
        %v2327 = vadd.f32 0.0, %v2326
        %v2328 = vpop.f32.mrb[0].mxu0
        %v2329 = vadd.f32 0.0, %v2328
        %v2330 = vpop.f32.mrb[0].mxu0
        %v2331 = vadd.f32 0.0, %v2330
        %v2332 = vpop.f32.mrb[0].mxu0
        %v2333 = vadd.f32 0.0, %v2332
        %2334 = vmatprep.mubr.bf16.mxu0 0
        %2335 = vmatmul.mubr.bf16.gmra.mrb[0].mxu0 %v2192
        %v2336 = vpop.f32.mrb[0].mxu0
        %v2337 = vadd.f32 0.0, %v2336
        %v2338 = vpop.f32.mrb[0].mxu0
        %v2339 = vadd.f32 0.0, %v2338
        %v2340 = vpop.f32.mrb[0].mxu0
        %v2341 = vadd.f32 0.0, %v2340
        %v2342 = vpop.f32.mrb[0].mxu0
        %v2343 = vadd.f32 0.0, %v2342
        %2344 = vmatprep.mubr.bf16.mxu0 0
        %2345 = vmatmul.mubr.bf16.gmra.mrb[0].mxu0 %v2195
        %v2346 = vpop.f32.mrb[0].mxu0
        %v2347 = vadd.f32 0.0, %v2346
        %v2348 = vpop.f32.mrb[0].mxu0
        %v2349 = vadd.f32 0.0, %v2348
        %v2350 = vpop.f32.mrb[0].mxu0
        %v2351 = vadd.f32 0.0, %v2350
        %v2352 = vpop.f32.mrb[0].mxu0
        %v2353 = vadd.f32 0.0, %v2352
        %2354 = vmatprep.mubr.bf16.mxu0 0
        %2355 = vmatmul.mubr.bf16.gmra.mrb[0].mxu0 %v2198
        %v2356 = vpop.f32.mrb[0].mxu0
        %v2357 = vadd.f32 0.0, %v2356
        %v2358 = vpop.f32.mrb[0].mxu0
        %v2359 = vadd.f32 0.0, %v2358
        %v2360 = vpop.f32.mrb[0].mxu0
        %v2361 = vadd.f32 0.0, %v2360
        %v2362 = vpop.f32.mrb[0].mxu0
        %v2363 = vadd.f32 0.0, %v2362
        %2364 = vmatprep.mubr.bf16.mxu0 0
        %2365 = vmatmul.mubr.bf16.gmra.mrb[0].mxu0 %v2201
        %v2366 = vpop.f32.mrb[0].mxu0
        %v2367 = vadd.f32 0.0, %v2366
        %v2368 = vpop.f32.mrb[0].mxu0
        %v2369 = vadd.f32 0.0, %v2368
        %v2370 = vpop.f32.mrb[0].mxu0
        %v2371 = vadd.f32 0.0, %v2370
        %v2372 = vpop.f32.mrb[0].mxu0
        %v2373 = vadd.f32 0.0, %v2372
        %2374 = vmatprep.mubr.bf16.mxu0 0
        %2375 = vmatmul.mubr.bf16.gmra.mrb[0].mxu0 %v2204
        %v2376 = vpop.f32.mrb[0].mxu0
        %v2377 = vadd.f32 0.0, %v2376
        %v2378 = vpop.f32.mrb[0].mxu0
        %v2379 = vadd.f32 0.0, %v2378
        %v2380 = vpop.f32.mrb[0].mxu0
        %v2381 = vadd.f32 0.0, %v2380
        %v2382 = vpop.f32.mrb[0].mxu0
        %v2383 = vadd.f32 0.0, %v2382
        %2384 = vmatprep.mubr.bf16.mxu0 0
        %2385 = vmatmul.mubr.bf16.gmra.mrb[0].mxu0 %v2207
        %v2386 = vpop.f32.mrb[0].mxu0
        %v2387 = vadd.f32 0.0, %v2386
        %v2388 = vpop.f32.mrb[0].mxu0
        %v2389 = vadd.f32 0.0, %v2388
        %v2390 = vpop.f32.mrb[0].mxu0
        %v2391 = vadd.f32 0.0, %v2390
        %v2392 = vpop.f32.mrb[0].mxu0
        %v2393 = vadd.f32 0.0, %v2392
        %2394 = vmatprep.mubr.bf16.mxu0 0
        %2395 = vmatmul.mubr.bf16.gmra.mrb[0].mxu0 %v2210
        %v2396 = vpop.f32.mrb[0].mxu0
        %v2397 = vadd.f32 0.0, %v2396
        %v2398 = vpop.f32.mrb[0].mxu0
        %v2399 = vadd.f32 0.0, %v2398
        %v2400 = vpop.f32.mrb[0].mxu0
        %v2401 = vadd.f32 0.0, %v2400
        %v2402 = vpop.f32.mrb[0].mxu0
        %v2403 = vadd.f32 0.0, %v2402
        %2404 = vdwg.mxu0
        %2405 = vmatprep.subr.bf16.mxu0 %v526
        %2406 = vmatpush1.bf16.msra.mxu0 %v525
        %2407 = vmatprep.subr.bf16.mxu0 0
        %2408 = vmatpush1.bf16.msra.mxu0 0
        %2409 = vmatprep.subr.bf16.mxu0 0
        %2410 = vmatpush1.bf16.msra.mxu0 0
        %2411 = vmatprep.subr.bf16.mxu0 0
        %2412 = vmatpush1.bf16.msra.mxu0 0
        %2413 = vmatprep.subr.bf16.mxu0 0
        %2414 = vmatpush1.bf16.msra.mxu0 0
        %2415 = vmatprep.subr.bf16.mxu0 0
        %2416 = vmatpush1.bf16.msra.mxu0 0
        %2417 = vmatprep.subr.bf16.mxu0 0
        %2418 = vmatpush1.bf16.msra.mxu0 0
        %2419 = vmatprep.subr.bf16.mxu0 0
        %2420 = vmatpush1.bf16.msra.mxu0 0
        %2421 = vmatprep.subr.bf16.mxu0 0
        %2422 = vmatpush1.bf16.msra.mxu0 0
        %2423 = vmatprep.subr.bf16.mxu0 0
        %2424 = vmatpush1.bf16.msra.mxu0 0
        %2425 = vmatprep.subr.bf16.mxu0 0
        %2426 = vmatpush1.bf16.msra.mxu0 0
        %2427 = vmatprep.subr.bf16.mxu0 0
        %2428 = vmatpush1.bf16.msra.mxu0 0
        %2429 = vmatprep.subr.bf16.mxu0 0
        %2430 = vmatpush1.bf16.msra.mxu0 0
        %2431 = vmatprep.subr.bf16.mxu0 0
        %2432 = vmatpush1.bf16.msra.mxu0 0
        %2433 = vmatprep.subr.bf16.mxu0 0
        %2434 = vmatpush1.bf16.msra.mxu0 0
        %2435 = vmatprep.subr.bf16.mxu0 0
        %2436 = vmatpush1.bf16.msra.mxu0 0
        %2437 = vmatprep.mubr.bf16.mxu0 0
        %2438 = vmatmul.mubr.bf16.gmra.mrb[0].mxu0 %v2165
        %v2439 = vpop.f32.mrb[0].mxu0
        %v2440 = vadd.f32 0.0, %v2439
        %v2441 = vpop.f32.mrb[0].mxu0
        %v2442 = vadd.f32 0.0, %v2441
        %v2443 = vpop.f32.mrb[0].mxu0
        %v2444 = vadd.f32 0.0, %v2443
        %v2445 = vpop.f32.mrb[0].mxu0
        %v2446 = vadd.f32 0.0, %v2445
        %2447 = vmatprep.mubr.bf16.mxu0 0
        %2448 = vmatmul.mubr.bf16.gmra.mrb[0].mxu0 %v2168
        %v2449 = vpop.f32.mrb[0].mxu0
        %v2450 = vadd.f32 0.0, %v2449
        %v2451 = vpop.f32.mrb[0].mxu0
        %v2452 = vadd.f32 0.0, %v2451
        %v2453 = vpop.f32.mrb[0].mxu0
        %v2454 = vadd.f32 0.0, %v2453
        %v2455 = vpop.f32.mrb[0].mxu0
        %v2456 = vadd.f32 0.0, %v2455
        %2457 = vmatprep.mubr.bf16.mxu0 0
        %2458 = vmatmul.mubr.bf16.gmra.mrb[0].mxu0 %v2171
        %v2459 = vpop.f32.mrb[0].mxu0
        %v2460 = vadd.f32 0.0, %v2459
        %v2461 = vpop.f32.mrb[0].mxu0
        %v2462 = vadd.f32 0.0, %v2461
        %v2463 = vpop.f32.mrb[0].mxu0
        %v2464 = vadd.f32 0.0, %v2463
        %v2465 = vpop.f32.mrb[0].mxu0
        %v2466 = vadd.f32 0.0, %v2465
        %2467 = vmatprep.mubr.bf16.mxu0 0
        %2468 = vmatmul.mubr.bf16.gmra.mrb[0].mxu0 %v2174
        %v2469 = vpop.f32.mrb[0].mxu0
        %v2470 = vadd.f32 0.0, %v2469
        %v2471 = vpop.f32.mrb[0].mxu0
        %v2472 = vadd.f32 0.0, %v2471
        %v2473 = vpop.f32.mrb[0].mxu0
        %v2474 = vadd.f32 0.0, %v2473
        %v2475 = vpop.f32.mrb[0].mxu0
        %v2476 = vadd.f32 0.0, %v2475
        %2477 = vmatprep.mubr.bf16.mxu0 0
        %2478 = vmatmul.mubr.bf16.gmra.mrb[0].mxu0 %v2177
        %v2479 = vpop.f32.mrb[0].mxu0
        %v2480 = vadd.f32 0.0, %v2479
        %v2481 = vpop.f32.mrb[0].mxu0
        %v2482 = vadd.f32 0.0, %v2481
        %v2483 = vpop.f32.mrb[0].mxu0
        %v2484 = vadd.f32 0.0, %v2483
        %v2485 = vpop.f32.mrb[0].mxu0
        %v2486 = vadd.f32 0.0, %v2485
        %2487 = vmatprep.mubr.bf16.mxu0 0
        %2488 = vmatmul.mubr.bf16.gmra.mrb[0].mxu0 %v2180
        %v2489 = vpop.f32.mrb[0].mxu0
        %v2490 = vadd.f32 0.0, %v2489
        %v2491 = vpop.f32.mrb[0].mxu0
        %v2492 = vadd.f32 0.0, %v2491
        %v2493 = vpop.f32.mrb[0].mxu0
        %v2494 = vadd.f32 0.0, %v2493
        %v2495 = vpop.f32.mrb[0].mxu0
        %v2496 = vadd.f32 0.0, %v2495
        %2497 = vmatprep.mubr.bf16.mxu0 0
        %2498 = vmatmul.mubr.bf16.gmra.mrb[0].mxu0 %v2183
        %v2499 = vpop.f32.mrb[0].mxu0
        %v2500 = vadd.f32 0.0, %v2499
        %v2501 = vpop.f32.mrb[0].mxu0
        %v2502 = vadd.f32 0.0, %v2501
        %v2503 = vpop.f32.mrb[0].mxu0
        %v2504 = vadd.f32 0.0, %v2503
        %v2505 = vpop.f32.mrb[0].mxu0
        %v2506 = vadd.f32 0.0, %v2505
        %2507 = vmatprep.mubr.bf16.mxu0 0
        %2508 = vmatmul.mubr.bf16.gmra.mrb[0].mxu0 %v2186
        %v2509 = vpop.f32.mrb[0].mxu0
        %v2510 = vadd.f32 0.0, %v2509
        %v2511 = vpop.f32.mrb[0].mxu0
        %v2512 = vadd.f32 0.0, %v2511
        %v2513 = vpop.f32.mrb[0].mxu0
        %v2514 = vadd.f32 0.0, %v2513
        %v2515 = vpop.f32.mrb[0].mxu0
        %v2516 = vadd.f32 0.0, %v2515
        %2517 = vmatprep.mubr.bf16.mxu0 0
        %2518 = vmatmul.mubr.bf16.gmra.mrb[0].mxu0 %v2189
        %v2519 = vpop.f32.mrb[0].mxu0
        %v2520 = vadd.f32 0.0, %v2519
        %v2521 = vpop.f32.mrb[0].mxu0
        %v2522 = vadd.f32 0.0, %v2521
        %v2523 = vpop.f32.mrb[0].mxu0
        %v2524 = vadd.f32 0.0, %v2523
        %v2525 = vpop.f32.mrb[0].mxu0
        %v2526 = vadd.f32 0.0, %v2525
        %2527 = vmatprep.mubr.bf16.mxu0 0
        %2528 = vmatmul.mubr.bf16.gmra.mrb[0].mxu0 %v2192
        %v2529 = vpop.f32.mrb[0].mxu0
        %v2530 = vadd.f32 0.0, %v2529
        %v2531 = vpop.f32.mrb[0].mxu0
        %v2532 = vadd.f32 0.0, %v2531
        %v2533 = vpop.f32.mrb[0].mxu0
        %v2534 = vadd.f32 0.0, %v2533
        %v2535 = vpop.f32.mrb[0].mxu0
        %v2536 = vadd.f32 0.0, %v2535
        %2537 = vmatprep.mubr.bf16.mxu0 0
        %2538 = vmatmul.mubr.bf16.gmra.mrb[0].mxu0 %v2195
        %v2539 = vpop.f32.mrb[0].mxu0
        %v2540 = vadd.f32 0.0, %v2539
        %v2541 = vpop.f32.mrb[0].mxu0
        %v2542 = vadd.f32 0.0, %v2541
        %v2543 = vpop.f32.mrb[0].mxu0
        %v2544 = vadd.f32 0.0, %v2543
        %v2545 = vpop.f32.mrb[0].mxu0
        %v2546 = vadd.f32 0.0, %v2545
        %2547 = vmatprep.mubr.bf16.mxu0 0
        %2548 = vmatmul.mubr.bf16.gmra.mrb[0].mxu0 %v2198
        %v2549 = vpop.f32.mrb[0].mxu0
        %v2550 = vadd.f32 0.0, %v2549
        %v2551 = vpop.f32.mrb[0].mxu0
        %v2552 = vadd.f32 0.0, %v2551
        %v2553 = vpop.f32.mrb[0].mxu0
        %v2554 = vadd.f32 0.0, %v2553
        %v2555 = vpop.f32.mrb[0].mxu0
        %v2556 = vadd.f32 0.0, %v2555
        %2557 = vmatprep.mubr.bf16.mxu0 0
        %2558 = vmatmul.mubr.bf16.gmra.mrb[0].mxu0 %v2201
        %v2559 = vpop.f32.mrb[0].mxu0
        %v2560 = vadd.f32 0.0, %v2559
        %v2561 = vpop.f32.mrb[0].mxu0
        %v2562 = vadd.f32 0.0, %v2561
        %v2563 = vpop.f32.mrb[0].mxu0
        %v2564 = vadd.f32 0.0, %v2563
        %v2565 = vpop.f32.mrb[0].mxu0
        %v2566 = vadd.f32 0.0, %v2565
        %2567 = vmatprep.mubr.bf16.mxu0 0
        %2568 = vmatmul.mubr.bf16.gmra.mrb[0].mxu0 %v2204
        %v2569 = vpop.f32.mrb[0].mxu0
        %v2570 = vadd.f32 0.0, %v2569
        %v2571 = vpop.f32.mrb[0].mxu0
        %v2572 = vadd.f32 0.0, %v2571
        %v2573 = vpop.f32.mrb[0].mxu0
        %v2574 = vadd.f32 0.0, %v2573
        %v2575 = vpop.f32.mrb[0].mxu0
        %v2576 = vadd.f32 0.0, %v2575
        %2577 = vmatprep.mubr.bf16.mxu0 0
        %2578 = vmatmul.mubr.bf16.gmra.mrb[0].mxu0 %v2207
        %v2579 = vpop.f32.mrb[0].mxu0
        %v2580 = vadd.f32 0.0, %v2579
        %v2581 = vpop.f32.mrb[0].mxu0
        %v2582 = vadd.f32 0.0, %v2581
        %v2583 = vpop.f32.mrb[0].mxu0
        %v2584 = vadd.f32 0.0, %v2583
        %v2585 = vpop.f32.mrb[0].mxu0
        %v2586 = vadd.f32 0.0, %v2585
        %2587 = vmatprep.mubr.bf16.mxu0 0
        %2588 = vmatmul.mubr.bf16.gmra.mrb[0].mxu0 %v2210
        %v2589 = vpop.f32.mrb[0].mxu0
        %v2590 = vadd.f32 0.0, %v2589
        %v2591 = vpop.f32.mrb[0].mxu0
        %v2592 = vadd.f32 0.0, %v2591
        %v2593 = vpop.f32.mrb[0].mxu0
        %v2594 = vadd.f32 0.0, %v2593
        %v2595 = vpop.f32.mrb[0].mxu0
        %v2596 = vadd.f32 0.0, %v2595
        %2597 = vdwg.mxu0
        %2598 = vmatprep.subr.bf16.mxu0 %v528
        %2599 = vmatpush1.bf16.msra.mxu0 %v527
        %2600 = vmatprep.subr.bf16.mxu0 0
        %2601 = vmatpush1.bf16.msra.mxu0 0
        %2602 = vmatprep.subr.bf16.mxu0 0
        %2603 = vmatpush1.bf16.msra.mxu0 0
        %2604 = vmatprep.subr.bf16.mxu0 0
        %2605 = vmatpush1.bf16.msra.mxu0 0
        %2606 = vmatprep.subr.bf16.mxu0 0
        %2607 = vmatpush1.bf16.msra.mxu0 0
        %2608 = vmatprep.subr.bf16.mxu0 0
        %2609 = vmatpush1.bf16.msra.mxu0 0
        %2610 = vmatprep.subr.bf16.mxu0 0
        %2611 = vmatpush1.bf16.msra.mxu0 0
        %2612 = vmatprep.subr.bf16.mxu0 0
        %2613 = vmatpush1.bf16.msra.mxu0 0
        %2614 = vmatprep.subr.bf16.mxu0 0
        %2615 = vmatpush1.bf16.msra.mxu0 0
        %2616 = vmatprep.subr.bf16.mxu0 0
        %2617 = vmatpush1.bf16.msra.mxu0 0
        %2618 = vmatprep.subr.bf16.mxu0 0
        %2619 = vmatpush1.bf16.msra.mxu0 0
        %2620 = vmatprep.subr.bf16.mxu0 0
        %2621 = vmatpush1.bf16.msra.mxu0 0
        %2622 = vmatprep.subr.bf16.mxu0 0
        %2623 = vmatpush1.bf16.msra.mxu0 0
        %2624 = vmatprep.subr.bf16.mxu0 0
        %2625 = vmatpush1.bf16.msra.mxu0 0
        %2626 = vmatprep.subr.bf16.mxu0 0
        %2627 = vmatpush1.bf16.msra.mxu0 0
        %2628 = vmatprep.subr.bf16.mxu0 0
        %2629 = vmatpush1.bf16.msra.mxu0 0
        %2630 = vmatprep.mubr.bf16.mxu0 0
        %2631 = vmatmul.mubr.bf16.gmra.mrb[0].mxu0 %v2165
        %v2632 = vpop.f32.mrb[0].mxu0
        %v2633 = vadd.f32 0.0, %v2632
        %v2634 = vpop.f32.mrb[0].mxu0
        %v2635 = vadd.f32 0.0, %v2634
        %v2636 = vpop.f32.mrb[0].mxu0
        %v2637 = vadd.f32 0.0, %v2636
        %v2638 = vpop.f32.mrb[0].mxu0
        %v2639 = vadd.f32 0.0, %v2638
        %2640 = vmatprep.mubr.bf16.mxu0 0
        %2641 = vmatmul.mubr.bf16.gmra.mrb[0].mxu0 %v2168
        %v2642 = vpop.f32.mrb[0].mxu0
        %v2643 = vadd.f32 0.0, %v2642
        %v2644 = vpop.f32.mrb[0].mxu0
        %v2645 = vadd.f32 0.0, %v2644
        %v2646 = vpop.f32.mrb[0].mxu0
        %v2647 = vadd.f32 0.0, %v2646
        %v2648 = vpop.f32.mrb[0].mxu0
        %v2649 = vadd.f32 0.0, %v2648
        %2650 = vmatprep.mubr.bf16.mxu0 0
        %2651 = vmatmul.mubr.bf16.gmra.mrb[0].mxu0 %v2171
        %v2652 = vpop.f32.mrb[0].mxu0
        %v2653 = vadd.f32 0.0, %v2652
        %v2654 = vpop.f32.mrb[0].mxu0
        %v2655 = vadd.f32 0.0, %v2654
        %v2656 = vpop.f32.mrb[0].mxu0
        %v2657 = vadd.f32 0.0, %v2656
        %v2658 = vpop.f32.mrb[0].mxu0
        %v2659 = vadd.f32 0.0, %v2658
        %2660 = vmatprep.mubr.bf16.mxu0 0
        %2661 = vmatmul.mubr.bf16.gmra.mrb[0].mxu0 %v2174
        %v2662 = vpop.f32.mrb[0].mxu0
        %v2663 = vadd.f32 0.0, %v2662
        %v2664 = vpop.f32.mrb[0].mxu0
        %v2665 = vadd.f32 0.0, %v2664
        %v2666 = vpop.f32.mrb[0].mxu0
        %v2667 = vadd.f32 0.0, %v2666
        %v2668 = vpop.f32.mrb[0].mxu0
        %v2669 = vadd.f32 0.0, %v2668
        %2670 = vmatprep.mubr.bf16.mxu0 0
        %2671 = vmatmul.mubr.bf16.gmra.mrb[0].mxu0 %v2177
        %v2672 = vpop.f32.mrb[0].mxu0
        %v2673 = vadd.f32 0.0, %v2672
        %v2674 = vpop.f32.mrb[0].mxu0
        %v2675 = vadd.f32 0.0, %v2674
        %v2676 = vpop.f32.mrb[0].mxu0
        %v2677 = vadd.f32 0.0, %v2676
        %v2678 = vpop.f32.mrb[0].mxu0
        %v2679 = vadd.f32 0.0, %v2678
        %2680 = vmatprep.mubr.bf16.mxu0 0
        %2681 = vmatmul.mubr.bf16.gmra.mrb[0].mxu0 %v2180
        %v2682 = vpop.f32.mrb[0].mxu0
        %v2683 = vadd.f32 0.0, %v2682
        %v2684 = vpop.f32.mrb[0].mxu0
        %v2685 = vadd.f32 0.0, %v2684
        %v2686 = vpop.f32.mrb[0].mxu0
        %v2687 = vadd.f32 0.0, %v2686
        %v2688 = vpop.f32.mrb[0].mxu0
        %v2689 = vadd.f32 0.0, %v2688
        %2690 = vmatprep.mubr.bf16.mxu0 0
        %2691 = vmatmul.mubr.bf16.gmra.mrb[0].mxu0 %v2183
        %v2692 = vpop.f32.mrb[0].mxu0
        %v2693 = vadd.f32 0.0, %v2692
        %v2694 = vpop.f32.mrb[0].mxu0
        %v2695 = vadd.f32 0.0, %v2694
        %v2696 = vpop.f32.mrb[0].mxu0
        %v2697 = vadd.f32 0.0, %v2696
        %v2698 = vpop.f32.mrb[0].mxu0
        %v2699 = vadd.f32 0.0, %v2698
        %2700 = vmatprep.mubr.bf16.mxu0 0
        %2701 = vmatmul.mubr.bf16.gmra.mrb[0].mxu0 %v2186
        %v2702 = vpop.f32.mrb[0].mxu0
        %v2703 = vadd.f32 0.0, %v2702
        %v2704 = vpop.f32.mrb[0].mxu0
        %v2705 = vadd.f32 0.0, %v2704
        %v2706 = vpop.f32.mrb[0].mxu0
        %v2707 = vadd.f32 0.0, %v2706
        %v2708 = vpop.f32.mrb[0].mxu0
        %v2709 = vadd.f32 0.0, %v2708
        %2710 = vmatprep.mubr.bf16.mxu0 0
        %2711 = vmatmul.mubr.bf16.gmra.mrb[0].mxu0 %v2189
        %v2712 = vpop.f32.mrb[0].mxu0
        %v2713 = vadd.f32 0.0, %v2712
        %v2714 = vpop.f32.mrb[0].mxu0
        %v2715 = vadd.f32 0.0, %v2714
        %v2716 = vpop.f32.mrb[0].mxu0
        %v2717 = vadd.f32 0.0, %v2716
        %v2718 = vpop.f32.mrb[0].mxu0
        %v2719 = vadd.f32 0.0, %v2718
        %2720 = vmatprep.mubr.bf16.mxu0 0
        %2721 = vmatmul.mubr.bf16.gmra.mrb[0].mxu0 %v2192
        %v2722 = vpop.f32.mrb[0].mxu0
        %v2723 = vadd.f32 0.0, %v2722
        %v2724 = vpop.f32.mrb[0].mxu0
        %v2725 = vadd.f32 0.0, %v2724
        %v2726 = vpop.f32.mrb[0].mxu0
        %v2727 = vadd.f32 0.0, %v2726
        %v2728 = vpop.f32.mrb[0].mxu0
        %v2729 = vadd.f32 0.0, %v2728
        %2730 = vmatprep.mubr.bf16.mxu0 0
        %2731 = vmatmul.mubr.bf16.gmra.mrb[0].mxu0 %v2195
        %v2732 = vpop.f32.mrb[0].mxu0
        %v2733 = vadd.f32 0.0, %v2732
        %v2734 = vpop.f32.mrb[0].mxu0
        %v2735 = vadd.f32 0.0, %v2734
        %v2736 = vpop.f32.mrb[0].mxu0
        %v2737 = vadd.f32 0.0, %v2736
        %v2738 = vpop.f32.mrb[0].mxu0
        %v2739 = vadd.f32 0.0, %v2738
        %2740 = vmatprep.mubr.bf16.mxu0 0
        %2741 = vmatmul.mubr.bf16.gmra.mrb[0].mxu0 %v2198
        %v2742 = vpop.f32.mrb[0].mxu0
        %v2743 = vadd.f32 0.0, %v2742
        %v2744 = vpop.f32.mrb[0].mxu0
        %v2745 = vadd.f32 0.0, %v2744
        %v2746 = vpop.f32.mrb[0].mxu0
        %v2747 = vadd.f32 0.0, %v2746
        %v2748 = vpop.f32.mrb[0].mxu0
        %v2749 = vadd.f32 0.0, %v2748
        %2750 = vmatprep.mubr.bf16.mxu0 0
        %2751 = vmatmul.mubr.bf16.gmra.mrb[0].mxu0 %v2201
        %v2752 = vpop.f32.mrb[0].mxu0
        %v2753 = vadd.f32 0.0, %v2752
        %v2754 = vpop.f32.mrb[0].mxu0
        %v2755 = vadd.f32 0.0, %v2754
        %v2756 = vpop.f32.mrb[0].mxu0
        %v2757 = vadd.f32 0.0, %v2756
        %v2758 = vpop.f32.mrb[0].mxu0
        %v2759 = vadd.f32 0.0, %v2758
        %2760 = vmatprep.mubr.bf16.mxu0 0
        %2761 = vmatmul.mubr.bf16.gmra.mrb[0].mxu0 %v2204
        %v2762 = vpop.f32.mrb[0].mxu0
        %v2763 = vadd.f32 0.0, %v2762
        %v2764 = vpop.f32.mrb[0].mxu0
        %v2765 = vadd.f32 0.0, %v2764
        %v2766 = vpop.f32.mrb[0].mxu0
        %v2767 = vadd.f32 0.0, %v2766
        %v2768 = vpop.f32.mrb[0].mxu0
        %v2769 = vadd.f32 0.0, %v2768
        %2770 = vmatprep.mubr.bf16.mxu0 0
        %2771 = vmatmul.mubr.bf16.gmra.mrb[0].mxu0 %v2207
        %v2772 = vpop.f32.mrb[0].mxu0
        %v2773 = vadd.f32 0.0, %v2772
        %v2774 = vpop.f32.mrb[0].mxu0
        %v2775 = vadd.f32 0.0, %v2774
        %v2776 = vpop.f32.mrb[0].mxu0
        %v2777 = vadd.f32 0.0, %v2776
        %v2778 = vpop.f32.mrb[0].mxu0
        %v2779 = vadd.f32 0.0, %v2778
        %2780 = vmatprep.mubr.bf16.mxu0 0
        %2781 = vmatmul.mubr.bf16.gmra.mrb[0].mxu0 %v2210
        %v2782 = vpop.f32.mrb[0].mxu0
        %v2783 = vadd.f32 0.0, %v2782
        %v2784 = vpop.f32.mrb[0].mxu0
        %v2785 = vadd.f32 0.0, %v2784
        %v2786 = vpop.f32.mrb[0].mxu0
        %v2787 = vadd.f32 0.0, %v2786
        %v2788 = vpop.f32.mrb[0].mxu0
        %v2789 = vadd.f32 0.0, %v2788
        %2790 = vdwg.mxu0
        %2791 = vmatprep.subr.bf16.mxu0 %v530
        %2792 = vmatpush1.bf16.msra.mxu0 %v529
        %2793 = vmatprep.subr.bf16.mxu0 0
        %2794 = vmatpush1.bf16.msra.mxu0 0
        %2795 = vmatprep.subr.bf16.mxu0 0
        %2796 = vmatpush1.bf16.msra.mxu0 0
        %2797 = vmatprep.subr.bf16.mxu0 0
        %2798 = vmatpush1.bf16.msra.mxu0 0
        %2799 = vmatprep.subr.bf16.mxu0 0
        %2800 = vmatpush1.bf16.msra.mxu0 0
        %2801 = vmatprep.subr.bf16.mxu0 0
        %2802 = vmatpush1.bf16.msra.mxu0 0
        %2803 = vmatprep.subr.bf16.mxu0 0
        %2804 = vmatpush1.bf16.msra.mxu0 0
        %2805 = vmatprep.subr.bf16.mxu0 0
        %2806 = vmatpush1.bf16.msra.mxu0 0
        %2807 = vmatprep.subr.bf16.mxu0 0
        %2808 = vmatpush1.bf16.msra.mxu0 0
        %2809 = vmatprep.subr.bf16.mxu0 0
        %2810 = vmatpush1.bf16.msra.mxu0 0
        %2811 = vmatprep.subr.bf16.mxu0 0
        %2812 = vmatpush1.bf16.msra.mxu0 0
        %2813 = vmatprep.subr.bf16.mxu0 0
        %2814 = vmatpush1.bf16.msra.mxu0 0
        %2815 = vmatprep.subr.bf16.mxu0 0
        %2816 = vmatpush1.bf16.msra.mxu0 0
        %2817 = vmatprep.subr.bf16.mxu0 0
        %2818 = vmatpush1.bf16.msra.mxu0 0
        %2819 = vmatprep.subr.bf16.mxu0 0
        %2820 = vmatpush1.bf16.msra.mxu0 0
        %2821 = vmatprep.subr.bf16.mxu0 0
        %2822 = vmatpush1.bf16.msra.mxu0 0
        %2823 = vmatprep.mubr.bf16.mxu0 0
        %2824 = vmatmul.mubr.bf16.gmra.mrb[0].mxu0 %v2165
        %v2825 = vpop.f32.mrb[0].mxu0
        %v2826 = vadd.f32 0.0, %v2825
        %v2827 = vpop.f32.mrb[0].mxu0
        %v2828 = vadd.f32 0.0, %v2827
        %v2829 = vpop.f32.mrb[0].mxu0
        %v2830 = vadd.f32 0.0, %v2829
        %v2831 = vpop.f32.mrb[0].mxu0
        %v2832 = vadd.f32 0.0, %v2831
        %2833 = vmatprep.mubr.bf16.mxu0 0
        %2834 = vmatmul.mubr.bf16.gmra.mrb[0].mxu0 %v2168
        %v2835 = vpop.f32.mrb[0].mxu0
        %v2836 = vadd.f32 0.0, %v2835
        %v2837 = vpop.f32.mrb[0].mxu0
        %v2838 = vadd.f32 0.0, %v2837
        %v2839 = vpop.f32.mrb[0].mxu0
        %v2840 = vadd.f32 0.0, %v2839
        %v2841 = vpop.f32.mrb[0].mxu0
        %v2842 = vadd.f32 0.0, %v2841
        %2843 = vmatprep.mubr.bf16.mxu0 0
        %2844 = vmatmul.mubr.bf16.gmra.mrb[0].mxu0 %v2171
        %v2845 = vpop.f32.mrb[0].mxu0
        %v2846 = vadd.f32 0.0, %v2845
        %v2847 = vpop.f32.mrb[0].mxu0
        %v2848 = vadd.f32 0.0, %v2847
        %v2849 = vpop.f32.mrb[0].mxu0
        %v2850 = vadd.f32 0.0, %v2849
        %v2851 = vpop.f32.mrb[0].mxu0
        %v2852 = vadd.f32 0.0, %v2851
        %2853 = vmatprep.mubr.bf16.mxu0 0
        %2854 = vmatmul.mubr.bf16.gmra.mrb[0].mxu0 %v2174
        %v2855 = vpop.f32.mrb[0].mxu0
        %v2856 = vadd.f32 0.0, %v2855
        %v2857 = vpop.f32.mrb[0].mxu0
        %v2858 = vadd.f32 0.0, %v2857
        %v2859 = vpop.f32.mrb[0].mxu0
        %v2860 = vadd.f32 0.0, %v2859
        %v2861 = vpop.f32.mrb[0].mxu0
        %v2862 = vadd.f32 0.0, %v2861
        %2863 = vmatprep.mubr.bf16.mxu0 0
        %2864 = vmatmul.mubr.bf16.gmra.mrb[0].mxu0 %v2177
        %v2865 = vpop.f32.mrb[0].mxu0
        %v2866 = vadd.f32 0.0, %v2865
        %v2867 = vpop.f32.mrb[0].mxu0
        %v2868 = vadd.f32 0.0, %v2867
        %v2869 = vpop.f32.mrb[0].mxu0
        %v2870 = vadd.f32 0.0, %v2869
        %v2871 = vpop.f32.mrb[0].mxu0
        %v2872 = vadd.f32 0.0, %v2871
        %2873 = vmatprep.mubr.bf16.mxu0 0
        %2874 = vmatmul.mubr.bf16.gmra.mrb[0].mxu0 %v2180
        %v2875 = vpop.f32.mrb[0].mxu0
        %v2876 = vadd.f32 0.0, %v2875
        %v2877 = vpop.f32.mrb[0].mxu0
        %v2878 = vadd.f32 0.0, %v2877
        %v2879 = vpop.f32.mrb[0].mxu0
        %v2880 = vadd.f32 0.0, %v2879
        %v2881 = vpop.f32.mrb[0].mxu0
        %v2882 = vadd.f32 0.0, %v2881
        %2883 = vmatprep.mubr.bf16.mxu0 0
        %2884 = vmatmul.mubr.bf16.gmra.mrb[0].mxu0 %v2183
        %v2885 = vpop.f32.mrb[0].mxu0
        %v2886 = vadd.f32 0.0, %v2885
        %v2887 = vpop.f32.mrb[0].mxu0
        %v2888 = vadd.f32 0.0, %v2887
        %v2889 = vpop.f32.mrb[0].mxu0
        %v2890 = vadd.f32 0.0, %v2889
        %v2891 = vpop.f32.mrb[0].mxu0
        %v2892 = vadd.f32 0.0, %v2891
        %2893 = vmatprep.mubr.bf16.mxu0 0
        %2894 = vmatmul.mubr.bf16.gmra.mrb[0].mxu0 %v2186
        %v2895 = vpop.f32.mrb[0].mxu0
        %v2896 = vadd.f32 0.0, %v2895
        %v2897 = vpop.f32.mrb[0].mxu0
        %v2898 = vadd.f32 0.0, %v2897
        %v2899 = vpop.f32.mrb[0].mxu0
        %v2900 = vadd.f32 0.0, %v2899
        %v2901 = vpop.f32.mrb[0].mxu0
        %v2902 = vadd.f32 0.0, %v2901
        %2903 = vmatprep.mubr.bf16.mxu0 0
        %2904 = vmatmul.mubr.bf16.gmra.mrb[0].mxu0 %v2189
        %v2905 = vpop.f32.mrb[0].mxu0
        %v2906 = vadd.f32 0.0, %v2905
        %v2907 = vpop.f32.mrb[0].mxu0
        %v2908 = vadd.f32 0.0, %v2907
        %v2909 = vpop.f32.mrb[0].mxu0
        %v2910 = vadd.f32 0.0, %v2909
        %v2911 = vpop.f32.mrb[0].mxu0
        %v2912 = vadd.f32 0.0, %v2911
        %2913 = vmatprep.mubr.bf16.mxu0 0
        %2914 = vmatmul.mubr.bf16.gmra.mrb[0].mxu0 %v2192
        %v2915 = vpop.f32.mrb[0].mxu0
        %v2916 = vadd.f32 0.0, %v2915
        %v2917 = vpop.f32.mrb[0].mxu0
        %v2918 = vadd.f32 0.0, %v2917
        %v2919 = vpop.f32.mrb[0].mxu0
        %v2920 = vadd.f32 0.0, %v2919
        %v2921 = vpop.f32.mrb[0].mxu0
        %v2922 = vadd.f32 0.0, %v2921
        %2923 = vmatprep.mubr.bf16.mxu0 0
        %2924 = vmatmul.mubr.bf16.gmra.mrb[0].mxu0 %v2195
        %v2925 = vpop.f32.mrb[0].mxu0
        %v2926 = vadd.f32 0.0, %v2925
        %v2927 = vpop.f32.mrb[0].mxu0
        %v2928 = vadd.f32 0.0, %v2927
        %v2929 = vpop.f32.mrb[0].mxu0
        %v2930 = vadd.f32 0.0, %v2929
        %v2931 = vpop.f32.mrb[0].mxu0
        %v2932 = vadd.f32 0.0, %v2931
        %2933 = vmatprep.mubr.bf16.mxu0 0
        %2934 = vmatmul.mubr.bf16.gmra.mrb[0].mxu0 %v2198
        %v2935 = vpop.f32.mrb[0].mxu0
        %v2936 = vadd.f32 0.0, %v2935
        %v2937 = vpop.f32.mrb[0].mxu0
        %v2938 = vadd.f32 0.0, %v2937
        %v2939 = vpop.f32.mrb[0].mxu0
        %v2940 = vadd.f32 0.0, %v2939
        %v2941 = vpop.f32.mrb[0].mxu0
        %v2942 = vadd.f32 0.0, %v2941
        %2943 = vmatprep.mubr.bf16.mxu0 0
        %2944 = vmatmul.mubr.bf16.gmra.mrb[0].mxu0 %v2201
        %v2945 = vpop.f32.mrb[0].mxu0
        %v2946 = vadd.f32 0.0, %v2945
        %v2947 = vpop.f32.mrb[0].mxu0
        %v2948 = vadd.f32 0.0, %v2947
        %v2949 = vpop.f32.mrb[0].mxu0
        %v2950 = vadd.f32 0.0, %v2949
        %v2951 = vpop.f32.mrb[0].mxu0
        %v2952 = vadd.f32 0.0, %v2951
        %2953 = vmatprep.mubr.bf16.mxu0 0
        %2954 = vmatmul.mubr.bf16.gmra.mrb[0].mxu0 %v2204
        %v2955 = vpop.f32.mrb[0].mxu0
        %v2956 = vadd.f32 0.0, %v2955
        %v2957 = vpop.f32.mrb[0].mxu0
        %v2958 = vadd.f32 0.0, %v2957
        %v2959 = vpop.f32.mrb[0].mxu0
        %v2960 = vadd.f32 0.0, %v2959
        %v2961 = vpop.f32.mrb[0].mxu0
        %v2962 = vadd.f32 0.0, %v2961
        %2963 = vmatprep.mubr.bf16.mxu0 0
        %2964 = vmatmul.mubr.bf16.gmra.mrb[0].mxu0 %v2207
        %v2965 = vpop.f32.mrb[0].mxu0
        %v2966 = vadd.f32 0.0, %v2965
        %v2967 = vpop.f32.mrb[0].mxu0
        %v2968 = vadd.f32 0.0, %v2967
        %v2969 = vpop.f32.mrb[0].mxu0
        %v2970 = vadd.f32 0.0, %v2969
        %v2971 = vpop.f32.mrb[0].mxu0
        %v2972 = vadd.f32 0.0, %v2971
        %2973 = vmatprep.mubr.bf16.mxu0 0
        %2974 = vmatmul.mubr.bf16.gmra.mrb[0].mxu0 %v2210
        %v2975 = vpop.f32.mrb[0].mxu0
        %v2976 = vadd.f32 0.0, %v2975
        %v2977 = vpop.f32.mrb[0].mxu0
        %v2978 = vadd.f32 0.0, %v2977
        %v2979 = vpop.f32.mrb[0].mxu0
        %v2980 = vadd.f32 0.0, %v2979
        %v2981 = vpop.f32.mrb[0].mxu0
        %v2982 = vadd.f32 0.0, %v2981
        %2983 = vdwg.mxu0
        %v2984 = vadd.f32 %v1427, %v2247
        %v2985 = vadd.f32 %v1429, %v2249
        %v2986 = vadd.f32 %v1620, %v2440
        %v2987 = vadd.f32 %v1622, %v2442
        %v2988 = vadd.f32 %v1813, %v2633
        %v2989 = vadd.f32 %v1815, %v2635
        %v2990 = vadd.f32 %v2006, %v2826
        %v2991 = vadd.f32 %v2008, %v2828
        %v2992 = vadd.f32 %v1431, %v2251
        %v2993 = vadd.f32 %v1433, %v2253
        %v2994 = vadd.f32 %v1624, %v2444
        %v2995 = vadd.f32 %v1626, %v2446
        %v2996 = vadd.f32 %v1817, %v2637
        %v2997 = vadd.f32 %v1819, %v2639
        %v2998 = vadd.f32 %v2010, %v2830
        %v2999 = vadd.f32 %v2012, %v2832
        %v3000 = vadd.f32 %v1437, %v2257
        %v3001 = vadd.f32 %v1439, %v2259
        %v3002 = vadd.f32 %v1630, %v2450
        %v3003 = vadd.f32 %v1632, %v2452
        %v3004 = vadd.f32 %v1823, %v2643
        %v3005 = vadd.f32 %v1825, %v2645
        %v3006 = vadd.f32 %v2016, %v2836
        %v3007 = vadd.f32 %v2018, %v2838
        %v3008 = vadd.f32 %v1441, %v2261
        %v3009 = vadd.f32 %v1443, %v2263
        %v3010 = vadd.f32 %v1634, %v2454
        %v3011 = vadd.f32 %v1636, %v2456
        %v3012 = vadd.f32 %v1827, %v2647
        %v3013 = vadd.f32 %v1829, %v2649
        %v3014 = vadd.f32 %v2020, %v2840
        %v3015 = vadd.f32 %v2022, %v2842
        %v3016 = vadd.f32 %v1447, %v2267
        %v3017 = vadd.f32 %v1449, %v2269
        %v3018 = vadd.f32 %v1640, %v2460
        %v3019 = vadd.f32 %v1642, %v2462
        %v3020 = vadd.f32 %v1833, %v2653
        %v3021 = vadd.f32 %v1835, %v2655
        %v3022 = vadd.f32 %v2026, %v2846
        %v3023 = vadd.f32 %v2028, %v2848
        %v3024 = vadd.f32 %v1451, %v2271
        %v3025 = vadd.f32 %v1453, %v2273
        %v3026 = vadd.f32 %v1644, %v2464
        %v3027 = vadd.f32 %v1646, %v2466
        %v3028 = vadd.f32 %v1837, %v2657
        %v3029 = vadd.f32 %v1839, %v2659
        %v3030 = vadd.f32 %v2030, %v2850
        %v3031 = vadd.f32 %v2032, %v2852
        %v3032 = vadd.f32 %v1457, %v2277
        %v3033 = vadd.f32 %v1459, %v2279
        %v3034 = vadd.f32 %v1650, %v2470
        %v3035 = vadd.f32 %v1652, %v2472
        %v3036 = vadd.f32 %v1843, %v2663
        %v3037 = vadd.f32 %v1845, %v2665
        %v3038 = vadd.f32 %v2036, %v2856
        %v3039 = vadd.f32 %v2038, %v2858
        %v3040 = vadd.f32 %v1461, %v2281
        %v3041 = vadd.f32 %v1463, %v2283
        %v3042 = vadd.f32 %v1654, %v2474
        %v3043 = vadd.f32 %v1656, %v2476
        %v3044 = vadd.f32 %v1847, %v2667
        %v3045 = vadd.f32 %v1849, %v2669
        %v3046 = vadd.f32 %v2040, %v2860
        %v3047 = vadd.f32 %v2042, %v2862
        %v3048 = vadd.f32 %v1467, %v2287
        %v3049 = vadd.f32 %v1469, %v2289
        %v3050 = vadd.f32 %v1660, %v2480
        %v3051 = vadd.f32 %v1662, %v2482
        %v3052 = vadd.f32 %v1853, %v2673
        %v3053 = vadd.f32 %v1855, %v2675
        %v3054 = vadd.f32 %v2046, %v2866
        %v3055 = vadd.f32 %v2048, %v2868
        %v3056 = vadd.f32 %v1471, %v2291
        %v3057 = vadd.f32 %v1473, %v2293
        %v3058 = vadd.f32 %v1664, %v2484
        %v3059 = vadd.f32 %v1666, %v2486
        %v3060 = vadd.f32 %v1857, %v2677
        %v3061 = vadd.f32 %v1859, %v2679
        %v3062 = vadd.f32 %v2050, %v2870
        %v3063 = vadd.f32 %v2052, %v2872
        %v3064 = vadd.f32 %v1477, %v2297
        %v3065 = vadd.f32 %v1479, %v2299
        %v3066 = vadd.f32 %v1670, %v2490
        %v3067 = vadd.f32 %v1672, %v2492
        %v3068 = vadd.f32 %v1863, %v2683
        %v3069 = vadd.f32 %v1865, %v2685
        %v3070 = vadd.f32 %v2056, %v2876
        %v3071 = vadd.f32 %v2058, %v2878
        %v3072 = vadd.f32 %v1481, %v2301
        %v3073 = vadd.f32 %v1483, %v2303
        %v3074 = vadd.f32 %v1674, %v2494
        %v3075 = vadd.f32 %v1676, %v2496
        %v3076 = vadd.f32 %v1867, %v2687
        %v3077 = vadd.f32 %v1869, %v2689
        %v3078 = vadd.f32 %v2060, %v2880
        %v3079 = vadd.f32 %v2062, %v2882
        %v3080 = vadd.f32 %v1487, %v2307
        %v3081 = vadd.f32 %v1489, %v2309
        %v3082 = vadd.f32 %v1680, %v2500
        %v3083 = vadd.f32 %v1682, %v2502
        %v3084 = vadd.f32 %v1873, %v2693
        %v3085 = vadd.f32 %v1875, %v2695
        %v3086 = vadd.f32 %v2066, %v2886
        %v3087 = vadd.f32 %v2068, %v2888
        %v3088 = vadd.f32 %v1491, %v2311
        %v3089 = vadd.f32 %v1493, %v2313
        %v3090 = vadd.f32 %v1684, %v2504
        %v3091 = vadd.f32 %v1686, %v2506
        %v3092 = vadd.f32 %v1877, %v2697
        %v3093 = vadd.f32 %v1879, %v2699
        %v3094 = vadd.f32 %v2070, %v2890
        %v3095 = vadd.f32 %v2072, %v2892
        %v3096 = vadd.f32 %v1497, %v2317
        %v3097 = vadd.f32 %v1499, %v2319
        %v3098 = vadd.f32 %v1690, %v2510
        %v3099 = vadd.f32 %v1692, %v2512
        %v3100 = vadd.f32 %v1883, %v2703
        %v3101 = vadd.f32 %v1885, %v2705
        %v3102 = vadd.f32 %v2076, %v2896
        %v3103 = vadd.f32 %v2078, %v2898
        %v3104 = vadd.f32 %v1501, %v2321
        %v3105 = vadd.f32 %v1503, %v2323
        %v3106 = vadd.f32 %v1694, %v2514
        %v3107 = vadd.f32 %v1696, %v2516
        %v3108 = vadd.f32 %v1887, %v2707
        %v3109 = vadd.f32 %v1889, %v2709
        %v3110 = vadd.f32 %v2080, %v2900
        %v3111 = vadd.f32 %v2082, %v2902
        %v3112 = vadd.f32 %v1507, %v2327
        %v3113 = vadd.f32 %v1509, %v2329
        %v3114 = vadd.f32 %v1700, %v2520
        %v3115 = vadd.f32 %v1702, %v2522
        %v3116 = vadd.f32 %v1893, %v2713
        %v3117 = vadd.f32 %v1895, %v2715
        %v3118 = vadd.f32 %v2086, %v2906
        %v3119 = vadd.f32 %v2088, %v2908
        %v3120 = vadd.f32 %v1511, %v2331
        %v3121 = vadd.f32 %v1513, %v2333
        %v3122 = vadd.f32 %v1704, %v2524
        %v3123 = vadd.f32 %v1706, %v2526
        %v3124 = vadd.f32 %v1897, %v2717
        %v3125 = vadd.f32 %v1899, %v2719
        %v3126 = vadd.f32 %v2090, %v2910
        %v3127 = vadd.f32 %v2092, %v2912
        %v3128 = vadd.f32 %v1517, %v2337
        %v3129 = vadd.f32 %v1519, %v2339
        %v3130 = vadd.f32 %v1710, %v2530
        %v3131 = vadd.f32 %v1712, %v2532
        %v3132 = vadd.f32 %v1903, %v2723
        %v3133 = vadd.f32 %v1905, %v2725
        %v3134 = vadd.f32 %v2096, %v2916
        %v3135 = vadd.f32 %v2098, %v2918
        %v3136 = vadd.f32 %v1521, %v2341
        %v3137 = vadd.f32 %v1523, %v2343
        %v3138 = vadd.f32 %v1714, %v2534
        %v3139 = vadd.f32 %v1716, %v2536
        %v3140 = vadd.f32 %v1907, %v2727
        %v3141 = vadd.f32 %v1909, %v2729
        %v3142 = vadd.f32 %v2100, %v2920
        %v3143 = vadd.f32 %v2102, %v2922
        %v3144 = vadd.f32 %v1527, %v2347
        %v3145 = vadd.f32 %v1529, %v2349
        %v3146 = vadd.f32 %v1720, %v2540
        %v3147 = vadd.f32 %v1722, %v2542
        %v3148 = vadd.f32 %v1913, %v2733
        %v3149 = vadd.f32 %v1915, %v2735
        %v3150 = vadd.f32 %v2106, %v2926
        %v3151 = vadd.f32 %v2108, %v2928
        %v3152 = vadd.f32 %v1531, %v2351
        %v3153 = vadd.f32 %v1533, %v2353
        %v3154 = vadd.f32 %v1724, %v2544
        %v3155 = vadd.f32 %v1726, %v2546
        %v3156 = vadd.f32 %v1917, %v2737
        %v3157 = vadd.f32 %v1919, %v2739
        %v3158 = vadd.f32 %v2110, %v2930
        %v3159 = vadd.f32 %v2112, %v2932
        %v3160 = vadd.f32 %v1537, %v2357
        %v3161 = vadd.f32 %v1539, %v2359
        %v3162 = vadd.f32 %v1730, %v2550
        %v3163 = vadd.f32 %v1732, %v2552
        %v3164 = vadd.f32 %v1923, %v2743
        %v3165 = vadd.f32 %v1925, %v2745
        %v3166 = vadd.f32 %v2116, %v2936
        %v3167 = vadd.f32 %v2118, %v2938
        %v3168 = vadd.f32 %v1541, %v2361
        %v3169 = vadd.f32 %v1543, %v2363
        %v3170 = vadd.f32 %v1734, %v2554
        %v3171 = vadd.f32 %v1736, %v2556
        %v3172 = vadd.f32 %v1927, %v2747
        %v3173 = vadd.f32 %v1929, %v2749
        %v3174 = vadd.f32 %v2120, %v2940
        %v3175 = vadd.f32 %v2122, %v2942
        %v3176 = vadd.f32 %v1547, %v2367
        %v3177 = vadd.f32 %v1549, %v2369
        %v3178 = vadd.f32 %v1740, %v2560
        %v3179 = vadd.f32 %v1742, %v2562
        %v3180 = vadd.f32 %v1933, %v2753
        %v3181 = vadd.f32 %v1935, %v2755
        %v3182 = vadd.f32 %v2126, %v2946
        %v3183 = vadd.f32 %v2128, %v2948
        %v3184 = vadd.f32 %v1551, %v2371
        %v3185 = vadd.f32 %v1553, %v2373
        %v3186 = vadd.f32 %v1744, %v2564
        %v3187 = vadd.f32 %v1746, %v2566
        %v3188 = vadd.f32 %v1937, %v2757
        %v3189 = vadd.f32 %v1939, %v2759
        %v3190 = vadd.f32 %v2130, %v2950
        %v3191 = vadd.f32 %v2132, %v2952
        %v3192 = vadd.f32 %v1557, %v2377
        %v3193 = vadd.f32 %v1559, %v2379
        %v3194 = vadd.f32 %v1750, %v2570
        %v3195 = vadd.f32 %v1752, %v2572
        %v3196 = vadd.f32 %v1943, %v2763
        %v3197 = vadd.f32 %v1945, %v2765
        %v3198 = vadd.f32 %v2136, %v2956
        %v3199 = vadd.f32 %v2138, %v2958
        %v3200 = vadd.f32 %v1561, %v2381
        %v3201 = vadd.f32 %v1563, %v2383
        %v3202 = vadd.f32 %v1754, %v2574
        %v3203 = vadd.f32 %v1756, %v2576
        %v3204 = vadd.f32 %v1947, %v2767
        %v3205 = vadd.f32 %v1949, %v2769
        %v3206 = vadd.f32 %v2140, %v2960
        %v3207 = vadd.f32 %v2142, %v2962
        %v3208 = vadd.f32 %v1567, %v2387
        %v3209 = vadd.f32 %v1569, %v2389
        %v3210 = vadd.f32 %v1760, %v2580
        %v3211 = vadd.f32 %v1762, %v2582
        %v3212 = vadd.f32 %v1953, %v2773
        %v3213 = vadd.f32 %v1955, %v2775
        %v3214 = vadd.f32 %v2146, %v2966
        %v3215 = vadd.f32 %v2148, %v2968
        %v3216 = vadd.f32 %v1571, %v2391
        %v3217 = vadd.f32 %v1573, %v2393
        %v3218 = vadd.f32 %v1764, %v2584
        %v3219 = vadd.f32 %v1766, %v2586
        %v3220 = vadd.f32 %v1957, %v2777
        %v3221 = vadd.f32 %v1959, %v2779
        %v3222 = vadd.f32 %v2150, %v2970
        %v3223 = vadd.f32 %v2152, %v2972
        %v3224 = vadd.f32 %v1577, %v2397
        %v3225 = vadd.f32 %v1579, %v2399
        %v3226 = vadd.f32 %v1770, %v2590
        %v3227 = vadd.f32 %v1772, %v2592
        %v3228 = vadd.f32 %v1963, %v2783
        %v3229 = vadd.f32 %v1965, %v2785
        %v3230 = vadd.f32 %v2156, %v2976
        %v3231 = vadd.f32 %v2158, %v2978
        %v3232 = vadd.f32 %v1581, %v2401
        %v3233 = vadd.f32 %v1583, %v2403
        %v3234 = vadd.f32 %v1774, %v2594
        %v3235 = vadd.f32 %v1776, %v2596
        %v3236 = vadd.f32 %v1967, %v2787
        %v3237 = vadd.f32 %v1969, %v2789
        %v3238 = vadd.f32 %v2160, %v2980
        %v3239 = vadd.f32 %v2162, %v2982
        %v3240 = vld [vmem:[%s2] sm:$0xff]
        %v3242 = vlaneseq
        %v3243 = vshrl.u32 %v3242, 7
        %v3244 = vsub.s32 0, %v3243
        %v3245 = vrot.slane %v3240, %v3244
        %v3246 = vlaneseq
        %v3247 = vshrl.u32 %v3246, 7
        %v3248 = vsub.s32 1, %v3247
        %v3249 = vrot.slane %v3240, %v3248
        %v3250 = vlaneseq
        %v3251 = vshrl.u32 %v3250, 7
        %v3252 = vsub.s32 2, %v3251
        %v3253 = vrot.slane %v3240, %v3252
        %v3254 = vlaneseq
        %v3255 = vshrl.u32 %v3254, 7
        %v3256 = vsub.s32 3, %v3255
        %v3257 = vrot.slane %v3240, %v3256
        %v3258 = vlaneseq
        %v3259 = vshrl.u32 %v3258, 7
        %v3260 = vsub.s32 4, %v3259
        %v3261 = vrot.slane %v3240, %v3260
        %v3262 = vlaneseq
        %v3263 = vshrl.u32 %v3262, 7
        %v3264 = vsub.s32 5, %v3263
        %v3265 = vrot.slane %v3240, %v3264
        %v3266 = vlaneseq
        %v3267 = vshrl.u32 %v3266, 7
        %v3268 = vsub.s32 6, %v3267
        %v3269 = vrot.slane %v3240, %v3268
        %v3270 = vlaneseq
        %v3271 = vshrl.u32 %v3270, 7
        %v3272 = vsub.s32 7, %v3271
        %v3273 = vrot.slane %v3240, %v3272
        %v3282 = vadd.f32 %v2984, %v3245
        %v3283 = vadd.f32 %v2985, %v3249
        %v3284 = vadd.f32 %v2986, %v3253
        %v3285 = vadd.f32 %v2987, %v3257
        %v3286 = vadd.f32 %v2988, %v3261
        %v3287 = vadd.f32 %v2989, %v3265
        %v3288 = vadd.f32 %v2990, %v3269
        %v3289 = vadd.f32 %v2991, %v3273
        %v3290 = vadd.f32 %v2992, %v3245
        %v3291 = vadd.f32 %v2993, %v3249
        %v3292 = vadd.f32 %v2994, %v3253
        %v3293 = vadd.f32 %v2995, %v3257
        %v3294 = vadd.f32 %v2996, %v3261
        %v3295 = vadd.f32 %v2997, %v3265
        %v3296 = vadd.f32 %v2998, %v3269
        %v3297 = vadd.f32 %v2999, %v3273
        %v3298 = vadd.f32 %v3000, %v3245
        %v3299 = vadd.f32 %v3001, %v3249
        %v3300 = vadd.f32 %v3002, %v3253
        %v3301 = vadd.f32 %v3003, %v3257
        %v3302 = vadd.f32 %v3004, %v3261
        %v3303 = vadd.f32 %v3005, %v3265
        %v3304 = vadd.f32 %v3006, %v3269
        %v3305 = vadd.f32 %v3007, %v3273
        %v3306 = vadd.f32 %v3008, %v3245
        %v3307 = vadd.f32 %v3009, %v3249
        %v3308 = vadd.f32 %v3010, %v3253
        %v3309 = vadd.f32 %v3011, %v3257
        %v3310 = vadd.f32 %v3012, %v3261
        %v3311 = vadd.f32 %v3013, %v3265
        %v3312 = vadd.f32 %v3014, %v3269
        %v3313 = vadd.f32 %v3015, %v3273
        %v3314 = vadd.f32 %v3016, %v3245
        %v3315 = vadd.f32 %v3017, %v3249
        %v3316 = vadd.f32 %v3018, %v3253
        %v3317 = vadd.f32 %v3019, %v3257
        %v3318 = vadd.f32 %v3020, %v3261
        %v3319 = vadd.f32 %v3021, %v3265
        %v3320 = vadd.f32 %v3022, %v3269
        %v3321 = vadd.f32 %v3023, %v3273
        %v3322 = vadd.f32 %v3024, %v3245
        %v3323 = vadd.f32 %v3025, %v3249
        %v3324 = vadd.f32 %v3026, %v3253
        %v3325 = vadd.f32 %v3027, %v3257
        %v3326 = vadd.f32 %v3028, %v3261
        %v3327 = vadd.f32 %v3029, %v3265
        %v3328 = vadd.f32 %v3030, %v3269
        %v3329 = vadd.f32 %v3031, %v3273
        %v3330 = vadd.f32 %v3032, %v3245
        %v3331 = vadd.f32 %v3033, %v3249
        %v3332 = vadd.f32 %v3034, %v3253
        %v3333 = vadd.f32 %v3035, %v3257
        %v3334 = vadd.f32 %v3036, %v3261
        %v3335 = vadd.f32 %v3037, %v3265
        %v3336 = vadd.f32 %v3038, %v3269
        %v3337 = vadd.f32 %v3039, %v3273
        %v3338 = vadd.f32 %v3040, %v3245
        %v3339 = vadd.f32 %v3041, %v3249
        %v3340 = vadd.f32 %v3042, %v3253
        %v3341 = vadd.f32 %v3043, %v3257
        %v3342 = vadd.f32 %v3044, %v3261
        %v3343 = vadd.f32 %v3045, %v3265
        %v3344 = vadd.f32 %v3046, %v3269
        %v3345 = vadd.f32 %v3047, %v3273
        %v3346 = vadd.f32 %v3048, %v3245
        %v3347 = vadd.f32 %v3049, %v3249
        %v3348 = vadd.f32 %v3050, %v3253
        %v3349 = vadd.f32 %v3051, %v3257
        %v3350 = vadd.f32 %v3052, %v3261
        %v3351 = vadd.f32 %v3053, %v3265
        %v3352 = vadd.f32 %v3054, %v3269
        %v3353 = vadd.f32 %v3055, %v3273
        %v3354 = vadd.f32 %v3056, %v3245
        %v3355 = vadd.f32 %v3057, %v3249
        %v3356 = vadd.f32 %v3058, %v3253
        %v3357 = vadd.f32 %v3059, %v3257
        %v3358 = vadd.f32 %v3060, %v3261
        %v3359 = vadd.f32 %v3061, %v3265
        %v3360 = vadd.f32 %v3062, %v3269
        %v3361 = vadd.f32 %v3063, %v3273
        %v3362 = vadd.f32 %v3064, %v3245
        %v3363 = vadd.f32 %v3065, %v3249
        %v3364 = vadd.f32 %v3066, %v3253
        %v3365 = vadd.f32 %v3067, %v3257
        %v3366 = vadd.f32 %v3068, %v3261
        %v3367 = vadd.f32 %v3069, %v3265
        %v3368 = vadd.f32 %v3070, %v3269
        %v3369 = vadd.f32 %v3071, %v3273
        %v3370 = vadd.f32 %v3072, %v3245
        %v3371 = vadd.f32 %v3073, %v3249
        %v3372 = vadd.f32 %v3074, %v3253
        %v3373 = vadd.f32 %v3075, %v3257
        %v3374 = vadd.f32 %v3076, %v3261
        %v3375 = vadd.f32 %v3077, %v3265
        %v3376 = vadd.f32 %v3078, %v3269
        %v3377 = vadd.f32 %v3079, %v3273
        %v3378 = vadd.f32 %v3080, %v3245
        %v3379 = vadd.f32 %v3081, %v3249
        %v3380 = vadd.f32 %v3082, %v3253
        %v3381 = vadd.f32 %v3083, %v3257
        %v3382 = vadd.f32 %v3084, %v3261
        %v3383 = vadd.f32 %v3085, %v3265
        %v3384 = vadd.f32 %v3086, %v3269
        %v3385 = vadd.f32 %v3087, %v3273
        %v3386 = vadd.f32 %v3088, %v3245
        %v3387 = vadd.f32 %v3089, %v3249
        %v3388 = vadd.f32 %v3090, %v3253
        %v3389 = vadd.f32 %v3091, %v3257
        %v3390 = vadd.f32 %v3092, %v3261
        %v3391 = vadd.f32 %v3093, %v3265
        %v3392 = vadd.f32 %v3094, %v3269
        %v3393 = vadd.f32 %v3095, %v3273
        %v3394 = vadd.f32 %v3096, %v3245
        %v3395 = vadd.f32 %v3097, %v3249
        %v3396 = vadd.f32 %v3098, %v3253
        %v3397 = vadd.f32 %v3099, %v3257
        %v3398 = vadd.f32 %v3100, %v3261
        %v3399 = vadd.f32 %v3101, %v3265
        %v3400 = vadd.f32 %v3102, %v3269
        %v3401 = vadd.f32 %v3103, %v3273
        %v3402 = vadd.f32 %v3104, %v3245
        %v3403 = vadd.f32 %v3105, %v3249
        %v3404 = vadd.f32 %v3106, %v3253
        %v3405 = vadd.f32 %v3107, %v3257
        %v3406 = vadd.f32 %v3108, %v3261
        %v3407 = vadd.f32 %v3109, %v3265
        %v3408 = vadd.f32 %v3110, %v3269
        %v3409 = vadd.f32 %v3111, %v3273
        %v3410 = vadd.f32 %v3112, %v3245
        %v3411 = vadd.f32 %v3113, %v3249
        %v3412 = vadd.f32 %v3114, %v3253
        %v3413 = vadd.f32 %v3115, %v3257
        %v3414 = vadd.f32 %v3116, %v3261
        %v3415 = vadd.f32 %v3117, %v3265
        %v3416 = vadd.f32 %v3118, %v3269
        %v3417 = vadd.f32 %v3119, %v3273
        %v3418 = vadd.f32 %v3120, %v3245
        %v3419 = vadd.f32 %v3121, %v3249
        %v3420 = vadd.f32 %v3122, %v3253
        %v3421 = vadd.f32 %v3123, %v3257
        %v3422 = vadd.f32 %v3124, %v3261
        %v3423 = vadd.f32 %v3125, %v3265
        %v3424 = vadd.f32 %v3126, %v3269
        %v3425 = vadd.f32 %v3127, %v3273
        %v3426 = vadd.f32 %v3128, %v3245
        %v3427 = vadd.f32 %v3129, %v3249
        %v3428 = vadd.f32 %v3130, %v3253
        %v3429 = vadd.f32 %v3131, %v3257
        %v3430 = vadd.f32 %v3132, %v3261
        %v3431 = vadd.f32 %v3133, %v3265
        %v3432 = vadd.f32 %v3134, %v3269
        %v3433 = vadd.f32 %v3135, %v3273
        %v3434 = vadd.f32 %v3136, %v3245
        %v3435 = vadd.f32 %v3137, %v3249
        %v3436 = vadd.f32 %v3138, %v3253
        %v3437 = vadd.f32 %v3139, %v3257
        %v3438 = vadd.f32 %v3140, %v3261
        %v3439 = vadd.f32 %v3141, %v3265
        %v3440 = vadd.f32 %v3142, %v3269
        %v3441 = vadd.f32 %v3143, %v3273
        %v3442 = vadd.f32 %v3144, %v3245
        %v3443 = vadd.f32 %v3145, %v3249
        %v3444 = vadd.f32 %v3146, %v3253
        %v3445 = vadd.f32 %v3147, %v3257
        %v3446 = vadd.f32 %v3148, %v3261
        %v3447 = vadd.f32 %v3149, %v3265
        %v3448 = vadd.f32 %v3150, %v3269
        %v3449 = vadd.f32 %v3151, %v3273
        %v3450 = vadd.f32 %v3152, %v3245
        %v3451 = vadd.f32 %v3153, %v3249
        %v3452 = vadd.f32 %v3154, %v3253
        %v3453 = vadd.f32 %v3155, %v3257
        %v3454 = vadd.f32 %v3156, %v3261
        %v3455 = vadd.f32 %v3157, %v3265
        %v3456 = vadd.f32 %v3158, %v3269
        %v3457 = vadd.f32 %v3159, %v3273
        %v3458 = vadd.f32 %v3160, %v3245
        %v3459 = vadd.f32 %v3161, %v3249
        %v3460 = vadd.f32 %v3162, %v3253
        %v3461 = vadd.f32 %v3163, %v3257
        %v3462 = vadd.f32 %v3164, %v3261
        %v3463 = vadd.f32 %v3165, %v3265
        %v3464 = vadd.f32 %v3166, %v3269
        %v3465 = vadd.f32 %v3167, %v3273
        %v3466 = vadd.f32 %v3168, %v3245
        %v3467 = vadd.f32 %v3169, %v3249
        %v3468 = vadd.f32 %v3170, %v3253
        %v3469 = vadd.f32 %v3171, %v3257
        %v3470 = vadd.f32 %v3172, %v3261
        %v3471 = vadd.f32 %v3173, %v3265
        %v3472 = vadd.f32 %v3174, %v3269
        %v3473 = vadd.f32 %v3175, %v3273
        %v3474 = vadd.f32 %v3176, %v3245
        %v3475 = vadd.f32 %v3177, %v3249
        %v3476 = vadd.f32 %v3178, %v3253
        %v3477 = vadd.f32 %v3179, %v3257
        %v3478 = vadd.f32 %v3180, %v3261
        %v3479 = vadd.f32 %v3181, %v3265
        %v3480 = vadd.f32 %v3182, %v3269
        %v3481 = vadd.f32 %v3183, %v3273
        %v3482 = vadd.f32 %v3184, %v3245
        %v3483 = vadd.f32 %v3185, %v3249
        %v3484 = vadd.f32 %v3186, %v3253
        %v3485 = vadd.f32 %v3187, %v3257
        %v3486 = vadd.f32 %v3188, %v3261
        %v3487 = vadd.f32 %v3189, %v3265
        %v3488 = vadd.f32 %v3190, %v3269
        %v3489 = vadd.f32 %v3191, %v3273
        %v3490 = vadd.f32 %v3192, %v3245
        %v3491 = vadd.f32 %v3193, %v3249
        %v3492 = vadd.f32 %v3194, %v3253
        %v3493 = vadd.f32 %v3195, %v3257
        %v3494 = vadd.f32 %v3196, %v3261
        %v3495 = vadd.f32 %v3197, %v3265
        %v3496 = vadd.f32 %v3198, %v3269
        %v3497 = vadd.f32 %v3199, %v3273
        %v3498 = vadd.f32 %v3200, %v3245
        %v3499 = vadd.f32 %v3201, %v3249
        %v3500 = vadd.f32 %v3202, %v3253
        %v3501 = vadd.f32 %v3203, %v3257
        %v3502 = vadd.f32 %v3204, %v3261
        %v3503 = vadd.f32 %v3205, %v3265
        %v3504 = vadd.f32 %v3206, %v3269
        %v3505 = vadd.f32 %v3207, %v3273
        %v3506 = vadd.f32 %v3208, %v3245
        %v3507 = vadd.f32 %v3209, %v3249
        %v3508 = vadd.f32 %v3210, %v3253
        %v3509 = vadd.f32 %v3211, %v3257
        %v3510 = vadd.f32 %v3212, %v3261
        %v3511 = vadd.f32 %v3213, %v3265
        %v3512 = vadd.f32 %v3214, %v3269
        %v3513 = vadd.f32 %v3215, %v3273
        %v3514 = vadd.f32 %v3216, %v3245
        %v3515 = vadd.f32 %v3217, %v3249
        %v3516 = vadd.f32 %v3218, %v3253
        %v3517 = vadd.f32 %v3219, %v3257
        %v3518 = vadd.f32 %v3220, %v3261
        %v3519 = vadd.f32 %v3221, %v3265
        %v3520 = vadd.f32 %v3222, %v3269
        %v3521 = vadd.f32 %v3223, %v3273
        %v3522 = vadd.f32 %v3224, %v3245
        %v3523 = vadd.f32 %v3225, %v3249
        %v3524 = vadd.f32 %v3226, %v3253
        %v3525 = vadd.f32 %v3227, %v3257
        %v3526 = vadd.f32 %v3228, %v3261
        %v3527 = vadd.f32 %v3229, %v3265
        %v3528 = vadd.f32 %v3230, %v3269
        %v3529 = vadd.f32 %v3231, %v3273
        %v3530 = vadd.f32 %v3232, %v3245
        %v3531 = vadd.f32 %v3233, %v3249
        %v3532 = vadd.f32 %v3234, %v3253
        %v3533 = vadd.f32 %v3235, %v3257
        %v3534 = vadd.f32 %v3236, %v3261
        %v3535 = vadd.f32 %v3237, %v3265
        %v3536 = vadd.f32 %v3238, %v3269
        %v3537 = vadd.f32 %v3239, %v3273
        %v3538 = vtanh.pop %v3282
        %v3539 = vtanh.pop %v3283
        %v3540 = vtanh.pop %v3284
        %v3541 = vtanh.pop %v3285
        %v3542 = vtanh.pop %v3286
        %v3543 = vtanh.pop %v3287
        %v3544 = vtanh.pop %v3288
        %v3545 = vtanh.pop %v3289
        %v3546 = vtanh.pop %v3290
        %v3547 = vtanh.pop %v3291
        %v3548 = vtanh.pop %v3292
        %v3549 = vtanh.pop %v3293
        %v3550 = vtanh.pop %v3294
        %v3551 = vtanh.pop %v3295
        %v3552 = vtanh.pop %v3296
        %v3553 = vtanh.pop %v3297
        %v3554 = vtanh.pop %v3298
        %v3555 = vtanh.pop %v3299
        %v3556 = vtanh.pop %v3300
        %v3557 = vtanh.pop %v3301
        %v3558 = vtanh.pop %v3302
        %v3559 = vtanh.pop %v3303
        %v3560 = vtanh.pop %v3304
        %v3561 = vtanh.pop %v3305
        %v3562 = vtanh.pop %v3306
        %v3563 = vtanh.pop %v3307
        %v3564 = vtanh.pop %v3308
        %v3565 = vtanh.pop %v3309
        %v3566 = vtanh.pop %v3310
        %v3567 = vtanh.pop %v3311
        %v3568 = vtanh.pop %v3312
        %v3569 = vtanh.pop %v3313
        %v3570 = vtanh.pop %v3314
        %v3571 = vtanh.pop %v3315
        %v3572 = vtanh.pop %v3316
        %v3573 = vtanh.pop %v3317
        %v3574 = vtanh.pop %v3318
        %v3575 = vtanh.pop %v3319
        %v3576 = vtanh.pop %v3320
        %v3577 = vtanh.pop %v3321
        %v3578 = vtanh.pop %v3322
        %v3579 = vtanh.pop %v3323
        %v3580 = vtanh.pop %v3324
        %v3581 = vtanh.pop %v3325
        %v3582 = vtanh.pop %v3326
        %v3583 = vtanh.pop %v3327
        %v3584 = vtanh.pop %v3328
        %v3585 = vtanh.pop %v3329
        %v3586 = vtanh.pop %v3330
        %v3587 = vtanh.pop %v3331
        %v3588 = vtanh.pop %v3332
        %v3589 = vtanh.pop %v3333
        %v3590 = vtanh.pop %v3334
        %v3591 = vtanh.pop %v3335
        %v3592 = vtanh.pop %v3336
        %v3593 = vtanh.pop %v3337
        %v3594 = vtanh.pop %v3338
        %v3595 = vtanh.pop %v3339
        %v3596 = vtanh.pop %v3340
        %v3597 = vtanh.pop %v3341
        %v3598 = vtanh.pop %v3342
        %v3599 = vtanh.pop %v3343
        %v3600 = vtanh.pop %v3344
        %v3601 = vtanh.pop %v3345
        %v3602 = vtanh.pop %v3346
        %v3603 = vtanh.pop %v3347
        %v3604 = vtanh.pop %v3348
        %v3605 = vtanh.pop %v3349
        %v3606 = vtanh.pop %v3350
        %v3607 = vtanh.pop %v3351
        %v3608 = vtanh.pop %v3352
        %v3609 = vtanh.pop %v3353
        %v3610 = vtanh.pop %v3354
        %v3611 = vtanh.pop %v3355
        %v3612 = vtanh.pop %v3356
        %v3613 = vtanh.pop %v3357
        %v3614 = vtanh.pop %v3358
        %v3615 = vtanh.pop %v3359
        %v3616 = vtanh.pop %v3360
        %v3617 = vtanh.pop %v3361
        %v3618 = vtanh.pop %v3362
        %v3619 = vtanh.pop %v3363
        %v3620 = vtanh.pop %v3364
        %v3621 = vtanh.pop %v3365
        %v3622 = vtanh.pop %v3366
        %v3623 = vtanh.pop %v3367
        %v3624 = vtanh.pop %v3368
        %v3625 = vtanh.pop %v3369
        %v3626 = vtanh.pop %v3370
        %v3627 = vtanh.pop %v3371
        %v3628 = vtanh.pop %v3372
        %v3629 = vtanh.pop %v3373
        %v3630 = vtanh.pop %v3374
        %v3631 = vtanh.pop %v3375
        %v3632 = vtanh.pop %v3376
        %v3633 = vtanh.pop %v3377
        %v3634 = vtanh.pop %v3378
        %v3635 = vtanh.pop %v3379
        %v3636 = vtanh.pop %v3380
        %v3637 = vtanh.pop %v3381
        %v3638 = vtanh.pop %v3382
        %v3639 = vtanh.pop %v3383
        %v3640 = vtanh.pop %v3384
        %v3641 = vtanh.pop %v3385
        %v3642 = vtanh.pop %v3386
        %v3643 = vtanh.pop %v3387
        %v3644 = vtanh.pop %v3388
        %v3645 = vtanh.pop %v3389
        %v3646 = vtanh.pop %v3390
        %v3647 = vtanh.pop %v3391
        %v3648 = vtanh.pop %v3392
        %v3649 = vtanh.pop %v3393
        %v3650 = vtanh.pop %v3394
        %v3651 = vtanh.pop %v3395
        %v3652 = vtanh.pop %v3396
        %v3653 = vtanh.pop %v3397
        %v3654 = vtanh.pop %v3398
        %v3655 = vtanh.pop %v3399
        %v3656 = vtanh.pop %v3400
        %v3657 = vtanh.pop %v3401
        %v3658 = vtanh.pop %v3402
        %v3659 = vtanh.pop %v3403
        %v3660 = vtanh.pop %v3404
        %v3661 = vtanh.pop %v3405
        %v3662 = vtanh.pop %v3406
        %v3663 = vtanh.pop %v3407
        %v3664 = vtanh.pop %v3408
        %v3665 = vtanh.pop %v3409
        %v3666 = vtanh.pop %v3410
        %v3667 = vtanh.pop %v3411
        %v3668 = vtanh.pop %v3412
        %v3669 = vtanh.pop %v3413
        %v3670 = vtanh.pop %v3414
        %v3671 = vtanh.pop %v3415
        %v3672 = vtanh.pop %v3416
        %v3673 = vtanh.pop %v3417
        %v3674 = vtanh.pop %v3418
        %v3675 = vtanh.pop %v3419
        %v3676 = vtanh.pop %v3420
        %v3677 = vtanh.pop %v3421
        %v3678 = vtanh.pop %v3422
        %v3679 = vtanh.pop %v3423
        %v3680 = vtanh.pop %v3424
        %v3681 = vtanh.pop %v3425
        %v3682 = vtanh.pop %v3426
        %v3683 = vtanh.pop %v3427
        %v3684 = vtanh.pop %v3428
        %v3685 = vtanh.pop %v3429
        %v3686 = vtanh.pop %v3430
        %v3687 = vtanh.pop %v3431
        %v3688 = vtanh.pop %v3432
        %v3689 = vtanh.pop %v3433
        %v3690 = vtanh.pop %v3434
        %v3691 = vtanh.pop %v3435
        %v3692 = vtanh.pop %v3436
        %v3693 = vtanh.pop %v3437
        %v3694 = vtanh.pop %v3438
        %v3695 = vtanh.pop %v3439
        %v3696 = vtanh.pop %v3440
        %v3697 = vtanh.pop %v3441
        %v3698 = vtanh.pop %v3442
        %v3699 = vtanh.pop %v3443
        %v3700 = vtanh.pop %v3444
        %v3701 = vtanh.pop %v3445
        %v3702 = vtanh.pop %v3446
        %v3703 = vtanh.pop %v3447
        %v3704 = vtanh.pop %v3448
        %v3705 = vtanh.pop %v3449
        %v3706 = vtanh.pop %v3450
        %v3707 = vtanh.pop %v3451
        %v3708 = vtanh.pop %v3452
        %v3709 = vtanh.pop %v3453
        %v3710 = vtanh.pop %v3454
        %v3711 = vtanh.pop %v3455
        %v3712 = vtanh.pop %v3456
        %v3713 = vtanh.pop %v3457
        %v3714 = vtanh.pop %v3458
        %v3715 = vtanh.pop %v3459
        %v3716 = vtanh.pop %v3460
        %v3717 = vtanh.pop %v3461
        %v3718 = vtanh.pop %v3462
        %v3719 = vtanh.pop %v3463
        %v3720 = vtanh.pop %v3464
        %v3721 = vtanh.pop %v3465
        %v3722 = vtanh.pop %v3466
        %v3723 = vtanh.pop %v3467
        %v3724 = vtanh.pop %v3468
        %v3725 = vtanh.pop %v3469
        %v3726 = vtanh.pop %v3470
        %v3727 = vtanh.pop %v3471
        %v3728 = vtanh.pop %v3472
        %v3729 = vtanh.pop %v3473
        %v3730 = vtanh.pop %v3474
        %v3731 = vtanh.pop %v3475
        %v3732 = vtanh.pop %v3476
        %v3733 = vtanh.pop %v3477
        %v3734 = vtanh.pop %v3478
        %v3735 = vtanh.pop %v3479
        %v3736 = vtanh.pop %v3480
        %v3737 = vtanh.pop %v3481
        %v3738 = vtanh.pop %v3482
        %v3739 = vtanh.pop %v3483
        %v3740 = vtanh.pop %v3484
        %v3741 = vtanh.pop %v3485
        %v3742 = vtanh.pop %v3486
        %v3743 = vtanh.pop %v3487
        %v3744 = vtanh.pop %v3488
        %v3745 = vtanh.pop %v3489
        %v3746 = vtanh.pop %v3490
        %v3747 = vtanh.pop %v3491
        %v3748 = vtanh.pop %v3492
        %v3749 = vtanh.pop %v3493
        %v3750 = vtanh.pop %v3494
        %v3751 = vtanh.pop %v3495
        %v3752 = vtanh.pop %v3496
        %v3753 = vtanh.pop %v3497
        %v3754 = vtanh.pop %v3498
        %v3755 = vtanh.pop %v3499
        %v3756 = vtanh.pop %v3500
        %v3757 = vtanh.pop %v3501
        %v3758 = vtanh.pop %v3502
        %v3759 = vtanh.pop %v3503
        %v3760 = vtanh.pop %v3504
        %v3761 = vtanh.pop %v3505
        %v3762 = vtanh.pop %v3506
        %v3763 = vtanh.pop %v3507
        %v3764 = vtanh.pop %v3508
        %v3765 = vtanh.pop %v3509
        %v3766 = vtanh.pop %v3510
        %v3767 = vtanh.pop %v3511
        %v3768 = vtanh.pop %v3512
        %v3769 = vtanh.pop %v3513
        %v3770 = vtanh.pop %v3514
        %v3771 = vtanh.pop %v3515
        %v3772 = vtanh.pop %v3516
        %v3773 = vtanh.pop %v3517
        %v3774 = vtanh.pop %v3518
        %v3775 = vtanh.pop %v3519
        %v3776 = vtanh.pop %v3520
        %v3777 = vtanh.pop %v3521
        %v3778 = vtanh.pop %v3522
        %v3779 = vtanh.pop %v3523
        %v3780 = vtanh.pop %v3524
        %v3781 = vtanh.pop %v3525
        %v3782 = vtanh.pop %v3526
        %v3783 = vtanh.pop %v3527
        %v3784 = vtanh.pop %v3528
        %v3785 = vtanh.pop %v3529
        %v3786 = vtanh.pop %v3530
        %v3787 = vtanh.pop %v3531
        %v3788 = vtanh.pop %v3532
        %v3789 = vtanh.pop %v3533
        %v3790 = vtanh.pop %v3534
        %v3791 = vtanh.pop %v3535
        %v3792 = vtanh.pop %v3536
        %v3793 = vtanh.pop %v3537
        %v3794 = vpack.c.bf16 %v3546, %v3538
        %v3795 = vpack.c.bf16 %v3547, %v3539
        %v3796 = vpack.c.bf16 %v3548, %v3540
        %v3797 = vpack.c.bf16 %v3549, %v3541
        %v3798 = vpack.c.bf16 %v3550, %v3542
        %v3799 = vpack.c.bf16 %v3551, %v3543
        %v3800 = vpack.c.bf16 %v3552, %v3544
        %v3801 = vpack.c.bf16 %v3553, %v3545
        %v3802 = vpack.c.bf16 %v3562, %v3554
        %v3803 = vpack.c.bf16 %v3563, %v3555
        %v3804 = vpack.c.bf16 %v3564, %v3556
        %v3805 = vpack.c.bf16 %v3565, %v3557
        %v3806 = vpack.c.bf16 %v3566, %v3558
        %v3807 = vpack.c.bf16 %v3567, %v3559
        %v3808 = vpack.c.bf16 %v3568, %v3560
        %v3809 = vpack.c.bf16 %v3569, %v3561
        %v3810 = vpack.c.bf16 %v3578, %v3570
        %v3811 = vpack.c.bf16 %v3579, %v3571
        %v3812 = vpack.c.bf16 %v3580, %v3572
        %v3813 = vpack.c.bf16 %v3581, %v3573
        %v3814 = vpack.c.bf16 %v3582, %v3574
        %v3815 = vpack.c.bf16 %v3583, %v3575
        %v3816 = vpack.c.bf16 %v3584, %v3576
        %v3817 = vpack.c.bf16 %v3585, %v3577
        %v3818 = vpack.c.bf16 %v3594, %v3586
        %v3819 = vpack.c.bf16 %v3595, %v3587
        %v3820 = vpack.c.bf16 %v3596, %v3588
        %v3821 = vpack.c.bf16 %v3597, %v3589
        %v3822 = vpack.c.bf16 %v3598, %v3590
        %v3823 = vpack.c.bf16 %v3599, %v3591
        %v3824 = vpack.c.bf16 %v3600, %v3592
        %v3825 = vpack.c.bf16 %v3601, %v3593
        %v3826 = vpack.c.bf16 %v3610, %v3602
        %v3827 = vpack.c.bf16 %v3611, %v3603
        %v3828 = vpack.c.bf16 %v3612, %v3604
        %v3829 = vpack.c.bf16 %v3613, %v3605
        %v3830 = vpack.c.bf16 %v3614, %v3606
        %v3831 = vpack.c.bf16 %v3615, %v3607
        %v3832 = vpack.c.bf16 %v3616, %v3608
        %v3833 = vpack.c.bf16 %v3617, %v3609
        %v3834 = vpack.c.bf16 %v3626, %v3618
        %v3835 = vpack.c.bf16 %v3627, %v3619
        %v3836 = vpack.c.bf16 %v3628, %v3620
        %v3837 = vpack.c.bf16 %v3629, %v3621
        %v3838 = vpack.c.bf16 %v3630, %v3622
        %v3839 = vpack.c.bf16 %v3631, %v3623
        %v3840 = vpack.c.bf16 %v3632, %v3624
        %v3841 = vpack.c.bf16 %v3633, %v3625
        %v3842 = vpack.c.bf16 %v3642, %v3634
        %v3843 = vpack.c.bf16 %v3643, %v3635
        %v3844 = vpack.c.bf16 %v3644, %v3636
        %v3845 = vpack.c.bf16 %v3645, %v3637
        %v3846 = vpack.c.bf16 %v3646, %v3638
        %v3847 = vpack.c.bf16 %v3647, %v3639
        %v3848 = vpack.c.bf16 %v3648, %v3640
        %v3849 = vpack.c.bf16 %v3649, %v3641
        %v3850 = vpack.c.bf16 %v3658, %v3650
        %v3851 = vpack.c.bf16 %v3659, %v3651
        %v3852 = vpack.c.bf16 %v3660, %v3652
        %v3853 = vpack.c.bf16 %v3661, %v3653
        %v3854 = vpack.c.bf16 %v3662, %v3654
        %v3855 = vpack.c.bf16 %v3663, %v3655
        %v3856 = vpack.c.bf16 %v3664, %v3656
        %v3857 = vpack.c.bf16 %v3665, %v3657
        %v3858 = vpack.c.bf16 %v3674, %v3666
        %v3859 = vpack.c.bf16 %v3675, %v3667
        %v3860 = vpack.c.bf16 %v3676, %v3668
        %v3861 = vpack.c.bf16 %v3677, %v3669
        %v3862 = vpack.c.bf16 %v3678, %v3670
        %v3863 = vpack.c.bf16 %v3679, %v3671
        %v3864 = vpack.c.bf16 %v3680, %v3672
        %v3865 = vpack.c.bf16 %v3681, %v3673
        %v3866 = vpack.c.bf16 %v3690, %v3682
        %v3867 = vpack.c.bf16 %v3691, %v3683
        %v3868 = vpack.c.bf16 %v3692, %v3684
        %v3869 = vpack.c.bf16 %v3693, %v3685
        %v3870 = vpack.c.bf16 %v3694, %v3686
        %v3871 = vpack.c.bf16 %v3695, %v3687
        %v3872 = vpack.c.bf16 %v3696, %v3688
        %v3873 = vpack.c.bf16 %v3697, %v3689
        %v3874 = vpack.c.bf16 %v3706, %v3698
        %v3875 = vpack.c.bf16 %v3707, %v3699
        %v3876 = vpack.c.bf16 %v3708, %v3700
        %v3877 = vpack.c.bf16 %v3709, %v3701
        %v3878 = vpack.c.bf16 %v3710, %v3702
        %v3879 = vpack.c.bf16 %v3711, %v3703
        %v3880 = vpack.c.bf16 %v3712, %v3704
        %v3881 = vpack.c.bf16 %v3713, %v3705
        %v3882 = vpack.c.bf16 %v3722, %v3714
        %v3883 = vpack.c.bf16 %v3723, %v3715
        %v3884 = vpack.c.bf16 %v3724, %v3716
        %v3885 = vpack.c.bf16 %v3725, %v3717
        %v3886 = vpack.c.bf16 %v3726, %v3718
        %v3887 = vpack.c.bf16 %v3727, %v3719
        %v3888 = vpack.c.bf16 %v3728, %v3720
        %v3889 = vpack.c.bf16 %v3729, %v3721
        %v3890 = vpack.c.bf16 %v3738, %v3730
        %v3891 = vpack.c.bf16 %v3739, %v3731
        %v3892 = vpack.c.bf16 %v3740, %v3732
        %v3893 = vpack.c.bf16 %v3741, %v3733
        %v3894 = vpack.c.bf16 %v3742, %v3734
        %v3895 = vpack.c.bf16 %v3743, %v3735
        %v3896 = vpack.c.bf16 %v3744, %v3736
        %v3897 = vpack.c.bf16 %v3745, %v3737
        %v3898 = vpack.c.bf16 %v3754, %v3746
        %v3899 = vpack.c.bf16 %v3755, %v3747
        %v3900 = vpack.c.bf16 %v3756, %v3748
        %v3901 = vpack.c.bf16 %v3757, %v3749
        %v3902 = vpack.c.bf16 %v3758, %v3750
        %v3903 = vpack.c.bf16 %v3759, %v3751
        %v3904 = vpack.c.bf16 %v3760, %v3752
        %v3905 = vpack.c.bf16 %v3761, %v3753
        %v3906 = vpack.c.bf16 %v3770, %v3762
        %v3907 = vpack.c.bf16 %v3771, %v3763
        %v3908 = vpack.c.bf16 %v3772, %v3764
        %v3909 = vpack.c.bf16 %v3773, %v3765
        %v3910 = vpack.c.bf16 %v3774, %v3766
        %v3911 = vpack.c.bf16 %v3775, %v3767
        %v3912 = vpack.c.bf16 %v3776, %v3768
        %v3913 = vpack.c.bf16 %v3777, %v3769
        %v3914 = vpack.c.bf16 %v3786, %v3778
        %v3915 = vpack.c.bf16 %v3787, %v3779
        %v3916 = vpack.c.bf16 %v3788, %v3780
        %v3917 = vpack.c.bf16 %v3789, %v3781
        %v3918 = vpack.c.bf16 %v3790, %v3782
        %v3919 = vpack.c.bf16 %v3791, %v3783
        %v3920 = vpack.c.bf16 %v3792, %v3784
        %v3921 = vpack.c.bf16 %v3793, %v3785
        %v3922 = vld [vmem:[#allocation5] sm:$0xff]
        %v3923 = vld [vmem:[#allocation5 + $0x8] sm:$0xff]
        %v3924 = vld [vmem:[#allocation5 + $0x10] sm:$0xff]
        %v3925 = vld [vmem:[#allocation5 + $0x18] sm:$0xff]
        %v3926 = vld [vmem:[#allocation5 + $0x20] sm:$0xff]
        %v3927 = vld [vmem:[#allocation5 + $0x28] sm:$0xff]
        %v3928 = vld [vmem:[#allocation5 + $0x30] sm:$0xff]
        %v3929 = vld [vmem:[#allocation5 + $0x38] sm:$0xff]
        %v3930 = vld [vmem:[#allocation5 + $0x40] sm:$0xff]
        %v3931 = vld [vmem:[#allocation5 + $0x48] sm:$0xff]
        %v3932 = vld [vmem:[#allocation5 + $0x50] sm:$0xff]
        %v3933 = vld [vmem:[#allocation5 + $0x58] sm:$0xff]
        %v3934 = vld [vmem:[#allocation5 + $0x60] sm:$0xff]
        %v3935 = vld [vmem:[#allocation5 + $0x68] sm:$0xff]
        %v3936 = vld [vmem:[#allocation5 + $0x70] sm:$0xff]
        %v3937 = vld [vmem:[#allocation5 + $0x78] sm:$0xff]
        %v3938 = vld [vmem:[#allocation5 + $0x80] sm:$0xff]
        %v3939 = vld [vmem:[#allocation5 + $0x88] sm:$0xff]
        %v3940 = vld [vmem:[#allocation5 + $0x90] sm:$0xff]
        %v3941 = vld [vmem:[#allocation5 + $0x98] sm:$0xff]
        %v3942 = vld [vmem:[#allocation5 + $0xa0] sm:$0xff]
        %v3943 = vld [vmem:[#allocation5 + $0xa8] sm:$0xff]
        %v3944 = vld [vmem:[#allocation5 + $0xb0] sm:$0xff]
        %v3945 = vld [vmem:[#allocation5 + $0xb8] sm:$0xff]
        %v3946 = vld [vmem:[#allocation5 + $0xc0] sm:$0xff]
        %v3947 = vld [vmem:[#allocation5 + $0xc8] sm:$0xff]
        %v3948 = vld [vmem:[#allocation5 + $0xd0] sm:$0xff]
        %v3949 = vld [vmem:[#allocation5 + $0xd8] sm:$0xff]
        %v3950 = vld [vmem:[#allocation5 + $0xe0] sm:$0xff]
        %v3951 = vld [vmem:[#allocation5 + $0xe8] sm:$0xff]
        %v3952 = vld [vmem:[#allocation5 + $0xf0] sm:$0xff]
        %v3953 = vld [vmem:[#allocation5 + $0xf8] sm:$0xff]
        %v3954 = vld [vmem:[#allocation5 + $0x100] sm:$0xff]
        %v3955 = vld [vmem:[#allocation5 + $0x108] sm:$0xff]
        %v3956 = vld [vmem:[#allocation5 + $0x110] sm:$0xff]
        %v3957 = vld [vmem:[#allocation5 + $0x118] sm:$0xff]
        %v3958 = vld [vmem:[#allocation5 + $0x120] sm:$0xff]
        %v3959 = vld [vmem:[#allocation5 + $0x128] sm:$0xff]
        %v3960 = vld [vmem:[#allocation5 + $0x130] sm:$0xff]
        %v3961 = vld [vmem:[#allocation5 + $0x138] sm:$0xff]
        %v3962 = vld [vmem:[#allocation5 + $0x140] sm:$0xff]
        %v3963 = vld [vmem:[#allocation5 + $0x148] sm:$0xff]
        %v3964 = vld [vmem:[#allocation5 + $0x150] sm:$0xff]
        %v3965 = vld [vmem:[#allocation5 + $0x158] sm:$0xff]
        %v3966 = vld [vmem:[#allocation5 + $0x160] sm:$0xff]
        %v3967 = vld [vmem:[#allocation5 + $0x168] sm:$0xff]
        %v3968 = vld [vmem:[#allocation5 + $0x170] sm:$0xff]
        %v3969 = vld [vmem:[#allocation5 + $0x178] sm:$0xff]
        %v3970 = vld [vmem:[#allocation5 + $0x180] sm:$0xff]
        %v3971 = vld [vmem:[#allocation5 + $0x188] sm:$0xff]
        %v3972 = vld [vmem:[#allocation5 + $0x190] sm:$0xff]
        %v3973 = vld [vmem:[#allocation5 + $0x198] sm:$0xff]
        %v3974 = vld [vmem:[#allocation5 + $0x1a0] sm:$0xff]
        %v3975 = vld [vmem:[#allocation5 + $0x1a8] sm:$0xff]
        %v3976 = vld [vmem:[#allocation5 + $0x1b0] sm:$0xff]
        %v3977 = vld [vmem:[#allocation5 + $0x1b8] sm:$0xff]
        %v3978 = vld [vmem:[#allocation5 + $0x1c0] sm:$0xff]
        %v3979 = vld [vmem:[#allocation5 + $0x1c8] sm:$0xff]
        %v3980 = vld [vmem:[#allocation5 + $0x1d0] sm:$0xff]
        %v3981 = vld [vmem:[#allocation5 + $0x1d8] sm:$0xff]
        %v3982 = vld [vmem:[#allocation5 + $0x1e0] sm:$0xff]
        %v3983 = vld [vmem:[#allocation5 + $0x1e8] sm:$0xff]
        %v3984 = vld [vmem:[#allocation5 + $0x1f0] sm:$0xff]
        %v3985 = vld [vmem:[#allocation5 + $0x1f8] sm:$0xff]
        %v3986 = vld [vmem:[#allocation5 + $0x200] sm:$0xff]
        %v3987 = vld [vmem:[#allocation5 + $0x208] sm:$0xff]
        %v3988 = vld [vmem:[#allocation5 + $0x210] sm:$0xff]
        %v3989 = vld [vmem:[#allocation5 + $0x218] sm:$0xff]
        %v3990 = vld [vmem:[#allocation5 + $0x220] sm:$0xff]
        %v3991 = vld [vmem:[#allocation5 + $0x228] sm:$0xff]
        %v3992 = vld [vmem:[#allocation5 + $0x230] sm:$0xff]
        %v3993 = vld [vmem:[#allocation5 + $0x238] sm:$0xff]
        %v3994 = vld [vmem:[#allocation5 + $0x240] sm:$0xff]
        %v3995 = vld [vmem:[#allocation5 + $0x248] sm:$0xff]
        %v3996 = vld [vmem:[#allocation5 + $0x250] sm:$0xff]
        %v3997 = vld [vmem:[#allocation5 + $0x258] sm:$0xff]
        %v3998 = vld [vmem:[#allocation5 + $0x260] sm:$0xff]
        %v3999 = vld [vmem:[#allocation5 + $0x268] sm:$0xff]
        %v4000 = vld [vmem:[#allocation5 + $0x270] sm:$0xff]
        %v4001 = vld [vmem:[#allocation5 + $0x278] sm:$0xff]
        %v4002 = vld [vmem:[#allocation5 + $0x280] sm:$0xff]
        %v4003 = vld [vmem:[#allocation5 + $0x288] sm:$0xff]
        %v4004 = vld [vmem:[#allocation5 + $0x290] sm:$0xff]
        %v4005 = vld [vmem:[#allocation5 + $0x298] sm:$0xff]
        %v4006 = vld [vmem:[#allocation5 + $0x2a0] sm:$0xff]
        %v4007 = vld [vmem:[#allocation5 + $0x2a8] sm:$0xff]
        %v4008 = vld [vmem:[#allocation5 + $0x2b0] sm:$0xff]
        %v4009 = vld [vmem:[#allocation5 + $0x2b8] sm:$0xff]
        %v4010 = vld [vmem:[#allocation5 + $0x2c0] sm:$0xff]
        %v4011 = vld [vmem:[#allocation5 + $0x2c8] sm:$0xff]
        %v4012 = vld [vmem:[#allocation5 + $0x2d0] sm:$0xff]
        %v4013 = vld [vmem:[#allocation5 + $0x2d8] sm:$0xff]
        %v4014 = vld [vmem:[#allocation5 + $0x2e0] sm:$0xff]
        %v4015 = vld [vmem:[#allocation5 + $0x2e8] sm:$0xff]
        %v4016 = vld [vmem:[#allocation5 + $0x2f0] sm:$0xff]
        %v4017 = vld [vmem:[#allocation5 + $0x2f8] sm:$0xff]
        %v4018 = vld [vmem:[#allocation5 + $0x300] sm:$0xff]
        %v4019 = vld [vmem:[#allocation5 + $0x308] sm:$0xff]
        %v4020 = vld [vmem:[#allocation5 + $0x310] sm:$0xff]
        %v4021 = vld [vmem:[#allocation5 + $0x318] sm:$0xff]
        %v4022 = vld [vmem:[#allocation5 + $0x320] sm:$0xff]
        %v4023 = vld [vmem:[#allocation5 + $0x328] sm:$0xff]
        %v4024 = vld [vmem:[#allocation5 + $0x330] sm:$0xff]
        %v4025 = vld [vmem:[#allocation5 + $0x338] sm:$0xff]
        %v4026 = vld [vmem:[#allocation5 + $0x340] sm:$0xff]
        %v4027 = vld [vmem:[#allocation5 + $0x348] sm:$0xff]
        %v4028 = vld [vmem:[#allocation5 + $0x350] sm:$0xff]
        %v4029 = vld [vmem:[#allocation5 + $0x358] sm:$0xff]
        %v4030 = vld [vmem:[#allocation5 + $0x360] sm:$0xff]
        %v4031 = vld [vmem:[#allocation5 + $0x368] sm:$0xff]
        %v4032 = vld [vmem:[#allocation5 + $0x370] sm:$0xff]
        %v4033 = vld [vmem:[#allocation5 + $0x378] sm:$0xff]
        %v4034 = vld [vmem:[#allocation5 + $0x380] sm:$0xff]
        %v4035 = vld [vmem:[#allocation5 + $0x388] sm:$0xff]
        %v4036 = vld [vmem:[#allocation5 + $0x390] sm:$0xff]
        %v4037 = vld [vmem:[#allocation5 + $0x398] sm:$0xff]
        %v4038 = vld [vmem:[#allocation5 + $0x3a0] sm:$0xff]
        %v4039 = vld [vmem:[#allocation5 + $0x3a8] sm:$0xff]
        %v4040 = vld [vmem:[#allocation5 + $0x3b0] sm:$0xff]
        %v4041 = vld [vmem:[#allocation5 + $0x3b8] sm:$0xff]
        %v4042 = vld [vmem:[#allocation5 + $0x3c0] sm:$0xff]
        %v4043 = vld [vmem:[#allocation5 + $0x3c8] sm:$0xff]
        %v4044 = vld [vmem:[#allocation5 + $0x3d0] sm:$0xff]
        %v4045 = vld [vmem:[#allocation5 + $0x3d8] sm:$0xff]
        %v4046 = vld [vmem:[#allocation5 + $0x3e0] sm:$0xff]
        %v4047 = vld [vmem:[#allocation5 + $0x3e8] sm:$0xff]
        %v4048 = vld [vmem:[#allocation5 + $0x3f0] sm:$0xff]
        %v4049 = vld [vmem:[#allocation5 + $0x3f8] sm:$0xff]
        %v4050 = vld [vmem:[%s4] sm:$0xf]
        %v4052 = vlaneseq
        %v4053 = vshrl.u32 %v4052, 7
        %v4054 = vsub.s32 0, %v4053
        %v4055 = vrot.slane %v4050, %v4054
        %v4056 = vlaneseq
        %v4057 = vshrl.u32 %v4056, 7
        %v4058 = vsub.s32 1, %v4057
        %v4059 = vrot.slane %v4050, %v4058
        %v4060 = vlaneseq
        %v4061 = vshrl.u32 %v4060, 7
        %v4062 = vsub.s32 2, %v4061
        %v4063 = vrot.slane %v4050, %v4062
        %v4064 = vlaneseq
        %v4065 = vshrl.u32 %v4064, 7
        %v4066 = vsub.s32 3, %v4065
        %v4067 = vrot.slane %v4050, %v4066
        %v4200 = vunpack.c.l.b16 %v3922
        %v4201 = vunpack.c.h.b16 %v3922
        %v4202 = vunpack.c.l.b16 %v3923
        %v4203 = vunpack.c.h.b16 %v3923
        %v4204 = vunpack.c.l.b16 %v3924
        %v4205 = vunpack.c.h.b16 %v3924
        %v4206 = vunpack.c.l.b16 %v3925
        %v4207 = vunpack.c.h.b16 %v3925
        %v4208 = vunpack.c.l.b16 %v3926
        %v4209 = vunpack.c.h.b16 %v3926
        %v4210 = vunpack.c.l.b16 %v3927
        %v4211 = vunpack.c.h.b16 %v3927
        %v4212 = vunpack.c.l.b16 %v3928
        %v4213 = vunpack.c.h.b16 %v3928
        %v4214 = vunpack.c.l.b16 %v3929
        %v4215 = vunpack.c.h.b16 %v3929
        %v4216 = vunpack.c.l.b16 %v3930
        %v4217 = vunpack.c.h.b16 %v3930
        %v4218 = vunpack.c.l.b16 %v3931
        %v4219 = vunpack.c.h.b16 %v3931
        %v4220 = vunpack.c.l.b16 %v3932
        %v4221 = vunpack.c.h.b16 %v3932
        %v4222 = vunpack.c.l.b16 %v3933
        %v4223 = vunpack.c.h.b16 %v3933
        %v4224 = vunpack.c.l.b16 %v3934
        %v4225 = vunpack.c.h.b16 %v3934
        %v4226 = vunpack.c.l.b16 %v3935
        %v4227 = vunpack.c.h.b16 %v3935
        %v4228 = vunpack.c.l.b16 %v3936
        %v4229 = vunpack.c.h.b16 %v3936
        %v4230 = vunpack.c.l.b16 %v3937
        %v4231 = vunpack.c.h.b16 %v3937
        %v4232 = vunpack.c.l.b16 %v3938
        %v4233 = vunpack.c.h.b16 %v3938
        %v4234 = vunpack.c.l.b16 %v3939
        %v4235 = vunpack.c.h.b16 %v3939
        %v4236 = vunpack.c.l.b16 %v3940
        %v4237 = vunpack.c.h.b16 %v3940
        %v4238 = vunpack.c.l.b16 %v3941
        %v4239 = vunpack.c.h.b16 %v3941
        %v4240 = vunpack.c.l.b16 %v3942
        %v4241 = vunpack.c.h.b16 %v3942
        %v4242 = vunpack.c.l.b16 %v3943
        %v4243 = vunpack.c.h.b16 %v3943
        %v4244 = vunpack.c.l.b16 %v3944
        %v4245 = vunpack.c.h.b16 %v3944
        %v4246 = vunpack.c.l.b16 %v3945
        %v4247 = vunpack.c.h.b16 %v3945
        %v4248 = vunpack.c.l.b16 %v3946
        %v4249 = vunpack.c.h.b16 %v3946
        %v4250 = vunpack.c.l.b16 %v3947
        %v4251 = vunpack.c.h.b16 %v3947
        %v4252 = vunpack.c.l.b16 %v3948
        %v4253 = vunpack.c.h.b16 %v3948
        %v4254 = vunpack.c.l.b16 %v3949
        %v4255 = vunpack.c.h.b16 %v3949
        %v4256 = vunpack.c.l.b16 %v3950
        %v4257 = vunpack.c.h.b16 %v3950
        %v4258 = vunpack.c.l.b16 %v3951
        %v4259 = vunpack.c.h.b16 %v3951
        %v4260 = vunpack.c.l.b16 %v3952
        %v4261 = vunpack.c.h.b16 %v3952
        %v4262 = vunpack.c.l.b16 %v3953
        %v4263 = vunpack.c.h.b16 %v3953
        %v4264 = vunpack.c.l.b16 %v3954
        %v4265 = vunpack.c.h.b16 %v3954
        %v4266 = vunpack.c.l.b16 %v3955
        %v4267 = vunpack.c.h.b16 %v3955
        %v4268 = vunpack.c.l.b16 %v3956
        %v4269 = vunpack.c.h.b16 %v3956
        %v4270 = vunpack.c.l.b16 %v3957
        %v4271 = vunpack.c.h.b16 %v3957
        %v4272 = vunpack.c.l.b16 %v3958
        %v4273 = vunpack.c.h.b16 %v3958
        %v4274 = vunpack.c.l.b16 %v3959
        %v4275 = vunpack.c.h.b16 %v3959
        %v4276 = vunpack.c.l.b16 %v3960
        %v4277 = vunpack.c.h.b16 %v3960
        %v4278 = vunpack.c.l.b16 %v3961
        %v4279 = vunpack.c.h.b16 %v3961
        %v4280 = vunpack.c.l.b16 %v3962
        %v4281 = vunpack.c.h.b16 %v3962
        %v4282 = vunpack.c.l.b16 %v3963
        %v4283 = vunpack.c.h.b16 %v3963
        %v4284 = vunpack.c.l.b16 %v3964
        %v4285 = vunpack.c.h.b16 %v3964
        %v4286 = vunpack.c.l.b16 %v3965
        %v4287 = vunpack.c.h.b16 %v3965
        %v4288 = vunpack.c.l.b16 %v3966
        %v4289 = vunpack.c.h.b16 %v3966
        %v4290 = vunpack.c.l.b16 %v3967
        %v4291 = vunpack.c.h.b16 %v3967
        %v4292 = vunpack.c.l.b16 %v3968
        %v4293 = vunpack.c.h.b16 %v3968
        %v4294 = vunpack.c.l.b16 %v3969
        %v4295 = vunpack.c.h.b16 %v3969
        %v4296 = vunpack.c.l.b16 %v3970
        %v4297 = vunpack.c.h.b16 %v3970
        %v4298 = vunpack.c.l.b16 %v3971
        %v4299 = vunpack.c.h.b16 %v3971
        %v4300 = vunpack.c.l.b16 %v3972
        %v4301 = vunpack.c.h.b16 %v3972
        %v4302 = vunpack.c.l.b16 %v3973
        %v4303 = vunpack.c.h.b16 %v3973
        %v4304 = vunpack.c.l.b16 %v3974
        %v4305 = vunpack.c.h.b16 %v3974
        %v4306 = vunpack.c.l.b16 %v3975
        %v4307 = vunpack.c.h.b16 %v3975
        %v4308 = vunpack.c.l.b16 %v3976
        %v4309 = vunpack.c.h.b16 %v3976
        %v4310 = vunpack.c.l.b16 %v3977
        %v4311 = vunpack.c.h.b16 %v3977
        %v4312 = vunpack.c.l.b16 %v3978
        %v4313 = vunpack.c.h.b16 %v3978
        %v4314 = vunpack.c.l.b16 %v3979
        %v4315 = vunpack.c.h.b16 %v3979
        %v4316 = vunpack.c.l.b16 %v3980
        %v4317 = vunpack.c.h.b16 %v3980
        %v4318 = vunpack.c.l.b16 %v3981
        %v4319 = vunpack.c.h.b16 %v3981
        %v4320 = vunpack.c.l.b16 %v3982
        %v4321 = vunpack.c.h.b16 %v3982
        %v4322 = vunpack.c.l.b16 %v3983
        %v4323 = vunpack.c.h.b16 %v3983
        %v4324 = vunpack.c.l.b16 %v3984
        %v4325 = vunpack.c.h.b16 %v3984
        %v4326 = vunpack.c.l.b16 %v3985
        %v4327 = vunpack.c.h.b16 %v3985
        %v4328 = vunpack.c.l.b16 %v3986
        %v4329 = vunpack.c.h.b16 %v3986
        %v4330 = vunpack.c.l.b16 %v3987
        %v4331 = vunpack.c.h.b16 %v3987
        %v4332 = vunpack.c.l.b16 %v3988
        %v4333 = vunpack.c.h.b16 %v3988
        %v4334 = vunpack.c.l.b16 %v3989
        %v4335 = vunpack.c.h.b16 %v3989
        %v4336 = vunpack.c.l.b16 %v3990
        %v4337 = vunpack.c.h.b16 %v3990
        %v4338 = vunpack.c.l.b16 %v3991
        %v4339 = vunpack.c.h.b16 %v3991
        %v4340 = vunpack.c.l.b16 %v3992
        %v4341 = vunpack.c.h.b16 %v3992
        %v4342 = vunpack.c.l.b16 %v3993
        %v4343 = vunpack.c.h.b16 %v3993
        %v4344 = vunpack.c.l.b16 %v3994
        %v4345 = vunpack.c.h.b16 %v3994
        %v4346 = vunpack.c.l.b16 %v3995
        %v4347 = vunpack.c.h.b16 %v3995
        %v4348 = vunpack.c.l.b16 %v3996
        %v4349 = vunpack.c.h.b16 %v3996
        %v4350 = vunpack.c.l.b16 %v3997
        %v4351 = vunpack.c.h.b16 %v3997
        %v4352 = vunpack.c.l.b16 %v3998
        %v4353 = vunpack.c.h.b16 %v3998
        %v4354 = vunpack.c.l.b16 %v3999
        %v4355 = vunpack.c.h.b16 %v3999
        %v4356 = vunpack.c.l.b16 %v4000
        %v4357 = vunpack.c.h.b16 %v4000
        %v4358 = vunpack.c.l.b16 %v4001
        %v4359 = vunpack.c.h.b16 %v4001
        %v4360 = vunpack.c.l.b16 %v4002
        %v4361 = vunpack.c.h.b16 %v4002
        %v4362 = vunpack.c.l.b16 %v4003
        %v4363 = vunpack.c.h.b16 %v4003
        %v4364 = vunpack.c.l.b16 %v4004
        %v4365 = vunpack.c.h.b16 %v4004
        %v4366 = vunpack.c.l.b16 %v4005
        %v4367 = vunpack.c.h.b16 %v4005
        %v4368 = vunpack.c.l.b16 %v4006
        %v4369 = vunpack.c.h.b16 %v4006
        %v4370 = vunpack.c.l.b16 %v4007
        %v4371 = vunpack.c.h.b16 %v4007
        %v4372 = vunpack.c.l.b16 %v4008
        %v4373 = vunpack.c.h.b16 %v4008
        %v4374 = vunpack.c.l.b16 %v4009
        %v4375 = vunpack.c.h.b16 %v4009
        %v4376 = vunpack.c.l.b16 %v4010
        %v4377 = vunpack.c.h.b16 %v4010
        %v4378 = vunpack.c.l.b16 %v4011
        %v4379 = vunpack.c.h.b16 %v4011
        %v4380 = vunpack.c.l.b16 %v4012
        %v4381 = vunpack.c.h.b16 %v4012
        %v4382 = vunpack.c.l.b16 %v4013
        %v4383 = vunpack.c.h.b16 %v4013
        %v4384 = vunpack.c.l.b16 %v4014
        %v4385 = vunpack.c.h.b16 %v4014
        %v4386 = vunpack.c.l.b16 %v4015
        %v4387 = vunpack.c.h.b16 %v4015
        %v4388 = vunpack.c.l.b16 %v4016
        %v4389 = vunpack.c.h.b16 %v4016
        %v4390 = vunpack.c.l.b16 %v4017
        %v4391 = vunpack.c.h.b16 %v4017
        %v4392 = vunpack.c.l.b16 %v4018
        %v4393 = vunpack.c.h.b16 %v4018
        %v4394 = vunpack.c.l.b16 %v4019
        %v4395 = vunpack.c.h.b16 %v4019
        %v4396 = vunpack.c.l.b16 %v4020
        %v4397 = vunpack.c.h.b16 %v4020
        %v4398 = vunpack.c.l.b16 %v4021
        %v4399 = vunpack.c.h.b16 %v4021
        %v4400 = vunpack.c.l.b16 %v4022
        %v4401 = vunpack.c.h.b16 %v4022
        %v4402 = vunpack.c.l.b16 %v4023
        %v4403 = vunpack.c.h.b16 %v4023
        %v4404 = vunpack.c.l.b16 %v4024
        %v4405 = vunpack.c.h.b16 %v4024
        %v4406 = vunpack.c.l.b16 %v4025
        %v4407 = vunpack.c.h.b16 %v4025
        %v4408 = vunpack.c.l.b16 %v4026
        %v4409 = vunpack.c.h.b16 %v4026
        %v4410 = vunpack.c.l.b16 %v4027
        %v4411 = vunpack.c.h.b16 %v4027
        %v4412 = vunpack.c.l.b16 %v4028
        %v4413 = vunpack.c.h.b16 %v4028
        %v4414 = vunpack.c.l.b16 %v4029
        %v4415 = vunpack.c.h.b16 %v4029
        %v4416 = vunpack.c.l.b16 %v4030
        %v4417 = vunpack.c.h.b16 %v4030
        %v4418 = vunpack.c.l.b16 %v4031
        %v4419 = vunpack.c.h.b16 %v4031
        %v4420 = vunpack.c.l.b16 %v4032
        %v4421 = vunpack.c.h.b16 %v4032
        %v4422 = vunpack.c.l.b16 %v4033
        %v4423 = vunpack.c.h.b16 %v4033
        %v4424 = vunpack.c.l.b16 %v4034
        %v4425 = vunpack.c.h.b16 %v4034
        %v4426 = vunpack.c.l.b16 %v4035
        %v4427 = vunpack.c.h.b16 %v4035
        %v4428 = vunpack.c.l.b16 %v4036
        %v4429 = vunpack.c.h.b16 %v4036
        %v4430 = vunpack.c.l.b16 %v4037
        %v4431 = vunpack.c.h.b16 %v4037
        %v4432 = vunpack.c.l.b16 %v4038
        %v4433 = vunpack.c.h.b16 %v4038
        %v4434 = vunpack.c.l.b16 %v4039
        %v4435 = vunpack.c.h.b16 %v4039
        %v4436 = vunpack.c.l.b16 %v4040
        %v4437 = vunpack.c.h.b16 %v4040
        %v4438 = vunpack.c.l.b16 %v4041
        %v4439 = vunpack.c.h.b16 %v4041
        %v4440 = vunpack.c.l.b16 %v4042
        %v4441 = vunpack.c.h.b16 %v4042
        %v4442 = vunpack.c.l.b16 %v4043
        %v4443 = vunpack.c.h.b16 %v4043
        %v4444 = vunpack.c.l.b16 %v4044
        %v4445 = vunpack.c.h.b16 %v4044
        %v4446 = vunpack.c.l.b16 %v4045
        %v4447 = vunpack.c.h.b16 %v4045
        %v4448 = vunpack.c.l.b16 %v4046
        %v4449 = vunpack.c.h.b16 %v4046
        %v4450 = vunpack.c.l.b16 %v4047
        %v4451 = vunpack.c.h.b16 %v4047
        %v4452 = vunpack.c.l.b16 %v4048
        %v4453 = vunpack.c.h.b16 %v4048
        %v4454 = vunpack.c.l.b16 %v4049
        %v4455 = vunpack.c.h.b16 %v4049
        %v4456 = vpack.c.b16 %v4204, %v4200
        %v4457 = vpack.c.b16 %v4205, %v4201
        %v4458 = vpack.c.b16 %v4206, %v4202
        %v4459 = vpack.c.b16 %v4207, %v4203
        %v4460 = vpack.c.b16 %v4212, %v4208
        %v4461 = vpack.c.b16 %v4213, %v4209
        %v4462 = vpack.c.b16 %v4214, %v4210
        %v4463 = vpack.c.b16 %v4215, %v4211
        %v4464 = vpack.c.b16 %v4220, %v4216
        %v4465 = vpack.c.b16 %v4221, %v4217
        %v4466 = vpack.c.b16 %v4222, %v4218
        %v4467 = vpack.c.b16 %v4223, %v4219
        %v4468 = vpack.c.b16 %v4228, %v4224
        %v4469 = vpack.c.b16 %v4229, %v4225
        %v4470 = vpack.c.b16 %v4230, %v4226
        %v4471 = vpack.c.b16 %v4231, %v4227
        %v4472 = vpack.c.b16 %v4236, %v4232
        %v4473 = vpack.c.b16 %v4237, %v4233
        %v4474 = vpack.c.b16 %v4238, %v4234
        %v4475 = vpack.c.b16 %v4239, %v4235
        %v4476 = vpack.c.b16 %v4244, %v4240
        %v4477 = vpack.c.b16 %v4245, %v4241
        %v4478 = vpack.c.b16 %v4246, %v4242
        %v4479 = vpack.c.b16 %v4247, %v4243
        %v4480 = vpack.c.b16 %v4252, %v4248
        %v4481 = vpack.c.b16 %v4253, %v4249
        %v4482 = vpack.c.b16 %v4254, %v4250
        %v4483 = vpack.c.b16 %v4255, %v4251
        %v4484 = vpack.c.b16 %v4260, %v4256
        %v4485 = vpack.c.b16 %v4261, %v4257
        %v4486 = vpack.c.b16 %v4262, %v4258
        %v4487 = vpack.c.b16 %v4263, %v4259
        %v4488 = vpack.c.b16 %v4268, %v4264
        %v4489 = vpack.c.b16 %v4269, %v4265
        %v4490 = vpack.c.b16 %v4270, %v4266
        %v4491 = vpack.c.b16 %v4271, %v4267
        %v4492 = vpack.c.b16 %v4276, %v4272
        %v4493 = vpack.c.b16 %v4277, %v4273
        %v4494 = vpack.c.b16 %v4278, %v4274
        %v4495 = vpack.c.b16 %v4279, %v4275
        %v4496 = vpack.c.b16 %v4284, %v4280
        %v4497 = vpack.c.b16 %v4285, %v4281
        %v4498 = vpack.c.b16 %v4286, %v4282
        %v4499 = vpack.c.b16 %v4287, %v4283
        %v4500 = vpack.c.b16 %v4292, %v4288
        %v4501 = vpack.c.b16 %v4293, %v4289
        %v4502 = vpack.c.b16 %v4294, %v4290
        %v4503 = vpack.c.b16 %v4295, %v4291
        %v4504 = vpack.c.b16 %v4300, %v4296
        %v4505 = vpack.c.b16 %v4301, %v4297
        %v4506 = vpack.c.b16 %v4302, %v4298
        %v4507 = vpack.c.b16 %v4303, %v4299
        %v4508 = vpack.c.b16 %v4308, %v4304
        %v4509 = vpack.c.b16 %v4309, %v4305
        %v4510 = vpack.c.b16 %v4310, %v4306
        %v4511 = vpack.c.b16 %v4311, %v4307
        %v4512 = vpack.c.b16 %v4316, %v4312
        %v4513 = vpack.c.b16 %v4317, %v4313
        %v4514 = vpack.c.b16 %v4318, %v4314
        %v4515 = vpack.c.b16 %v4319, %v4315
        %v4516 = vpack.c.b16 %v4324, %v4320
        %v4517 = vpack.c.b16 %v4325, %v4321
        %v4518 = vpack.c.b16 %v4326, %v4322
        %v4519 = vpack.c.b16 %v4327, %v4323
        %v4520 = vpack.c.b16 %v4332, %v4328
        %v4521 = vpack.c.b16 %v4333, %v4329
        %v4522 = vpack.c.b16 %v4334, %v4330
        %v4523 = vpack.c.b16 %v4335, %v4331
        %v4524 = vpack.c.b16 %v4340, %v4336
        %v4525 = vpack.c.b16 %v4341, %v4337
        %v4526 = vpack.c.b16 %v4342, %v4338
        %v4527 = vpack.c.b16 %v4343, %v4339
        %v4528 = vpack.c.b16 %v4348, %v4344
        %v4529 = vpack.c.b16 %v4349, %v4345
        %v4530 = vpack.c.b16 %v4350, %v4346
        %v4531 = vpack.c.b16 %v4351, %v4347
        %v4532 = vpack.c.b16 %v4356, %v4352
        %v4533 = vpack.c.b16 %v4357, %v4353
        %v4534 = vpack.c.b16 %v4358, %v4354
        %v4535 = vpack.c.b16 %v4359, %v4355
        %v4536 = vpack.c.b16 %v4364, %v4360
        %v4537 = vpack.c.b16 %v4365, %v4361
        %v4538 = vpack.c.b16 %v4366, %v4362
        %v4539 = vpack.c.b16 %v4367, %v4363
        %v4540 = vpack.c.b16 %v4372, %v4368
        %v4541 = vpack.c.b16 %v4373, %v4369
        %v4542 = vpack.c.b16 %v4374, %v4370
        %v4543 = vpack.c.b16 %v4375, %v4371
        %v4544 = vpack.c.b16 %v4380, %v4376
        %v4545 = vpack.c.b16 %v4381, %v4377
        %v4546 = vpack.c.b16 %v4382, %v4378
        %v4547 = vpack.c.b16 %v4383, %v4379
        %v4548 = vpack.c.b16 %v4388, %v4384
        %v4549 = vpack.c.b16 %v4389, %v4385
        %v4550 = vpack.c.b16 %v4390, %v4386
        %v4551 = vpack.c.b16 %v4391, %v4387
        %v4552 = vpack.c.b16 %v4396, %v4392
        %v4553 = vpack.c.b16 %v4397, %v4393
        %v4554 = vpack.c.b16 %v4398, %v4394
        %v4555 = vpack.c.b16 %v4399, %v4395
        %v4556 = vpack.c.b16 %v4404, %v4400
        %v4557 = vpack.c.b16 %v4405, %v4401
        %v4558 = vpack.c.b16 %v4406, %v4402
        %v4559 = vpack.c.b16 %v4407, %v4403
        %v4560 = vpack.c.b16 %v4412, %v4408
        %v4561 = vpack.c.b16 %v4413, %v4409
        %v4562 = vpack.c.b16 %v4414, %v4410
        %v4563 = vpack.c.b16 %v4415, %v4411
        %v4564 = vpack.c.b16 %v4420, %v4416
        %v4565 = vpack.c.b16 %v4421, %v4417
        %v4566 = vpack.c.b16 %v4422, %v4418
        %v4567 = vpack.c.b16 %v4423, %v4419
        %v4568 = vpack.c.b16 %v4428, %v4424
        %v4569 = vpack.c.b16 %v4429, %v4425
        %v4570 = vpack.c.b16 %v4430, %v4426
        %v4571 = vpack.c.b16 %v4431, %v4427
        %v4572 = vpack.c.b16 %v4436, %v4432
        %v4573 = vpack.c.b16 %v4437, %v4433
        %v4574 = vpack.c.b16 %v4438, %v4434
        %v4575 = vpack.c.b16 %v4439, %v4435
        %v4576 = vpack.c.b16 %v4444, %v4440
        %v4577 = vpack.c.b16 %v4445, %v4441
        %v4578 = vpack.c.b16 %v4446, %v4442
        %v4579 = vpack.c.b16 %v4447, %v4443
        %v4580 = vpack.c.b16 %v4452, %v4448
        %v4581 = vpack.c.b16 %v4453, %v4449
        %v4582 = vpack.c.b16 %v4454, %v4450
        %v4583 = vpack.c.b16 %v4455, %v4451
        %4712 = vmatprep.subr.bf16.mxu0 %v4457
        %4713 = vmatpush1.bf16.msra.mxu0 %v4456
        %4714 = vmatprep.subr.bf16.mxu0 %v4461
        %4715 = vmatpush1.bf16.msra.mxu0 %v4460
        %4716 = vmatprep.subr.bf16.mxu0 %v4465
        %4717 = vmatpush1.bf16.msra.mxu0 %v4464
        %4718 = vmatprep.subr.bf16.mxu0 %v4469
        %4719 = vmatpush1.bf16.msra.mxu0 %v4468
        %4720 = vmatprep.subr.bf16.mxu0 %v4473
        %4721 = vmatpush1.bf16.msra.mxu0 %v4472
        %4722 = vmatprep.subr.bf16.mxu0 %v4477
        %4723 = vmatpush1.bf16.msra.mxu0 %v4476
        %4724 = vmatprep.subr.bf16.mxu0 %v4481
        %4725 = vmatpush1.bf16.msra.mxu0 %v4480
        %4726 = vmatprep.subr.bf16.mxu0 %v4485
        %4727 = vmatpush1.bf16.msra.mxu0 %v4484
        %4728 = vmatprep.subr.bf16.mxu0 %v4489
        %4729 = vmatpush1.bf16.msra.mxu0 %v4488
        %4730 = vmatprep.subr.bf16.mxu0 %v4493
        %4731 = vmatpush1.bf16.msra.mxu0 %v4492
        %4732 = vmatprep.subr.bf16.mxu0 %v4497
        %4733 = vmatpush1.bf16.msra.mxu0 %v4496
        %4734 = vmatprep.subr.bf16.mxu0 %v4501
        %4735 = vmatpush1.bf16.msra.mxu0 %v4500
        %4736 = vmatprep.subr.bf16.mxu0 %v4505
        %4737 = vmatpush1.bf16.msra.mxu0 %v4504
        %4738 = vmatprep.subr.bf16.mxu0 %v4509
        %4739 = vmatpush1.bf16.msra.mxu0 %v4508
        %4740 = vmatprep.subr.bf16.mxu0 %v4513
        %4741 = vmatpush1.bf16.msra.mxu0 %v4512
        %4742 = vmatprep.subr.bf16.mxu0 %v4517
        %4743 = vmatpush1.bf16.msra.mxu0 %v4516
        %4744 = vmatprep.mubr.bf16.mxu0 %v3795
        %4745 = vmatmul.mubr.bf16.gmra.mrb[0].mxu0 %v3794
        %v4746 = vpop.f32.mrb[0].mxu0
        %v4747 = vadd.f32 %v4055, %v4746
        %v4748 = vpop.f32.mrb[0].mxu0
        %v4749 = vadd.f32 %v4059, %v4748
        %v4750 = vpop.f32.mrb[0].mxu0
        %v4751 = vadd.f32 %v4055, %v4750
        %v4752 = vpop.f32.mrb[0].mxu0
        %v4753 = vadd.f32 %v4059, %v4752
        %4754 = vmatprep.mubr.bf16.mxu0 %v3803
        %4755 = vmatmul.mubr.bf16.gmra.mrb[0].mxu0 %v3802
        %v4756 = vpop.f32.mrb[0].mxu0
        %v4757 = vadd.f32 %v4055, %v4756
        %v4758 = vpop.f32.mrb[0].mxu0
        %v4759 = vadd.f32 %v4059, %v4758
        %v4760 = vpop.f32.mrb[0].mxu0
        %v4761 = vadd.f32 %v4055, %v4760
        %v4762 = vpop.f32.mrb[0].mxu0
        %v4763 = vadd.f32 %v4059, %v4762
        %4764 = vmatprep.mubr.bf16.mxu0 %v3811
        %4765 = vmatmul.mubr.bf16.gmra.mrb[0].mxu0 %v3810
        %v4766 = vpop.f32.mrb[0].mxu0
        %v4767 = vadd.f32 %v4055, %v4766
        %v4768 = vpop.f32.mrb[0].mxu0
        %v4769 = vadd.f32 %v4059, %v4768
        %v4770 = vpop.f32.mrb[0].mxu0
        %v4771 = vadd.f32 %v4055, %v4770
        %v4772 = vpop.f32.mrb[0].mxu0
        %v4773 = vadd.f32 %v4059, %v4772
        %4774 = vmatprep.mubr.bf16.mxu0 %v3819
        %4775 = vmatmul.mubr.bf16.gmra.mrb[0].mxu0 %v3818
        %v4776 = vpop.f32.mrb[0].mxu0
        %v4777 = vadd.f32 %v4055, %v4776
        %v4778 = vpop.f32.mrb[0].mxu0
        %v4779 = vadd.f32 %v4059, %v4778
        %v4780 = vpop.f32.mrb[0].mxu0
        %v4781 = vadd.f32 %v4055, %v4780
        %v4782 = vpop.f32.mrb[0].mxu0
        %v4783 = vadd.f32 %v4059, %v4782
        %4784 = vmatprep.mubr.bf16.mxu0 %v3827
        %4785 = vmatmul.mubr.bf16.gmra.mrb[0].mxu0 %v3826
        %v4786 = vpop.f32.mrb[0].mxu0
        %v4787 = vadd.f32 %v4055, %v4786
        %v4788 = vpop.f32.mrb[0].mxu0
        %v4789 = vadd.f32 %v4059, %v4788
        %v4790 = vpop.f32.mrb[0].mxu0
        %v4791 = vadd.f32 %v4055, %v4790
        %v4792 = vpop.f32.mrb[0].mxu0
        %v4793 = vadd.f32 %v4059, %v4792
        %4794 = vmatprep.mubr.bf16.mxu0 %v3835
        %4795 = vmatmul.mubr.bf16.gmra.mrb[0].mxu0 %v3834
        %v4796 = vpop.f32.mrb[0].mxu0
        %v4797 = vadd.f32 %v4055, %v4796
        %v4798 = vpop.f32.mrb[0].mxu0
        %v4799 = vadd.f32 %v4059, %v4798
        %v4800 = vpop.f32.mrb[0].mxu0
        %v4801 = vadd.f32 %v4055, %v4800
        %v4802 = vpop.f32.mrb[0].mxu0
        %v4803 = vadd.f32 %v4059, %v4802
        %4804 = vmatprep.mubr.bf16.mxu0 %v3843
        %4805 = vmatmul.mubr.bf16.gmra.mrb[0].mxu0 %v3842
        %v4806 = vpop.f32.mrb[0].mxu0
        %v4807 = vadd.f32 %v4055, %v4806
        %v4808 = vpop.f32.mrb[0].mxu0
        %v4809 = vadd.f32 %v4059, %v4808
        %v4810 = vpop.f32.mrb[0].mxu0
        %v4811 = vadd.f32 %v4055, %v4810
        %v4812 = vpop.f32.mrb[0].mxu0
        %v4813 = vadd.f32 %v4059, %v4812
        %4814 = vmatprep.mubr.bf16.mxu0 %v3851
        %4815 = vmatmul.mubr.bf16.gmra.mrb[0].mxu0 %v3850
        %v4816 = vpop.f32.mrb[0].mxu0
        %v4817 = vadd.f32 %v4055, %v4816
        %v4818 = vpop.f32.mrb[0].mxu0
        %v4819 = vadd.f32 %v4059, %v4818
        %v4820 = vpop.f32.mrb[0].mxu0
        %v4821 = vadd.f32 %v4055, %v4820
        %v4822 = vpop.f32.mrb[0].mxu0
        %v4823 = vadd.f32 %v4059, %v4822
        %4824 = vmatprep.mubr.bf16.mxu0 %v3859
        %4825 = vmatmul.mubr.bf16.gmra.mrb[0].mxu0 %v3858
        %v4826 = vpop.f32.mrb[0].mxu0
        %v4827 = vadd.f32 %v4055, %v4826
        %v4828 = vpop.f32.mrb[0].mxu0
        %v4829 = vadd.f32 %v4059, %v4828
        %v4830 = vpop.f32.mrb[0].mxu0
        %v4831 = vadd.f32 %v4055, %v4830
        %v4832 = vpop.f32.mrb[0].mxu0
        %v4833 = vadd.f32 %v4059, %v4832
        %4834 = vmatprep.mubr.bf16.mxu0 %v3867
        %4835 = vmatmul.mubr.bf16.gmra.mrb[0].mxu0 %v3866
        %v4836 = vpop.f32.mrb[0].mxu0
        %v4837 = vadd.f32 %v4055, %v4836
        %v4838 = vpop.f32.mrb[0].mxu0
        %v4839 = vadd.f32 %v4059, %v4838
        %v4840 = vpop.f32.mrb[0].mxu0
        %v4841 = vadd.f32 %v4055, %v4840
        %v4842 = vpop.f32.mrb[0].mxu0
        %v4843 = vadd.f32 %v4059, %v4842
        %4844 = vmatprep.mubr.bf16.mxu0 %v3875
        %4845 = vmatmul.mubr.bf16.gmra.mrb[0].mxu0 %v3874
        %v4846 = vpop.f32.mrb[0].mxu0
        %v4847 = vadd.f32 %v4055, %v4846
        %v4848 = vpop.f32.mrb[0].mxu0
        %v4849 = vadd.f32 %v4059, %v4848
        %v4850 = vpop.f32.mrb[0].mxu0
        %v4851 = vadd.f32 %v4055, %v4850
        %v4852 = vpop.f32.mrb[0].mxu0
        %v4853 = vadd.f32 %v4059, %v4852
        %4854 = vmatprep.mubr.bf16.mxu0 %v3883
        %4855 = vmatmul.mubr.bf16.gmra.mrb[0].mxu0 %v3882
        %v4856 = vpop.f32.mrb[0].mxu0
        %v4857 = vadd.f32 %v4055, %v4856
        %v4858 = vpop.f32.mrb[0].mxu0
        %v4859 = vadd.f32 %v4059, %v4858
        %v4860 = vpop.f32.mrb[0].mxu0
        %v4861 = vadd.f32 %v4055, %v4860
        %v4862 = vpop.f32.mrb[0].mxu0
        %v4863 = vadd.f32 %v4059, %v4862
        %4864 = vmatprep.mubr.bf16.mxu0 %v3891
        %4865 = vmatmul.mubr.bf16.gmra.mrb[0].mxu0 %v3890
        %v4866 = vpop.f32.mrb[0].mxu0
        %v4867 = vadd.f32 %v4055, %v4866
        %v4868 = vpop.f32.mrb[0].mxu0
        %v4869 = vadd.f32 %v4059, %v4868
        %v4870 = vpop.f32.mrb[0].mxu0
        %v4871 = vadd.f32 %v4055, %v4870
        %v4872 = vpop.f32.mrb[0].mxu0
        %v4873 = vadd.f32 %v4059, %v4872
        %4874 = vmatprep.mubr.bf16.mxu0 %v3899
        %4875 = vmatmul.mubr.bf16.gmra.mrb[0].mxu0 %v3898
        %v4876 = vpop.f32.mrb[0].mxu0
        %v4877 = vadd.f32 %v4055, %v4876
        %v4878 = vpop.f32.mrb[0].mxu0
        %v4879 = vadd.f32 %v4059, %v4878
        %v4880 = vpop.f32.mrb[0].mxu0
        %v4881 = vadd.f32 %v4055, %v4880
        %v4882 = vpop.f32.mrb[0].mxu0
        %v4883 = vadd.f32 %v4059, %v4882
        %4884 = vmatprep.mubr.bf16.mxu0 %v3907
        %4885 = vmatmul.mubr.bf16.gmra.mrb[0].mxu0 %v3906
        %v4886 = vpop.f32.mrb[0].mxu0
        %v4887 = vadd.f32 %v4055, %v4886
        %v4888 = vpop.f32.mrb[0].mxu0
        %v4889 = vadd.f32 %v4059, %v4888
        %v4890 = vpop.f32.mrb[0].mxu0
        %v4891 = vadd.f32 %v4055, %v4890
        %v4892 = vpop.f32.mrb[0].mxu0
        %v4893 = vadd.f32 %v4059, %v4892
        %4894 = vmatprep.mubr.bf16.mxu0 %v3915
        %4895 = vmatmul.mubr.bf16.gmra.mrb[0].mxu0 %v3914
        %v4896 = vpop.f32.mrb[0].mxu0
        %v4897 = vadd.f32 %v4055, %v4896
        %v4898 = vpop.f32.mrb[0].mxu0
        %v4899 = vadd.f32 %v4059, %v4898
        %v4900 = vpop.f32.mrb[0].mxu0
        %v4901 = vadd.f32 %v4055, %v4900
        %v4902 = vpop.f32.mrb[0].mxu0
        %v4903 = vadd.f32 %v4059, %v4902
        %4904 = vdwg.mxu0
        %4905 = vmatprep.subr.bf16.mxu0 %v4521
        %4906 = vmatpush1.bf16.msra.mxu0 %v4520
        %4907 = vmatprep.subr.bf16.mxu0 %v4525
        %4908 = vmatpush1.bf16.msra.mxu0 %v4524
        %4909 = vmatprep.subr.bf16.mxu0 %v4529
        %4910 = vmatpush1.bf16.msra.mxu0 %v4528
        %4911 = vmatprep.subr.bf16.mxu0 %v4533
        %4912 = vmatpush1.bf16.msra.mxu0 %v4532
        %4913 = vmatprep.subr.bf16.mxu0 %v4537
        %4914 = vmatpush1.bf16.msra.mxu0 %v4536
        %4915 = vmatprep.subr.bf16.mxu0 %v4541
        %4916 = vmatpush1.bf16.msra.mxu0 %v4540
        %4917 = vmatprep.subr.bf16.mxu0 %v4545
        %4918 = vmatpush1.bf16.msra.mxu0 %v4544
        %4919 = vmatprep.subr.bf16.mxu0 %v4549
        %4920 = vmatpush1.bf16.msra.mxu0 %v4548
        %4921 = vmatprep.subr.bf16.mxu0 %v4553
        %4922 = vmatpush1.bf16.msra.mxu0 %v4552
        %4923 = vmatprep.subr.bf16.mxu0 %v4557
        %4924 = vmatpush1.bf16.msra.mxu0 %v4556
        %4925 = vmatprep.subr.bf16.mxu0 %v4561
        %4926 = vmatpush1.bf16.msra.mxu0 %v4560
        %4927 = vmatprep.subr.bf16.mxu0 %v4565
        %4928 = vmatpush1.bf16.msra.mxu0 %v4564
        %4929 = vmatprep.subr.bf16.mxu0 %v4569
        %4930 = vmatpush1.bf16.msra.mxu0 %v4568
        %4931 = vmatprep.subr.bf16.mxu0 %v4573
        %4932 = vmatpush1.bf16.msra.mxu0 %v4572
        %4933 = vmatprep.subr.bf16.mxu0 %v4577
        %4934 = vmatpush1.bf16.msra.mxu0 %v4576
        %4935 = vmatprep.subr.bf16.mxu0 %v4581
        %4936 = vmatpush1.bf16.msra.mxu0 %v4580
        %4937 = vmatprep.mubr.bf16.mxu0 %v3797
        %4938 = vmatmul.mubr.bf16.gmra.mrb[0].mxu0 %v3796
        %v4939 = vpop.f32.mrb[0].mxu0
        %v4940 = vadd.f32 %v4747, %v4939
        %v4941 = vpop.f32.mrb[0].mxu0
        %v4942 = vadd.f32 %v4749, %v4941
        %v4943 = vpop.f32.mrb[0].mxu0
        %v4944 = vadd.f32 %v4751, %v4943
        %v4945 = vpop.f32.mrb[0].mxu0
        %v4946 = vadd.f32 %v4753, %v4945
        %4947 = vmatprep.mubr.bf16.mxu0 %v3805
        %4948 = vmatmul.mubr.bf16.gmra.mrb[0].mxu0 %v3804
        %v4949 = vpop.f32.mrb[0].mxu0
        %v4950 = vadd.f32 %v4757, %v4949
        %v4951 = vpop.f32.mrb[0].mxu0
        %v4952 = vadd.f32 %v4759, %v4951
        %v4953 = vpop.f32.mrb[0].mxu0
        %v4954 = vadd.f32 %v4761, %v4953
        %v4955 = vpop.f32.mrb[0].mxu0
        %v4956 = vadd.f32 %v4763, %v4955
        %4957 = vmatprep.mubr.bf16.mxu0 %v3813
        %4958 = vmatmul.mubr.bf16.gmra.mrb[0].mxu0 %v3812
        %v4959 = vpop.f32.mrb[0].mxu0
        %v4960 = vadd.f32 %v4767, %v4959
        %v4961 = vpop.f32.mrb[0].mxu0
        %v4962 = vadd.f32 %v4769, %v4961
        %v4963 = vpop.f32.mrb[0].mxu0
        %v4964 = vadd.f32 %v4771, %v4963
        %v4965 = vpop.f32.mrb[0].mxu0
        %v4966 = vadd.f32 %v4773, %v4965
        %4967 = vmatprep.mubr.bf16.mxu0 %v3821
        %4968 = vmatmul.mubr.bf16.gmra.mrb[0].mxu0 %v3820
        %v4969 = vpop.f32.mrb[0].mxu0
        %v4970 = vadd.f32 %v4777, %v4969
        %v4971 = vpop.f32.mrb[0].mxu0
        %v4972 = vadd.f32 %v4779, %v4971
        %v4973 = vpop.f32.mrb[0].mxu0
        %v4974 = vadd.f32 %v4781, %v4973
        %v4975 = vpop.f32.mrb[0].mxu0
        %v4976 = vadd.f32 %v4783, %v4975
        %4977 = vmatprep.mubr.bf16.mxu0 %v3829
        %4978 = vmatmul.mubr.bf16.gmra.mrb[0].mxu0 %v3828
        %v4979 = vpop.f32.mrb[0].mxu0
        %v4980 = vadd.f32 %v4787, %v4979
        %v4981 = vpop.f32.mrb[0].mxu0
        %v4982 = vadd.f32 %v4789, %v4981
        %v4983 = vpop.f32.mrb[0].mxu0
        %v4984 = vadd.f32 %v4791, %v4983
        %v4985 = vpop.f32.mrb[0].mxu0
        %v4986 = vadd.f32 %v4793, %v4985
        %4987 = vmatprep.mubr.bf16.mxu0 %v3837
        %4988 = vmatmul.mubr.bf16.gmra.mrb[0].mxu0 %v3836
        %v4989 = vpop.f32.mrb[0].mxu0
        %v4990 = vadd.f32 %v4797, %v4989
        %v4991 = vpop.f32.mrb[0].mxu0
        %v4992 = vadd.f32 %v4799, %v4991
        %v4993 = vpop.f32.mrb[0].mxu0
        %v4994 = vadd.f32 %v4801, %v4993
        %v4995 = vpop.f32.mrb[0].mxu0
        %v4996 = vadd.f32 %v4803, %v4995
        %4997 = vmatprep.mubr.bf16.mxu0 %v3845
        %4998 = vmatmul.mubr.bf16.gmra.mrb[0].mxu0 %v3844
        %v4999 = vpop.f32.mrb[0].mxu0
        %v5000 = vadd.f32 %v4807, %v4999
        %v5001 = vpop.f32.mrb[0].mxu0
        %v5002 = vadd.f32 %v4809, %v5001
        %v5003 = vpop.f32.mrb[0].mxu0
        %v5004 = vadd.f32 %v4811, %v5003
        %v5005 = vpop.f32.mrb[0].mxu0
        %v5006 = vadd.f32 %v4813, %v5005
        %5007 = vmatprep.mubr.bf16.mxu0 %v3853
        %5008 = vmatmul.mubr.bf16.gmra.mrb[0].mxu0 %v3852
        %v5009 = vpop.f32.mrb[0].mxu0
        %v5010 = vadd.f32 %v4817, %v5009
        %v5011 = vpop.f32.mrb[0].mxu0
        %v5012 = vadd.f32 %v4819, %v5011
        %v5013 = vpop.f32.mrb[0].mxu0
        %v5014 = vadd.f32 %v4821, %v5013
        %v5015 = vpop.f32.mrb[0].mxu0
        %v5016 = vadd.f32 %v4823, %v5015
        %5017 = vmatprep.mubr.bf16.mxu0 %v3861
        %5018 = vmatmul.mubr.bf16.gmra.mrb[0].mxu0 %v3860
        %v5019 = vpop.f32.mrb[0].mxu0
        %v5020 = vadd.f32 %v4827, %v5019
        %v5021 = vpop.f32.mrb[0].mxu0
        %v5022 = vadd.f32 %v4829, %v5021
        %v5023 = vpop.f32.mrb[0].mxu0
        %v5024 = vadd.f32 %v4831, %v5023
        %v5025 = vpop.f32.mrb[0].mxu0
        %v5026 = vadd.f32 %v4833, %v5025
        %5027 = vmatprep.mubr.bf16.mxu0 %v3869
        %5028 = vmatmul.mubr.bf16.gmra.mrb[0].mxu0 %v3868
        %v5029 = vpop.f32.mrb[0].mxu0
        %v5030 = vadd.f32 %v4837, %v5029
        %v5031 = vpop.f32.mrb[0].mxu0
        %v5032 = vadd.f32 %v4839, %v5031
        %v5033 = vpop.f32.mrb[0].mxu0
        %v5034 = vadd.f32 %v4841, %v5033
        %v5035 = vpop.f32.mrb[0].mxu0
        %v5036 = vadd.f32 %v4843, %v5035
        %5037 = vmatprep.mubr.bf16.mxu0 %v3877
        %5038 = vmatmul.mubr.bf16.gmra.mrb[0].mxu0 %v3876
        %v5039 = vpop.f32.mrb[0].mxu0
        %v5040 = vadd.f32 %v4847, %v5039
        %v5041 = vpop.f32.mrb[0].mxu0
        %v5042 = vadd.f32 %v4849, %v5041
        %v5043 = vpop.f32.mrb[0].mxu0
        %v5044 = vadd.f32 %v4851, %v5043
        %v5045 = vpop.f32.mrb[0].mxu0
        %v5046 = vadd.f32 %v4853, %v5045
        %5047 = vmatprep.mubr.bf16.mxu0 %v3885
        %5048 = vmatmul.mubr.bf16.gmra.mrb[0].mxu0 %v3884
        %v5049 = vpop.f32.mrb[0].mxu0
        %v5050 = vadd.f32 %v4857, %v5049
        %v5051 = vpop.f32.mrb[0].mxu0
        %v5052 = vadd.f32 %v4859, %v5051
        %v5053 = vpop.f32.mrb[0].mxu0
        %v5054 = vadd.f32 %v4861, %v5053
        %v5055 = vpop.f32.mrb[0].mxu0
        %v5056 = vadd.f32 %v4863, %v5055
        %5057 = vmatprep.mubr.bf16.mxu0 %v3893
        %5058 = vmatmul.mubr.bf16.gmra.mrb[0].mxu0 %v3892
        %v5059 = vpop.f32.mrb[0].mxu0
        %v5060 = vadd.f32 %v4867, %v5059
        %v5061 = vpop.f32.mrb[0].mxu0
        %v5062 = vadd.f32 %v4869, %v5061
        %v5063 = vpop.f32.mrb[0].mxu0
        %v5064 = vadd.f32 %v4871, %v5063
        %v5065 = vpop.f32.mrb[0].mxu0
        %v5066 = vadd.f32 %v4873, %v5065
        %5067 = vmatprep.mubr.bf16.mxu0 %v3901
        %5068 = vmatmul.mubr.bf16.gmra.mrb[0].mxu0 %v3900
        %v5069 = vpop.f32.mrb[0].mxu0
        %v5070 = vadd.f32 %v4877, %v5069
        %v5071 = vpop.f32.mrb[0].mxu0
        %v5072 = vadd.f32 %v4879, %v5071
        %v5073 = vpop.f32.mrb[0].mxu0
        %v5074 = vadd.f32 %v4881, %v5073
        %v5075 = vpop.f32.mrb[0].mxu0
        %v5076 = vadd.f32 %v4883, %v5075
        %5077 = vmatprep.mubr.bf16.mxu0 %v3909
        %5078 = vmatmul.mubr.bf16.gmra.mrb[0].mxu0 %v3908
        %v5079 = vpop.f32.mrb[0].mxu0
        %v5080 = vadd.f32 %v4887, %v5079
        %v5081 = vpop.f32.mrb[0].mxu0
        %v5082 = vadd.f32 %v4889, %v5081
        %v5083 = vpop.f32.mrb[0].mxu0
        %v5084 = vadd.f32 %v4891, %v5083
        %v5085 = vpop.f32.mrb[0].mxu0
        %v5086 = vadd.f32 %v4893, %v5085
        %5087 = vmatprep.mubr.bf16.mxu0 %v3917
        %5088 = vmatmul.mubr.bf16.gmra.mrb[0].mxu0 %v3916
        %v5089 = vpop.f32.mrb[0].mxu0
        %v5090 = vadd.f32 %v4897, %v5089
        %v5091 = vpop.f32.mrb[0].mxu0
        %v5092 = vadd.f32 %v4899, %v5091
        %v5093 = vpop.f32.mrb[0].mxu0
        %v5094 = vadd.f32 %v4901, %v5093
        %v5095 = vpop.f32.mrb[0].mxu0
        %v5096 = vadd.f32 %v4903, %v5095
        %5097 = vdwg.mxu0
        %5098 = vmatprep.subr.bf16.mxu0 %v4459
        %5099 = vmatpush1.bf16.msra.mxu0 %v4458
        %5100 = vmatprep.subr.bf16.mxu0 %v4463
        %5101 = vmatpush1.bf16.msra.mxu0 %v4462
        %5102 = vmatprep.subr.bf16.mxu0 %v4467
        %5103 = vmatpush1.bf16.msra.mxu0 %v4466
        %5104 = vmatprep.subr.bf16.mxu0 %v4471
        %5105 = vmatpush1.bf16.msra.mxu0 %v4470
        %5106 = vmatprep.subr.bf16.mxu0 %v4475
        %5107 = vmatpush1.bf16.msra.mxu0 %v4474
        %5108 = vmatprep.subr.bf16.mxu0 %v4479
        %5109 = vmatpush1.bf16.msra.mxu0 %v4478
        %5110 = vmatprep.subr.bf16.mxu0 %v4483
        %5111 = vmatpush1.bf16.msra.mxu0 %v4482
        %5112 = vmatprep.subr.bf16.mxu0 %v4487
        %5113 = vmatpush1.bf16.msra.mxu0 %v4486
        %5114 = vmatprep.subr.bf16.mxu0 %v4491
        %5115 = vmatpush1.bf16.msra.mxu0 %v4490
        %5116 = vmatprep.subr.bf16.mxu0 %v4495
        %5117 = vmatpush1.bf16.msra.mxu0 %v4494
        %5118 = vmatprep.subr.bf16.mxu0 %v4499
        %5119 = vmatpush1.bf16.msra.mxu0 %v4498
        %5120 = vmatprep.subr.bf16.mxu0 %v4503
        %5121 = vmatpush1.bf16.msra.mxu0 %v4502
        %5122 = vmatprep.subr.bf16.mxu0 %v4507
        %5123 = vmatpush1.bf16.msra.mxu0 %v4506
        %5124 = vmatprep.subr.bf16.mxu0 %v4511
        %5125 = vmatpush1.bf16.msra.mxu0 %v4510
        %5126 = vmatprep.subr.bf16.mxu0 %v4515
        %5127 = vmatpush1.bf16.msra.mxu0 %v4514
        %5128 = vmatprep.subr.bf16.mxu0 %v4519
        %5129 = vmatpush1.bf16.msra.mxu0 %v4518
        %5130 = vmatprep.mubr.bf16.mxu0 %v3795
        %5131 = vmatmul.mubr.bf16.gmra.mrb[0].mxu0 %v3794
        %v5132 = vpop.f32.mrb[0].mxu0
        %v5133 = vadd.f32 %v4063, %v5132
        %v5134 = vpop.f32.mrb[0].mxu0
        %v5135 = vadd.f32 %v4067, %v5134
        %v5136 = vpop.f32.mrb[0].mxu0
        %v5137 = vadd.f32 %v4063, %v5136
        %v5138 = vpop.f32.mrb[0].mxu0
        %v5139 = vadd.f32 %v4067, %v5138
        %5140 = vmatprep.mubr.bf16.mxu0 %v3803
        %5141 = vmatmul.mubr.bf16.gmra.mrb[0].mxu0 %v3802
        %v5142 = vpop.f32.mrb[0].mxu0
        %v5143 = vadd.f32 %v4063, %v5142
        %v5144 = vpop.f32.mrb[0].mxu0
        %v5145 = vadd.f32 %v4067, %v5144
        %v5146 = vpop.f32.mrb[0].mxu0
        %v5147 = vadd.f32 %v4063, %v5146
        %v5148 = vpop.f32.mrb[0].mxu0
        %v5149 = vadd.f32 %v4067, %v5148
        %5150 = vmatprep.mubr.bf16.mxu0 %v3811
        %5151 = vmatmul.mubr.bf16.gmra.mrb[0].mxu0 %v3810
        %v5152 = vpop.f32.mrb[0].mxu0
        %v5153 = vadd.f32 %v4063, %v5152
        %v5154 = vpop.f32.mrb[0].mxu0
        %v5155 = vadd.f32 %v4067, %v5154
        %v5156 = vpop.f32.mrb[0].mxu0
        %v5157 = vadd.f32 %v4063, %v5156
        %v5158 = vpop.f32.mrb[0].mxu0
        %v5159 = vadd.f32 %v4067, %v5158
        %5160 = vmatprep.mubr.bf16.mxu0 %v3819
        %5161 = vmatmul.mubr.bf16.gmra.mrb[0].mxu0 %v3818
        %v5162 = vpop.f32.mrb[0].mxu0
        %v5163 = vadd.f32 %v4063, %v5162
        %v5164 = vpop.f32.mrb[0].mxu0
        %v5165 = vadd.f32 %v4067, %v5164
        %v5166 = vpop.f32.mrb[0].mxu0
        %v5167 = vadd.f32 %v4063, %v5166
        %v5168 = vpop.f32.mrb[0].mxu0
        %v5169 = vadd.f32 %v4067, %v5168
        %5170 = vmatprep.mubr.bf16.mxu0 %v3827
        %5171 = vmatmul.mubr.bf16.gmra.mrb[0].mxu0 %v3826
        %v5172 = vpop.f32.mrb[0].mxu0
        %v5173 = vadd.f32 %v4063, %v5172
        %v5174 = vpop.f32.mrb[0].mxu0
        %v5175 = vadd.f32 %v4067, %v5174
        %v5176 = vpop.f32.mrb[0].mxu0
        %v5177 = vadd.f32 %v4063, %v5176
        %v5178 = vpop.f32.mrb[0].mxu0
        %v5179 = vadd.f32 %v4067, %v5178
        %5180 = vmatprep.mubr.bf16.mxu0 %v3835
        %5181 = vmatmul.mubr.bf16.gmra.mrb[0].mxu0 %v3834
        %v5182 = vpop.f32.mrb[0].mxu0
        %v5183 = vadd.f32 %v4063, %v5182
        %v5184 = vpop.f32.mrb[0].mxu0
        %v5185 = vadd.f32 %v4067, %v5184
        %v5186 = vpop.f32.mrb[0].mxu0
        %v5187 = vadd.f32 %v4063, %v5186
        %v5188 = vpop.f32.mrb[0].mxu0
        %v5189 = vadd.f32 %v4067, %v5188
        %5190 = vmatprep.mubr.bf16.mxu0 %v3843
        %5191 = vmatmul.mubr.bf16.gmra.mrb[0].mxu0 %v3842
        %v5192 = vpop.f32.mrb[0].mxu0
        %v5193 = vadd.f32 %v4063, %v5192
        %v5194 = vpop.f32.mrb[0].mxu0
        %v5195 = vadd.f32 %v4067, %v5194
        %v5196 = vpop.f32.mrb[0].mxu0
        %v5197 = vadd.f32 %v4063, %v5196
        %v5198 = vpop.f32.mrb[0].mxu0
        %v5199 = vadd.f32 %v4067, %v5198
        %5200 = vmatprep.mubr.bf16.mxu0 %v3851
        %5201 = vmatmul.mubr.bf16.gmra.mrb[0].mxu0 %v3850
        %v5202 = vpop.f32.mrb[0].mxu0
        %v5203 = vadd.f32 %v4063, %v5202
        %v5204 = vpop.f32.mrb[0].mxu0
        %v5205 = vadd.f32 %v4067, %v5204
        %v5206 = vpop.f32.mrb[0].mxu0
        %v5207 = vadd.f32 %v4063, %v5206
        %v5208 = vpop.f32.mrb[0].mxu0
        %v5209 = vadd.f32 %v4067, %v5208
        %5210 = vmatprep.mubr.bf16.mxu0 %v3859
        %5211 = vmatmul.mubr.bf16.gmra.mrb[0].mxu0 %v3858
        %v5212 = vpop.f32.mrb[0].mxu0
        %v5213 = vadd.f32 %v4063, %v5212
        %v5214 = vpop.f32.mrb[0].mxu0
        %v5215 = vadd.f32 %v4067, %v5214
        %v5216 = vpop.f32.mrb[0].mxu0
        %v5217 = vadd.f32 %v4063, %v5216
        %v5218 = vpop.f32.mrb[0].mxu0
        %v5219 = vadd.f32 %v4067, %v5218
        %5220 = vmatprep.mubr.bf16.mxu0 %v3867
        %5221 = vmatmul.mubr.bf16.gmra.mrb[0].mxu0 %v3866
        %v5222 = vpop.f32.mrb[0].mxu0
        %v5223 = vadd.f32 %v4063, %v5222
        %v5224 = vpop.f32.mrb[0].mxu0
        %v5225 = vadd.f32 %v4067, %v5224
        %v5226 = vpop.f32.mrb[0].mxu0
        %v5227 = vadd.f32 %v4063, %v5226
        %v5228 = vpop.f32.mrb[0].mxu0
        %v5229 = vadd.f32 %v4067, %v5228
        %5230 = vmatprep.mubr.bf16.mxu0 %v3875
        %5231 = vmatmul.mubr.bf16.gmra.mrb[0].mxu0 %v3874
        %v5232 = vpop.f32.mrb[0].mxu0
        %v5233 = vadd.f32 %v4063, %v5232
        %v5234 = vpop.f32.mrb[0].mxu0
        %v5235 = vadd.f32 %v4067, %v5234
        %v5236 = vpop.f32.mrb[0].mxu0
        %v5237 = vadd.f32 %v4063, %v5236
        %v5238 = vpop.f32.mrb[0].mxu0
        %v5239 = vadd.f32 %v4067, %v5238
        %5240 = vmatprep.mubr.bf16.mxu0 %v3883
        %5241 = vmatmul.mubr.bf16.gmra.mrb[0].mxu0 %v3882
        %v5242 = vpop.f32.mrb[0].mxu0
        %v5243 = vadd.f32 %v4063, %v5242
        %v5244 = vpop.f32.mrb[0].mxu0
        %v5245 = vadd.f32 %v4067, %v5244
        %v5246 = vpop.f32.mrb[0].mxu0
        %v5247 = vadd.f32 %v4063, %v5246
        %v5248 = vpop.f32.mrb[0].mxu0
        %v5249 = vadd.f32 %v4067, %v5248
        %5250 = vmatprep.mubr.bf16.mxu0 %v3891
        %5251 = vmatmul.mubr.bf16.gmra.mrb[0].mxu0 %v3890
        %v5252 = vpop.f32.mrb[0].mxu0
        %v5253 = vadd.f32 %v4063, %v5252
        %v5254 = vpop.f32.mrb[0].mxu0
        %v5255 = vadd.f32 %v4067, %v5254
        %v5256 = vpop.f32.mrb[0].mxu0
        %v5257 = vadd.f32 %v4063, %v5256
        %v5258 = vpop.f32.mrb[0].mxu0
        %v5259 = vadd.f32 %v4067, %v5258
        %5260 = vmatprep.mubr.bf16.mxu0 %v3899
        %5261 = vmatmul.mubr.bf16.gmra.mrb[0].mxu0 %v3898
        %v5262 = vpop.f32.mrb[0].mxu0
        %v5263 = vadd.f32 %v4063, %v5262
        %v5264 = vpop.f32.mrb[0].mxu0
        %v5265 = vadd.f32 %v4067, %v5264
        %v5266 = vpop.f32.mrb[0].mxu0
        %v5267 = vadd.f32 %v4063, %v5266
        %v5268 = vpop.f32.mrb[0].mxu0
        %v5269 = vadd.f32 %v4067, %v5268
        %5270 = vmatprep.mubr.bf16.mxu0 %v3907
        %5271 = vmatmul.mubr.bf16.gmra.mrb[0].mxu0 %v3906
        %v5272 = vpop.f32.mrb[0].mxu0
        %v5273 = vadd.f32 %v4063, %v5272
        %v5274 = vpop.f32.mrb[0].mxu0
        %v5275 = vadd.f32 %v4067, %v5274
        %v5276 = vpop.f32.mrb[0].mxu0
        %v5277 = vadd.f32 %v4063, %v5276
        %v5278 = vpop.f32.mrb[0].mxu0
        %v5279 = vadd.f32 %v4067, %v5278
        %5280 = vmatprep.mubr.bf16.mxu0 %v3915
        %5281 = vmatmul.mubr.bf16.gmra.mrb[0].mxu0 %v3914
        %v5282 = vpop.f32.mrb[0].mxu0
        %v5283 = vadd.f32 %v4063, %v5282
        %v5284 = vpop.f32.mrb[0].mxu0
        %v5285 = vadd.f32 %v4067, %v5284
        %v5286 = vpop.f32.mrb[0].mxu0
        %v5287 = vadd.f32 %v4063, %v5286
        %v5288 = vpop.f32.mrb[0].mxu0
        %v5289 = vadd.f32 %v4067, %v5288
        %5290 = vdwg.mxu0
        %5291 = vmatprep.subr.bf16.mxu0 %v4523
        %5292 = vmatpush1.bf16.msra.mxu0 %v4522
        %5293 = vmatprep.subr.bf16.mxu0 %v4527
        %5294 = vmatpush1.bf16.msra.mxu0 %v4526
        %5295 = vmatprep.subr.bf16.mxu0 %v4531
        %5296 = vmatpush1.bf16.msra.mxu0 %v4530
        %5297 = vmatprep.subr.bf16.mxu0 %v4535
        %5298 = vmatpush1.bf16.msra.mxu0 %v4534
        %5299 = vmatprep.subr.bf16.mxu0 %v4539
        %5300 = vmatpush1.bf16.msra.mxu0 %v4538
        %5301 = vmatprep.subr.bf16.mxu0 %v4543
        %5302 = vmatpush1.bf16.msra.mxu0 %v4542
        %5303 = vmatprep.subr.bf16.mxu0 %v4547
        %5304 = vmatpush1.bf16.msra.mxu0 %v4546
        %5305 = vmatprep.subr.bf16.mxu0 %v4551
        %5306 = vmatpush1.bf16.msra.mxu0 %v4550
        %5307 = vmatprep.subr.bf16.mxu0 %v4555
        %5308 = vmatpush1.bf16.msra.mxu0 %v4554
        %5309 = vmatprep.subr.bf16.mxu0 %v4559
        %5310 = vmatpush1.bf16.msra.mxu0 %v4558
        %5311 = vmatprep.subr.bf16.mxu0 %v4563
        %5312 = vmatpush1.bf16.msra.mxu0 %v4562
        %5313 = vmatprep.subr.bf16.mxu0 %v4567
        %5314 = vmatpush1.bf16.msra.mxu0 %v4566
        %5315 = vmatprep.subr.bf16.mxu0 %v4571
        %5316 = vmatpush1.bf16.msra.mxu0 %v4570
        %5317 = vmatprep.subr.bf16.mxu0 %v4575
        %5318 = vmatpush1.bf16.msra.mxu0 %v4574
        %5319 = vmatprep.subr.bf16.mxu0 %v4579
        %5320 = vmatpush1.bf16.msra.mxu0 %v4578
        %5321 = vmatprep.subr.bf16.mxu0 %v4583
        %5322 = vmatpush1.bf16.msra.mxu0 %v4582
        %5323 = vmatprep.mubr.bf16.mxu0 %v3797
        %5324 = vmatmul.mubr.bf16.gmra.mrb[0].mxu0 %v3796
        %v5325 = vpop.f32.mrb[0].mxu0
        %v5326 = vadd.f32 %v5133, %v5325
        %v5327 = vpop.f32.mrb[0].mxu0
        %v5328 = vadd.f32 %v5135, %v5327
        %v5329 = vpop.f32.mrb[0].mxu0
        %v5330 = vadd.f32 %v5137, %v5329
        %v5331 = vpop.f32.mrb[0].mxu0
        %v5332 = vadd.f32 %v5139, %v5331
        %5333 = vmatprep.mubr.bf16.mxu0 %v3805
        %5334 = vmatmul.mubr.bf16.gmra.mrb[0].mxu0 %v3804
        %v5335 = vpop.f32.mrb[0].mxu0
        %v5336 = vadd.f32 %v5143, %v5335
        %v5337 = vpop.f32.mrb[0].mxu0
        %v5338 = vadd.f32 %v5145, %v5337
        %v5339 = vpop.f32.mrb[0].mxu0
        %v5340 = vadd.f32 %v5147, %v5339
        %v5341 = vpop.f32.mrb[0].mxu0
        %v5342 = vadd.f32 %v5149, %v5341
        %5343 = vmatprep.mubr.bf16.mxu0 %v3813
        %5344 = vmatmul.mubr.bf16.gmra.mrb[0].mxu0 %v3812
        %v5345 = vpop.f32.mrb[0].mxu0
        %v5346 = vadd.f32 %v5153, %v5345
        %v5347 = vpop.f32.mrb[0].mxu0
        %v5348 = vadd.f32 %v5155, %v5347
        %v5349 = vpop.f32.mrb[0].mxu0
        %v5350 = vadd.f32 %v5157, %v5349
        %v5351 = vpop.f32.mrb[0].mxu0
        %v5352 = vadd.f32 %v5159, %v5351
        %5353 = vmatprep.mubr.bf16.mxu0 %v3821
        %5354 = vmatmul.mubr.bf16.gmra.mrb[0].mxu0 %v3820
        %v5355 = vpop.f32.mrb[0].mxu0
        %v5356 = vadd.f32 %v5163, %v5355
        %v5357 = vpop.f32.mrb[0].mxu0
        %v5358 = vadd.f32 %v5165, %v5357
        %v5359 = vpop.f32.mrb[0].mxu0
        %v5360 = vadd.f32 %v5167, %v5359
        %v5361 = vpop.f32.mrb[0].mxu0
        %v5362 = vadd.f32 %v5169, %v5361
        %5363 = vmatprep.mubr.bf16.mxu0 %v3829
        %5364 = vmatmul.mubr.bf16.gmra.mrb[0].mxu0 %v3828
        %v5365 = vpop.f32.mrb[0].mxu0
        %v5366 = vadd.f32 %v5173, %v5365
        %v5367 = vpop.f32.mrb[0].mxu0
        %v5368 = vadd.f32 %v5175, %v5367
        %v5369 = vpop.f32.mrb[0].mxu0
        %v5370 = vadd.f32 %v5177, %v5369
        %v5371 = vpop.f32.mrb[0].mxu0
        %v5372 = vadd.f32 %v5179, %v5371
        %5373 = vmatprep.mubr.bf16.mxu0 %v3837
        %5374 = vmatmul.mubr.bf16.gmra.mrb[0].mxu0 %v3836
        %v5375 = vpop.f32.mrb[0].mxu0
        %v5376 = vadd.f32 %v5183, %v5375
        %v5377 = vpop.f32.mrb[0].mxu0
        %v5378 = vadd.f32 %v5185, %v5377
        %v5379 = vpop.f32.mrb[0].mxu0
        %v5380 = vadd.f32 %v5187, %v5379
        %v5381 = vpop.f32.mrb[0].mxu0
        %v5382 = vadd.f32 %v5189, %v5381
        %5383 = vmatprep.mubr.bf16.mxu0 %v3845
        %5384 = vmatmul.mubr.bf16.gmra.mrb[0].mxu0 %v3844
        %v5385 = vpop.f32.mrb[0].mxu0
        %v5386 = vadd.f32 %v5193, %v5385
        %v5387 = vpop.f32.mrb[0].mxu0
        %v5388 = vadd.f32 %v5195, %v5387
        %v5389 = vpop.f32.mrb[0].mxu0
        %v5390 = vadd.f32 %v5197, %v5389
        %v5391 = vpop.f32.mrb[0].mxu0
        %v5392 = vadd.f32 %v5199, %v5391
        %5393 = vmatprep.mubr.bf16.mxu0 %v3853
        %5394 = vmatmul.mubr.bf16.gmra.mrb[0].mxu0 %v3852
        %v5395 = vpop.f32.mrb[0].mxu0
        %v5396 = vadd.f32 %v5203, %v5395
        %v5397 = vpop.f32.mrb[0].mxu0
        %v5398 = vadd.f32 %v5205, %v5397
        %v5399 = vpop.f32.mrb[0].mxu0
        %v5400 = vadd.f32 %v5207, %v5399
        %v5401 = vpop.f32.mrb[0].mxu0
        %v5402 = vadd.f32 %v5209, %v5401
        %5403 = vmatprep.mubr.bf16.mxu0 %v3861
        %5404 = vmatmul.mubr.bf16.gmra.mrb[0].mxu0 %v3860
        %v5405 = vpop.f32.mrb[0].mxu0
        %v5406 = vadd.f32 %v5213, %v5405
        %v5407 = vpop.f32.mrb[0].mxu0
        %v5408 = vadd.f32 %v5215, %v5407
        %v5409 = vpop.f32.mrb[0].mxu0
        %v5410 = vadd.f32 %v5217, %v5409
        %v5411 = vpop.f32.mrb[0].mxu0
        %v5412 = vadd.f32 %v5219, %v5411
        %5413 = vmatprep.mubr.bf16.mxu0 %v3869
        %5414 = vmatmul.mubr.bf16.gmra.mrb[0].mxu0 %v3868
        %v5415 = vpop.f32.mrb[0].mxu0
        %v5416 = vadd.f32 %v5223, %v5415
        %v5417 = vpop.f32.mrb[0].mxu0
        %v5418 = vadd.f32 %v5225, %v5417
        %v5419 = vpop.f32.mrb[0].mxu0
        %v5420 = vadd.f32 %v5227, %v5419
        %v5421 = vpop.f32.mrb[0].mxu0
        %v5422 = vadd.f32 %v5229, %v5421
        %5423 = vmatprep.mubr.bf16.mxu0 %v3877
        %5424 = vmatmul.mubr.bf16.gmra.mrb[0].mxu0 %v3876
        %v5425 = vpop.f32.mrb[0].mxu0
        %v5426 = vadd.f32 %v5233, %v5425
        %v5427 = vpop.f32.mrb[0].mxu0
        %v5428 = vadd.f32 %v5235, %v5427
        %v5429 = vpop.f32.mrb[0].mxu0
        %v5430 = vadd.f32 %v5237, %v5429
        %v5431 = vpop.f32.mrb[0].mxu0
        %v5432 = vadd.f32 %v5239, %v5431
        %5433 = vmatprep.mubr.bf16.mxu0 %v3885
        %5434 = vmatmul.mubr.bf16.gmra.mrb[0].mxu0 %v3884
        %v5435 = vpop.f32.mrb[0].mxu0
        %v5436 = vadd.f32 %v5243, %v5435
        %v5437 = vpop.f32.mrb[0].mxu0
        %v5438 = vadd.f32 %v5245, %v5437
        %v5439 = vpop.f32.mrb[0].mxu0
        %v5440 = vadd.f32 %v5247, %v5439
        %v5441 = vpop.f32.mrb[0].mxu0
        %v5442 = vadd.f32 %v5249, %v5441
        %5443 = vmatprep.mubr.bf16.mxu0 %v3893
        %5444 = vmatmul.mubr.bf16.gmra.mrb[0].mxu0 %v3892
        %v5445 = vpop.f32.mrb[0].mxu0
        %v5446 = vadd.f32 %v5253, %v5445
        %v5447 = vpop.f32.mrb[0].mxu0
        %v5448 = vadd.f32 %v5255, %v5447
        %v5449 = vpop.f32.mrb[0].mxu0
        %v5450 = vadd.f32 %v5257, %v5449
        %v5451 = vpop.f32.mrb[0].mxu0
        %v5452 = vadd.f32 %v5259, %v5451
        %5453 = vmatprep.mubr.bf16.mxu0 %v3901
        %5454 = vmatmul.mubr.bf16.gmra.mrb[0].mxu0 %v3900
        %v5455 = vpop.f32.mrb[0].mxu0
        %v5456 = vadd.f32 %v5263, %v5455
        %v5457 = vpop.f32.mrb[0].mxu0
        %v5458 = vadd.f32 %v5265, %v5457
        %v5459 = vpop.f32.mrb[0].mxu0
        %v5460 = vadd.f32 %v5267, %v5459
        %v5461 = vpop.f32.mrb[0].mxu0
        %v5462 = vadd.f32 %v5269, %v5461
        %5463 = vmatprep.mubr.bf16.mxu0 %v3909
        %5464 = vmatmul.mubr.bf16.gmra.mrb[0].mxu0 %v3908
        %v5465 = vpop.f32.mrb[0].mxu0
        %v5466 = vadd.f32 %v5273, %v5465
        %v5467 = vpop.f32.mrb[0].mxu0
        %v5468 = vadd.f32 %v5275, %v5467
        %v5469 = vpop.f32.mrb[0].mxu0
        %v5470 = vadd.f32 %v5277, %v5469
        %v5471 = vpop.f32.mrb[0].mxu0
        %v5472 = vadd.f32 %v5279, %v5471
        %5473 = vmatprep.mubr.bf16.mxu0 %v3917
        %5474 = vmatmul.mubr.bf16.gmra.mrb[0].mxu0 %v3916
        %v5475 = vpop.f32.mrb[0].mxu0
        %v5476 = vadd.f32 %v5283, %v5475
        %v5477 = vpop.f32.mrb[0].mxu0
        %v5478 = vadd.f32 %v5285, %v5477
        %v5479 = vpop.f32.mrb[0].mxu0
        %v5480 = vadd.f32 %v5287, %v5479
        %v5481 = vpop.f32.mrb[0].mxu0
        %v5482 = vadd.f32 %v5289, %v5481
        %5483 = vdwg.mxu0
        %v5484 = vtanh.pop %v4940
        %v5485 = vtanh.pop %v4942
        %v5486 = vtanh.pop %v5326
        %v5487 = vtanh.pop %v5328
        %v5488 = vtanh.pop %v4944
        %v5489 = vtanh.pop %v4946
        %v5490 = vtanh.pop %v5330
        %v5491 = vtanh.pop %v5332
        %v5492 = vtanh.pop %v4950
        %v5493 = vtanh.pop %v4952
        %v5494 = vtanh.pop %v5336
        %v5495 = vtanh.pop %v5338
        %v5496 = vtanh.pop %v4954
        %v5497 = vtanh.pop %v4956
        %v5498 = vtanh.pop %v5340
        %v5499 = vtanh.pop %v5342
        %v5500 = vtanh.pop %v4960
        %v5501 = vtanh.pop %v4962
        %v5502 = vtanh.pop %v5346
        %v5503 = vtanh.pop %v5348
        %v5504 = vtanh.pop %v4964
        %v5505 = vtanh.pop %v4966
        %v5506 = vtanh.pop %v5350
        %v5507 = vtanh.pop %v5352
        %v5508 = vtanh.pop %v4970
        %v5509 = vtanh.pop %v4972
        %v5510 = vtanh.pop %v5356
        %v5511 = vtanh.pop %v5358
        %v5512 = vtanh.pop %v4974
        %v5513 = vtanh.pop %v4976
        %v5514 = vtanh.pop %v5360
        %v5515 = vtanh.pop %v5362
        %v5516 = vtanh.pop %v4980
        %v5517 = vtanh.pop %v4982
        %v5518 = vtanh.pop %v5366
        %v5519 = vtanh.pop %v5368
        %v5520 = vtanh.pop %v4984
        %v5521 = vtanh.pop %v4986
        %v5522 = vtanh.pop %v5370
        %v5523 = vtanh.pop %v5372
        %v5524 = vtanh.pop %v4990
        %v5525 = vtanh.pop %v4992
        %v5526 = vtanh.pop %v5376
        %v5527 = vtanh.pop %v5378
        %v5528 = vtanh.pop %v4994
        %v5529 = vtanh.pop %v4996
        %v5530 = vtanh.pop %v5380
        %v5531 = vtanh.pop %v5382
        %v5532 = vtanh.pop %v5000
        %v5533 = vtanh.pop %v5002
        %v5534 = vtanh.pop %v5386
        %v5535 = vtanh.pop %v5388
        %v5536 = vtanh.pop %v5004
        %v5537 = vtanh.pop %v5006
        %v5538 = vtanh.pop %v5390
        %v5539 = vtanh.pop %v5392
        %v5540 = vtanh.pop %v5010
        %v5541 = vtanh.pop %v5012
        %v5542 = vtanh.pop %v5396
        %v5543 = vtanh.pop %v5398
        %v5544 = vtanh.pop %v5014
        %v5545 = vtanh.pop %v5016
        %v5546 = vtanh.pop %v5400
        %v5547 = vtanh.pop %v5402
        %v5548 = vtanh.pop %v5020
        %v5549 = vtanh.pop %v5022
        %v5550 = vtanh.pop %v5406
        %v5551 = vtanh.pop %v5408
        %v5552 = vtanh.pop %v5024
        %v5553 = vtanh.pop %v5026
        %v5554 = vtanh.pop %v5410
        %v5555 = vtanh.pop %v5412
        %v5556 = vtanh.pop %v5030
        %v5557 = vtanh.pop %v5032
        %v5558 = vtanh.pop %v5416
        %v5559 = vtanh.pop %v5418
        %v5560 = vtanh.pop %v5034
        %v5561 = vtanh.pop %v5036
        %v5562 = vtanh.pop %v5420
        %v5563 = vtanh.pop %v5422
        %v5564 = vtanh.pop %v5040
        %v5565 = vtanh.pop %v5042
        %v5566 = vtanh.pop %v5426
        %v5567 = vtanh.pop %v5428
        %v5568 = vtanh.pop %v5044
        %v5569 = vtanh.pop %v5046
        %v5570 = vtanh.pop %v5430
        %v5571 = vtanh.pop %v5432
        %v5572 = vtanh.pop %v5050
        %v5573 = vtanh.pop %v5052
        %v5574 = vtanh.pop %v5436
        %v5575 = vtanh.pop %v5438
        %v5576 = vtanh.pop %v5054
        %v5577 = vtanh.pop %v5056
        %v5578 = vtanh.pop %v5440
        %v5579 = vtanh.pop %v5442
        %v5580 = vtanh.pop %v5060
        %v5581 = vtanh.pop %v5062
        %v5582 = vtanh.pop %v5446
        %v5583 = vtanh.pop %v5448
        %v5584 = vtanh.pop %v5064
        %v5585 = vtanh.pop %v5066
        %v5586 = vtanh.pop %v5450
        %v5587 = vtanh.pop %v5452
        %v5588 = vtanh.pop %v5070
        %v5589 = vtanh.pop %v5072
        %v5590 = vtanh.pop %v5456
        %v5591 = vtanh.pop %v5458
        %v5592 = vtanh.pop %v5074
        %v5593 = vtanh.pop %v5076
        %v5594 = vtanh.pop %v5460
        %v5595 = vtanh.pop %v5462
        %v5596 = vtanh.pop %v5080
        %v5597 = vtanh.pop %v5082
        %v5598 = vtanh.pop %v5466
        %v5599 = vtanh.pop %v5468
        %v5600 = vtanh.pop %v5084
        %v5601 = vtanh.pop %v5086
        %v5602 = vtanh.pop %v5470
        %v5603 = vtanh.pop %v5472
        %v5604 = vtanh.pop %v5090
        %v5605 = vtanh.pop %v5092
        %v5606 = vtanh.pop %v5476
        %v5607 = vtanh.pop %v5478
        %v5608 = vtanh.pop %v5094
        %v5609 = vtanh.pop %v5096
        %v5610 = vtanh.pop %v5480
        %v5611 = vtanh.pop %v5482
        %v5612 = vpack.c.bf16 %v5488, %v5484
        %v5613 = vpack.c.bf16 %v5489, %v5485
        %v5614 = vpack.c.bf16 %v5490, %v5486
        %v5615 = vpack.c.bf16 %v5491, %v5487
        %v5616 = vpack.c.bf16 %v5496, %v5492
        %v5617 = vpack.c.bf16 %v5497, %v5493
        %v5618 = vpack.c.bf16 %v5498, %v5494
        %v5619 = vpack.c.bf16 %v5499, %v5495
        %v5620 = vpack.c.bf16 %v5504, %v5500
        %v5621 = vpack.c.bf16 %v5505, %v5501
        %v5622 = vpack.c.bf16 %v5506, %v5502
        %v5623 = vpack.c.bf16 %v5507, %v5503
        %v5624 = vpack.c.bf16 %v5512, %v5508
        %v5625 = vpack.c.bf16 %v5513, %v5509
        %v5626 = vpack.c.bf16 %v5514, %v5510
        %v5627 = vpack.c.bf16 %v5515, %v5511
        %v5628 = vpack.c.bf16 %v5520, %v5516
        %v5629 = vpack.c.bf16 %v5521, %v5517
        %v5630 = vpack.c.bf16 %v5522, %v5518
        %v5631 = vpack.c.bf16 %v5523, %v5519
        %v5632 = vpack.c.bf16 %v5528, %v5524
        %v5633 = vpack.c.bf16 %v5529, %v5525
        %v5634 = vpack.c.bf16 %v5530, %v5526
        %v5635 = vpack.c.bf16 %v5531, %v5527
        %v5636 = vpack.c.bf16 %v5536, %v5532
        %v5637 = vpack.c.bf16 %v5537, %v5533
        %v5638 = vpack.c.bf16 %v5538, %v5534
        %v5639 = vpack.c.bf16 %v5539, %v5535
        %v5640 = vpack.c.bf16 %v5544, %v5540
        %v5641 = vpack.c.bf16 %v5545, %v5541
        %v5642 = vpack.c.bf16 %v5546, %v5542
        %v5643 = vpack.c.bf16 %v5547, %v5543
        %v5644 = vpack.c.bf16 %v5552, %v5548
        %v5645 = vpack.c.bf16 %v5553, %v5549
        %v5646 = vpack.c.bf16 %v5554, %v5550
        %v5647 = vpack.c.bf16 %v5555, %v5551
        %v5648 = vpack.c.bf16 %v5560, %v5556
        %v5649 = vpack.c.bf16 %v5561, %v5557
        %v5650 = vpack.c.bf16 %v5562, %v5558
        %v5651 = vpack.c.bf16 %v5563, %v5559
        %v5652 = vpack.c.bf16 %v5568, %v5564
        %v5653 = vpack.c.bf16 %v5569, %v5565
        %v5654 = vpack.c.bf16 %v5570, %v5566
        %v5655 = vpack.c.bf16 %v5571, %v5567
        %v5656 = vpack.c.bf16 %v5576, %v5572
        %v5657 = vpack.c.bf16 %v5577, %v5573
        %v5658 = vpack.c.bf16 %v5578, %v5574
        %v5659 = vpack.c.bf16 %v5579, %v5575
        %v5660 = vpack.c.bf16 %v5584, %v5580
        %v5661 = vpack.c.bf16 %v5585, %v5581
        %v5662 = vpack.c.bf16 %v5586, %v5582
        %v5663 = vpack.c.bf16 %v5587, %v5583
        %v5664 = vpack.c.bf16 %v5592, %v5588
        %v5665 = vpack.c.bf16 %v5593, %v5589
        %v5666 = vpack.c.bf16 %v5594, %v5590
        %v5667 = vpack.c.bf16 %v5595, %v5591
        %v5668 = vpack.c.bf16 %v5600, %v5596
        %v5669 = vpack.c.bf16 %v5601, %v5597
        %v5670 = vpack.c.bf16 %v5602, %v5598
        %v5671 = vpack.c.bf16 %v5603, %v5599
        %v5672 = vpack.c.bf16 %v5608, %v5604
        %v5673 = vpack.c.bf16 %v5609, %v5605
        %v5674 = vpack.c.bf16 %v5610, %v5606
        %v5675 = vpack.c.bf16 %v5611, %v5607
        %v5676 = vld [vmem:[#allocation7] sm:$0xff]
        %v5677 = vld [vmem:[#allocation7 + $0x8] sm:$0xff]
        %v5678 = vld [vmem:[#allocation7 + $0x10] sm:$0xff]
        %v5679 = vld [vmem:[#allocation7 + $0x18] sm:$0xff]
        %v5680 = vld [vmem:[#allocation7 + $0x20] sm:$0xff]
        %v5681 = vld [vmem:[#allocation7 + $0x28] sm:$0xff]
        %v5682 = vld [vmem:[#allocation7 + $0x30] sm:$0xff]
        %v5683 = vld [vmem:[#allocation7 + $0x38] sm:$0xff]
        %v5684 = vld [vmem:[#allocation7 + $0x40] sm:$0xff]
        %v5685 = vld [vmem:[#allocation7 + $0x48] sm:$0xff]
        %v5686 = vld [vmem:[#allocation7 + $0x50] sm:$0xff]
        %v5687 = vld [vmem:[#allocation7 + $0x58] sm:$0xff]
        %v5688 = vld [vmem:[#allocation7 + $0x60] sm:$0xff]
        %v5689 = vld [vmem:[#allocation7 + $0x68] sm:$0xff]
        %v5690 = vld [vmem:[#allocation7 + $0x70] sm:$0xff]
        %v5691 = vld [vmem:[#allocation7 + $0x78] sm:$0xff]
        %v5692 = vld [vmem:[#allocation7 + $0x80] sm:$0xff]
        %v5693 = vld [vmem:[#allocation7 + $0x88] sm:$0xff]
        %v5694 = vld [vmem:[#allocation7 + $0x90] sm:$0xff]
        %v5695 = vld [vmem:[#allocation7 + $0x98] sm:$0xff]
        %v5696 = vld [vmem:[#allocation7 + $0xa0] sm:$0xff]
        %v5697 = vld [vmem:[#allocation7 + $0xa8] sm:$0xff]
        %v5698 = vld [vmem:[#allocation7 + $0xb0] sm:$0xff]
        %v5699 = vld [vmem:[#allocation7 + $0xb8] sm:$0xff]
        %v5700 = vld [vmem:[#allocation7 + $0xc0] sm:$0xff]
        %v5701 = vld [vmem:[#allocation7 + $0xc8] sm:$0xff]
        %v5702 = vld [vmem:[#allocation7 + $0xd0] sm:$0xff]
        %v5703 = vld [vmem:[#allocation7 + $0xd8] sm:$0xff]
        %v5704 = vld [vmem:[#allocation7 + $0xe0] sm:$0xff]
        %v5705 = vld [vmem:[#allocation7 + $0xe8] sm:$0xff]
        %v5706 = vld [vmem:[#allocation7 + $0xf0] sm:$0xff]
        %v5707 = vld [vmem:[#allocation7 + $0xf8] sm:$0xff]
        %v5708 = vld [vmem:[#allocation7 + $0x100] sm:$0xff]
        %v5709 = vld [vmem:[#allocation7 + $0x108] sm:$0xff]
        %v5710 = vld [vmem:[#allocation7 + $0x110] sm:$0xff]
        %v5711 = vld [vmem:[#allocation7 + $0x118] sm:$0xff]
        %v5712 = vld [vmem:[#allocation7 + $0x120] sm:$0xff]
        %v5713 = vld [vmem:[#allocation7 + $0x128] sm:$0xff]
        %v5714 = vld [vmem:[#allocation7 + $0x130] sm:$0xff]
        %v5715 = vld [vmem:[#allocation7 + $0x138] sm:$0xff]
        %v5716 = vld [vmem:[#allocation7 + $0x140] sm:$0xff]
        %v5717 = vld [vmem:[#allocation7 + $0x148] sm:$0xff]
        %v5718 = vld [vmem:[#allocation7 + $0x150] sm:$0xff]
        %v5719 = vld [vmem:[#allocation7 + $0x158] sm:$0xff]
        %v5720 = vld [vmem:[#allocation7 + $0x160] sm:$0xff]
        %v5721 = vld [vmem:[#allocation7 + $0x168] sm:$0xff]
        %v5722 = vld [vmem:[#allocation7 + $0x170] sm:$0xff]
        %v5723 = vld [vmem:[#allocation7 + $0x178] sm:$0xff]
        %v5724 = vld [vmem:[#allocation7 + $0x180] sm:$0xff]
        %v5725 = vld [vmem:[#allocation7 + $0x188] sm:$0xff]
        %v5726 = vld [vmem:[#allocation7 + $0x190] sm:$0xff]
        %v5727 = vld [vmem:[#allocation7 + $0x198] sm:$0xff]
        %v5728 = vld [vmem:[#allocation7 + $0x1a0] sm:$0xff]
        %v5729 = vld [vmem:[#allocation7 + $0x1a8] sm:$0xff]
        %v5730 = vld [vmem:[#allocation7 + $0x1b0] sm:$0xff]
        %v5731 = vld [vmem:[#allocation7 + $0x1b8] sm:$0xff]
        %v5732 = vld [vmem:[#allocation7 + $0x1c0] sm:$0xff]
        %v5733 = vld [vmem:[#allocation7 + $0x1c8] sm:$0xff]
        %v5734 = vld [vmem:[#allocation7 + $0x1d0] sm:$0xff]
        %v5735 = vld [vmem:[#allocation7 + $0x1d8] sm:$0xff]
        %v5736 = vld [vmem:[#allocation7 + $0x1e0] sm:$0xff]
        %v5737 = vld [vmem:[#allocation7 + $0x1e8] sm:$0xff]
        %v5738 = vld [vmem:[#allocation7 + $0x1f0] sm:$0xff]
        %v5739 = vld [vmem:[#allocation7 + $0x1f8] sm:$0xff]
        %v5740 = vld [vmem:[#allocation7 + $0x200] sm:$0xff]
        %v5741 = vld [vmem:[#allocation7 + $0x208] sm:$0xff]
        %v5742 = vld [vmem:[#allocation7 + $0x210] sm:$0xff]
        %v5743 = vld [vmem:[#allocation7 + $0x218] sm:$0xff]
        %v5744 = vld [vmem:[#allocation7 + $0x220] sm:$0xff]
        %v5745 = vld [vmem:[#allocation7 + $0x228] sm:$0xff]
        %v5746 = vld [vmem:[#allocation7 + $0x230] sm:$0xff]
        %v5747 = vld [vmem:[#allocation7 + $0x238] sm:$0xff]
        %v5748 = vld [vmem:[#allocation7 + $0x240] sm:$0xff]
        %v5749 = vld [vmem:[#allocation7 + $0x248] sm:$0xff]
        %v5750 = vld [vmem:[#allocation7 + $0x250] sm:$0xff]
        %v5751 = vld [vmem:[#allocation7 + $0x258] sm:$0xff]
        %v5752 = vld [vmem:[#allocation7 + $0x260] sm:$0xff]
        %v5753 = vld [vmem:[#allocation7 + $0x268] sm:$0xff]
        %v5754 = vld [vmem:[#allocation7 + $0x270] sm:$0xff]
        %v5755 = vld [vmem:[#allocation7 + $0x278] sm:$0xff]
        %v5756 = vld [vmem:[#allocation7 + $0x280] sm:$0xff]
        %v5757 = vld [vmem:[#allocation7 + $0x288] sm:$0xff]
        %v5758 = vld [vmem:[#allocation7 + $0x290] sm:$0xff]
        %v5759 = vld [vmem:[#allocation7 + $0x298] sm:$0xff]
        %v5760 = vld [vmem:[#allocation7 + $0x2a0] sm:$0xff]
        %v5761 = vld [vmem:[#allocation7 + $0x2a8] sm:$0xff]
        %v5762 = vld [vmem:[#allocation7 + $0x2b0] sm:$0xff]
        %v5763 = vld [vmem:[#allocation7 + $0x2b8] sm:$0xff]
        %v5764 = vld [vmem:[#allocation7 + $0x2c0] sm:$0xff]
        %v5765 = vld [vmem:[#allocation7 + $0x2c8] sm:$0xff]
        %v5766 = vld [vmem:[#allocation7 + $0x2d0] sm:$0xff]
        %v5767 = vld [vmem:[#allocation7 + $0x2d8] sm:$0xff]
        %v5768 = vld [vmem:[#allocation7 + $0x2e0] sm:$0xff]
        %v5769 = vld [vmem:[#allocation7 + $0x2e8] sm:$0xff]
        %v5770 = vld [vmem:[#allocation7 + $0x2f0] sm:$0xff]
        %v5771 = vld [vmem:[#allocation7 + $0x2f8] sm:$0xff]
        %v5772 = vld [vmem:[#allocation7 + $0x300] sm:$0xff]
        %v5773 = vld [vmem:[#allocation7 + $0x308] sm:$0xff]
        %v5774 = vld [vmem:[#allocation7 + $0x310] sm:$0xff]
        %v5775 = vld [vmem:[#allocation7 + $0x318] sm:$0xff]
        %v5776 = vld [vmem:[#allocation7 + $0x320] sm:$0xff]
        %v5777 = vld [vmem:[#allocation7 + $0x328] sm:$0xff]
        %v5778 = vld [vmem:[#allocation7 + $0x330] sm:$0xff]
        %v5779 = vld [vmem:[#allocation7 + $0x338] sm:$0xff]
        %v5780 = vld [vmem:[#allocation7 + $0x340] sm:$0xff]
        %v5781 = vld [vmem:[#allocation7 + $0x348] sm:$0xff]
        %v5782 = vld [vmem:[#allocation7 + $0x350] sm:$0xff]
        %v5783 = vld [vmem:[#allocation7 + $0x358] sm:$0xff]
        %v5784 = vld [vmem:[#allocation7 + $0x360] sm:$0xff]
        %v5785 = vld [vmem:[#allocation7 + $0x368] sm:$0xff]
        %v5786 = vld [vmem:[#allocation7 + $0x370] sm:$0xff]
        %v5787 = vld [vmem:[#allocation7 + $0x378] sm:$0xff]
        %v5788 = vld [vmem:[#allocation7 + $0x380] sm:$0xff]
        %v5789 = vld [vmem:[#allocation7 + $0x388] sm:$0xff]
        %v5790 = vld [vmem:[#allocation7 + $0x390] sm:$0xff]
        %v5791 = vld [vmem:[#allocation7 + $0x398] sm:$0xff]
        %v5792 = vld [vmem:[#allocation7 + $0x3a0] sm:$0xff]
        %v5793 = vld [vmem:[#allocation7 + $0x3a8] sm:$0xff]
        %v5794 = vld [vmem:[#allocation7 + $0x3b0] sm:$0xff]
        %v5795 = vld [vmem:[#allocation7 + $0x3b8] sm:$0xff]
        %v5796 = vld [vmem:[#allocation7 + $0x3c0] sm:$0xff]
        %v5797 = vld [vmem:[#allocation7 + $0x3c8] sm:$0xff]
        %v5798 = vld [vmem:[#allocation7 + $0x3d0] sm:$0xff]
        %v5799 = vld [vmem:[#allocation7 + $0x3d8] sm:$0xff]
        %v5800 = vld [vmem:[#allocation7 + $0x3e0] sm:$0xff]
        %v5801 = vld [vmem:[#allocation7 + $0x3e8] sm:$0xff]
        %v5802 = vld [vmem:[#allocation7 + $0x3f0] sm:$0xff]
        %v5803 = vld [vmem:[#allocation7 + $0x3f8] sm:$0xff]
        %v5804 = vld [vmem:[%s6] sm:$0xf]
        %v5806 = vlaneseq
        %v5807 = vshrl.u32 %v5806, 7
        %v5808 = vsub.s32 0, %v5807
        %v5809 = vrot.slane %v5804, %v5808
        %v5810 = vlaneseq
        %v5811 = vshrl.u32 %v5810, 7
        %v5812 = vsub.s32 1, %v5811
        %v5813 = vrot.slane %v5804, %v5812
        %v5814 = vlaneseq
        %v5815 = vshrl.u32 %v5814, 7
        %v5816 = vsub.s32 2, %v5815
        %v5817 = vrot.slane %v5804, %v5816
        %v5818 = vlaneseq
        %v5819 = vshrl.u32 %v5818, 7
        %v5820 = vsub.s32 3, %v5819
        %v5821 = vrot.slane %v5804, %v5820
        %v5954 = vunpack.c.l.b16 %v5676
        %v5955 = vunpack.c.h.b16 %v5676
        %v5956 = vunpack.c.l.b16 %v5677
        %v5957 = vunpack.c.h.b16 %v5677
        %v5958 = vunpack.c.l.b16 %v5678
        %v5959 = vunpack.c.h.b16 %v5678
        %v5960 = vunpack.c.l.b16 %v5679
        %v5961 = vunpack.c.h.b16 %v5679
        %v5962 = vunpack.c.l.b16 %v5680
        %v5963 = vunpack.c.h.b16 %v5680
        %v5964 = vunpack.c.l.b16 %v5681
        %v5965 = vunpack.c.h.b16 %v5681
        %v5966 = vunpack.c.l.b16 %v5682
        %v5967 = vunpack.c.h.b16 %v5682
        %v5968 = vunpack.c.l.b16 %v5683
        %v5969 = vunpack.c.h.b16 %v5683
        %v5970 = vunpack.c.l.b16 %v5684
        %v5971 = vunpack.c.h.b16 %v5684
        %v5972 = vunpack.c.l.b16 %v5685
        %v5973 = vunpack.c.h.b16 %v5685
        %v5974 = vunpack.c.l.b16 %v5686
        %v5975 = vunpack.c.h.b16 %v5686
        %v5976 = vunpack.c.l.b16 %v5687
        %v5977 = vunpack.c.h.b16 %v5687
        %v5978 = vunpack.c.l.b16 %v5688
        %v5979 = vunpack.c.h.b16 %v5688
        %v5980 = vunpack.c.l.b16 %v5689
        %v5981 = vunpack.c.h.b16 %v5689
        %v5982 = vunpack.c.l.b16 %v5690
        %v5983 = vunpack.c.h.b16 %v5690
        %v5984 = vunpack.c.l.b16 %v5691
        %v5985 = vunpack.c.h.b16 %v5691
        %v5986 = vunpack.c.l.b16 %v5692
        %v5987 = vunpack.c.h.b16 %v5692
        %v5988 = vunpack.c.l.b16 %v5693
        %v5989 = vunpack.c.h.b16 %v5693
        %v5990 = vunpack.c.l.b16 %v5694
        %v5991 = vunpack.c.h.b16 %v5694
        %v5992 = vunpack.c.l.b16 %v5695
        %v5993 = vunpack.c.h.b16 %v5695
        %v5994 = vunpack.c.l.b16 %v5696
        %v5995 = vunpack.c.h.b16 %v5696
        %v5996 = vunpack.c.l.b16 %v5697
        %v5997 = vunpack.c.h.b16 %v5697
        %v5998 = vunpack.c.l.b16 %v5698
        %v5999 = vunpack.c.h.b16 %v5698
        %v6000 = vunpack.c.l.b16 %v5699
        %v6001 = vunpack.c.h.b16 %v5699
        %v6002 = vunpack.c.l.b16 %v5700
        %v6003 = vunpack.c.h.b16 %v5700
        %v6004 = vunpack.c.l.b16 %v5701
        %v6005 = vunpack.c.h.b16 %v5701
        %v6006 = vunpack.c.l.b16 %v5702
        %v6007 = vunpack.c.h.b16 %v5702
        %v6008 = vunpack.c.l.b16 %v5703
        %v6009 = vunpack.c.h.b16 %v5703
        %v6010 = vunpack.c.l.b16 %v5704
        %v6011 = vunpack.c.h.b16 %v5704
        %v6012 = vunpack.c.l.b16 %v5705
        %v6013 = vunpack.c.h.b16 %v5705
        %v6014 = vunpack.c.l.b16 %v5706
        %v6015 = vunpack.c.h.b16 %v5706
        %v6016 = vunpack.c.l.b16 %v5707
        %v6017 = vunpack.c.h.b16 %v5707
        %v6018 = vunpack.c.l.b16 %v5708
        %v6019 = vunpack.c.h.b16 %v5708
        %v6020 = vunpack.c.l.b16 %v5709
        %v6021 = vunpack.c.h.b16 %v5709
        %v6022 = vunpack.c.l.b16 %v5710
        %v6023 = vunpack.c.h.b16 %v5710
        %v6024 = vunpack.c.l.b16 %v5711
        %v6025 = vunpack.c.h.b16 %v5711
        %v6026 = vunpack.c.l.b16 %v5712
        %v6027 = vunpack.c.h.b16 %v5712
        %v6028 = vunpack.c.l.b16 %v5713
        %v6029 = vunpack.c.h.b16 %v5713
        %v6030 = vunpack.c.l.b16 %v5714
        %v6031 = vunpack.c.h.b16 %v5714
        %v6032 = vunpack.c.l.b16 %v5715
        %v6033 = vunpack.c.h.b16 %v5715
        %v6034 = vunpack.c.l.b16 %v5716
        %v6035 = vunpack.c.h.b16 %v5716
        %v6036 = vunpack.c.l.b16 %v5717
        %v6037 = vunpack.c.h.b16 %v5717
        %v6038 = vunpack.c.l.b16 %v5718
        %v6039 = vunpack.c.h.b16 %v5718
        %v6040 = vunpack.c.l.b16 %v5719
        %v6041 = vunpack.c.h.b16 %v5719
        %v6042 = vunpack.c.l.b16 %v5720
        %v6043 = vunpack.c.h.b16 %v5720
        %v6044 = vunpack.c.l.b16 %v5721
        %v6045 = vunpack.c.h.b16 %v5721
        %v6046 = vunpack.c.l.b16 %v5722
        %v6047 = vunpack.c.h.b16 %v5722
        %v6048 = vunpack.c.l.b16 %v5723
        %v6049 = vunpack.c.h.b16 %v5723
        %v6050 = vunpack.c.l.b16 %v5724
        %v6051 = vunpack.c.h.b16 %v5724
        %v6052 = vunpack.c.l.b16 %v5725
        %v6053 = vunpack.c.h.b16 %v5725
        %v6054 = vunpack.c.l.b16 %v5726
        %v6055 = vunpack.c.h.b16 %v5726
        %v6056 = vunpack.c.l.b16 %v5727
        %v6057 = vunpack.c.h.b16 %v5727
        %v6058 = vunpack.c.l.b16 %v5728
        %v6059 = vunpack.c.h.b16 %v5728
        %v6060 = vunpack.c.l.b16 %v5729
        %v6061 = vunpack.c.h.b16 %v5729
        %v6062 = vunpack.c.l.b16 %v5730
        %v6063 = vunpack.c.h.b16 %v5730
        %v6064 = vunpack.c.l.b16 %v5731
        %v6065 = vunpack.c.h.b16 %v5731
        %v6066 = vunpack.c.l.b16 %v5732
        %v6067 = vunpack.c.h.b16 %v5732
        %v6068 = vunpack.c.l.b16 %v5733
        %v6069 = vunpack.c.h.b16 %v5733
        %v6070 = vunpack.c.l.b16 %v5734
        %v6071 = vunpack.c.h.b16 %v5734
        %v6072 = vunpack.c.l.b16 %v5735
        %v6073 = vunpack.c.h.b16 %v5735
        %v6074 = vunpack.c.l.b16 %v5736
        %v6075 = vunpack.c.h.b16 %v5736
        %v6076 = vunpack.c.l.b16 %v5737
        %v6077 = vunpack.c.h.b16 %v5737
        %v6078 = vunpack.c.l.b16 %v5738
        %v6079 = vunpack.c.h.b16 %v5738
        %v6080 = vunpack.c.l.b16 %v5739
        %v6081 = vunpack.c.h.b16 %v5739
        %v6082 = vunpack.c.l.b16 %v5740
        %v6083 = vunpack.c.h.b16 %v5740
        %v6084 = vunpack.c.l.b16 %v5741
        %v6085 = vunpack.c.h.b16 %v5741
        %v6086 = vunpack.c.l.b16 %v5742
        %v6087 = vunpack.c.h.b16 %v5742
        %v6088 = vunpack.c.l.b16 %v5743
        %v6089 = vunpack.c.h.b16 %v5743
        %v6090 = vunpack.c.l.b16 %v5744
        %v6091 = vunpack.c.h.b16 %v5744
        %v6092 = vunpack.c.l.b16 %v5745
        %v6093 = vunpack.c.h.b16 %v5745
        %v6094 = vunpack.c.l.b16 %v5746
        %v6095 = vunpack.c.h.b16 %v5746
        %v6096 = vunpack.c.l.b16 %v5747
        %v6097 = vunpack.c.h.b16 %v5747
        %v6098 = vunpack.c.l.b16 %v5748
        %v6099 = vunpack.c.h.b16 %v5748
        %v6100 = vunpack.c.l.b16 %v5749
        %v6101 = vunpack.c.h.b16 %v5749
        %v6102 = vunpack.c.l.b16 %v5750
        %v6103 = vunpack.c.h.b16 %v5750
        %v6104 = vunpack.c.l.b16 %v5751
        %v6105 = vunpack.c.h.b16 %v5751
        %v6106 = vunpack.c.l.b16 %v5752
        %v6107 = vunpack.c.h.b16 %v5752
        %v6108 = vunpack.c.l.b16 %v5753
        %v6109 = vunpack.c.h.b16 %v5753
        %v6110 = vunpack.c.l.b16 %v5754
        %v6111 = vunpack.c.h.b16 %v5754
        %v6112 = vunpack.c.l.b16 %v5755
        %v6113 = vunpack.c.h.b16 %v5755
        %v6114 = vunpack.c.l.b16 %v5756
        %v6115 = vunpack.c.h.b16 %v5756
        %v6116 = vunpack.c.l.b16 %v5757
        %v6117 = vunpack.c.h.b16 %v5757
        %v6118 = vunpack.c.l.b16 %v5758
        %v6119 = vunpack.c.h.b16 %v5758
        %v6120 = vunpack.c.l.b16 %v5759
        %v6121 = vunpack.c.h.b16 %v5759
        %v6122 = vunpack.c.l.b16 %v5760
        %v6123 = vunpack.c.h.b16 %v5760
        %v6124 = vunpack.c.l.b16 %v5761
        %v6125 = vunpack.c.h.b16 %v5761
        %v6126 = vunpack.c.l.b16 %v5762
        %v6127 = vunpack.c.h.b16 %v5762
        %v6128 = vunpack.c.l.b16 %v5763
        %v6129 = vunpack.c.h.b16 %v5763
        %v6130 = vunpack.c.l.b16 %v5764
        %v6131 = vunpack.c.h.b16 %v5764
        %v6132 = vunpack.c.l.b16 %v5765
        %v6133 = vunpack.c.h.b16 %v5765
        %v6134 = vunpack.c.l.b16 %v5766
        %v6135 = vunpack.c.h.b16 %v5766
        %v6136 = vunpack.c.l.b16 %v5767
        %v6137 = vunpack.c.h.b16 %v5767
        %v6138 = vunpack.c.l.b16 %v5768
        %v6139 = vunpack.c.h.b16 %v5768
        %v6140 = vunpack.c.l.b16 %v5769
        %v6141 = vunpack.c.h.b16 %v5769
        %v6142 = vunpack.c.l.b16 %v5770
        %v6143 = vunpack.c.h.b16 %v5770
        %v6144 = vunpack.c.l.b16 %v5771
        %v6145 = vunpack.c.h.b16 %v5771
        %v6146 = vunpack.c.l.b16 %v5772
        %v6147 = vunpack.c.h.b16 %v5772
        %v6148 = vunpack.c.l.b16 %v5773
        %v6149 = vunpack.c.h.b16 %v5773
        %v6150 = vunpack.c.l.b16 %v5774
        %v6151 = vunpack.c.h.b16 %v5774
        %v6152 = vunpack.c.l.b16 %v5775
        %v6153 = vunpack.c.h.b16 %v5775
        %v6154 = vunpack.c.l.b16 %v5776
        %v6155 = vunpack.c.h.b16 %v5776
        %v6156 = vunpack.c.l.b16 %v5777
        %v6157 = vunpack.c.h.b16 %v5777
        %v6158 = vunpack.c.l.b16 %v5778
        %v6159 = vunpack.c.h.b16 %v5778
        %v6160 = vunpack.c.l.b16 %v5779
        %v6161 = vunpack.c.h.b16 %v5779
        %v6162 = vunpack.c.l.b16 %v5780
        %v6163 = vunpack.c.h.b16 %v5780
        %v6164 = vunpack.c.l.b16 %v5781
        %v6165 = vunpack.c.h.b16 %v5781
        %v6166 = vunpack.c.l.b16 %v5782
        %v6167 = vunpack.c.h.b16 %v5782
        %v6168 = vunpack.c.l.b16 %v5783
        %v6169 = vunpack.c.h.b16 %v5783
        %v6170 = vunpack.c.l.b16 %v5784
        %v6171 = vunpack.c.h.b16 %v5784
        %v6172 = vunpack.c.l.b16 %v5785
        %v6173 = vunpack.c.h.b16 %v5785
        %v6174 = vunpack.c.l.b16 %v5786
        %v6175 = vunpack.c.h.b16 %v5786
        %v6176 = vunpack.c.l.b16 %v5787
        %v6177 = vunpack.c.h.b16 %v5787
        %v6178 = vunpack.c.l.b16 %v5788
        %v6179 = vunpack.c.h.b16 %v5788
        %v6180 = vunpack.c.l.b16 %v5789
        %v6181 = vunpack.c.h.b16 %v5789
        %v6182 = vunpack.c.l.b16 %v5790
        %v6183 = vunpack.c.h.b16 %v5790
        %v6184 = vunpack.c.l.b16 %v5791
        %v6185 = vunpack.c.h.b16 %v5791
        %v6186 = vunpack.c.l.b16 %v5792
        %v6187 = vunpack.c.h.b16 %v5792
        %v6188 = vunpack.c.l.b16 %v5793
        %v6189 = vunpack.c.h.b16 %v5793
        %v6190 = vunpack.c.l.b16 %v5794
        %v6191 = vunpack.c.h.b16 %v5794
        %v6192 = vunpack.c.l.b16 %v5795
        %v6193 = vunpack.c.h.b16 %v5795
        %v6194 = vunpack.c.l.b16 %v5796
        %v6195 = vunpack.c.h.b16 %v5796
        %v6196 = vunpack.c.l.b16 %v5797
        %v6197 = vunpack.c.h.b16 %v5797
        %v6198 = vunpack.c.l.b16 %v5798
        %v6199 = vunpack.c.h.b16 %v5798
        %v6200 = vunpack.c.l.b16 %v5799
        %v6201 = vunpack.c.h.b16 %v5799
        %v6202 = vunpack.c.l.b16 %v5800
        %v6203 = vunpack.c.h.b16 %v5800
        %v6204 = vunpack.c.l.b16 %v5801
        %v6205 = vunpack.c.h.b16 %v5801
        %v6206 = vunpack.c.l.b16 %v5802
        %v6207 = vunpack.c.h.b16 %v5802
        %v6208 = vunpack.c.l.b16 %v5803
        %v6209 = vunpack.c.h.b16 %v5803
        %v6210 = vpack.c.b16 %v5958, %v5954
        %v6211 = vpack.c.b16 %v5959, %v5955
        %v6212 = vpack.c.b16 %v5960, %v5956
        %v6213 = vpack.c.b16 %v5961, %v5957
        %v6214 = vpack.c.b16 %v5966, %v5962
        %v6215 = vpack.c.b16 %v5967, %v5963
        %v6216 = vpack.c.b16 %v5968, %v5964
        %v6217 = vpack.c.b16 %v5969, %v5965
        %v6218 = vpack.c.b16 %v5974, %v5970
        %v6219 = vpack.c.b16 %v5975, %v5971
        %v6220 = vpack.c.b16 %v5976, %v5972
        %v6221 = vpack.c.b16 %v5977, %v5973
        %v6222 = vpack.c.b16 %v5982, %v5978
        %v6223 = vpack.c.b16 %v5983, %v5979
        %v6224 = vpack.c.b16 %v5984, %v5980
        %v6225 = vpack.c.b16 %v5985, %v5981
        %v6226 = vpack.c.b16 %v5990, %v5986
        %v6227 = vpack.c.b16 %v5991, %v5987
        %v6228 = vpack.c.b16 %v5992, %v5988
        %v6229 = vpack.c.b16 %v5993, %v5989
        %v6230 = vpack.c.b16 %v5998, %v5994
        %v6231 = vpack.c.b16 %v5999, %v5995
        %v6232 = vpack.c.b16 %v6000, %v5996
        %v6233 = vpack.c.b16 %v6001, %v5997
        %v6234 = vpack.c.b16 %v6006, %v6002
        %v6235 = vpack.c.b16 %v6007, %v6003
        %v6236 = vpack.c.b16 %v6008, %v6004
        %v6237 = vpack.c.b16 %v6009, %v6005
        %v6238 = vpack.c.b16 %v6014, %v6010
        %v6239 = vpack.c.b16 %v6015, %v6011
        %v6240 = vpack.c.b16 %v6016, %v6012
        %v6241 = vpack.c.b16 %v6017, %v6013
        %v6242 = vpack.c.b16 %v6022, %v6018
        %v6243 = vpack.c.b16 %v6023, %v6019
        %v6244 = vpack.c.b16 %v6024, %v6020
        %v6245 = vpack.c.b16 %v6025, %v6021
        %v6246 = vpack.c.b16 %v6030, %v6026
        %v6247 = vpack.c.b16 %v6031, %v6027
        %v6248 = vpack.c.b16 %v6032, %v6028
        %v6249 = vpack.c.b16 %v6033, %v6029
        %v6250 = vpack.c.b16 %v6038, %v6034
        %v6251 = vpack.c.b16 %v6039, %v6035
        %v6252 = vpack.c.b16 %v6040, %v6036
        %v6253 = vpack.c.b16 %v6041, %v6037
        %v6254 = vpack.c.b16 %v6046, %v6042
        %v6255 = vpack.c.b16 %v6047, %v6043
        %v6256 = vpack.c.b16 %v6048, %v6044
        %v6257 = vpack.c.b16 %v6049, %v6045
        %v6258 = vpack.c.b16 %v6054, %v6050
        %v6259 = vpack.c.b16 %v6055, %v6051
        %v6260 = vpack.c.b16 %v6056, %v6052
        %v6261 = vpack.c.b16 %v6057, %v6053
        %v6262 = vpack.c.b16 %v6062, %v6058
        %v6263 = vpack.c.b16 %v6063, %v6059
        %v6264 = vpack.c.b16 %v6064, %v6060
        %v6265 = vpack.c.b16 %v6065, %v6061
        %v6266 = vpack.c.b16 %v6070, %v6066
        %v6267 = vpack.c.b16 %v6071, %v6067
        %v6268 = vpack.c.b16 %v6072, %v6068
        %v6269 = vpack.c.b16 %v6073, %v6069
        %v6270 = vpack.c.b16 %v6078, %v6074
        %v6271 = vpack.c.b16 %v6079, %v6075
        %v6272 = vpack.c.b16 %v6080, %v6076
        %v6273 = vpack.c.b16 %v6081, %v6077
        %v6274 = vpack.c.b16 %v6086, %v6082
        %v6275 = vpack.c.b16 %v6087, %v6083
        %v6276 = vpack.c.b16 %v6088, %v6084
        %v6277 = vpack.c.b16 %v6089, %v6085
        %v6278 = vpack.c.b16 %v6094, %v6090
        %v6279 = vpack.c.b16 %v6095, %v6091
        %v6280 = vpack.c.b16 %v6096, %v6092
        %v6281 = vpack.c.b16 %v6097, %v6093
        %v6282 = vpack.c.b16 %v6102, %v6098
        %v6283 = vpack.c.b16 %v6103, %v6099
        %v6284 = vpack.c.b16 %v6104, %v6100
        %v6285 = vpack.c.b16 %v6105, %v6101
        %v6286 = vpack.c.b16 %v6110, %v6106
        %v6287 = vpack.c.b16 %v6111, %v6107
        %v6288 = vpack.c.b16 %v6112, %v6108
        %v6289 = vpack.c.b16 %v6113, %v6109
        %v6290 = vpack.c.b16 %v6118, %v6114
        %v6291 = vpack.c.b16 %v6119, %v6115
        %v6292 = vpack.c.b16 %v6120, %v6116
        %v6293 = vpack.c.b16 %v6121, %v6117
        %v6294 = vpack.c.b16 %v6126, %v6122
        %v6295 = vpack.c.b16 %v6127, %v6123
        %v6296 = vpack.c.b16 %v6128, %v6124
        %v6297 = vpack.c.b16 %v6129, %v6125
        %v6298 = vpack.c.b16 %v6134, %v6130
        %v6299 = vpack.c.b16 %v6135, %v6131
        %v6300 = vpack.c.b16 %v6136, %v6132
        %v6301 = vpack.c.b16 %v6137, %v6133
        %v6302 = vpack.c.b16 %v6142, %v6138
        %v6303 = vpack.c.b16 %v6143, %v6139
        %v6304 = vpack.c.b16 %v6144, %v6140
        %v6305 = vpack.c.b16 %v6145, %v6141
        %v6306 = vpack.c.b16 %v6150, %v6146
        %v6307 = vpack.c.b16 %v6151, %v6147
        %v6308 = vpack.c.b16 %v6152, %v6148
        %v6309 = vpack.c.b16 %v6153, %v6149
        %v6310 = vpack.c.b16 %v6158, %v6154
        %v6311 = vpack.c.b16 %v6159, %v6155
        %v6312 = vpack.c.b16 %v6160, %v6156
        %v6313 = vpack.c.b16 %v6161, %v6157
        %v6314 = vpack.c.b16 %v6166, %v6162
        %v6315 = vpack.c.b16 %v6167, %v6163
        %v6316 = vpack.c.b16 %v6168, %v6164
        %v6317 = vpack.c.b16 %v6169, %v6165
        %v6318 = vpack.c.b16 %v6174, %v6170
        %v6319 = vpack.c.b16 %v6175, %v6171
        %v6320 = vpack.c.b16 %v6176, %v6172
        %v6321 = vpack.c.b16 %v6177, %v6173
        %v6322 = vpack.c.b16 %v6182, %v6178
        %v6323 = vpack.c.b16 %v6183, %v6179
        %v6324 = vpack.c.b16 %v6184, %v6180
        %v6325 = vpack.c.b16 %v6185, %v6181
        %v6326 = vpack.c.b16 %v6190, %v6186
        %v6327 = vpack.c.b16 %v6191, %v6187
        %v6328 = vpack.c.b16 %v6192, %v6188
        %v6329 = vpack.c.b16 %v6193, %v6189
        %v6330 = vpack.c.b16 %v6198, %v6194
        %v6331 = vpack.c.b16 %v6199, %v6195
        %v6332 = vpack.c.b16 %v6200, %v6196
        %v6333 = vpack.c.b16 %v6201, %v6197
        %v6334 = vpack.c.b16 %v6206, %v6202
        %v6335 = vpack.c.b16 %v6207, %v6203
        %v6336 = vpack.c.b16 %v6208, %v6204
        %v6337 = vpack.c.b16 %v6209, %v6205
        %6466 = vmatprep.subr.bf16.mxu0 %v6211
        %6467 = vmatpush1.bf16.msra.mxu0 %v6210
        %6468 = vmatprep.subr.bf16.mxu0 %v6215
        %6469 = vmatpush1.bf16.msra.mxu0 %v6214
        %6470 = vmatprep.subr.bf16.mxu0 %v6219
        %6471 = vmatpush1.bf16.msra.mxu0 %v6218
        %6472 = vmatprep.subr.bf16.mxu0 %v6223
        %6473 = vmatpush1.bf16.msra.mxu0 %v6222
        %6474 = vmatprep.subr.bf16.mxu0 %v6227
        %6475 = vmatpush1.bf16.msra.mxu0 %v6226
        %6476 = vmatprep.subr.bf16.mxu0 %v6231
        %6477 = vmatpush1.bf16.msra.mxu0 %v6230
        %6478 = vmatprep.subr.bf16.mxu0 %v6235
        %6479 = vmatpush1.bf16.msra.mxu0 %v6234
        %6480 = vmatprep.subr.bf16.mxu0 %v6239
        %6481 = vmatpush1.bf16.msra.mxu0 %v6238
        %6482 = vmatprep.subr.bf16.mxu0 %v6243
        %6483 = vmatpush1.bf16.msra.mxu0 %v6242
        %6484 = vmatprep.subr.bf16.mxu0 %v6247
        %6485 = vmatpush1.bf16.msra.mxu0 %v6246
        %6486 = vmatprep.subr.bf16.mxu0 %v6251
        %6487 = vmatpush1.bf16.msra.mxu0 %v6250
        %6488 = vmatprep.subr.bf16.mxu0 %v6255
        %6489 = vmatpush1.bf16.msra.mxu0 %v6254
        %6490 = vmatprep.subr.bf16.mxu0 %v6259
        %6491 = vmatpush1.bf16.msra.mxu0 %v6258
        %6492 = vmatprep.subr.bf16.mxu0 %v6263
        %6493 = vmatpush1.bf16.msra.mxu0 %v6262
        %6494 = vmatprep.subr.bf16.mxu0 %v6267
        %6495 = vmatpush1.bf16.msra.mxu0 %v6266
        %6496 = vmatprep.subr.bf16.mxu0 %v6271
        %6497 = vmatpush1.bf16.msra.mxu0 %v6270
        %6498 = vmatprep.mubr.bf16.mxu0 %v3799
        %6499 = vmatmul.mubr.bf16.gmra.mrb[0].mxu0 %v3798
        %v6500 = vpop.f32.mrb[0].mxu0
        %v6501 = vadd.f32 %v5809, %v6500
        %v6502 = vpop.f32.mrb[0].mxu0
        %v6503 = vadd.f32 %v5813, %v6502
        %v6504 = vpop.f32.mrb[0].mxu0
        %v6505 = vadd.f32 %v5809, %v6504
        %v6506 = vpop.f32.mrb[0].mxu0
        %v6507 = vadd.f32 %v5813, %v6506
        %6508 = vmatprep.mubr.bf16.mxu0 %v3807
        %6509 = vmatmul.mubr.bf16.gmra.mrb[0].mxu0 %v3806
        %v6510 = vpop.f32.mrb[0].mxu0
        %v6511 = vadd.f32 %v5809, %v6510
        %v6512 = vpop.f32.mrb[0].mxu0
        %v6513 = vadd.f32 %v5813, %v6512
        %v6514 = vpop.f32.mrb[0].mxu0
        %v6515 = vadd.f32 %v5809, %v6514
        %v6516 = vpop.f32.mrb[0].mxu0
        %v6517 = vadd.f32 %v5813, %v6516
        %6518 = vmatprep.mubr.bf16.mxu0 %v3815
        %6519 = vmatmul.mubr.bf16.gmra.mrb[0].mxu0 %v3814
        %v6520 = vpop.f32.mrb[0].mxu0
        %v6521 = vadd.f32 %v5809, %v6520
        %v6522 = vpop.f32.mrb[0].mxu0
        %v6523 = vadd.f32 %v5813, %v6522
        %v6524 = vpop.f32.mrb[0].mxu0
        %v6525 = vadd.f32 %v5809, %v6524
        %v6526 = vpop.f32.mrb[0].mxu0
        %v6527 = vadd.f32 %v5813, %v6526
        %6528 = vmatprep.mubr.bf16.mxu0 %v3823
        %6529 = vmatmul.mubr.bf16.gmra.mrb[0].mxu0 %v3822
        %v6530 = vpop.f32.mrb[0].mxu0
        %v6531 = vadd.f32 %v5809, %v6530
        %v6532 = vpop.f32.mrb[0].mxu0
        %v6533 = vadd.f32 %v5813, %v6532
        %v6534 = vpop.f32.mrb[0].mxu0
        %v6535 = vadd.f32 %v5809, %v6534
        %v6536 = vpop.f32.mrb[0].mxu0
        %v6537 = vadd.f32 %v5813, %v6536
        %6538 = vmatprep.mubr.bf16.mxu0 %v3831
        %6539 = vmatmul.mubr.bf16.gmra.mrb[0].mxu0 %v3830
        %v6540 = vpop.f32.mrb[0].mxu0
        %v6541 = vadd.f32 %v5809, %v6540
        %v6542 = vpop.f32.mrb[0].mxu0
        %v6543 = vadd.f32 %v5813, %v6542
        %v6544 = vpop.f32.mrb[0].mxu0
        %v6545 = vadd.f32 %v5809, %v6544
        %v6546 = vpop.f32.mrb[0].mxu0
        %v6547 = vadd.f32 %v5813, %v6546
        %6548 = vmatprep.mubr.bf16.mxu0 %v3839
        %6549 = vmatmul.mubr.bf16.gmra.mrb[0].mxu0 %v3838
        %v6550 = vpop.f32.mrb[0].mxu0
        %v6551 = vadd.f32 %v5809, %v6550
        %v6552 = vpop.f32.mrb[0].mxu0
        %v6553 = vadd.f32 %v5813, %v6552
        %v6554 = vpop.f32.mrb[0].mxu0
        %v6555 = vadd.f32 %v5809, %v6554
        %v6556 = vpop.f32.mrb[0].mxu0
        %v6557 = vadd.f32 %v5813, %v6556
        %6558 = vmatprep.mubr.bf16.mxu0 %v3847
        %6559 = vmatmul.mubr.bf16.gmra.mrb[0].mxu0 %v3846
        %v6560 = vpop.f32.mrb[0].mxu0
        %v6561 = vadd.f32 %v5809, %v6560
        %v6562 = vpop.f32.mrb[0].mxu0
        %v6563 = vadd.f32 %v5813, %v6562
        %v6564 = vpop.f32.mrb[0].mxu0
        %v6565 = vadd.f32 %v5809, %v6564
        %v6566 = vpop.f32.mrb[0].mxu0
        %v6567 = vadd.f32 %v5813, %v6566
        %6568 = vmatprep.mubr.bf16.mxu0 %v3855
        %6569 = vmatmul.mubr.bf16.gmra.mrb[0].mxu0 %v3854
        %v6570 = vpop.f32.mrb[0].mxu0
        %v6571 = vadd.f32 %v5809, %v6570
        %v6572 = vpop.f32.mrb[0].mxu0
        %v6573 = vadd.f32 %v5813, %v6572
        %v6574 = vpop.f32.mrb[0].mxu0
        %v6575 = vadd.f32 %v5809, %v6574
        %v6576 = vpop.f32.mrb[0].mxu0
        %v6577 = vadd.f32 %v5813, %v6576
        %6578 = vmatprep.mubr.bf16.mxu0 %v3863
        %6579 = vmatmul.mubr.bf16.gmra.mrb[0].mxu0 %v3862
        %v6580 = vpop.f32.mrb[0].mxu0
        %v6581 = vadd.f32 %v5809, %v6580
        %v6582 = vpop.f32.mrb[0].mxu0
        %v6583 = vadd.f32 %v5813, %v6582
        %v6584 = vpop.f32.mrb[0].mxu0
        %v6585 = vadd.f32 %v5809, %v6584
        %v6586 = vpop.f32.mrb[0].mxu0
        %v6587 = vadd.f32 %v5813, %v6586
        %6588 = vmatprep.mubr.bf16.mxu0 %v3871
        %6589 = vmatmul.mubr.bf16.gmra.mrb[0].mxu0 %v3870
        %v6590 = vpop.f32.mrb[0].mxu0
        %v6591 = vadd.f32 %v5809, %v6590
        %v6592 = vpop.f32.mrb[0].mxu0
        %v6593 = vadd.f32 %v5813, %v6592
        %v6594 = vpop.f32.mrb[0].mxu0
        %v6595 = vadd.f32 %v5809, %v6594
        %v6596 = vpop.f32.mrb[0].mxu0
        %v6597 = vadd.f32 %v5813, %v6596
        %6598 = vmatprep.mubr.bf16.mxu0 %v3879
        %6599 = vmatmul.mubr.bf16.gmra.mrb[0].mxu0 %v3878
        %v6600 = vpop.f32.mrb[0].mxu0
        %v6601 = vadd.f32 %v5809, %v6600
        %v6602 = vpop.f32.mrb[0].mxu0
        %v6603 = vadd.f32 %v5813, %v6602
        %v6604 = vpop.f32.mrb[0].mxu0
        %v6605 = vadd.f32 %v5809, %v6604
        %v6606 = vpop.f32.mrb[0].mxu0
        %v6607 = vadd.f32 %v5813, %v6606
        %6608 = vmatprep.mubr.bf16.mxu0 %v3887
        %6609 = vmatmul.mubr.bf16.gmra.mrb[0].mxu0 %v3886
        %v6610 = vpop.f32.mrb[0].mxu0
        %v6611 = vadd.f32 %v5809, %v6610
        %v6612 = vpop.f32.mrb[0].mxu0
        %v6613 = vadd.f32 %v5813, %v6612
        %v6614 = vpop.f32.mrb[0].mxu0
        %v6615 = vadd.f32 %v5809, %v6614
        %v6616 = vpop.f32.mrb[0].mxu0
        %v6617 = vadd.f32 %v5813, %v6616
        %6618 = vmatprep.mubr.bf16.mxu0 %v3895
        %6619 = vmatmul.mubr.bf16.gmra.mrb[0].mxu0 %v3894
        %v6620 = vpop.f32.mrb[0].mxu0
        %v6621 = vadd.f32 %v5809, %v6620
        %v6622 = vpop.f32.mrb[0].mxu0
        %v6623 = vadd.f32 %v5813, %v6622
        %v6624 = vpop.f32.mrb[0].mxu0
        %v6625 = vadd.f32 %v5809, %v6624
        %v6626 = vpop.f32.mrb[0].mxu0
        %v6627 = vadd.f32 %v5813, %v6626
        %6628 = vmatprep.mubr.bf16.mxu0 %v3903
        %6629 = vmatmul.mubr.bf16.gmra.mrb[0].mxu0 %v3902
        %v6630 = vpop.f32.mrb[0].mxu0
        %v6631 = vadd.f32 %v5809, %v6630
        %v6632 = vpop.f32.mrb[0].mxu0
        %v6633 = vadd.f32 %v5813, %v6632
        %v6634 = vpop.f32.mrb[0].mxu0
        %v6635 = vadd.f32 %v5809, %v6634
        %v6636 = vpop.f32.mrb[0].mxu0
        %v6637 = vadd.f32 %v5813, %v6636
        %6638 = vmatprep.mubr.bf16.mxu0 %v3911
        %6639 = vmatmul.mubr.bf16.gmra.mrb[0].mxu0 %v3910
        %v6640 = vpop.f32.mrb[0].mxu0
        %v6641 = vadd.f32 %v5809, %v6640
        %v6642 = vpop.f32.mrb[0].mxu0
        %v6643 = vadd.f32 %v5813, %v6642
        %v6644 = vpop.f32.mrb[0].mxu0
        %v6645 = vadd.f32 %v5809, %v6644
        %v6646 = vpop.f32.mrb[0].mxu0
        %v6647 = vadd.f32 %v5813, %v6646
        %6648 = vmatprep.mubr.bf16.mxu0 %v3919
        %6649 = vmatmul.mubr.bf16.gmra.mrb[0].mxu0 %v3918
        %v6650 = vpop.f32.mrb[0].mxu0
        %v6651 = vadd.f32 %v5809, %v6650
        %v6652 = vpop.f32.mrb[0].mxu0
        %v6653 = vadd.f32 %v5813, %v6652
        %v6654 = vpop.f32.mrb[0].mxu0
        %v6655 = vadd.f32 %v5809, %v6654
        %v6656 = vpop.f32.mrb[0].mxu0
        %v6657 = vadd.f32 %v5813, %v6656
        %6658 = vdwg.mxu0
        %6659 = vmatprep.subr.bf16.mxu0 %v6275
        %6660 = vmatpush1.bf16.msra.mxu0 %v6274
        %6661 = vmatprep.subr.bf16.mxu0 %v6279
        %6662 = vmatpush1.bf16.msra.mxu0 %v6278
        %6663 = vmatprep.subr.bf16.mxu0 %v6283
        %6664 = vmatpush1.bf16.msra.mxu0 %v6282
        %6665 = vmatprep.subr.bf16.mxu0 %v6287
        %6666 = vmatpush1.bf16.msra.mxu0 %v6286
        %6667 = vmatprep.subr.bf16.mxu0 %v6291
        %6668 = vmatpush1.bf16.msra.mxu0 %v6290
        %6669 = vmatprep.subr.bf16.mxu0 %v6295
        %6670 = vmatpush1.bf16.msra.mxu0 %v6294
        %6671 = vmatprep.subr.bf16.mxu0 %v6299
        %6672 = vmatpush1.bf16.msra.mxu0 %v6298
        %6673 = vmatprep.subr.bf16.mxu0 %v6303
        %6674 = vmatpush1.bf16.msra.mxu0 %v6302
        %6675 = vmatprep.subr.bf16.mxu0 %v6307
        %6676 = vmatpush1.bf16.msra.mxu0 %v6306
        %6677 = vmatprep.subr.bf16.mxu0 %v6311
        %6678 = vmatpush1.bf16.msra.mxu0 %v6310
        %6679 = vmatprep.subr.bf16.mxu0 %v6315
        %6680 = vmatpush1.bf16.msra.mxu0 %v6314
        %6681 = vmatprep.subr.bf16.mxu0 %v6319
        %6682 = vmatpush1.bf16.msra.mxu0 %v6318
        %6683 = vmatprep.subr.bf16.mxu0 %v6323
        %6684 = vmatpush1.bf16.msra.mxu0 %v6322
        %6685 = vmatprep.subr.bf16.mxu0 %v6327
        %6686 = vmatpush1.bf16.msra.mxu0 %v6326
        %6687 = vmatprep.subr.bf16.mxu0 %v6331
        %6688 = vmatpush1.bf16.msra.mxu0 %v6330
        %6689 = vmatprep.subr.bf16.mxu0 %v6335
        %6690 = vmatpush1.bf16.msra.mxu0 %v6334
        %6691 = vmatprep.mubr.bf16.mxu0 %v3801
        %6692 = vmatmul.mubr.bf16.gmra.mrb[0].mxu0 %v3800
        %v6693 = vpop.f32.mrb[0].mxu0
        %v6694 = vadd.f32 %v6501, %v6693
        %v6695 = vpop.f32.mrb[0].mxu0
        %v6696 = vadd.f32 %v6503, %v6695
        %v6697 = vpop.f32.mrb[0].mxu0
        %v6698 = vadd.f32 %v6505, %v6697
        %v6699 = vpop.f32.mrb[0].mxu0
        %v6700 = vadd.f32 %v6507, %v6699
        %6701 = vmatprep.mubr.bf16.mxu0 %v3809
        %6702 = vmatmul.mubr.bf16.gmra.mrb[0].mxu0 %v3808
        %v6703 = vpop.f32.mrb[0].mxu0
        %v6704 = vadd.f32 %v6511, %v6703
        %v6705 = vpop.f32.mrb[0].mxu0
        %v6706 = vadd.f32 %v6513, %v6705
        %v6707 = vpop.f32.mrb[0].mxu0
        %v6708 = vadd.f32 %v6515, %v6707
        %v6709 = vpop.f32.mrb[0].mxu0
        %v6710 = vadd.f32 %v6517, %v6709
        %6711 = vmatprep.mubr.bf16.mxu0 %v3817
        %6712 = vmatmul.mubr.bf16.gmra.mrb[0].mxu0 %v3816
        %v6713 = vpop.f32.mrb[0].mxu0
        %v6714 = vadd.f32 %v6521, %v6713
        %v6715 = vpop.f32.mrb[0].mxu0
        %v6716 = vadd.f32 %v6523, %v6715
        %v6717 = vpop.f32.mrb[0].mxu0
        %v6718 = vadd.f32 %v6525, %v6717
        %v6719 = vpop.f32.mrb[0].mxu0
        %v6720 = vadd.f32 %v6527, %v6719
        %6721 = vmatprep.mubr.bf16.mxu0 %v3825
        %6722 = vmatmul.mubr.bf16.gmra.mrb[0].mxu0 %v3824
        %v6723 = vpop.f32.mrb[0].mxu0
        %v6724 = vadd.f32 %v6531, %v6723
        %v6725 = vpop.f32.mrb[0].mxu0
        %v6726 = vadd.f32 %v6533, %v6725
        %v6727 = vpop.f32.mrb[0].mxu0
        %v6728 = vadd.f32 %v6535, %v6727
        %v6729 = vpop.f32.mrb[0].mxu0
        %v6730 = vadd.f32 %v6537, %v6729
        %6731 = vmatprep.mubr.bf16.mxu0 %v3833
        %6732 = vmatmul.mubr.bf16.gmra.mrb[0].mxu0 %v3832
        %v6733 = vpop.f32.mrb[0].mxu0
        %v6734 = vadd.f32 %v6541, %v6733
        %v6735 = vpop.f32.mrb[0].mxu0
        %v6736 = vadd.f32 %v6543, %v6735
        %v6737 = vpop.f32.mrb[0].mxu0
        %v6738 = vadd.f32 %v6545, %v6737
        %v6739 = vpop.f32.mrb[0].mxu0
        %v6740 = vadd.f32 %v6547, %v6739
        %6741 = vmatprep.mubr.bf16.mxu0 %v3841
        %6742 = vmatmul.mubr.bf16.gmra.mrb[0].mxu0 %v3840
        %v6743 = vpop.f32.mrb[0].mxu0
        %v6744 = vadd.f32 %v6551, %v6743
        %v6745 = vpop.f32.mrb[0].mxu0
        %v6746 = vadd.f32 %v6553, %v6745
        %v6747 = vpop.f32.mrb[0].mxu0
        %v6748 = vadd.f32 %v6555, %v6747
        %v6749 = vpop.f32.mrb[0].mxu0
        %v6750 = vadd.f32 %v6557, %v6749
        %6751 = vmatprep.mubr.bf16.mxu0 %v3849
        %6752 = vmatmul.mubr.bf16.gmra.mrb[0].mxu0 %v3848
        %v6753 = vpop.f32.mrb[0].mxu0
        %v6754 = vadd.f32 %v6561, %v6753
        %v6755 = vpop.f32.mrb[0].mxu0
        %v6756 = vadd.f32 %v6563, %v6755
        %v6757 = vpop.f32.mrb[0].mxu0
        %v6758 = vadd.f32 %v6565, %v6757
        %v6759 = vpop.f32.mrb[0].mxu0
        %v6760 = vadd.f32 %v6567, %v6759
        %6761 = vmatprep.mubr.bf16.mxu0 %v3857
        %6762 = vmatmul.mubr.bf16.gmra.mrb[0].mxu0 %v3856
        %v6763 = vpop.f32.mrb[0].mxu0
        %v6764 = vadd.f32 %v6571, %v6763
        %v6765 = vpop.f32.mrb[0].mxu0
        %v6766 = vadd.f32 %v6573, %v6765
        %v6767 = vpop.f32.mrb[0].mxu0
        %v6768 = vadd.f32 %v6575, %v6767
        %v6769 = vpop.f32.mrb[0].mxu0
        %v6770 = vadd.f32 %v6577, %v6769
        %6771 = vmatprep.mubr.bf16.mxu0 %v3865
        %6772 = vmatmul.mubr.bf16.gmra.mrb[0].mxu0 %v3864
        %v6773 = vpop.f32.mrb[0].mxu0
        %v6774 = vadd.f32 %v6581, %v6773
        %v6775 = vpop.f32.mrb[0].mxu0
        %v6776 = vadd.f32 %v6583, %v6775
        %v6777 = vpop.f32.mrb[0].mxu0
        %v6778 = vadd.f32 %v6585, %v6777
        %v6779 = vpop.f32.mrb[0].mxu0
        %v6780 = vadd.f32 %v6587, %v6779
        %6781 = vmatprep.mubr.bf16.mxu0 %v3873
        %6782 = vmatmul.mubr.bf16.gmra.mrb[0].mxu0 %v3872
        %v6783 = vpop.f32.mrb[0].mxu0
        %v6784 = vadd.f32 %v6591, %v6783
        %v6785 = vpop.f32.mrb[0].mxu0
        %v6786 = vadd.f32 %v6593, %v6785
        %v6787 = vpop.f32.mrb[0].mxu0
        %v6788 = vadd.f32 %v6595, %v6787
        %v6789 = vpop.f32.mrb[0].mxu0
        %v6790 = vadd.f32 %v6597, %v6789
        %6791 = vmatprep.mubr.bf16.mxu0 %v3881
        %6792 = vmatmul.mubr.bf16.gmra.mrb[0].mxu0 %v3880
        %v6793 = vpop.f32.mrb[0].mxu0
        %v6794 = vadd.f32 %v6601, %v6793
        %v6795 = vpop.f32.mrb[0].mxu0
        %v6796 = vadd.f32 %v6603, %v6795
        %v6797 = vpop.f32.mrb[0].mxu0
        %v6798 = vadd.f32 %v6605, %v6797
        %v6799 = vpop.f32.mrb[0].mxu0
        %v6800 = vadd.f32 %v6607, %v6799
        %6801 = vmatprep.mubr.bf16.mxu0 %v3889
        %6802 = vmatmul.mubr.bf16.gmra.mrb[0].mxu0 %v3888
        %v6803 = vpop.f32.mrb[0].mxu0
        %v6804 = vadd.f32 %v6611, %v6803
        %v6805 = vpop.f32.mrb[0].mxu0
        %v6806 = vadd.f32 %v6613, %v6805
        %v6807 = vpop.f32.mrb[0].mxu0
        %v6808 = vadd.f32 %v6615, %v6807
        %v6809 = vpop.f32.mrb[0].mxu0
        %v6810 = vadd.f32 %v6617, %v6809
        %6811 = vmatprep.mubr.bf16.mxu0 %v3897
        %6812 = vmatmul.mubr.bf16.gmra.mrb[0].mxu0 %v3896
        %v6813 = vpop.f32.mrb[0].mxu0
        %v6814 = vadd.f32 %v6621, %v6813
        %v6815 = vpop.f32.mrb[0].mxu0
        %v6816 = vadd.f32 %v6623, %v6815
        %v6817 = vpop.f32.mrb[0].mxu0
        %v6818 = vadd.f32 %v6625, %v6817
        %v6819 = vpop.f32.mrb[0].mxu0
        %v6820 = vadd.f32 %v6627, %v6819
        %6821 = vmatprep.mubr.bf16.mxu0 %v3905
        %6822 = vmatmul.mubr.bf16.gmra.mrb[0].mxu0 %v3904
        %v6823 = vpop.f32.mrb[0].mxu0
        %v6824 = vadd.f32 %v6631, %v6823
        %v6825 = vpop.f32.mrb[0].mxu0
        %v6826 = vadd.f32 %v6633, %v6825
        %v6827 = vpop.f32.mrb[0].mxu0
        %v6828 = vadd.f32 %v6635, %v6827
        %v6829 = vpop.f32.mrb[0].mxu0
        %v6830 = vadd.f32 %v6637, %v6829
        %6831 = vmatprep.mubr.bf16.mxu0 %v3913
        %6832 = vmatmul.mubr.bf16.gmra.mrb[0].mxu0 %v3912
        %v6833 = vpop.f32.mrb[0].mxu0
        %v6834 = vadd.f32 %v6641, %v6833
        %v6835 = vpop.f32.mrb[0].mxu0
        %v6836 = vadd.f32 %v6643, %v6835
        %v6837 = vpop.f32.mrb[0].mxu0
        %v6838 = vadd.f32 %v6645, %v6837
        %v6839 = vpop.f32.mrb[0].mxu0
        %v6840 = vadd.f32 %v6647, %v6839
        %6841 = vmatprep.mubr.bf16.mxu0 %v3921
        %6842 = vmatmul.mubr.bf16.gmra.mrb[0].mxu0 %v3920
        %v6843 = vpop.f32.mrb[0].mxu0
        %v6844 = vadd.f32 %v6651, %v6843
        %v6845 = vpop.f32.mrb[0].mxu0
        %v6846 = vadd.f32 %v6653, %v6845
        %v6847 = vpop.f32.mrb[0].mxu0
        %v6848 = vadd.f32 %v6655, %v6847
        %v6849 = vpop.f32.mrb[0].mxu0
        %v6850 = vadd.f32 %v6657, %v6849
        %6851 = vdwg.mxu0
        %6852 = vmatprep.subr.bf16.mxu0 %v6213
        %6853 = vmatpush1.bf16.msra.mxu0 %v6212
        %6854 = vmatprep.subr.bf16.mxu0 %v6217
        %6855 = vmatpush1.bf16.msra.mxu0 %v6216
        %6856 = vmatprep.subr.bf16.mxu0 %v6221
        %6857 = vmatpush1.bf16.msra.mxu0 %v6220
        %6858 = vmatprep.subr.bf16.mxu0 %v6225
        %6859 = vmatpush1.bf16.msra.mxu0 %v6224
        %6860 = vmatprep.subr.bf16.mxu0 %v6229
        %6861 = vmatpush1.bf16.msra.mxu0 %v6228
        %6862 = vmatprep.subr.bf16.mxu0 %v6233
        %6863 = vmatpush1.bf16.msra.mxu0 %v6232
        %6864 = vmatprep.subr.bf16.mxu0 %v6237
        %6865 = vmatpush1.bf16.msra.mxu0 %v6236
        %6866 = vmatprep.subr.bf16.mxu0 %v6241
        %6867 = vmatpush1.bf16.msra.mxu0 %v6240
        %6868 = vmatprep.subr.bf16.mxu0 %v6245
        %6869 = vmatpush1.bf16.msra.mxu0 %v6244
        %6870 = vmatprep.subr.bf16.mxu0 %v6249
        %6871 = vmatpush1.bf16.msra.mxu0 %v6248
        %6872 = vmatprep.subr.bf16.mxu0 %v6253
        %6873 = vmatpush1.bf16.msra.mxu0 %v6252
        %6874 = vmatprep.subr.bf16.mxu0 %v6257
        %6875 = vmatpush1.bf16.msra.mxu0 %v6256
        %6876 = vmatprep.subr.bf16.mxu0 %v6261
        %6877 = vmatpush1.bf16.msra.mxu0 %v6260
        %6878 = vmatprep.subr.bf16.mxu0 %v6265
        %6879 = vmatpush1.bf16.msra.mxu0 %v6264
        %6880 = vmatprep.subr.bf16.mxu0 %v6269
        %6881 = vmatpush1.bf16.msra.mxu0 %v6268
        %6882 = vmatprep.subr.bf16.mxu0 %v6273
        %6883 = vmatpush1.bf16.msra.mxu0 %v6272
        %6884 = vmatprep.mubr.bf16.mxu0 %v3799
        %6885 = vmatmul.mubr.bf16.gmra.mrb[0].mxu0 %v3798
        %v6886 = vpop.f32.mrb[0].mxu0
        %v6887 = vadd.f32 %v5817, %v6886
        %v6888 = vpop.f32.mrb[0].mxu0
        %v6889 = vadd.f32 %v5821, %v6888
        %v6890 = vpop.f32.mrb[0].mxu0
        %v6891 = vadd.f32 %v5817, %v6890
        %v6892 = vpop.f32.mrb[0].mxu0
        %v6893 = vadd.f32 %v5821, %v6892
        %6894 = vmatprep.mubr.bf16.mxu0 %v3807
        %6895 = vmatmul.mubr.bf16.gmra.mrb[0].mxu0 %v3806
        %v6896 = vpop.f32.mrb[0].mxu0
        %v6897 = vadd.f32 %v5817, %v6896
        %v6898 = vpop.f32.mrb[0].mxu0
        %v6899 = vadd.f32 %v5821, %v6898
        %v6900 = vpop.f32.mrb[0].mxu0
        %v6901 = vadd.f32 %v5817, %v6900
        %v6902 = vpop.f32.mrb[0].mxu0
        %v6903 = vadd.f32 %v5821, %v6902
        %6904 = vmatprep.mubr.bf16.mxu0 %v3815
        %6905 = vmatmul.mubr.bf16.gmra.mrb[0].mxu0 %v3814
        %v6906 = vpop.f32.mrb[0].mxu0
        %v6907 = vadd.f32 %v5817, %v6906
        %v6908 = vpop.f32.mrb[0].mxu0
        %v6909 = vadd.f32 %v5821, %v6908
        %v6910 = vpop.f32.mrb[0].mxu0
        %v6911 = vadd.f32 %v5817, %v6910
        %v6912 = vpop.f32.mrb[0].mxu0
        %v6913 = vadd.f32 %v5821, %v6912
        %6914 = vmatprep.mubr.bf16.mxu0 %v3823
        %6915 = vmatmul.mubr.bf16.gmra.mrb[0].mxu0 %v3822
        %v6916 = vpop.f32.mrb[0].mxu0
        %v6917 = vadd.f32 %v5817, %v6916
        %v6918 = vpop.f32.mrb[0].mxu0
        %v6919 = vadd.f32 %v5821, %v6918
        %v6920 = vpop.f32.mrb[0].mxu0
        %v6921 = vadd.f32 %v5817, %v6920
        %v6922 = vpop.f32.mrb[0].mxu0
        %v6923 = vadd.f32 %v5821, %v6922
        %6924 = vmatprep.mubr.bf16.mxu0 %v3831
        %6925 = vmatmul.mubr.bf16.gmra.mrb[0].mxu0 %v3830
        %v6926 = vpop.f32.mrb[0].mxu0
        %v6927 = vadd.f32 %v5817, %v6926
        %v6928 = vpop.f32.mrb[0].mxu0
        %v6929 = vadd.f32 %v5821, %v6928
        %v6930 = vpop.f32.mrb[0].mxu0
        %v6931 = vadd.f32 %v5817, %v6930
        %v6932 = vpop.f32.mrb[0].mxu0
        %v6933 = vadd.f32 %v5821, %v6932
        %6934 = vmatprep.mubr.bf16.mxu0 %v3839
        %6935 = vmatmul.mubr.bf16.gmra.mrb[0].mxu0 %v3838
        %v6936 = vpop.f32.mrb[0].mxu0
        %v6937 = vadd.f32 %v5817, %v6936
        %v6938 = vpop.f32.mrb[0].mxu0
        %v6939 = vadd.f32 %v5821, %v6938
        %v6940 = vpop.f32.mrb[0].mxu0
        %v6941 = vadd.f32 %v5817, %v6940
        %v6942 = vpop.f32.mrb[0].mxu0
        %v6943 = vadd.f32 %v5821, %v6942
        %6944 = vmatprep.mubr.bf16.mxu0 %v3847
        %6945 = vmatmul.mubr.bf16.gmra.mrb[0].mxu0 %v3846
        %v6946 = vpop.f32.mrb[0].mxu0
        %v6947 = vadd.f32 %v5817, %v6946
        %v6948 = vpop.f32.mrb[0].mxu0
        %v6949 = vadd.f32 %v5821, %v6948
        %v6950 = vpop.f32.mrb[0].mxu0
        %v6951 = vadd.f32 %v5817, %v6950
        %v6952 = vpop.f32.mrb[0].mxu0
        %v6953 = vadd.f32 %v5821, %v6952
        %6954 = vmatprep.mubr.bf16.mxu0 %v3855
        %6955 = vmatmul.mubr.bf16.gmra.mrb[0].mxu0 %v3854
        %v6956 = vpop.f32.mrb[0].mxu0
        %v6957 = vadd.f32 %v5817, %v6956
        %v6958 = vpop.f32.mrb[0].mxu0
        %v6959 = vadd.f32 %v5821, %v6958
        %v6960 = vpop.f32.mrb[0].mxu0
        %v6961 = vadd.f32 %v5817, %v6960
        %v6962 = vpop.f32.mrb[0].mxu0
        %v6963 = vadd.f32 %v5821, %v6962
        %6964 = vmatprep.mubr.bf16.mxu0 %v3863
        %6965 = vmatmul.mubr.bf16.gmra.mrb[0].mxu0 %v3862
        %v6966 = vpop.f32.mrb[0].mxu0
        %v6967 = vadd.f32 %v5817, %v6966
        %v6968 = vpop.f32.mrb[0].mxu0
        %v6969 = vadd.f32 %v5821, %v6968
        %v6970 = vpop.f32.mrb[0].mxu0
        %v6971 = vadd.f32 %v5817, %v6970
        %v6972 = vpop.f32.mrb[0].mxu0
        %v6973 = vadd.f32 %v5821, %v6972
        %6974 = vmatprep.mubr.bf16.mxu0 %v3871
        %6975 = vmatmul.mubr.bf16.gmra.mrb[0].mxu0 %v3870
        %v6976 = vpop.f32.mrb[0].mxu0
        %v6977 = vadd.f32 %v5817, %v6976
        %v6978 = vpop.f32.mrb[0].mxu0
        %v6979 = vadd.f32 %v5821, %v6978
        %v6980 = vpop.f32.mrb[0].mxu0
        %v6981 = vadd.f32 %v5817, %v6980
        %v6982 = vpop.f32.mrb[0].mxu0
        %v6983 = vadd.f32 %v5821, %v6982
        %6984 = vmatprep.mubr.bf16.mxu0 %v3879
        %6985 = vmatmul.mubr.bf16.gmra.mrb[0].mxu0 %v3878
        %v6986 = vpop.f32.mrb[0].mxu0
        %v6987 = vadd.f32 %v5817, %v6986
        %v6988 = vpop.f32.mrb[0].mxu0
        %v6989 = vadd.f32 %v5821, %v6988
        %v6990 = vpop.f32.mrb[0].mxu0
        %v6991 = vadd.f32 %v5817, %v6990
        %v6992 = vpop.f32.mrb[0].mxu0
        %v6993 = vadd.f32 %v5821, %v6992
        %6994 = vmatprep.mubr.bf16.mxu0 %v3887
        %6995 = vmatmul.mubr.bf16.gmra.mrb[0].mxu0 %v3886
        %v6996 = vpop.f32.mrb[0].mxu0
        %v6997 = vadd.f32 %v5817, %v6996
        %v6998 = vpop.f32.mrb[0].mxu0
        %v6999 = vadd.f32 %v5821, %v6998
        %v7000 = vpop.f32.mrb[0].mxu0
        %v7001 = vadd.f32 %v5817, %v7000
        %v7002 = vpop.f32.mrb[0].mxu0
        %v7003 = vadd.f32 %v5821, %v7002
        %7004 = vmatprep.mubr.bf16.mxu0 %v3895
        %7005 = vmatmul.mubr.bf16.gmra.mrb[0].mxu0 %v3894
        %v7006 = vpop.f32.mrb[0].mxu0
        %v7007 = vadd.f32 %v5817, %v7006
        %v7008 = vpop.f32.mrb[0].mxu0
        %v7009 = vadd.f32 %v5821, %v7008
        %v7010 = vpop.f32.mrb[0].mxu0
        %v7011 = vadd.f32 %v5817, %v7010
        %v7012 = vpop.f32.mrb[0].mxu0
        %v7013 = vadd.f32 %v5821, %v7012
        %7014 = vmatprep.mubr.bf16.mxu0 %v3903
        %7015 = vmatmul.mubr.bf16.gmra.mrb[0].mxu0 %v3902
        %v7016 = vpop.f32.mrb[0].mxu0
        %v7017 = vadd.f32 %v5817, %v7016
        %v7018 = vpop.f32.mrb[0].mxu0
        %v7019 = vadd.f32 %v5821, %v7018
        %v7020 = vpop.f32.mrb[0].mxu0
        %v7021 = vadd.f32 %v5817, %v7020
        %v7022 = vpop.f32.mrb[0].mxu0
        %v7023 = vadd.f32 %v5821, %v7022
        %7024 = vmatprep.mubr.bf16.mxu0 %v3911
        %7025 = vmatmul.mubr.bf16.gmra.mrb[0].mxu0 %v3910
        %v7026 = vpop.f32.mrb[0].mxu0
        %v7027 = vadd.f32 %v5817, %v7026
        %v7028 = vpop.f32.mrb[0].mxu0
        %v7029 = vadd.f32 %v5821, %v7028
        %v7030 = vpop.f32.mrb[0].mxu0
        %v7031 = vadd.f32 %v5817, %v7030
        %v7032 = vpop.f32.mrb[0].mxu0
        %v7033 = vadd.f32 %v5821, %v7032
        %7034 = vmatprep.mubr.bf16.mxu0 %v3919
        %7035 = vmatmul.mubr.bf16.gmra.mrb[0].mxu0 %v3918
        %v7036 = vpop.f32.mrb[0].mxu0
        %v7037 = vadd.f32 %v5817, %v7036
        %v7038 = vpop.f32.mrb[0].mxu0
        %v7039 = vadd.f32 %v5821, %v7038
        %v7040 = vpop.f32.mrb[0].mxu0
        %v7041 = vadd.f32 %v5817, %v7040
        %v7042 = vpop.f32.mrb[0].mxu0
        %v7043 = vadd.f32 %v5821, %v7042
        %7044 = vdwg.mxu0
        %7045 = vmatprep.subr.bf16.mxu0 %v6277
        %7046 = vmatpush1.bf16.msra.mxu0 %v6276
        %7047 = vmatprep.subr.bf16.mxu0 %v6281
        %7048 = vmatpush1.bf16.msra.mxu0 %v6280
        %7049 = vmatprep.subr.bf16.mxu0 %v6285
        %7050 = vmatpush1.bf16.msra.mxu0 %v6284
        %7051 = vmatprep.subr.bf16.mxu0 %v6289
        %7052 = vmatpush1.bf16.msra.mxu0 %v6288
        %7053 = vmatprep.subr.bf16.mxu0 %v6293
        %7054 = vmatpush1.bf16.msra.mxu0 %v6292
        %7055 = vmatprep.subr.bf16.mxu0 %v6297
        %7056 = vmatpush1.bf16.msra.mxu0 %v6296
        %7057 = vmatprep.subr.bf16.mxu0 %v6301
        %7058 = vmatpush1.bf16.msra.mxu0 %v6300
        %7059 = vmatprep.subr.bf16.mxu0 %v6305
        %7060 = vmatpush1.bf16.msra.mxu0 %v6304
        %7061 = vmatprep.subr.bf16.mxu0 %v6309
        %7062 = vmatpush1.bf16.msra.mxu0 %v6308
        %7063 = vmatprep.subr.bf16.mxu0 %v6313
        %7064 = vmatpush1.bf16.msra.mxu0 %v6312
        %7065 = vmatprep.subr.bf16.mxu0 %v6317
        %7066 = vmatpush1.bf16.msra.mxu0 %v6316
        %7067 = vmatprep.subr.bf16.mxu0 %v6321
        %7068 = vmatpush1.bf16.msra.mxu0 %v6320
        %7069 = vmatprep.subr.bf16.mxu0 %v6325
        %7070 = vmatpush1.bf16.msra.mxu0 %v6324
        %7071 = vmatprep.subr.bf16.mxu0 %v6329
        %7072 = vmatpush1.bf16.msra.mxu0 %v6328
        %7073 = vmatprep.subr.bf16.mxu0 %v6333
        %7074 = vmatpush1.bf16.msra.mxu0 %v6332
        %7075 = vmatprep.subr.bf16.mxu0 %v6337
        %7076 = vmatpush1.bf16.msra.mxu0 %v6336
        %7077 = vmatprep.mubr.bf16.mxu0 %v3801
        %7078 = vmatmul.mubr.bf16.gmra.mrb[0].mxu0 %v3800
        %v7079 = vpop.f32.mrb[0].mxu0
        %v7080 = vadd.f32 %v6887, %v7079
        %v7081 = vpop.f32.mrb[0].mxu0
        %v7082 = vadd.f32 %v6889, %v7081
        %v7083 = vpop.f32.mrb[0].mxu0
        %v7084 = vadd.f32 %v6891, %v7083
        %v7085 = vpop.f32.mrb[0].mxu0
        %v7086 = vadd.f32 %v6893, %v7085
        %7087 = vmatprep.mubr.bf16.mxu0 %v3809
        %7088 = vmatmul.mubr.bf16.gmra.mrb[0].mxu0 %v3808
        %v7089 = vpop.f32.mrb[0].mxu0
        %v7090 = vadd.f32 %v6897, %v7089
        %v7091 = vpop.f32.mrb[0].mxu0
        %v7092 = vadd.f32 %v6899, %v7091
        %v7093 = vpop.f32.mrb[0].mxu0
        %v7094 = vadd.f32 %v6901, %v7093
        %v7095 = vpop.f32.mrb[0].mxu0
        %v7096 = vadd.f32 %v6903, %v7095
        %7097 = vmatprep.mubr.bf16.mxu0 %v3817
        %7098 = vmatmul.mubr.bf16.gmra.mrb[0].mxu0 %v3816
        %v7099 = vpop.f32.mrb[0].mxu0
        %v7100 = vadd.f32 %v6907, %v7099
        %v7101 = vpop.f32.mrb[0].mxu0
        %v7102 = vadd.f32 %v6909, %v7101
        %v7103 = vpop.f32.mrb[0].mxu0
        %v7104 = vadd.f32 %v6911, %v7103
        %v7105 = vpop.f32.mrb[0].mxu0
        %v7106 = vadd.f32 %v6913, %v7105
        %7107 = vmatprep.mubr.bf16.mxu0 %v3825
        %7108 = vmatmul.mubr.bf16.gmra.mrb[0].mxu0 %v3824
        %v7109 = vpop.f32.mrb[0].mxu0
        %v7110 = vadd.f32 %v6917, %v7109
        %v7111 = vpop.f32.mrb[0].mxu0
        %v7112 = vadd.f32 %v6919, %v7111
        %v7113 = vpop.f32.mrb[0].mxu0
        %v7114 = vadd.f32 %v6921, %v7113
        %v7115 = vpop.f32.mrb[0].mxu0
        %v7116 = vadd.f32 %v6923, %v7115
        %7117 = vmatprep.mubr.bf16.mxu0 %v3833
        %7118 = vmatmul.mubr.bf16.gmra.mrb[0].mxu0 %v3832
        %v7119 = vpop.f32.mrb[0].mxu0
        %v7120 = vadd.f32 %v6927, %v7119
        %v7121 = vpop.f32.mrb[0].mxu0
        %v7122 = vadd.f32 %v6929, %v7121
        %v7123 = vpop.f32.mrb[0].mxu0
        %v7124 = vadd.f32 %v6931, %v7123
        %v7125 = vpop.f32.mrb[0].mxu0
        %v7126 = vadd.f32 %v6933, %v7125
        %7127 = vmatprep.mubr.bf16.mxu0 %v3841
        %7128 = vmatmul.mubr.bf16.gmra.mrb[0].mxu0 %v3840
        %v7129 = vpop.f32.mrb[0].mxu0
        %v7130 = vadd.f32 %v6937, %v7129
        %v7131 = vpop.f32.mrb[0].mxu0
        %v7132 = vadd.f32 %v6939, %v7131
        %v7133 = vpop.f32.mrb[0].mxu0
        %v7134 = vadd.f32 %v6941, %v7133
        %v7135 = vpop.f32.mrb[0].mxu0
        %v7136 = vadd.f32 %v6943, %v7135
        %7137 = vmatprep.mubr.bf16.mxu0 %v3849
        %7138 = vmatmul.mubr.bf16.gmra.mrb[0].mxu0 %v3848
        %v7139 = vpop.f32.mrb[0].mxu0
        %v7140 = vadd.f32 %v6947, %v7139
        %v7141 = vpop.f32.mrb[0].mxu0
        %v7142 = vadd.f32 %v6949, %v7141
        %v7143 = vpop.f32.mrb[0].mxu0
        %v7144 = vadd.f32 %v6951, %v7143
        %v7145 = vpop.f32.mrb[0].mxu0
        %v7146 = vadd.f32 %v6953, %v7145
        %7147 = vmatprep.mubr.bf16.mxu0 %v3857
        %7148 = vmatmul.mubr.bf16.gmra.mrb[0].mxu0 %v3856
        %v7149 = vpop.f32.mrb[0].mxu0
        %v7150 = vadd.f32 %v6957, %v7149
        %v7151 = vpop.f32.mrb[0].mxu0
        %v7152 = vadd.f32 %v6959, %v7151
        %v7153 = vpop.f32.mrb[0].mxu0
        %v7154 = vadd.f32 %v6961, %v7153
        %v7155 = vpop.f32.mrb[0].mxu0
        %v7156 = vadd.f32 %v6963, %v7155
        %7157 = vmatprep.mubr.bf16.mxu0 %v3865
        %7158 = vmatmul.mubr.bf16.gmra.mrb[0].mxu0 %v3864
        %v7159 = vpop.f32.mrb[0].mxu0
        %v7160 = vadd.f32 %v6967, %v7159
        %v7161 = vpop.f32.mrb[0].mxu0
        %v7162 = vadd.f32 %v6969, %v7161
        %v7163 = vpop.f32.mrb[0].mxu0
        %v7164 = vadd.f32 %v6971, %v7163
        %v7165 = vpop.f32.mrb[0].mxu0
        %v7166 = vadd.f32 %v6973, %v7165
        %7167 = vmatprep.mubr.bf16.mxu0 %v3873
        %7168 = vmatmul.mubr.bf16.gmra.mrb[0].mxu0 %v3872
        %v7169 = vpop.f32.mrb[0].mxu0
        %v7170 = vadd.f32 %v6977, %v7169
        %v7171 = vpop.f32.mrb[0].mxu0
        %v7172 = vadd.f32 %v6979, %v7171
        %v7173 = vpop.f32.mrb[0].mxu0
        %v7174 = vadd.f32 %v6981, %v7173
        %v7175 = vpop.f32.mrb[0].mxu0
        %v7176 = vadd.f32 %v6983, %v7175
        %7177 = vmatprep.mubr.bf16.mxu0 %v3881
        %7178 = vmatmul.mubr.bf16.gmra.mrb[0].mxu0 %v3880
        %v7179 = vpop.f32.mrb[0].mxu0
        %v7180 = vadd.f32 %v6987, %v7179
        %v7181 = vpop.f32.mrb[0].mxu0
        %v7182 = vadd.f32 %v6989, %v7181
        %v7183 = vpop.f32.mrb[0].mxu0
        %v7184 = vadd.f32 %v6991, %v7183
        %v7185 = vpop.f32.mrb[0].mxu0
        %v7186 = vadd.f32 %v6993, %v7185
        %7187 = vmatprep.mubr.bf16.mxu0 %v3889
        %7188 = vmatmul.mubr.bf16.gmra.mrb[0].mxu0 %v3888
        %v7189 = vpop.f32.mrb[0].mxu0
        %v7190 = vadd.f32 %v6997, %v7189
        %v7191 = vpop.f32.mrb[0].mxu0
        %v7192 = vadd.f32 %v6999, %v7191
        %v7193 = vpop.f32.mrb[0].mxu0
        %v7194 = vadd.f32 %v7001, %v7193
        %v7195 = vpop.f32.mrb[0].mxu0
        %v7196 = vadd.f32 %v7003, %v7195
        %7197 = vmatprep.mubr.bf16.mxu0 %v3897
        %7198 = vmatmul.mubr.bf16.gmra.mrb[0].mxu0 %v3896
        %v7199 = vpop.f32.mrb[0].mxu0
        %v7200 = vadd.f32 %v7007, %v7199
        %v7201 = vpop.f32.mrb[0].mxu0
        %v7202 = vadd.f32 %v7009, %v7201
        %v7203 = vpop.f32.mrb[0].mxu0
        %v7204 = vadd.f32 %v7011, %v7203
        %v7205 = vpop.f32.mrb[0].mxu0
        %v7206 = vadd.f32 %v7013, %v7205
        %7207 = vmatprep.mubr.bf16.mxu0 %v3905
        %7208 = vmatmul.mubr.bf16.gmra.mrb[0].mxu0 %v3904
        %v7209 = vpop.f32.mrb[0].mxu0
        %v7210 = vadd.f32 %v7017, %v7209
        %v7211 = vpop.f32.mrb[0].mxu0
        %v7212 = vadd.f32 %v7019, %v7211
        %v7213 = vpop.f32.mrb[0].mxu0
        %v7214 = vadd.f32 %v7021, %v7213
        %v7215 = vpop.f32.mrb[0].mxu0
        %v7216 = vadd.f32 %v7023, %v7215
        %7217 = vmatprep.mubr.bf16.mxu0 %v3913
        %7218 = vmatmul.mubr.bf16.gmra.mrb[0].mxu0 %v3912
        %v7219 = vpop.f32.mrb[0].mxu0
        %v7220 = vadd.f32 %v7027, %v7219
        %v7221 = vpop.f32.mrb[0].mxu0
        %v7222 = vadd.f32 %v7029, %v7221
        %v7223 = vpop.f32.mrb[0].mxu0
        %v7224 = vadd.f32 %v7031, %v7223
        %v7225 = vpop.f32.mrb[0].mxu0
        %v7226 = vadd.f32 %v7033, %v7225
        %7227 = vmatprep.mubr.bf16.mxu0 %v3921
        %7228 = vmatmul.mubr.bf16.gmra.mrb[0].mxu0 %v3920
        %v7229 = vpop.f32.mrb[0].mxu0
        %v7230 = vadd.f32 %v7037, %v7229
        %v7231 = vpop.f32.mrb[0].mxu0
        %v7232 = vadd.f32 %v7039, %v7231
        %v7233 = vpop.f32.mrb[0].mxu0
        %v7234 = vadd.f32 %v7041, %v7233
        %v7235 = vpop.f32.mrb[0].mxu0
        %v7236 = vadd.f32 %v7043, %v7235
        %7237 = vdwg.mxu0
        %v7238 = vtanh.pop %v6694
        %v7239 = vtanh.pop %v6696
        %v7240 = vtanh.pop %v7080
        %v7241 = vtanh.pop %v7082
        %v7242 = vtanh.pop %v6698
        %v7243 = vtanh.pop %v6700
        %v7244 = vtanh.pop %v7084
        %v7245 = vtanh.pop %v7086
        %v7246 = vtanh.pop %v6704
        %v7247 = vtanh.pop %v6706
        %v7248 = vtanh.pop %v7090
        %v7249 = vtanh.pop %v7092
        %v7250 = vtanh.pop %v6708
        %v7251 = vtanh.pop %v6710
        %v7252 = vtanh.pop %v7094
        %v7253 = vtanh.pop %v7096
        %v7254 = vtanh.pop %v6714
        %v7255 = vtanh.pop %v6716
        %v7256 = vtanh.pop %v7100
        %v7257 = vtanh.pop %v7102
        %v7258 = vtanh.pop %v6718
        %v7259 = vtanh.pop %v6720
        %v7260 = vtanh.pop %v7104
        %v7261 = vtanh.pop %v7106
        %v7262 = vtanh.pop %v6724
        %v7263 = vtanh.pop %v6726
        %v7264 = vtanh.pop %v7110
        %v7265 = vtanh.pop %v7112
        %v7266 = vtanh.pop %v6728
        %v7267 = vtanh.pop %v6730
        %v7268 = vtanh.pop %v7114
        %v7269 = vtanh.pop %v7116
        %v7270 = vtanh.pop %v6734
        %v7271 = vtanh.pop %v6736
        %v7272 = vtanh.pop %v7120
        %v7273 = vtanh.pop %v7122
        %v7274 = vtanh.pop %v6738
        %v7275 = vtanh.pop %v6740
        %v7276 = vtanh.pop %v7124
        %v7277 = vtanh.pop %v7126
        %v7278 = vtanh.pop %v6744
        %v7279 = vtanh.pop %v6746
        %v7280 = vtanh.pop %v7130
        %v7281 = vtanh.pop %v7132
        %v7282 = vtanh.pop %v6748
        %v7283 = vtanh.pop %v6750
        %v7284 = vtanh.pop %v7134
        %v7285 = vtanh.pop %v7136
        %v7286 = vtanh.pop %v6754
        %v7287 = vtanh.pop %v6756
        %v7288 = vtanh.pop %v7140
        %v7289 = vtanh.pop %v7142
        %v7290 = vtanh.pop %v6758
        %v7291 = vtanh.pop %v6760
        %v7292 = vtanh.pop %v7144
        %v7293 = vtanh.pop %v7146
        %v7294 = vtanh.pop %v6764
        %v7295 = vtanh.pop %v6766
        %v7296 = vtanh.pop %v7150
        %v7297 = vtanh.pop %v7152
        %v7298 = vtanh.pop %v6768
        %v7299 = vtanh.pop %v6770
        %v7300 = vtanh.pop %v7154
        %v7301 = vtanh.pop %v7156
        %v7302 = vtanh.pop %v6774
        %v7303 = vtanh.pop %v6776
        %v7304 = vtanh.pop %v7160
        %v7305 = vtanh.pop %v7162
        %v7306 = vtanh.pop %v6778
        %v7307 = vtanh.pop %v6780
        %v7308 = vtanh.pop %v7164
        %v7309 = vtanh.pop %v7166
        %v7310 = vtanh.pop %v6784
        %v7311 = vtanh.pop %v6786
        %v7312 = vtanh.pop %v7170
        %v7313 = vtanh.pop %v7172
        %v7314 = vtanh.pop %v6788
        %v7315 = vtanh.pop %v6790
        %v7316 = vtanh.pop %v7174
        %v7317 = vtanh.pop %v7176
        %v7318 = vtanh.pop %v6794
        %v7319 = vtanh.pop %v6796
        %v7320 = vtanh.pop %v7180
        %v7321 = vtanh.pop %v7182
        %v7322 = vtanh.pop %v6798
        %v7323 = vtanh.pop %v6800
        %v7324 = vtanh.pop %v7184
        %v7325 = vtanh.pop %v7186
        %v7326 = vtanh.pop %v6804
        %v7327 = vtanh.pop %v6806
        %v7328 = vtanh.pop %v7190
        %v7329 = vtanh.pop %v7192
        %v7330 = vtanh.pop %v6808
        %v7331 = vtanh.pop %v6810
        %v7332 = vtanh.pop %v7194
        %v7333 = vtanh.pop %v7196
        %v7334 = vtanh.pop %v6814
        %v7335 = vtanh.pop %v6816
        %v7336 = vtanh.pop %v7200
        %v7337 = vtanh.pop %v7202
        %v7338 = vtanh.pop %v6818
        %v7339 = vtanh.pop %v6820
        %v7340 = vtanh.pop %v7204
        %v7341 = vtanh.pop %v7206
        %v7342 = vtanh.pop %v6824
        %v7343 = vtanh.pop %v6826
        %v7344 = vtanh.pop %v7210
        %v7345 = vtanh.pop %v7212
        %v7346 = vtanh.pop %v6828
        %v7347 = vtanh.pop %v6830
        %v7348 = vtanh.pop %v7214
        %v7349 = vtanh.pop %v7216
        %v7350 = vtanh.pop %v6834
        %v7351 = vtanh.pop %v6836
        %v7352 = vtanh.pop %v7220
        %v7353 = vtanh.pop %v7222
        %v7354 = vtanh.pop %v6838
        %v7355 = vtanh.pop %v6840
        %v7356 = vtanh.pop %v7224
        %v7357 = vtanh.pop %v7226
        %v7358 = vtanh.pop %v6844
        %v7359 = vtanh.pop %v6846
        %v7360 = vtanh.pop %v7230
        %v7361 = vtanh.pop %v7232
        %v7362 = vtanh.pop %v6848
        %v7363 = vtanh.pop %v6850
        %v7364 = vtanh.pop %v7234
        %v7365 = vtanh.pop %v7236
        %v7366 = vpack.c.bf16 %v7242, %v7238
        %v7367 = vpack.c.bf16 %v7243, %v7239
        %v7368 = vpack.c.bf16 %v7244, %v7240
        %v7369 = vpack.c.bf16 %v7245, %v7241
        %v7370 = vpack.c.bf16 %v7250, %v7246
        %v7371 = vpack.c.bf16 %v7251, %v7247
        %v7372 = vpack.c.bf16 %v7252, %v7248
        %v7373 = vpack.c.bf16 %v7253, %v7249
        %v7374 = vpack.c.bf16 %v7258, %v7254
        %v7375 = vpack.c.bf16 %v7259, %v7255
        %v7376 = vpack.c.bf16 %v7260, %v7256
        %v7377 = vpack.c.bf16 %v7261, %v7257
        %v7378 = vpack.c.bf16 %v7266, %v7262
        %v7379 = vpack.c.bf16 %v7267, %v7263
        %v7380 = vpack.c.bf16 %v7268, %v7264
        %v7381 = vpack.c.bf16 %v7269, %v7265
        %v7382 = vpack.c.bf16 %v7274, %v7270
        %v7383 = vpack.c.bf16 %v7275, %v7271
        %v7384 = vpack.c.bf16 %v7276, %v7272
        %v7385 = vpack.c.bf16 %v7277, %v7273
        %v7386 = vpack.c.bf16 %v7282, %v7278
        %v7387 = vpack.c.bf16 %v7283, %v7279
        %v7388 = vpack.c.bf16 %v7284, %v7280
        %v7389 = vpack.c.bf16 %v7285, %v7281
        %v7390 = vpack.c.bf16 %v7290, %v7286
        %v7391 = vpack.c.bf16 %v7291, %v7287
        %v7392 = vpack.c.bf16 %v7292, %v7288
        %v7393 = vpack.c.bf16 %v7293, %v7289
        %v7394 = vpack.c.bf16 %v7298, %v7294
        %v7395 = vpack.c.bf16 %v7299, %v7295
        %v7396 = vpack.c.bf16 %v7300, %v7296
        %v7397 = vpack.c.bf16 %v7301, %v7297
        %v7398 = vpack.c.bf16 %v7306, %v7302
        %v7399 = vpack.c.bf16 %v7307, %v7303
        %v7400 = vpack.c.bf16 %v7308, %v7304
        %v7401 = vpack.c.bf16 %v7309, %v7305
        %v7402 = vpack.c.bf16 %v7314, %v7310
        %v7403 = vpack.c.bf16 %v7315, %v7311
        %v7404 = vpack.c.bf16 %v7316, %v7312
        %v7405 = vpack.c.bf16 %v7317, %v7313
        %v7406 = vpack.c.bf16 %v7322, %v7318
        %v7407 = vpack.c.bf16 %v7323, %v7319
        %v7408 = vpack.c.bf16 %v7324, %v7320
        %v7409 = vpack.c.bf16 %v7325, %v7321
        %v7410 = vpack.c.bf16 %v7330, %v7326
        %v7411 = vpack.c.bf16 %v7331, %v7327
        %v7412 = vpack.c.bf16 %v7332, %v7328
        %v7413 = vpack.c.bf16 %v7333, %v7329
        %v7414 = vpack.c.bf16 %v7338, %v7334
        %v7415 = vpack.c.bf16 %v7339, %v7335
        %v7416 = vpack.c.bf16 %v7340, %v7336
        %v7417 = vpack.c.bf16 %v7341, %v7337
        %v7418 = vpack.c.bf16 %v7346, %v7342
        %v7419 = vpack.c.bf16 %v7347, %v7343
        %v7420 = vpack.c.bf16 %v7348, %v7344
        %v7421 = vpack.c.bf16 %v7349, %v7345
        %v7422 = vpack.c.bf16 %v7354, %v7350
        %v7423 = vpack.c.bf16 %v7355, %v7351
        %v7424 = vpack.c.bf16 %v7356, %v7352
        %v7425 = vpack.c.bf16 %v7357, %v7353
        %v7426 = vpack.c.bf16 %v7362, %v7358
        %v7427 = vpack.c.bf16 %v7363, %v7359
        %v7428 = vpack.c.bf16 %v7364, %v7360
        %v7429 = vpack.c.bf16 %v7365, %v7361
        %v7430 = vld [vmem:[%s7] sm:$0xf]
        %v7431 = vld [vmem:[%s7 + $0x4] sm:$0xf]
        %v7432 = vld [vmem:[%s7 + $0x8] sm:$0xf]
        %v7433 = vld [vmem:[%s7 + $0xc] sm:$0xf]
        %v7434 = vld [vmem:[%s7 + $0x10] sm:$0xf]
        %v7435 = vld [vmem:[%s7 + $0x14] sm:$0xf]
        %v7436 = vld [vmem:[%s7 + $0x18] sm:$0xf]
        %v7437 = vld [vmem:[%s7 + $0x1c] sm:$0xf]
        %v7438 = vld [vmem:[%s7 + $0x20] sm:$0xf]
        %v7439 = vld [vmem:[%s7 + $0x24] sm:$0xf]
        %v7440 = vld [vmem:[%s7 + $0x28] sm:$0xf]
        %v7441 = vld [vmem:[%s7 + $0x2c] sm:$0xf]
        %v7442 = vld [vmem:[%s7 + $0x30] sm:$0xf]
        %v7443 = vld [vmem:[%s7 + $0x34] sm:$0xf]
        %v7444 = vld [vmem:[%s7 + $0x38] sm:$0xf]
        %v7445 = vld [vmem:[%s7 + $0x3c] sm:$0xf]
        %v7446 = vld [vmem:[%s7 + $0x40] sm:$0xf]
        %v7447 = vld [vmem:[%s7 + $0x44] sm:$0xf]
        %v7448 = vld [vmem:[%s7 + $0x48] sm:$0xf]
        %v7449 = vld [vmem:[%s7 + $0x4c] sm:$0xf]
        %v7450 = vld [vmem:[%s7 + $0x50] sm:$0xf]
        %v7451 = vld [vmem:[%s7 + $0x54] sm:$0xf]
        %v7452 = vld [vmem:[%s7 + $0x58] sm:$0xf]
        %v7453 = vld [vmem:[%s7 + $0x5c] sm:$0xf]
        %v7454 = vld [vmem:[%s7 + $0x60] sm:$0xf]
        %v7455 = vld [vmem:[%s7 + $0x64] sm:$0xf]
        %v7456 = vld [vmem:[%s7 + $0x68] sm:$0xf]
        %v7457 = vld [vmem:[%s7 + $0x6c] sm:$0xf]
        %v7458 = vld [vmem:[%s7 + $0x70] sm:$0xf]
        %v7459 = vld [vmem:[%s7 + $0x74] sm:$0xf]
        %v7460 = vld [vmem:[%s7 + $0x78] sm:$0xf]
        %v7461 = vld [vmem:[%s7 + $0x7c] sm:$0xf]
        %v7462 = vld [vmem:[%s7 + $0x80] sm:$0xf]
        %v7463 = vld [vmem:[%s7 + $0x84] sm:$0xf]
        %v7464 = vld [vmem:[%s7 + $0x88] sm:$0xf]
        %v7465 = vld [vmem:[%s7 + $0x8c] sm:$0xf]
        %v7466 = vld [vmem:[%s7 + $0x90] sm:$0xf]
        %v7467 = vld [vmem:[%s7 + $0x94] sm:$0xf]
        %v7468 = vld [vmem:[%s7 + $0x98] sm:$0xf]
        %v7469 = vld [vmem:[%s7 + $0x9c] sm:$0xf]
        %v7470 = vld [vmem:[%s7 + $0xa0] sm:$0xf]
        %v7471 = vld [vmem:[%s7 + $0xa4] sm:$0xf]
        %v7472 = vld [vmem:[%s7 + $0xa8] sm:$0xf]
        %v7473 = vld [vmem:[%s7 + $0xac] sm:$0xf]
        %v7474 = vld [vmem:[%s7 + $0xb0] sm:$0xf]
        %v7475 = vld [vmem:[%s7 + $0xb4] sm:$0xf]
        %v7476 = vld [vmem:[%s7 + $0xb8] sm:$0xf]
        %v7477 = vld [vmem:[%s7 + $0xbc] sm:$0xf]
        %v7478 = vld [vmem:[%s7 + $0xc0] sm:$0xf]
        %v7479 = vld [vmem:[%s7 + $0xc4] sm:$0xf]
        %v7480 = vld [vmem:[%s7 + $0xc8] sm:$0xf]
        %v7481 = vld [vmem:[%s7 + $0xcc] sm:$0xf]
        %v7482 = vld [vmem:[%s7 + $0xd0] sm:$0xf]
        %v7483 = vld [vmem:[%s7 + $0xd4] sm:$0xf]
        %v7484 = vld [vmem:[%s7 + $0xd8] sm:$0xf]
        %v7485 = vld [vmem:[%s7 + $0xdc] sm:$0xf]
        %v7486 = vld [vmem:[%s7 + $0xe0] sm:$0xf]
        %v7487 = vld [vmem:[%s7 + $0xe4] sm:$0xf]
        %v7488 = vld [vmem:[%s7 + $0xe8] sm:$0xf]
        %v7489 = vld [vmem:[%s7 + $0xec] sm:$0xf]
        %v7490 = vld [vmem:[%s7 + $0xf0] sm:$0xf]
        %v7491 = vld [vmem:[%s7 + $0xf4] sm:$0xf]
        %v7492 = vld [vmem:[%s7 + $0xf8] sm:$0xf]
        %v7493 = vld [vmem:[%s7 + $0xfc] sm:$0xf]
        %v7494 = vld [vmem:[%s7 + $0x100] sm:$0xf]
        %v7495 = vld [vmem:[%s7 + $0x104] sm:$0xf]
        %v7496 = vld [vmem:[%s7 + $0x108] sm:$0xf]
        %v7497 = vld [vmem:[%s7 + $0x10c] sm:$0xf]
        %v7498 = vld [vmem:[%s7 + $0x110] sm:$0xf]
        %v7499 = vld [vmem:[%s7 + $0x114] sm:$0xf]
        %v7500 = vld [vmem:[%s7 + $0x118] sm:$0xf]
        %v7501 = vld [vmem:[%s7 + $0x11c] sm:$0xf]
        %v7502 = vld [vmem:[%s7 + $0x120] sm:$0xf]
        %v7503 = vld [vmem:[%s7 + $0x124] sm:$0xf]
        %v7504 = vld [vmem:[%s7 + $0x128] sm:$0xf]
        %v7505 = vld [vmem:[%s7 + $0x12c] sm:$0xf]
        %v7506 = vld [vmem:[%s7 + $0x130] sm:$0xf]
        %v7507 = vld [vmem:[%s7 + $0x134] sm:$0xf]
        %v7508 = vld [vmem:[%s7 + $0x138] sm:$0xf]
        %v7509 = vld [vmem:[%s7 + $0x13c] sm:$0xf]
        %v7510 = vld [vmem:[%s7 + $0x140] sm:$0xf]
        %v7511 = vld [vmem:[%s7 + $0x144] sm:$0xf]
        %v7512 = vld [vmem:[%s7 + $0x148] sm:$0xf]
        %v7513 = vld [vmem:[%s7 + $0x14c] sm:$0xf]
        %v7514 = vld [vmem:[%s7 + $0x150] sm:$0xf]
        %v7515 = vld [vmem:[%s7 + $0x154] sm:$0xf]
        %v7516 = vld [vmem:[%s7 + $0x158] sm:$0xf]
        %v7517 = vld [vmem:[%s7 + $0x15c] sm:$0xf]
        %v7518 = vld [vmem:[%s7 + $0x160] sm:$0xf]
        %v7519 = vld [vmem:[%s7 + $0x164] sm:$0xf]
        %v7520 = vld [vmem:[%s7 + $0x168] sm:$0xf]
        %v7521 = vld [vmem:[%s7 + $0x16c] sm:$0xf]
        %v7522 = vld [vmem:[%s7 + $0x170] sm:$0xf]
        %v7523 = vld [vmem:[%s7 + $0x174] sm:$0xf]
        %v7524 = vld [vmem:[%s7 + $0x178] sm:$0xf]
        %v7525 = vld [vmem:[%s7 + $0x17c] sm:$0xf]
        %v7526 = vld [vmem:[%s7 + $0x180] sm:$0xf]
        %v7527 = vld [vmem:[%s7 + $0x184] sm:$0xf]
        %v7528 = vld [vmem:[%s7 + $0x188] sm:$0xf]
        %v7529 = vld [vmem:[%s7 + $0x18c] sm:$0xf]
        %v7530 = vld [vmem:[%s7 + $0x190] sm:$0xf]
        %v7531 = vld [vmem:[%s7 + $0x194] sm:$0xf]
        %v7532 = vld [vmem:[%s7 + $0x198] sm:$0xf]
        %v7533 = vld [vmem:[%s7 + $0x19c] sm:$0xf]
        %v7534 = vld [vmem:[%s7 + $0x1a0] sm:$0xf]
        %v7535 = vld [vmem:[%s7 + $0x1a4] sm:$0xf]
        %v7536 = vld [vmem:[%s7 + $0x1a8] sm:$0xf]
        %v7537 = vld [vmem:[%s7 + $0x1ac] sm:$0xf]
        %v7538 = vld [vmem:[%s7 + $0x1b0] sm:$0xf]
        %v7539 = vld [vmem:[%s7 + $0x1b4] sm:$0xf]
        %v7540 = vld [vmem:[%s7 + $0x1b8] sm:$0xf]
        %v7541 = vld [vmem:[%s7 + $0x1bc] sm:$0xf]
        %v7542 = vld [vmem:[%s7 + $0x1c0] sm:$0xf]
        %v7543 = vld [vmem:[%s7 + $0x1c4] sm:$0xf]
        %v7544 = vld [vmem:[%s7 + $0x1c8] sm:$0xf]
        %v7545 = vld [vmem:[%s7 + $0x1cc] sm:$0xf]
        %v7546 = vld [vmem:[%s7 + $0x1d0] sm:$0xf]
        %v7547 = vld [vmem:[%s7 + $0x1d4] sm:$0xf]
        %v7548 = vld [vmem:[%s7 + $0x1d8] sm:$0xf]
        %v7549 = vld [vmem:[%s7 + $0x1dc] sm:$0xf]
        %v7550 = vld [vmem:[%s7 + $0x1e0] sm:$0xf]
        %v7551 = vld [vmem:[%s7 + $0x1e4] sm:$0xf]
        %v7552 = vld [vmem:[%s7 + $0x1e8] sm:$0xf]
        %v7553 = vld [vmem:[%s7 + $0x1ec] sm:$0xf]
        %v7554 = vld [vmem:[%s7 + $0x1f0] sm:$0xf]
        %v7555 = vld [vmem:[%s7 + $0x1f4] sm:$0xf]
        %v7556 = vld [vmem:[%s7 + $0x1f8] sm:$0xf]
        %v7557 = vld [vmem:[%s7 + $0x1fc] sm:$0xf]
        %v7622 = vunpack.c.l.b16 %v7494
        %v7623 = vunpack.c.l.b16 %v7495
        %v7624 = vunpack.c.l.b16 %v7496
        %v7625 = vunpack.c.l.b16 %v7497
        %v7626 = vunpack.c.l.b16 %v7498
        %v7627 = vunpack.c.l.b16 %v7499
        %v7628 = vunpack.c.l.b16 %v7500
        %v7629 = vunpack.c.l.b16 %v7501
        %v7630 = vunpack.c.l.b16 %v7502
        %v7631 = vunpack.c.l.b16 %v7503
        %v7632 = vunpack.c.l.b16 %v7504
        %v7633 = vunpack.c.l.b16 %v7505
        %v7634 = vunpack.c.l.b16 %v7506
        %v7635 = vunpack.c.l.b16 %v7507
        %v7636 = vunpack.c.l.b16 %v7508
        %v7637 = vunpack.c.l.b16 %v7509
        %v7638 = vunpack.c.l.b16 %v7510
        %v7639 = vunpack.c.l.b16 %v7511
        %v7640 = vunpack.c.l.b16 %v7512
        %v7641 = vunpack.c.l.b16 %v7513
        %v7642 = vunpack.c.l.b16 %v7514
        %v7643 = vunpack.c.l.b16 %v7515
        %v7644 = vunpack.c.l.b16 %v7516
        %v7645 = vunpack.c.l.b16 %v7517
        %v7646 = vunpack.c.l.b16 %v7518
        %v7647 = vunpack.c.l.b16 %v7519
        %v7648 = vunpack.c.l.b16 %v7520
        %v7649 = vunpack.c.l.b16 %v7521
        %v7650 = vunpack.c.l.b16 %v7522
        %v7651 = vunpack.c.l.b16 %v7523
        %v7652 = vunpack.c.l.b16 %v7524
        %v7653 = vunpack.c.l.b16 %v7525
        %v7654 = vunpack.c.l.b16 %v7526
        %v7655 = vunpack.c.l.b16 %v7527
        %v7656 = vunpack.c.l.b16 %v7528
        %v7657 = vunpack.c.l.b16 %v7529
        %v7658 = vunpack.c.l.b16 %v7530
        %v7659 = vunpack.c.l.b16 %v7531
        %v7660 = vunpack.c.l.b16 %v7532
        %v7661 = vunpack.c.l.b16 %v7533
        %v7662 = vunpack.c.l.b16 %v7534
        %v7663 = vunpack.c.l.b16 %v7535
        %v7664 = vunpack.c.l.b16 %v7536
        %v7665 = vunpack.c.l.b16 %v7537
        %v7666 = vunpack.c.l.b16 %v7538
        %v7667 = vunpack.c.l.b16 %v7539
        %v7668 = vunpack.c.l.b16 %v7540
        %v7669 = vunpack.c.l.b16 %v7541
        %v7670 = vunpack.c.l.b16 %v7542
        %v7671 = vunpack.c.l.b16 %v7543
        %v7672 = vunpack.c.l.b16 %v7544
        %v7673 = vunpack.c.l.b16 %v7545
        %v7674 = vunpack.c.l.b16 %v7546
        %v7675 = vunpack.c.l.b16 %v7547
        %v7676 = vunpack.c.l.b16 %v7548
        %v7677 = vunpack.c.l.b16 %v7549
        %v7678 = vunpack.c.l.b16 %v7550
        %v7679 = vunpack.c.l.b16 %v7551
        %v7680 = vunpack.c.l.b16 %v7552
        %v7681 = vunpack.c.l.b16 %v7553
        %v7682 = vunpack.c.l.b16 %v7554
        %v7683 = vunpack.c.l.b16 %v7555
        %v7684 = vunpack.c.l.b16 %v7556
        %v7685 = vunpack.c.l.b16 %v7557
        %v7686 = vpack.c.b16 %v7623, %v7622
        %v7687 = vpack.c.b16 %v7625, %v7624
        %v7688 = vpack.c.b16 %v7627, %v7626
        %v7689 = vpack.c.b16 %v7629, %v7628
        %v7690 = vpack.c.b16 %v7631, %v7630
        %v7691 = vpack.c.b16 %v7633, %v7632
        %v7692 = vpack.c.b16 %v7635, %v7634
        %v7693 = vpack.c.b16 %v7637, %v7636
        %v7694 = vpack.c.b16 %v7639, %v7638
        %v7695 = vpack.c.b16 %v7641, %v7640
        %v7696 = vpack.c.b16 %v7643, %v7642
        %v7697 = vpack.c.b16 %v7645, %v7644
        %v7698 = vpack.c.b16 %v7647, %v7646
        %v7699 = vpack.c.b16 %v7649, %v7648
        %v7700 = vpack.c.b16 %v7651, %v7650
        %v7701 = vpack.c.b16 %v7653, %v7652
        %v7702 = vpack.c.b16 %v7655, %v7654
        %v7703 = vpack.c.b16 %v7657, %v7656
        %v7704 = vpack.c.b16 %v7659, %v7658
        %v7705 = vpack.c.b16 %v7661, %v7660
        %v7706 = vpack.c.b16 %v7663, %v7662
        %v7707 = vpack.c.b16 %v7665, %v7664
        %v7708 = vpack.c.b16 %v7667, %v7666
        %v7709 = vpack.c.b16 %v7669, %v7668
        %v7710 = vpack.c.b16 %v7671, %v7670
        %v7711 = vpack.c.b16 %v7673, %v7672
        %v7712 = vpack.c.b16 %v7675, %v7674
        %v7713 = vpack.c.b16 %v7677, %v7676
        %v7714 = vpack.c.b16 %v7679, %v7678
        %v7715 = vpack.c.b16 %v7681, %v7680
        %v7716 = vpack.c.b16 %v7683, %v7682
        %v7717 = vpack.c.b16 %v7685, %v7684
        %7750 = vmatprep.subr.bf16.mxu0 0
        %7751 = vmatpush1.bf16.msra.mxu0 %v7686
        %7752 = vmatprep.subr.bf16.mxu0 0
        %7753 = vmatpush1.bf16.msra.mxu0 %v7687
        %7754 = vmatprep.subr.bf16.mxu0 0
        %7755 = vmatpush1.bf16.msra.mxu0 %v7688
        %7756 = vmatprep.subr.bf16.mxu0 0
        %7757 = vmatpush1.bf16.msra.mxu0 %v7689
        %7758 = vmatprep.subr.bf16.mxu0 0
        %7759 = vmatpush1.bf16.msra.mxu0 %v7690
        %7760 = vmatprep.subr.bf16.mxu0 0
        %7761 = vmatpush1.bf16.msra.mxu0 %v7691
        %7762 = vmatprep.subr.bf16.mxu0 0
        %7763 = vmatpush1.bf16.msra.mxu0 %v7692
        %7764 = vmatprep.subr.bf16.mxu0 0
        %7765 = vmatpush1.bf16.msra.mxu0 %v7693
        %7766 = vmatprep.subr.bf16.mxu0 0
        %7767 = vmatpush1.bf16.msra.mxu0 %v7694
        %7768 = vmatprep.subr.bf16.mxu0 0
        %7769 = vmatpush1.bf16.msra.mxu0 %v7695
        %7770 = vmatprep.subr.bf16.mxu0 0
        %7771 = vmatpush1.bf16.msra.mxu0 %v7696
        %7772 = vmatprep.subr.bf16.mxu0 0
        %7773 = vmatpush1.bf16.msra.mxu0 %v7697
        %7774 = vmatprep.subr.bf16.mxu0 0
        %7775 = vmatpush1.bf16.msra.mxu0 %v7698
        %7776 = vmatprep.subr.bf16.mxu0 0
        %7777 = vmatpush1.bf16.msra.mxu0 %v7699
        %7778 = vmatprep.subr.bf16.mxu0 0
        %7779 = vmatpush1.bf16.msra.mxu0 %v7700
        %7780 = vmatprep.subr.bf16.mxu0 0
        %7781 = vmatpush1.bf16.msra.mxu0 %v7701
        %7782 = vmatprep.mubr.bf16.mxu0 %v7367
        %7783 = vmatmul.mubr.bf16.gmra.mrb[0].mxu0 %v7366
        %v7784 = vpop.f32.mrb[0].mxu0
        %v7785 = vadd.f32 0.0, %v7784
        %v7786 = vpop.f32.mrb[0].mxu0
        %v7787 = vpop.f32.mrb[0].mxu0
        %v7788 = vadd.f32 0.0, %v7787
        %v7789 = vpop.f32.mrb[0].mxu0
        %7790 = vmatprep.mubr.bf16.mxu0 %v7371
        %7791 = vmatmul.mubr.bf16.gmra.mrb[0].mxu0 %v7370
        %v7792 = vpop.f32.mrb[0].mxu0
        %v7793 = vadd.f32 0.0, %v7792
        %v7794 = vpop.f32.mrb[0].mxu0
        %v7795 = vpop.f32.mrb[0].mxu0
        %v7796 = vadd.f32 0.0, %v7795
        %v7797 = vpop.f32.mrb[0].mxu0
        %7798 = vmatprep.mubr.bf16.mxu0 %v7375
        %7799 = vmatmul.mubr.bf16.gmra.mrb[0].mxu0 %v7374
        %v7800 = vpop.f32.mrb[0].mxu0
        %v7801 = vadd.f32 0.0, %v7800
        %v7802 = vpop.f32.mrb[0].mxu0
        %v7803 = vpop.f32.mrb[0].mxu0
        %v7804 = vadd.f32 0.0, %v7803
        %v7805 = vpop.f32.mrb[0].mxu0
        %7806 = vmatprep.mubr.bf16.mxu0 %v7379
        %7807 = vmatmul.mubr.bf16.gmra.mrb[0].mxu0 %v7378
        %v7808 = vpop.f32.mrb[0].mxu0
        %v7809 = vadd.f32 0.0, %v7808
        %v7810 = vpop.f32.mrb[0].mxu0
        %v7811 = vpop.f32.mrb[0].mxu0
        %v7812 = vadd.f32 0.0, %v7811
        %v7813 = vpop.f32.mrb[0].mxu0
        %7814 = vmatprep.mubr.bf16.mxu0 %v7383
        %7815 = vmatmul.mubr.bf16.gmra.mrb[0].mxu0 %v7382
        %v7816 = vpop.f32.mrb[0].mxu0
        %v7817 = vadd.f32 0.0, %v7816
        %v7818 = vpop.f32.mrb[0].mxu0
        %v7819 = vpop.f32.mrb[0].mxu0
        %v7820 = vadd.f32 0.0, %v7819
        %v7821 = vpop.f32.mrb[0].mxu0
        %7822 = vmatprep.mubr.bf16.mxu0 %v7387
        %7823 = vmatmul.mubr.bf16.gmra.mrb[0].mxu0 %v7386
        %v7824 = vpop.f32.mrb[0].mxu0
        %v7825 = vadd.f32 0.0, %v7824
        %v7826 = vpop.f32.mrb[0].mxu0
        %v7827 = vpop.f32.mrb[0].mxu0
        %v7828 = vadd.f32 0.0, %v7827
        %v7829 = vpop.f32.mrb[0].mxu0
        %7830 = vmatprep.mubr.bf16.mxu0 %v7391
        %7831 = vmatmul.mubr.bf16.gmra.mrb[0].mxu0 %v7390
        %v7832 = vpop.f32.mrb[0].mxu0
        %v7833 = vadd.f32 0.0, %v7832
        %v7834 = vpop.f32.mrb[0].mxu0
        %v7835 = vpop.f32.mrb[0].mxu0
        %v7836 = vadd.f32 0.0, %v7835
        %v7837 = vpop.f32.mrb[0].mxu0
        %7838 = vmatprep.mubr.bf16.mxu0 %v7395
        %7839 = vmatmul.mubr.bf16.gmra.mrb[0].mxu0 %v7394
        %v7840 = vpop.f32.mrb[0].mxu0
        %v7841 = vadd.f32 0.0, %v7840
        %v7842 = vpop.f32.mrb[0].mxu0
        %v7843 = vpop.f32.mrb[0].mxu0
        %v7844 = vadd.f32 0.0, %v7843
        %v7845 = vpop.f32.mrb[0].mxu0
        %7846 = vmatprep.mubr.bf16.mxu0 %v7399
        %7847 = vmatmul.mubr.bf16.gmra.mrb[0].mxu0 %v7398
        %v7848 = vpop.f32.mrb[0].mxu0
        %v7849 = vadd.f32 0.0, %v7848
        %v7850 = vpop.f32.mrb[0].mxu0
        %v7851 = vpop.f32.mrb[0].mxu0
        %v7852 = vadd.f32 0.0, %v7851
        %v7853 = vpop.f32.mrb[0].mxu0
        %7854 = vmatprep.mubr.bf16.mxu0 %v7403
        %7855 = vmatmul.mubr.bf16.gmra.mrb[0].mxu0 %v7402
        %v7856 = vpop.f32.mrb[0].mxu0
        %v7857 = vadd.f32 0.0, %v7856
        %v7858 = vpop.f32.mrb[0].mxu0
        %v7859 = vpop.f32.mrb[0].mxu0
        %v7860 = vadd.f32 0.0, %v7859
        %v7861 = vpop.f32.mrb[0].mxu0
        %7862 = vmatprep.mubr.bf16.mxu0 %v7407
        %7863 = vmatmul.mubr.bf16.gmra.mrb[0].mxu0 %v7406
        %v7864 = vpop.f32.mrb[0].mxu0
        %v7865 = vadd.f32 0.0, %v7864
        %v7866 = vpop.f32.mrb[0].mxu0
        %v7867 = vpop.f32.mrb[0].mxu0
        %v7868 = vadd.f32 0.0, %v7867
        %v7869 = vpop.f32.mrb[0].mxu0
        %7870 = vmatprep.mubr.bf16.mxu0 %v7411
        %7871 = vmatmul.mubr.bf16.gmra.mrb[0].mxu0 %v7410
        %v7872 = vpop.f32.mrb[0].mxu0
        %v7873 = vadd.f32 0.0, %v7872
        %v7874 = vpop.f32.mrb[0].mxu0
        %v7875 = vpop.f32.mrb[0].mxu0
        %v7876 = vadd.f32 0.0, %v7875
        %v7877 = vpop.f32.mrb[0].mxu0
        %7878 = vmatprep.mubr.bf16.mxu0 %v7415
        %7879 = vmatmul.mubr.bf16.gmra.mrb[0].mxu0 %v7414
        %v7880 = vpop.f32.mrb[0].mxu0
        %v7881 = vadd.f32 0.0, %v7880
        %v7882 = vpop.f32.mrb[0].mxu0
        %v7883 = vpop.f32.mrb[0].mxu0
        %v7884 = vadd.f32 0.0, %v7883
        %v7885 = vpop.f32.mrb[0].mxu0
        %7886 = vmatprep.mubr.bf16.mxu0 %v7419
        %7887 = vmatmul.mubr.bf16.gmra.mrb[0].mxu0 %v7418
        %v7888 = vpop.f32.mrb[0].mxu0
        %v7889 = vadd.f32 0.0, %v7888
        %v7890 = vpop.f32.mrb[0].mxu0
        %v7891 = vpop.f32.mrb[0].mxu0
        %v7892 = vadd.f32 0.0, %v7891
        %v7893 = vpop.f32.mrb[0].mxu0
        %7894 = vmatprep.mubr.bf16.mxu0 %v7423
        %7895 = vmatmul.mubr.bf16.gmra.mrb[0].mxu0 %v7422
        %v7896 = vpop.f32.mrb[0].mxu0
        %v7897 = vadd.f32 0.0, %v7896
        %v7898 = vpop.f32.mrb[0].mxu0
        %v7899 = vpop.f32.mrb[0].mxu0
        %v7900 = vadd.f32 0.0, %v7899
        %v7901 = vpop.f32.mrb[0].mxu0
        %7902 = vmatprep.mubr.bf16.mxu0 %v7427
        %7903 = vmatmul.mubr.bf16.gmra.mrb[0].mxu0 %v7426
        %v7904 = vpop.f32.mrb[0].mxu0
        %v7905 = vadd.f32 0.0, %v7904
        %v7906 = vpop.f32.mrb[0].mxu0
        %v7907 = vpop.f32.mrb[0].mxu0
        %v7908 = vadd.f32 0.0, %v7907
        %v7909 = vpop.f32.mrb[0].mxu0
        %7910 = vdwg.mxu0
        %7911 = vmatprep.subr.bf16.mxu0 0
        %7912 = vmatpush1.bf16.msra.mxu0 %v7702
        %7913 = vmatprep.subr.bf16.mxu0 0
        %7914 = vmatpush1.bf16.msra.mxu0 %v7703
        %7915 = vmatprep.subr.bf16.mxu0 0
        %7916 = vmatpush1.bf16.msra.mxu0 %v7704
        %7917 = vmatprep.subr.bf16.mxu0 0
        %7918 = vmatpush1.bf16.msra.mxu0 %v7705
        %7919 = vmatprep.subr.bf16.mxu0 0
        %7920 = vmatpush1.bf16.msra.mxu0 %v7706
        %7921 = vmatprep.subr.bf16.mxu0 0
        %7922 = vmatpush1.bf16.msra.mxu0 %v7707
        %7923 = vmatprep.subr.bf16.mxu0 0
        %7924 = vmatpush1.bf16.msra.mxu0 %v7708
        %7925 = vmatprep.subr.bf16.mxu0 0
        %7926 = vmatpush1.bf16.msra.mxu0 %v7709
        %7927 = vmatprep.subr.bf16.mxu0 0
        %7928 = vmatpush1.bf16.msra.mxu0 %v7710
        %7929 = vmatprep.subr.bf16.mxu0 0
        %7930 = vmatpush1.bf16.msra.mxu0 %v7711
        %7931 = vmatprep.subr.bf16.mxu0 0
        %7932 = vmatpush1.bf16.msra.mxu0 %v7712
        %7933 = vmatprep.subr.bf16.mxu0 0
        %7934 = vmatpush1.bf16.msra.mxu0 %v7713
        %7935 = vmatprep.subr.bf16.mxu0 0
        %7936 = vmatpush1.bf16.msra.mxu0 %v7714
        %7937 = vmatprep.subr.bf16.mxu0 0
        %7938 = vmatpush1.bf16.msra.mxu0 %v7715
        %7939 = vmatprep.subr.bf16.mxu0 0
        %7940 = vmatpush1.bf16.msra.mxu0 %v7716
        %7941 = vmatprep.subr.bf16.mxu0 0
        %7942 = vmatpush1.bf16.msra.mxu0 %v7717
        %7943 = vmatprep.mubr.bf16.mxu0 %v7369
        %7944 = vmatmul.mubr.bf16.gmra.mrb[0].mxu0 %v7368
        %v7945 = vpop.f32.mrb[0].mxu0
        %v7946 = vadd.f32 %v7785, %v7945
        %v7947 = vpop.f32.mrb[0].mxu0
        %v7948 = vpop.f32.mrb[0].mxu0
        %v7949 = vadd.f32 %v7788, %v7948
        %v7950 = vpop.f32.mrb[0].mxu0
        %7951 = vmatprep.mubr.bf16.mxu0 %v7373
        %7952 = vmatmul.mubr.bf16.gmra.mrb[0].mxu0 %v7372
        %v7953 = vpop.f32.mrb[0].mxu0
        %v7954 = vadd.f32 %v7793, %v7953
        %v7955 = vpop.f32.mrb[0].mxu0
        %v7956 = vpop.f32.mrb[0].mxu0
        %v7957 = vadd.f32 %v7796, %v7956
        %v7958 = vpop.f32.mrb[0].mxu0
        %7959 = vmatprep.mubr.bf16.mxu0 %v7377
        %7960 = vmatmul.mubr.bf16.gmra.mrb[0].mxu0 %v7376
        %v7961 = vpop.f32.mrb[0].mxu0
        %v7962 = vadd.f32 %v7801, %v7961
        %v7963 = vpop.f32.mrb[0].mxu0
        %v7964 = vpop.f32.mrb[0].mxu0
        %v7965 = vadd.f32 %v7804, %v7964
        %v7966 = vpop.f32.mrb[0].mxu0
        %7967 = vmatprep.mubr.bf16.mxu0 %v7381
        %7968 = vmatmul.mubr.bf16.gmra.mrb[0].mxu0 %v7380
        %v7969 = vpop.f32.mrb[0].mxu0
        %v7970 = vadd.f32 %v7809, %v7969
        %v7971 = vpop.f32.mrb[0].mxu0
        %v7972 = vpop.f32.mrb[0].mxu0
        %v7973 = vadd.f32 %v7812, %v7972
        %v7974 = vpop.f32.mrb[0].mxu0
        %7975 = vmatprep.mubr.bf16.mxu0 %v7385
        %7976 = vmatmul.mubr.bf16.gmra.mrb[0].mxu0 %v7384
        %v7977 = vpop.f32.mrb[0].mxu0
        %v7978 = vadd.f32 %v7817, %v7977
        %v7979 = vpop.f32.mrb[0].mxu0
        %v7980 = vpop.f32.mrb[0].mxu0
        %v7981 = vadd.f32 %v7820, %v7980
        %v7982 = vpop.f32.mrb[0].mxu0
        %7983 = vmatprep.mubr.bf16.mxu0 %v7389
        %7984 = vmatmul.mubr.bf16.gmra.mrb[0].mxu0 %v7388
        %v7985 = vpop.f32.mrb[0].mxu0
        %v7986 = vadd.f32 %v7825, %v7985
        %v7987 = vpop.f32.mrb[0].mxu0
        %v7988 = vpop.f32.mrb[0].mxu0
        %v7989 = vadd.f32 %v7828, %v7988
        %v7990 = vpop.f32.mrb[0].mxu0
        %7991 = vmatprep.mubr.bf16.mxu0 %v7393
        %7992 = vmatmul.mubr.bf16.gmra.mrb[0].mxu0 %v7392
        %v7993 = vpop.f32.mrb[0].mxu0
        %v7994 = vadd.f32 %v7833, %v7993
        %v7995 = vpop.f32.mrb[0].mxu0
        %v7996 = vpop.f32.mrb[0].mxu0
        %v7997 = vadd.f32 %v7836, %v7996
        %v7998 = vpop.f32.mrb[0].mxu0
        %7999 = vmatprep.mubr.bf16.mxu0 %v7397
        %8000 = vmatmul.mubr.bf16.gmra.mrb[0].mxu0 %v7396
        %v8001 = vpop.f32.mrb[0].mxu0
        %v8002 = vadd.f32 %v7841, %v8001
        %v8003 = vpop.f32.mrb[0].mxu0
        %v8004 = vpop.f32.mrb[0].mxu0
        %v8005 = vadd.f32 %v7844, %v8004
        %v8006 = vpop.f32.mrb[0].mxu0
        %8007 = vmatprep.mubr.bf16.mxu0 %v7401
        %8008 = vmatmul.mubr.bf16.gmra.mrb[0].mxu0 %v7400
        %v8009 = vpop.f32.mrb[0].mxu0
        %v8010 = vadd.f32 %v7849, %v8009
        %v8011 = vpop.f32.mrb[0].mxu0
        %v8012 = vpop.f32.mrb[0].mxu0
        %v8013 = vadd.f32 %v7852, %v8012
        %v8014 = vpop.f32.mrb[0].mxu0
        %8015 = vmatprep.mubr.bf16.mxu0 %v7405
        %8016 = vmatmul.mubr.bf16.gmra.mrb[0].mxu0 %v7404
        %v8017 = vpop.f32.mrb[0].mxu0
        %v8018 = vadd.f32 %v7857, %v8017
        %v8019 = vpop.f32.mrb[0].mxu0
        %v8020 = vpop.f32.mrb[0].mxu0
        %v8021 = vadd.f32 %v7860, %v8020
        %v8022 = vpop.f32.mrb[0].mxu0
        %8023 = vmatprep.mubr.bf16.mxu0 %v7409
        %8024 = vmatmul.mubr.bf16.gmra.mrb[0].mxu0 %v7408
        %v8025 = vpop.f32.mrb[0].mxu0
        %v8026 = vadd.f32 %v7865, %v8025
        %v8027 = vpop.f32.mrb[0].mxu0
        %v8028 = vpop.f32.mrb[0].mxu0
        %v8029 = vadd.f32 %v7868, %v8028
        %v8030 = vpop.f32.mrb[0].mxu0
        %8031 = vmatprep.mubr.bf16.mxu0 %v7413
        %8032 = vmatmul.mubr.bf16.gmra.mrb[0].mxu0 %v7412
        %v8033 = vpop.f32.mrb[0].mxu0
        %v8034 = vadd.f32 %v7873, %v8033
        %v8035 = vpop.f32.mrb[0].mxu0
        %v8036 = vpop.f32.mrb[0].mxu0
        %v8037 = vadd.f32 %v7876, %v8036
        %v8038 = vpop.f32.mrb[0].mxu0
        %8039 = vmatprep.mubr.bf16.mxu0 %v7417
        %8040 = vmatmul.mubr.bf16.gmra.mrb[0].mxu0 %v7416
        %v8041 = vpop.f32.mrb[0].mxu0
        %v8042 = vadd.f32 %v7881, %v8041
        %v8043 = vpop.f32.mrb[0].mxu0
        %v8044 = vpop.f32.mrb[0].mxu0
        %v8045 = vadd.f32 %v7884, %v8044
        %v8046 = vpop.f32.mrb[0].mxu0
        %8047 = vmatprep.mubr.bf16.mxu0 %v7421
        %8048 = vmatmul.mubr.bf16.gmra.mrb[0].mxu0 %v7420
        %v8049 = vpop.f32.mrb[0].mxu0
        %v8050 = vadd.f32 %v7889, %v8049
        %v8051 = vpop.f32.mrb[0].mxu0
        %v8052 = vpop.f32.mrb[0].mxu0
        %v8053 = vadd.f32 %v7892, %v8052
        %v8054 = vpop.f32.mrb[0].mxu0
        %8055 = vmatprep.mubr.bf16.mxu0 %v7425
        %8056 = vmatmul.mubr.bf16.gmra.mrb[0].mxu0 %v7424
        %v8057 = vpop.f32.mrb[0].mxu0
        %v8058 = vadd.f32 %v7897, %v8057
        %v8059 = vpop.f32.mrb[0].mxu0
        %v8060 = vpop.f32.mrb[0].mxu0
        %v8061 = vadd.f32 %v7900, %v8060
        %v8062 = vpop.f32.mrb[0].mxu0
        %8063 = vmatprep.mubr.bf16.mxu0 %v7429
        %8064 = vmatmul.mubr.bf16.gmra.mrb[0].mxu0 %v7428
        %v8065 = vpop.f32.mrb[0].mxu0
        %v8066 = vadd.f32 %v7905, %v8065
        %v8067 = vpop.f32.mrb[0].mxu0
        %v8068 = vpop.f32.mrb[0].mxu0
        %v8069 = vadd.f32 %v7908, %v8068
        %v8070 = vpop.f32.mrb[0].mxu0
        %8071 = vdwg.mxu0
        %v8136 = vunpack.c.l.b16 %v7430
        %v8137 = vunpack.c.l.b16 %v7431
        %v8138 = vunpack.c.l.b16 %v7432
        %v8139 = vunpack.c.l.b16 %v7433
        %v8140 = vunpack.c.l.b16 %v7434
        %v8141 = vunpack.c.l.b16 %v7435
        %v8142 = vunpack.c.l.b16 %v7436
        %v8143 = vunpack.c.l.b16 %v7437
        %v8144 = vunpack.c.l.b16 %v7438
        %v8145 = vunpack.c.l.b16 %v7439
        %v8146 = vunpack.c.l.b16 %v7440
        %v8147 = vunpack.c.l.b16 %v7441
        %v8148 = vunpack.c.l.b16 %v7442
        %v8149 = vunpack.c.l.b16 %v7443
        %v8150 = vunpack.c.l.b16 %v7444
        %v8151 = vunpack.c.l.b16 %v7445
        %v8152 = vunpack.c.l.b16 %v7446
        %v8153 = vunpack.c.l.b16 %v7447
        %v8154 = vunpack.c.l.b16 %v7448
        %v8155 = vunpack.c.l.b16 %v7449
        %v8156 = vunpack.c.l.b16 %v7450
        %v8157 = vunpack.c.l.b16 %v7451
        %v8158 = vunpack.c.l.b16 %v7452
        %v8159 = vunpack.c.l.b16 %v7453
        %v8160 = vunpack.c.l.b16 %v7454
        %v8161 = vunpack.c.l.b16 %v7455
        %v8162 = vunpack.c.l.b16 %v7456
        %v8163 = vunpack.c.l.b16 %v7457
        %v8164 = vunpack.c.l.b16 %v7458
        %v8165 = vunpack.c.l.b16 %v7459
        %v8166 = vunpack.c.l.b16 %v7460
        %v8167 = vunpack.c.l.b16 %v7461
        %v8168 = vunpack.c.l.b16 %v7462
        %v8169 = vunpack.c.l.b16 %v7463
        %v8170 = vunpack.c.l.b16 %v7464
        %v8171 = vunpack.c.l.b16 %v7465
        %v8172 = vunpack.c.l.b16 %v7466
        %v8173 = vunpack.c.l.b16 %v7467
        %v8174 = vunpack.c.l.b16 %v7468
        %v8175 = vunpack.c.l.b16 %v7469
        %v8176 = vunpack.c.l.b16 %v7470
        %v8177 = vunpack.c.l.b16 %v7471
        %v8178 = vunpack.c.l.b16 %v7472
        %v8179 = vunpack.c.l.b16 %v7473
        %v8180 = vunpack.c.l.b16 %v7474
        %v8181 = vunpack.c.l.b16 %v7475
        %v8182 = vunpack.c.l.b16 %v7476
        %v8183 = vunpack.c.l.b16 %v7477
        %v8184 = vunpack.c.l.b16 %v7478
        %v8185 = vunpack.c.l.b16 %v7479
        %v8186 = vunpack.c.l.b16 %v7480
        %v8187 = vunpack.c.l.b16 %v7481
        %v8188 = vunpack.c.l.b16 %v7482
        %v8189 = vunpack.c.l.b16 %v7483
        %v8190 = vunpack.c.l.b16 %v7484
        %v8191 = vunpack.c.l.b16 %v7485
        %v8192 = vunpack.c.l.b16 %v7486
        %v8193 = vunpack.c.l.b16 %v7487
        %v8194 = vunpack.c.l.b16 %v7488
        %v8195 = vunpack.c.l.b16 %v7489
        %v8196 = vunpack.c.l.b16 %v7490
        %v8197 = vunpack.c.l.b16 %v7491
        %v8198 = vunpack.c.l.b16 %v7492
        %v8199 = vunpack.c.l.b16 %v7493
        %v8200 = vpack.c.b16 %v8137, %v8136
        %v8201 = vpack.c.b16 %v8139, %v8138
        %v8202 = vpack.c.b16 %v8141, %v8140
        %v8203 = vpack.c.b16 %v8143, %v8142
        %v8204 = vpack.c.b16 %v8145, %v8144
        %v8205 = vpack.c.b16 %v8147, %v8146
        %v8206 = vpack.c.b16 %v8149, %v8148
        %v8207 = vpack.c.b16 %v8151, %v8150
        %v8208 = vpack.c.b16 %v8153, %v8152
        %v8209 = vpack.c.b16 %v8155, %v8154
        %v8210 = vpack.c.b16 %v8157, %v8156
        %v8211 = vpack.c.b16 %v8159, %v8158
        %v8212 = vpack.c.b16 %v8161, %v8160
        %v8213 = vpack.c.b16 %v8163, %v8162
        %v8214 = vpack.c.b16 %v8165, %v8164
        %v8215 = vpack.c.b16 %v8167, %v8166
        %v8216 = vpack.c.b16 %v8169, %v8168
        %v8217 = vpack.c.b16 %v8171, %v8170
        %v8218 = vpack.c.b16 %v8173, %v8172
        %v8219 = vpack.c.b16 %v8175, %v8174
        %v8220 = vpack.c.b16 %v8177, %v8176
        %v8221 = vpack.c.b16 %v8179, %v8178
        %v8222 = vpack.c.b16 %v8181, %v8180
        %v8223 = vpack.c.b16 %v8183, %v8182
        %v8224 = vpack.c.b16 %v8185, %v8184
        %v8225 = vpack.c.b16 %v8187, %v8186
        %v8226 = vpack.c.b16 %v8189, %v8188
        %v8227 = vpack.c.b16 %v8191, %v8190
        %v8228 = vpack.c.b16 %v8193, %v8192
        %v8229 = vpack.c.b16 %v8195, %v8194
        %v8230 = vpack.c.b16 %v8197, %v8196
        %v8231 = vpack.c.b16 %v8199, %v8198
        %8264 = vmatprep.subr.bf16.mxu0 0
        %8265 = vmatpush1.bf16.msra.mxu0 %v8200
        %8266 = vmatprep.subr.bf16.mxu0 0
        %8267 = vmatpush1.bf16.msra.mxu0 %v8201
        %8268 = vmatprep.subr.bf16.mxu0 0
        %8269 = vmatpush1.bf16.msra.mxu0 %v8202
        %8270 = vmatprep.subr.bf16.mxu0 0
        %8271 = vmatpush1.bf16.msra.mxu0 %v8203
        %8272 = vmatprep.subr.bf16.mxu0 0
        %8273 = vmatpush1.bf16.msra.mxu0 %v8204
        %8274 = vmatprep.subr.bf16.mxu0 0
        %8275 = vmatpush1.bf16.msra.mxu0 %v8205
        %8276 = vmatprep.subr.bf16.mxu0 0
        %8277 = vmatpush1.bf16.msra.mxu0 %v8206
        %8278 = vmatprep.subr.bf16.mxu0 0
        %8279 = vmatpush1.bf16.msra.mxu0 %v8207
        %8280 = vmatprep.subr.bf16.mxu0 0
        %8281 = vmatpush1.bf16.msra.mxu0 %v8208
        %8282 = vmatprep.subr.bf16.mxu0 0
        %8283 = vmatpush1.bf16.msra.mxu0 %v8209
        %8284 = vmatprep.subr.bf16.mxu0 0
        %8285 = vmatpush1.bf16.msra.mxu0 %v8210
        %8286 = vmatprep.subr.bf16.mxu0 0
        %8287 = vmatpush1.bf16.msra.mxu0 %v8211
        %8288 = vmatprep.subr.bf16.mxu0 0
        %8289 = vmatpush1.bf16.msra.mxu0 %v8212
        %8290 = vmatprep.subr.bf16.mxu0 0
        %8291 = vmatpush1.bf16.msra.mxu0 %v8213
        %8292 = vmatprep.subr.bf16.mxu0 0
        %8293 = vmatpush1.bf16.msra.mxu0 %v8214
        %8294 = vmatprep.subr.bf16.mxu0 0
        %8295 = vmatpush1.bf16.msra.mxu0 %v8215
        %8296 = vmatprep.mubr.bf16.mxu0 %v5613
        %8297 = vmatmul.mubr.bf16.gmra.mrb[0].mxu0 %v5612
        %v8298 = vpop.f32.mrb[0].mxu0
        %v8299 = vadd.f32 %v7946, %v8298
        %v8300 = vpop.f32.mrb[0].mxu0
        %v8301 = vpop.f32.mrb[0].mxu0
        %v8302 = vadd.f32 %v7949, %v8301
        %v8303 = vpop.f32.mrb[0].mxu0
        %8304 = vmatprep.mubr.bf16.mxu0 %v5617
        %8305 = vmatmul.mubr.bf16.gmra.mrb[0].mxu0 %v5616
        %v8306 = vpop.f32.mrb[0].mxu0
        %v8307 = vadd.f32 %v7954, %v8306
        %v8308 = vpop.f32.mrb[0].mxu0
        %v8309 = vpop.f32.mrb[0].mxu0
        %v8310 = vadd.f32 %v7957, %v8309
        %v8311 = vpop.f32.mrb[0].mxu0
        %8312 = vmatprep.mubr.bf16.mxu0 %v5621
        %8313 = vmatmul.mubr.bf16.gmra.mrb[0].mxu0 %v5620
        %v8314 = vpop.f32.mrb[0].mxu0
        %v8315 = vadd.f32 %v7962, %v8314
        %v8316 = vpop.f32.mrb[0].mxu0
        %v8317 = vpop.f32.mrb[0].mxu0
        %v8318 = vadd.f32 %v7965, %v8317
        %v8319 = vpop.f32.mrb[0].mxu0
        %8320 = vmatprep.mubr.bf16.mxu0 %v5625
        %8321 = vmatmul.mubr.bf16.gmra.mrb[0].mxu0 %v5624
        %v8322 = vpop.f32.mrb[0].mxu0
        %v8323 = vadd.f32 %v7970, %v8322
        %v8324 = vpop.f32.mrb[0].mxu0
        %v8325 = vpop.f32.mrb[0].mxu0
        %v8326 = vadd.f32 %v7973, %v8325
        %v8327 = vpop.f32.mrb[0].mxu0
        %8328 = vmatprep.mubr.bf16.mxu0 %v5629
        %8329 = vmatmul.mubr.bf16.gmra.mrb[0].mxu0 %v5628
        %v8330 = vpop.f32.mrb[0].mxu0
        %v8331 = vadd.f32 %v7978, %v8330
        %v8332 = vpop.f32.mrb[0].mxu0
        %v8333 = vpop.f32.mrb[0].mxu0
        %v8334 = vadd.f32 %v7981, %v8333
        %v8335 = vpop.f32.mrb[0].mxu0
        %8336 = vmatprep.mubr.bf16.mxu0 %v5633
        %8337 = vmatmul.mubr.bf16.gmra.mrb[0].mxu0 %v5632
        %v8338 = vpop.f32.mrb[0].mxu0
        %v8339 = vadd.f32 %v7986, %v8338
        %v8340 = vpop.f32.mrb[0].mxu0
        %v8341 = vpop.f32.mrb[0].mxu0
        %v8342 = vadd.f32 %v7989, %v8341
        %v8343 = vpop.f32.mrb[0].mxu0
        %8344 = vmatprep.mubr.bf16.mxu0 %v5637
        %8345 = vmatmul.mubr.bf16.gmra.mrb[0].mxu0 %v5636
        %v8346 = vpop.f32.mrb[0].mxu0
        %v8347 = vadd.f32 %v7994, %v8346
        %v8348 = vpop.f32.mrb[0].mxu0
        %v8349 = vpop.f32.mrb[0].mxu0
        %v8350 = vadd.f32 %v7997, %v8349
        %v8351 = vpop.f32.mrb[0].mxu0
        %8352 = vmatprep.mubr.bf16.mxu0 %v5641
        %8353 = vmatmul.mubr.bf16.gmra.mrb[0].mxu0 %v5640
        %v8354 = vpop.f32.mrb[0].mxu0
        %v8355 = vadd.f32 %v8002, %v8354
        %v8356 = vpop.f32.mrb[0].mxu0
        %v8357 = vpop.f32.mrb[0].mxu0
        %v8358 = vadd.f32 %v8005, %v8357
        %v8359 = vpop.f32.mrb[0].mxu0
        %8360 = vmatprep.mubr.bf16.mxu0 %v5645
        %8361 = vmatmul.mubr.bf16.gmra.mrb[0].mxu0 %v5644
        %v8362 = vpop.f32.mrb[0].mxu0
        %v8363 = vadd.f32 %v8010, %v8362
        %v8364 = vpop.f32.mrb[0].mxu0
        %v8365 = vpop.f32.mrb[0].mxu0
        %v8366 = vadd.f32 %v8013, %v8365
        %v8367 = vpop.f32.mrb[0].mxu0
        %8368 = vmatprep.mubr.bf16.mxu0 %v5649
        %8369 = vmatmul.mubr.bf16.gmra.mrb[0].mxu0 %v5648
        %v8370 = vpop.f32.mrb[0].mxu0
        %v8371 = vadd.f32 %v8018, %v8370
        %v8372 = vpop.f32.mrb[0].mxu0
        %v8373 = vpop.f32.mrb[0].mxu0
        %v8374 = vadd.f32 %v8021, %v8373
        %v8375 = vpop.f32.mrb[0].mxu0
        %8376 = vmatprep.mubr.bf16.mxu0 %v5653
        %8377 = vmatmul.mubr.bf16.gmra.mrb[0].mxu0 %v5652
        %v8378 = vpop.f32.mrb[0].mxu0
        %v8379 = vadd.f32 %v8026, %v8378
        %v8380 = vpop.f32.mrb[0].mxu0
        %v8381 = vpop.f32.mrb[0].mxu0
        %v8382 = vadd.f32 %v8029, %v8381
        %v8383 = vpop.f32.mrb[0].mxu0
        %8384 = vmatprep.mubr.bf16.mxu0 %v5657
        %8385 = vmatmul.mubr.bf16.gmra.mrb[0].mxu0 %v5656
        %v8386 = vpop.f32.mrb[0].mxu0
        %v8387 = vadd.f32 %v8034, %v8386
        %v8388 = vpop.f32.mrb[0].mxu0
        %v8389 = vpop.f32.mrb[0].mxu0
        %v8390 = vadd.f32 %v8037, %v8389
        %v8391 = vpop.f32.mrb[0].mxu0
        %8392 = vmatprep.mubr.bf16.mxu0 %v5661
        %8393 = vmatmul.mubr.bf16.gmra.mrb[0].mxu0 %v5660
        %v8394 = vpop.f32.mrb[0].mxu0
        %v8395 = vadd.f32 %v8042, %v8394
        %v8396 = vpop.f32.mrb[0].mxu0
        %v8397 = vpop.f32.mrb[0].mxu0
        %v8398 = vadd.f32 %v8045, %v8397
        %v8399 = vpop.f32.mrb[0].mxu0
        %8400 = vmatprep.mubr.bf16.mxu0 %v5665
        %8401 = vmatmul.mubr.bf16.gmra.mrb[0].mxu0 %v5664
        %v8402 = vpop.f32.mrb[0].mxu0
        %v8403 = vadd.f32 %v8050, %v8402
        %v8404 = vpop.f32.mrb[0].mxu0
        %v8405 = vpop.f32.mrb[0].mxu0
        %v8406 = vadd.f32 %v8053, %v8405
        %v8407 = vpop.f32.mrb[0].mxu0
        %8408 = vmatprep.mubr.bf16.mxu0 %v5669
        %8409 = vmatmul.mubr.bf16.gmra.mrb[0].mxu0 %v5668
        %v8410 = vpop.f32.mrb[0].mxu0
        %v8411 = vadd.f32 %v8058, %v8410
        %v8412 = vpop.f32.mrb[0].mxu0
        %v8413 = vpop.f32.mrb[0].mxu0
        %v8414 = vadd.f32 %v8061, %v8413
        %v8415 = vpop.f32.mrb[0].mxu0
        %8416 = vmatprep.mubr.bf16.mxu0 %v5673
        %8417 = vmatmul.mubr.bf16.gmra.mrb[0].mxu0 %v5672
        %v8418 = vpop.f32.mrb[0].mxu0
        %v8419 = vadd.f32 %v8066, %v8418
        %v8420 = vpop.f32.mrb[0].mxu0
        %v8421 = vpop.f32.mrb[0].mxu0
        %v8422 = vadd.f32 %v8069, %v8421
        %v8423 = vpop.f32.mrb[0].mxu0
        %8424 = vdwg.mxu0
        %8425 = vmatprep.subr.bf16.mxu0 0
        %8426 = vmatpush1.bf16.msra.mxu0 %v8216
        %8427 = vmatprep.subr.bf16.mxu0 0
        %8428 = vmatpush1.bf16.msra.mxu0 %v8217
        %8429 = vmatprep.subr.bf16.mxu0 0
        %8430 = vmatpush1.bf16.msra.mxu0 %v8218
        %8431 = vmatprep.subr.bf16.mxu0 0
        %8432 = vmatpush1.bf16.msra.mxu0 %v8219
        %8433 = vmatprep.subr.bf16.mxu0 0
        %8434 = vmatpush1.bf16.msra.mxu0 %v8220
        %8435 = vmatprep.subr.bf16.mxu0 0
        %8436 = vmatpush1.bf16.msra.mxu0 %v8221
        %8437 = vmatprep.subr.bf16.mxu0 0
        %8438 = vmatpush1.bf16.msra.mxu0 %v8222
        %8439 = vmatprep.subr.bf16.mxu0 0
        %8440 = vmatpush1.bf16.msra.mxu0 %v8223
        %8441 = vmatprep.subr.bf16.mxu0 0
        %8442 = vmatpush1.bf16.msra.mxu0 %v8224
        %8443 = vmatprep.subr.bf16.mxu0 0
        %8444 = vmatpush1.bf16.msra.mxu0 %v8225
        %8445 = vmatprep.subr.bf16.mxu0 0
        %8446 = vmatpush1.bf16.msra.mxu0 %v8226
        %8447 = vmatprep.subr.bf16.mxu0 0
        %8448 = vmatpush1.bf16.msra.mxu0 %v8227
        %8449 = vmatprep.subr.bf16.mxu0 0
        %8450 = vmatpush1.bf16.msra.mxu0 %v8228
        %8451 = vmatprep.subr.bf16.mxu0 0
        %8452 = vmatpush1.bf16.msra.mxu0 %v8229
        %8453 = vmatprep.subr.bf16.mxu0 0
        %8454 = vmatpush1.bf16.msra.mxu0 %v8230
        %8455 = vmatprep.subr.bf16.mxu0 0
        %8456 = vmatpush1.bf16.msra.mxu0 %v8231
        %8457 = vmatprep.mubr.bf16.mxu0 %v5615
        %8458 = vmatmul.mubr.bf16.gmra.mrb[0].mxu0 %v5614
        %v8459 = vpop.f32.mrb[0].mxu0
        %v8460 = vadd.f32 %v8299, %v8459
        %v8461 = vpop.f32.mrb[0].mxu0
        %v8462 = vpop.f32.mrb[0].mxu0
        %v8463 = vadd.f32 %v8302, %v8462
        %v8464 = vpop.f32.mrb[0].mxu0
        %8465 = vmatprep.mubr.bf16.mxu0 %v5619
        %8466 = vmatmul.mubr.bf16.gmra.mrb[0].mxu0 %v5618
        %v8467 = vpop.f32.mrb[0].mxu0
        %v8468 = vadd.f32 %v8307, %v8467
        %v8469 = vpop.f32.mrb[0].mxu0
        %v8470 = vpop.f32.mrb[0].mxu0
        %v8471 = vadd.f32 %v8310, %v8470
        %v8472 = vpop.f32.mrb[0].mxu0
        %8473 = vmatprep.mubr.bf16.mxu0 %v5623
        %8474 = vmatmul.mubr.bf16.gmra.mrb[0].mxu0 %v5622
        %v8475 = vpop.f32.mrb[0].mxu0
        %v8476 = vadd.f32 %v8315, %v8475
        %v8477 = vpop.f32.mrb[0].mxu0
        %v8478 = vpop.f32.mrb[0].mxu0
        %v8479 = vadd.f32 %v8318, %v8478
        %v8480 = vpop.f32.mrb[0].mxu0
        %8481 = vmatprep.mubr.bf16.mxu0 %v5627
        %8482 = vmatmul.mubr.bf16.gmra.mrb[0].mxu0 %v5626
        %v8483 = vpop.f32.mrb[0].mxu0
        %v8484 = vadd.f32 %v8323, %v8483
        %v8485 = vpop.f32.mrb[0].mxu0
        %v8486 = vpop.f32.mrb[0].mxu0
        %v8487 = vadd.f32 %v8326, %v8486
        %v8488 = vpop.f32.mrb[0].mxu0
        %8489 = vmatprep.mubr.bf16.mxu0 %v5631
        %8490 = vmatmul.mubr.bf16.gmra.mrb[0].mxu0 %v5630
        %v8491 = vpop.f32.mrb[0].mxu0
        %v8492 = vadd.f32 %v8331, %v8491
        %v8493 = vpop.f32.mrb[0].mxu0
        %v8494 = vpop.f32.mrb[0].mxu0
        %v8495 = vadd.f32 %v8334, %v8494
        %v8496 = vpop.f32.mrb[0].mxu0
        %8497 = vmatprep.mubr.bf16.mxu0 %v5635
        %8498 = vmatmul.mubr.bf16.gmra.mrb[0].mxu0 %v5634
        %v8499 = vpop.f32.mrb[0].mxu0
        %v8500 = vadd.f32 %v8339, %v8499
        %v8501 = vpop.f32.mrb[0].mxu0
        %v8502 = vpop.f32.mrb[0].mxu0
        %v8503 = vadd.f32 %v8342, %v8502
        %v8504 = vpop.f32.mrb[0].mxu0
        %8505 = vmatprep.mubr.bf16.mxu0 %v5639
        %8506 = vmatmul.mubr.bf16.gmra.mrb[0].mxu0 %v5638
        %v8507 = vpop.f32.mrb[0].mxu0
        %v8508 = vadd.f32 %v8347, %v8507
        %v8509 = vpop.f32.mrb[0].mxu0
        %v8510 = vpop.f32.mrb[0].mxu0
        %v8511 = vadd.f32 %v8350, %v8510
        %v8512 = vpop.f32.mrb[0].mxu0
        %8513 = vmatprep.mubr.bf16.mxu0 %v5643
        %8514 = vmatmul.mubr.bf16.gmra.mrb[0].mxu0 %v5642
        %v8515 = vpop.f32.mrb[0].mxu0
        %v8516 = vadd.f32 %v8355, %v8515
        %v8517 = vpop.f32.mrb[0].mxu0
        %v8518 = vpop.f32.mrb[0].mxu0
        %v8519 = vadd.f32 %v8358, %v8518
        %v8520 = vpop.f32.mrb[0].mxu0
        %8521 = vmatprep.mubr.bf16.mxu0 %v5647
        %8522 = vmatmul.mubr.bf16.gmra.mrb[0].mxu0 %v5646
        %v8523 = vpop.f32.mrb[0].mxu0
        %v8524 = vadd.f32 %v8363, %v8523
        %v8525 = vpop.f32.mrb[0].mxu0
        %v8526 = vpop.f32.mrb[0].mxu0
        %v8527 = vadd.f32 %v8366, %v8526
        %v8528 = vpop.f32.mrb[0].mxu0
        %8529 = vmatprep.mubr.bf16.mxu0 %v5651
        %8530 = vmatmul.mubr.bf16.gmra.mrb[0].mxu0 %v5650
        %v8531 = vpop.f32.mrb[0].mxu0
        %v8532 = vadd.f32 %v8371, %v8531
        %v8533 = vpop.f32.mrb[0].mxu0
        %v8534 = vpop.f32.mrb[0].mxu0
        %v8535 = vadd.f32 %v8374, %v8534
        %v8536 = vpop.f32.mrb[0].mxu0
        %8537 = vmatprep.mubr.bf16.mxu0 %v5655
        %8538 = vmatmul.mubr.bf16.gmra.mrb[0].mxu0 %v5654
        %v8539 = vpop.f32.mrb[0].mxu0
        %v8540 = vadd.f32 %v8379, %v8539
        %v8541 = vpop.f32.mrb[0].mxu0
        %v8542 = vpop.f32.mrb[0].mxu0
        %v8543 = vadd.f32 %v8382, %v8542
        %v8544 = vpop.f32.mrb[0].mxu0
        %8545 = vmatprep.mubr.bf16.mxu0 %v5659
        %8546 = vmatmul.mubr.bf16.gmra.mrb[0].mxu0 %v5658
        %v8547 = vpop.f32.mrb[0].mxu0
        %v8548 = vadd.f32 %v8387, %v8547
        %v8549 = vpop.f32.mrb[0].mxu0
        %v8550 = vpop.f32.mrb[0].mxu0
        %v8551 = vadd.f32 %v8390, %v8550
        %v8552 = vpop.f32.mrb[0].mxu0
        %8553 = vmatprep.mubr.bf16.mxu0 %v5663
        %8554 = vmatmul.mubr.bf16.gmra.mrb[0].mxu0 %v5662
        %v8555 = vpop.f32.mrb[0].mxu0
        %v8556 = vadd.f32 %v8395, %v8555
        %v8557 = vpop.f32.mrb[0].mxu0
        %v8558 = vpop.f32.mrb[0].mxu0
        %v8559 = vadd.f32 %v8398, %v8558
        %v8560 = vpop.f32.mrb[0].mxu0
        %8561 = vmatprep.mubr.bf16.mxu0 %v5667
        %8562 = vmatmul.mubr.bf16.gmra.mrb[0].mxu0 %v5666
        %v8563 = vpop.f32.mrb[0].mxu0
        %v8564 = vadd.f32 %v8403, %v8563
        %v8565 = vpop.f32.mrb[0].mxu0
        %v8566 = vpop.f32.mrb[0].mxu0
        %v8567 = vadd.f32 %v8406, %v8566
        %v8568 = vpop.f32.mrb[0].mxu0
        %8569 = vmatprep.mubr.bf16.mxu0 %v5671
        %8570 = vmatmul.mubr.bf16.gmra.mrb[0].mxu0 %v5670
        %v8571 = vpop.f32.mrb[0].mxu0
        %v8572 = vadd.f32 %v8411, %v8571
        %v8573 = vpop.f32.mrb[0].mxu0
        %v8574 = vpop.f32.mrb[0].mxu0
        %v8575 = vadd.f32 %v8414, %v8574
        %v8576 = vpop.f32.mrb[0].mxu0
        %8577 = vmatprep.mubr.bf16.mxu0 %v5675
        %8578 = vmatmul.mubr.bf16.gmra.mrb[0].mxu0 %v5674
        %v8579 = vpop.f32.mrb[0].mxu0
        %v8580 = vadd.f32 %v8419, %v8579
        %v8581 = vpop.f32.mrb[0].mxu0
        %v8582 = vpop.f32.mrb[0].mxu0
        %v8583 = vadd.f32 %v8422, %v8582
        %v8584 = vpop.f32.mrb[0].mxu0
        %8585 = vdwg.mxu0
        %v8586 = vld [vmem:[%s8] sm:$0x1]
        %v8588 = vlaneseq
        %v8589 = vshrl.u32 %v8588, 7
        %v8590 = vsub.s32 0, %v8589
        %v8591 = vrot.slane %v8586, %v8590
        %v8593 = vadd.f32 %v8460, %v8591
        %v8594 = vadd.f32 %v8463, %v8591
        %v8595 = vadd.f32 %v8468, %v8591
        %v8596 = vadd.f32 %v8471, %v8591
        %v8597 = vadd.f32 %v8476, %v8591
        %v8598 = vadd.f32 %v8479, %v8591
        %v8599 = vadd.f32 %v8484, %v8591
        %v8600 = vadd.f32 %v8487, %v8591
        %v8601 = vadd.f32 %v8492, %v8591
        %v8602 = vadd.f32 %v8495, %v8591
        %v8603 = vadd.f32 %v8500, %v8591
        %v8604 = vadd.f32 %v8503, %v8591
        %v8605 = vadd.f32 %v8508, %v8591
        %v8606 = vadd.f32 %v8511, %v8591
        %v8607 = vadd.f32 %v8516, %v8591
        %v8608 = vadd.f32 %v8519, %v8591
        %v8609 = vadd.f32 %v8524, %v8591
        %v8610 = vadd.f32 %v8527, %v8591
        %v8611 = vadd.f32 %v8532, %v8591
        %v8612 = vadd.f32 %v8535, %v8591
        %v8613 = vadd.f32 %v8540, %v8591
        %v8614 = vadd.f32 %v8543, %v8591
        %v8615 = vadd.f32 %v8548, %v8591
        %v8616 = vadd.f32 %v8551, %v8591
        %v8617 = vadd.f32 %v8556, %v8591
        %v8618 = vadd.f32 %v8559, %v8591
        %v8619 = vadd.f32 %v8564, %v8591
        %v8620 = vadd.f32 %v8567, %v8591
        %v8621 = vadd.f32 %v8572, %v8591
        %v8622 = vadd.f32 %v8575, %v8591
        %v8623 = vadd.f32 %v8580, %v8591
        %v8624 = vadd.f32 %v8583, %v8591
        %v8625 = vmul.f32 %v8593, %v8593
        %v8626 = vmul.f32 %v8594, %v8594
        %v8627 = vmul.f32 %v8595, %v8595
        %v8628 = vmul.f32 %v8596, %v8596
        %v8629 = vmul.f32 %v8597, %v8597
        %v8630 = vmul.f32 %v8598, %v8598
        %v8631 = vmul.f32 %v8599, %v8599
        %v8632 = vmul.f32 %v8600, %v8600
        %v8633 = vmul.f32 %v8601, %v8601
        %v8634 = vmul.f32 %v8602, %v8602
        %v8635 = vmul.f32 %v8603, %v8603
        %v8636 = vmul.f32 %v8604, %v8604
        %v8637 = vmul.f32 %v8605, %v8605
        %v8638 = vmul.f32 %v8606, %v8606
        %v8639 = vmul.f32 %v8607, %v8607
        %v8640 = vmul.f32 %v8608, %v8608
        %v8641 = vmul.f32 %v8609, %v8609
        %v8642 = vmul.f32 %v8610, %v8610
        %v8643 = vmul.f32 %v8611, %v8611
        %v8644 = vmul.f32 %v8612, %v8612
        %v8645 = vmul.f32 %v8613, %v8613
        %v8646 = vmul.f32 %v8614, %v8614
        %v8647 = vmul.f32 %v8615, %v8615
        %v8648 = vmul.f32 %v8616, %v8616
        %v8649 = vmul.f32 %v8617, %v8617
        %v8650 = vmul.f32 %v8618, %v8618
        %v8651 = vmul.f32 %v8619, %v8619
        %v8652 = vmul.f32 %v8620, %v8620
        %v8653 = vmul.f32 %v8621, %v8621
        %v8654 = vmul.f32 %v8622, %v8622
        %v8655 = vmul.f32 %v8623, %v8623
        %v8656 = vmul.f32 %v8624, %v8624
        %8657 = vadd.xlane.f32.xlu0 %v8625
        %v8658 = vpop.xlane.xlu0 %8657
        %8659 = vadd.xlane.f32.xlu0 %v8626
        %v8660 = vpop.xlane.xlu0 %8659
        %8661 = vadd.xlane.f32.xlu0 %v8627
        %v8662 = vpop.xlane.xlu0 %8661
        %8663 = vadd.xlane.f32.xlu0 %v8628
        %v8664 = vpop.xlane.xlu0 %8663
        %8665 = vadd.xlane.f32.xlu0 %v8629
        %v8666 = vpop.xlane.xlu0 %8665
        %8667 = vadd.xlane.f32.xlu0 %v8630
        %v8668 = vpop.xlane.xlu0 %8667
        %8669 = vadd.xlane.f32.xlu0 %v8631
        %v8670 = vpop.xlane.xlu0 %8669
        %8671 = vadd.xlane.f32.xlu0 %v8632
        %v8672 = vpop.xlane.xlu0 %8671
        %8673 = vadd.xlane.f32.xlu0 %v8633
        %v8674 = vpop.xlane.xlu0 %8673
        %8675 = vadd.xlane.f32.xlu0 %v8634
        %v8676 = vpop.xlane.xlu0 %8675
        %8677 = vadd.xlane.f32.xlu0 %v8635
        %v8678 = vpop.xlane.xlu0 %8677
        %8679 = vadd.xlane.f32.xlu0 %v8636
        %v8680 = vpop.xlane.xlu0 %8679
        %8681 = vadd.xlane.f32.xlu0 %v8637
        %v8682 = vpop.xlane.xlu0 %8681
        %8683 = vadd.xlane.f32.xlu0 %v8638
        %v8684 = vpop.xlane.xlu0 %8683
        %8685 = vadd.xlane.f32.xlu0 %v8639
        %v8686 = vpop.xlane.xlu0 %8685
        %8687 = vadd.xlane.f32.xlu0 %v8640
        %v8688 = vpop.xlane.xlu0 %8687
        %8689 = vadd.xlane.f32.xlu0 %v8641
        %v8690 = vpop.xlane.xlu0 %8689
        %8691 = vadd.xlane.f32.xlu0 %v8642
        %v8692 = vpop.xlane.xlu0 %8691
        %8693 = vadd.xlane.f32.xlu0 %v8643
        %v8694 = vpop.xlane.xlu0 %8693
        %8695 = vadd.xlane.f32.xlu0 %v8644
        %v8696 = vpop.xlane.xlu0 %8695
        %8697 = vadd.xlane.f32.xlu0 %v8645
        %v8698 = vpop.xlane.xlu0 %8697
        %8699 = vadd.xlane.f32.xlu0 %v8646
        %v8700 = vpop.xlane.xlu0 %8699
        %8701 = vadd.xlane.f32.xlu0 %v8647
        %v8702 = vpop.xlane.xlu0 %8701
        %8703 = vadd.xlane.f32.xlu0 %v8648
        %v8704 = vpop.xlane.xlu0 %8703
        %8705 = vadd.xlane.f32.xlu0 %v8649
        %v8706 = vpop.xlane.xlu0 %8705
        %8707 = vadd.xlane.f32.xlu0 %v8650
        %v8708 = vpop.xlane.xlu0 %8707
        %8709 = vadd.xlane.f32.xlu0 %v8651
        %v8710 = vpop.xlane.xlu0 %8709
        %8711 = vadd.xlane.f32.xlu0 %v8652
        %v8712 = vpop.xlane.xlu0 %8711
        %8713 = vadd.xlane.f32.xlu0 %v8653
        %v8714 = vpop.xlane.xlu0 %8713
        %8715 = vadd.xlane.f32.xlu0 %v8654
        %v8716 = vpop.xlane.xlu0 %8715
        %8717 = vadd.xlane.f32.xlu0 %v8655
        %v8718 = vpop.xlane.xlu0 %8717
        %8719 = vadd.xlane.f32.xlu0 %v8656
        %v8720 = vpop.xlane.xlu0 %8719
        %v8721 = vrsqrt.pop %v8658
        %v8722 = vmul.f32 %v8658, %v8721
        %vm8723 = vcmp.eq.f32.partialorder %v8658, inf
        %v8724 = vsel %vm8723, %v8658, %v8722
        %vm8725 = vcmp.eq.f32.partialorder %v8658, 0.0
        %v8726 = vand.u32 %v8658, 2147483648
        %v8727 = vsel %vm8725, %v8726, %v8724
        %v8728 = vrsqrt.pop %v8660
        %v8729 = vmul.f32 %v8660, %v8728
        %vm8730 = vcmp.eq.f32.partialorder %v8660, inf
        %v8731 = vsel %vm8730, %v8660, %v8729
        %vm8732 = vcmp.eq.f32.partialorder %v8660, 0.0
        %v8733 = vand.u32 %v8660, 2147483648
        %v8734 = vsel %vm8732, %v8733, %v8731
        %v8735 = vrsqrt.pop %v8662
        %v8736 = vmul.f32 %v8662, %v8735
        %vm8737 = vcmp.eq.f32.partialorder %v8662, inf
        %v8738 = vsel %vm8737, %v8662, %v8736
        %vm8739 = vcmp.eq.f32.partialorder %v8662, 0.0
        %v8740 = vand.u32 %v8662, 2147483648
        %v8741 = vsel %vm8739, %v8740, %v8738
        %v8742 = vrsqrt.pop %v8664
        %v8743 = vmul.f32 %v8664, %v8742
        %vm8744 = vcmp.eq.f32.partialorder %v8664, inf
        %v8745 = vsel %vm8744, %v8664, %v8743
        %vm8746 = vcmp.eq.f32.partialorder %v8664, 0.0
        %v8747 = vand.u32 %v8664, 2147483648
        %v8748 = vsel %vm8746, %v8747, %v8745
        %v8749 = vrsqrt.pop %v8666
        %v8750 = vmul.f32 %v8666, %v8749
        %vm8751 = vcmp.eq.f32.partialorder %v8666, inf
        %v8752 = vsel %vm8751, %v8666, %v8750
        %vm8753 = vcmp.eq.f32.partialorder %v8666, 0.0
        %v8754 = vand.u32 %v8666, 2147483648
        %v8755 = vsel %vm8753, %v8754, %v8752
        %v8756 = vrsqrt.pop %v8668
        %v8757 = vmul.f32 %v8668, %v8756
        %vm8758 = vcmp.eq.f32.partialorder %v8668, inf
        %v8759 = vsel %vm8758, %v8668, %v8757
        %vm8760 = vcmp.eq.f32.partialorder %v8668, 0.0
        %v8761 = vand.u32 %v8668, 2147483648
        %v8762 = vsel %vm8760, %v8761, %v8759
        %v8763 = vrsqrt.pop %v8670
        %v8764 = vmul.f32 %v8670, %v8763
        %vm8765 = vcmp.eq.f32.partialorder %v8670, inf
        %v8766 = vsel %vm8765, %v8670, %v8764
        %vm8767 = vcmp.eq.f32.partialorder %v8670, 0.0
        %v8768 = vand.u32 %v8670, 2147483648
        %v8769 = vsel %vm8767, %v8768, %v8766
        %v8770 = vrsqrt.pop %v8672
        %v8771 = vmul.f32 %v8672, %v8770
        %vm8772 = vcmp.eq.f32.partialorder %v8672, inf
        %v8773 = vsel %vm8772, %v8672, %v8771
        %vm8774 = vcmp.eq.f32.partialorder %v8672, 0.0
        %v8775 = vand.u32 %v8672, 2147483648
        %v8776 = vsel %vm8774, %v8775, %v8773
        %v8777 = vrsqrt.pop %v8674
        %v8778 = vmul.f32 %v8674, %v8777
        %vm8779 = vcmp.eq.f32.partialorder %v8674, inf
        %v8780 = vsel %vm8779, %v8674, %v8778
        %vm8781 = vcmp.eq.f32.partialorder %v8674, 0.0
        %v8782 = vand.u32 %v8674, 2147483648
        %v8783 = vsel %vm8781, %v8782, %v8780
        %v8784 = vrsqrt.pop %v8676
        %v8785 = vmul.f32 %v8676, %v8784
        %vm8786 = vcmp.eq.f32.partialorder %v8676, inf
        %v8787 = vsel %vm8786, %v8676, %v8785
        %vm8788 = vcmp.eq.f32.partialorder %v8676, 0.0
        %v8789 = vand.u32 %v8676, 2147483648
        %v8790 = vsel %vm8788, %v8789, %v8787
        %v8791 = vrsqrt.pop %v8678
        %v8792 = vmul.f32 %v8678, %v8791
        %vm8793 = vcmp.eq.f32.partialorder %v8678, inf
        %v8794 = vsel %vm8793, %v8678, %v8792
        %vm8795 = vcmp.eq.f32.partialorder %v8678, 0.0
        %v8796 = vand.u32 %v8678, 2147483648
        %v8797 = vsel %vm8795, %v8796, %v8794
        %v8798 = vrsqrt.pop %v8680
        %v8799 = vmul.f32 %v8680, %v8798
        %vm8800 = vcmp.eq.f32.partialorder %v8680, inf
        %v8801 = vsel %vm8800, %v8680, %v8799
        %vm8802 = vcmp.eq.f32.partialorder %v8680, 0.0
        %v8803 = vand.u32 %v8680, 2147483648
        %v8804 = vsel %vm8802, %v8803, %v8801
        %v8805 = vrsqrt.pop %v8682
        %v8806 = vmul.f32 %v8682, %v8805
        %vm8807 = vcmp.eq.f32.partialorder %v8682, inf
        %v8808 = vsel %vm8807, %v8682, %v8806
        %vm8809 = vcmp.eq.f32.partialorder %v8682, 0.0
        %v8810 = vand.u32 %v8682, 2147483648
        %v8811 = vsel %vm8809, %v8810, %v8808
        %v8812 = vrsqrt.pop %v8684
        %v8813 = vmul.f32 %v8684, %v8812
        %vm8814 = vcmp.eq.f32.partialorder %v8684, inf
        %v8815 = vsel %vm8814, %v8684, %v8813
        %vm8816 = vcmp.eq.f32.partialorder %v8684, 0.0
        %v8817 = vand.u32 %v8684, 2147483648
        %v8818 = vsel %vm8816, %v8817, %v8815
        %v8819 = vrsqrt.pop %v8686
        %v8820 = vmul.f32 %v8686, %v8819
        %vm8821 = vcmp.eq.f32.partialorder %v8686, inf
        %v8822 = vsel %vm8821, %v8686, %v8820
        %vm8823 = vcmp.eq.f32.partialorder %v8686, 0.0
        %v8824 = vand.u32 %v8686, 2147483648
        %v8825 = vsel %vm8823, %v8824, %v8822
        %v8826 = vrsqrt.pop %v8688
        %v8827 = vmul.f32 %v8688, %v8826
        %vm8828 = vcmp.eq.f32.partialorder %v8688, inf
        %v8829 = vsel %vm8828, %v8688, %v8827
        %vm8830 = vcmp.eq.f32.partialorder %v8688, 0.0
        %v8831 = vand.u32 %v8688, 2147483648
        %v8832 = vsel %vm8830, %v8831, %v8829
        %v8833 = vrsqrt.pop %v8690
        %v8834 = vmul.f32 %v8690, %v8833
        %vm8835 = vcmp.eq.f32.partialorder %v8690, inf
        %v8836 = vsel %vm8835, %v8690, %v8834
        %vm8837 = vcmp.eq.f32.partialorder %v8690, 0.0
        %v8838 = vand.u32 %v8690, 2147483648
        %v8839 = vsel %vm8837, %v8838, %v8836
        %v8840 = vrsqrt.pop %v8692
        %v8841 = vmul.f32 %v8692, %v8840
        %vm8842 = vcmp.eq.f32.partialorder %v8692, inf
        %v8843 = vsel %vm8842, %v8692, %v8841
        %vm8844 = vcmp.eq.f32.partialorder %v8692, 0.0
        %v8845 = vand.u32 %v8692, 2147483648
        %v8846 = vsel %vm8844, %v8845, %v8843
        %v8847 = vrsqrt.pop %v8694
        %v8848 = vmul.f32 %v8694, %v8847
        %vm8849 = vcmp.eq.f32.partialorder %v8694, inf
        %v8850 = vsel %vm8849, %v8694, %v8848
        %vm8851 = vcmp.eq.f32.partialorder %v8694, 0.0
        %v8852 = vand.u32 %v8694, 2147483648
        %v8853 = vsel %vm8851, %v8852, %v8850
        %v8854 = vrsqrt.pop %v8696
        %v8855 = vmul.f32 %v8696, %v8854
        %vm8856 = vcmp.eq.f32.partialorder %v8696, inf
        %v8857 = vsel %vm8856, %v8696, %v8855
        %vm8858 = vcmp.eq.f32.partialorder %v8696, 0.0
        %v8859 = vand.u32 %v8696, 2147483648
        %v8860 = vsel %vm8858, %v8859, %v8857
        %v8861 = vrsqrt.pop %v8698
        %v8862 = vmul.f32 %v8698, %v8861
        %vm8863 = vcmp.eq.f32.partialorder %v8698, inf
        %v8864 = vsel %vm8863, %v8698, %v8862
        %vm8865 = vcmp.eq.f32.partialorder %v8698, 0.0
        %v8866 = vand.u32 %v8698, 2147483648
        %v8867 = vsel %vm8865, %v8866, %v8864
        %v8868 = vrsqrt.pop %v8700
        %v8869 = vmul.f32 %v8700, %v8868
        %vm8870 = vcmp.eq.f32.partialorder %v8700, inf
        %v8871 = vsel %vm8870, %v8700, %v8869
        %vm8872 = vcmp.eq.f32.partialorder %v8700, 0.0
        %v8873 = vand.u32 %v8700, 2147483648
        %v8874 = vsel %vm8872, %v8873, %v8871
        %v8875 = vrsqrt.pop %v8702
        %v8876 = vmul.f32 %v8702, %v8875
        %vm8877 = vcmp.eq.f32.partialorder %v8702, inf
        %v8878 = vsel %vm8877, %v8702, %v8876
        %vm8879 = vcmp.eq.f32.partialorder %v8702, 0.0
        %v8880 = vand.u32 %v8702, 2147483648
        %v8881 = vsel %vm8879, %v8880, %v8878
        %v8882 = vrsqrt.pop %v8704
        %v8883 = vmul.f32 %v8704, %v8882
        %vm8884 = vcmp.eq.f32.partialorder %v8704, inf
        %v8885 = vsel %vm8884, %v8704, %v8883
        %vm8886 = vcmp.eq.f32.partialorder %v8704, 0.0
        %v8887 = vand.u32 %v8704, 2147483648
        %v8888 = vsel %vm8886, %v8887, %v8885
        %v8889 = vrsqrt.pop %v8706
        %v8890 = vmul.f32 %v8706, %v8889
        %vm8891 = vcmp.eq.f32.partialorder %v8706, inf
        %v8892 = vsel %vm8891, %v8706, %v8890
        %vm8893 = vcmp.eq.f32.partialorder %v8706, 0.0
        %v8894 = vand.u32 %v8706, 2147483648
        %v8895 = vsel %vm8893, %v8894, %v8892
        %v8896 = vrsqrt.pop %v8708
        %v8897 = vmul.f32 %v8708, %v8896
        %vm8898 = vcmp.eq.f32.partialorder %v8708, inf
        %v8899 = vsel %vm8898, %v8708, %v8897
        %vm8900 = vcmp.eq.f32.partialorder %v8708, 0.0
        %v8901 = vand.u32 %v8708, 2147483648
        %v8902 = vsel %vm8900, %v8901, %v8899
        %v8903 = vrsqrt.pop %v8710
        %v8904 = vmul.f32 %v8710, %v8903
        %vm8905 = vcmp.eq.f32.partialorder %v8710, inf
        %v8906 = vsel %vm8905, %v8710, %v8904
        %vm8907 = vcmp.eq.f32.partialorder %v8710, 0.0
        %v8908 = vand.u32 %v8710, 2147483648
        %v8909 = vsel %vm8907, %v8908, %v8906
        %v8910 = vrsqrt.pop %v8712
        %v8911 = vmul.f32 %v8712, %v8910
        %vm8912 = vcmp.eq.f32.partialorder %v8712, inf
        %v8913 = vsel %vm8912, %v8712, %v8911
        %vm8914 = vcmp.eq.f32.partialorder %v8712, 0.0
        %v8915 = vand.u32 %v8712, 2147483648
        %v8916 = vsel %vm8914, %v8915, %v8913
        %v8917 = vrsqrt.pop %v8714
        %v8918 = vmul.f32 %v8714, %v8917
        %vm8919 = vcmp.eq.f32.partialorder %v8714, inf
        %v8920 = vsel %vm8919, %v8714, %v8918
        %vm8921 = vcmp.eq.f32.partialorder %v8714, 0.0
        %v8922 = vand.u32 %v8714, 2147483648
        %v8923 = vsel %vm8921, %v8922, %v8920
        %v8924 = vrsqrt.pop %v8716
        %v8925 = vmul.f32 %v8716, %v8924
        %vm8926 = vcmp.eq.f32.partialorder %v8716, inf
        %v8927 = vsel %vm8926, %v8716, %v8925
        %vm8928 = vcmp.eq.f32.partialorder %v8716, 0.0
        %v8929 = vand.u32 %v8716, 2147483648
        %v8930 = vsel %vm8928, %v8929, %v8927
        %v8931 = vrsqrt.pop %v8718
        %v8932 = vmul.f32 %v8718, %v8931
        %vm8933 = vcmp.eq.f32.partialorder %v8718, inf
        %v8934 = vsel %vm8933, %v8718, %v8932
        %vm8935 = vcmp.eq.f32.partialorder %v8718, 0.0
        %v8936 = vand.u32 %v8718, 2147483648
        %v8937 = vsel %vm8935, %v8936, %v8934
        %v8938 = vrsqrt.pop %v8720
        %v8939 = vmul.f32 %v8720, %v8938
        %vm8940 = vcmp.eq.f32.partialorder %v8720, inf
        %v8941 = vsel %vm8940, %v8720, %v8939
        %vm8942 = vcmp.eq.f32.partialorder %v8720, 0.0
        %v8943 = vand.u32 %v8720, 2147483648
        %v8944 = vsel %vm8942, %v8943, %v8941
        %v8977 = vlaneseq
        %v8978 = vshrl.u32 %v8977, 7
        %v8979 = vsub.s32 0, %v8978
        %v8980 = vrot.slane %v8727, %v8979
        %v8981 = vlaneseq
        %v8982 = vshrl.u32 %v8981, 7
        %v8983 = vsub.s32 1, %v8982
        %v8984 = vrot.slane %v8727, %v8983
        %v8985 = vlaneseq
        %v8986 = vshrl.u32 %v8985, 7
        %v8987 = vsub.s32 2, %v8986
        %v8988 = vrot.slane %v8727, %v8987
        %v8989 = vlaneseq
        %v8990 = vshrl.u32 %v8989, 7
        %v8991 = vsub.s32 3, %v8990
        %v8992 = vrot.slane %v8727, %v8991
        %v8993 = vlaneseq
        %v8994 = vshrl.u32 %v8993, 7
        %v8995 = vsub.s32 4, %v8994
        %v8996 = vrot.slane %v8727, %v8995
        %v8997 = vlaneseq
        %v8998 = vshrl.u32 %v8997, 7
        %v8999 = vsub.s32 5, %v8998
        %v9000 = vrot.slane %v8727, %v8999
        %v9001 = vlaneseq
        %v9002 = vshrl.u32 %v9001, 7
        %v9003 = vsub.s32 6, %v9002
        %v9004 = vrot.slane %v8727, %v9003
        %v9005 = vlaneseq
        %v9006 = vshrl.u32 %v9005, 7
        %v9007 = vsub.s32 7, %v9006
        %v9008 = vrot.slane %v8727, %v9007
        %v9009 = vlaneseq
        %v9010 = vshrl.u32 %v9009, 7
        %v9011 = vsub.s32 0, %v9010
        %v9012 = vrot.slane %v8734, %v9011
        %v9013 = vlaneseq
        %v9014 = vshrl.u32 %v9013, 7
        %v9015 = vsub.s32 1, %v9014
        %v9016 = vrot.slane %v8734, %v9015
        %v9017 = vlaneseq
        %v9018 = vshrl.u32 %v9017, 7
        %v9019 = vsub.s32 2, %v9018
        %v9020 = vrot.slane %v8734, %v9019
        %v9021 = vlaneseq
        %v9022 = vshrl.u32 %v9021, 7
        %v9023 = vsub.s32 3, %v9022
        %v9024 = vrot.slane %v8734, %v9023
        %v9025 = vlaneseq
        %v9026 = vshrl.u32 %v9025, 7
        %v9027 = vsub.s32 4, %v9026
        %v9028 = vrot.slane %v8734, %v9027
        %v9029 = vlaneseq
        %v9030 = vshrl.u32 %v9029, 7
        %v9031 = vsub.s32 5, %v9030
        %v9032 = vrot.slane %v8734, %v9031
        %v9033 = vlaneseq
        %v9034 = vshrl.u32 %v9033, 7
        %v9035 = vsub.s32 6, %v9034
        %v9036 = vrot.slane %v8734, %v9035
        %v9037 = vlaneseq
        %v9038 = vshrl.u32 %v9037, 7
        %v9039 = vsub.s32 7, %v9038
        %v9040 = vrot.slane %v8734, %v9039
        %v9041 = vlaneseq
        %v9042 = vshrl.u32 %v9041, 7
        %v9043 = vsub.s32 0, %v9042
        %v9044 = vrot.slane %v8741, %v9043
        %v9045 = vlaneseq
        %v9046 = vshrl.u32 %v9045, 7
        %v9047 = vsub.s32 1, %v9046
        %v9048 = vrot.slane %v8741, %v9047
        %v9049 = vlaneseq
        %v9050 = vshrl.u32 %v9049, 7
        %v9051 = vsub.s32 2, %v9050
        %v9052 = vrot.slane %v8741, %v9051
        %v9053 = vlaneseq
        %v9054 = vshrl.u32 %v9053, 7
        %v9055 = vsub.s32 3, %v9054
        %v9056 = vrot.slane %v8741, %v9055
        %v9057 = vlaneseq
        %v9058 = vshrl.u32 %v9057, 7
        %v9059 = vsub.s32 4, %v9058
        %v9060 = vrot.slane %v8741, %v9059
        %v9061 = vlaneseq
        %v9062 = vshrl.u32 %v9061, 7
        %v9063 = vsub.s32 5, %v9062
        %v9064 = vrot.slane %v8741, %v9063
        %v9065 = vlaneseq
        %v9066 = vshrl.u32 %v9065, 7
        %v9067 = vsub.s32 6, %v9066
        %v9068 = vrot.slane %v8741, %v9067
        %v9069 = vlaneseq
        %v9070 = vshrl.u32 %v9069, 7
        %v9071 = vsub.s32 7, %v9070
        %v9072 = vrot.slane %v8741, %v9071
        %v9073 = vlaneseq
        %v9074 = vshrl.u32 %v9073, 7
        %v9075 = vsub.s32 0, %v9074
        %v9076 = vrot.slane %v8748, %v9075
        %v9077 = vlaneseq
        %v9078 = vshrl.u32 %v9077, 7
        %v9079 = vsub.s32 1, %v9078
        %v9080 = vrot.slane %v8748, %v9079
        %v9081 = vlaneseq
        %v9082 = vshrl.u32 %v9081, 7
        %v9083 = vsub.s32 2, %v9082
        %v9084 = vrot.slane %v8748, %v9083
        %v9085 = vlaneseq
        %v9086 = vshrl.u32 %v9085, 7
        %v9087 = vsub.s32 3, %v9086
        %v9088 = vrot.slane %v8748, %v9087
        %v9089 = vlaneseq
        %v9090 = vshrl.u32 %v9089, 7
        %v9091 = vsub.s32 4, %v9090
        %v9092 = vrot.slane %v8748, %v9091
        %v9093 = vlaneseq
        %v9094 = vshrl.u32 %v9093, 7
        %v9095 = vsub.s32 5, %v9094
        %v9096 = vrot.slane %v8748, %v9095
        %v9097 = vlaneseq
        %v9098 = vshrl.u32 %v9097, 7
        %v9099 = vsub.s32 6, %v9098
        %v9100 = vrot.slane %v8748, %v9099
        %v9101 = vlaneseq
        %v9102 = vshrl.u32 %v9101, 7
        %v9103 = vsub.s32 7, %v9102
        %v9104 = vrot.slane %v8748, %v9103
        %v9105 = vlaneseq
        %v9106 = vshrl.u32 %v9105, 7
        %v9107 = vsub.s32 0, %v9106
        %v9108 = vrot.slane %v8755, %v9107
        %v9109 = vlaneseq
        %v9110 = vshrl.u32 %v9109, 7
        %v9111 = vsub.s32 1, %v9110
        %v9112 = vrot.slane %v8755, %v9111
        %v9113 = vlaneseq
        %v9114 = vshrl.u32 %v9113, 7
        %v9115 = vsub.s32 2, %v9114
        %v9116 = vrot.slane %v8755, %v9115
        %v9117 = vlaneseq
        %v9118 = vshrl.u32 %v9117, 7
        %v9119 = vsub.s32 3, %v9118
        %v9120 = vrot.slane %v8755, %v9119
        %v9121 = vlaneseq
        %v9122 = vshrl.u32 %v9121, 7
        %v9123 = vsub.s32 4, %v9122
        %v9124 = vrot.slane %v8755, %v9123
        %v9125 = vlaneseq
        %v9126 = vshrl.u32 %v9125, 7
        %v9127 = vsub.s32 5, %v9126
        %v9128 = vrot.slane %v8755, %v9127
        %v9129 = vlaneseq
        %v9130 = vshrl.u32 %v9129, 7
        %v9131 = vsub.s32 6, %v9130
        %v9132 = vrot.slane %v8755, %v9131
        %v9133 = vlaneseq
        %v9134 = vshrl.u32 %v9133, 7
        %v9135 = vsub.s32 7, %v9134
        %v9136 = vrot.slane %v8755, %v9135
        %v9137 = vlaneseq
        %v9138 = vshrl.u32 %v9137, 7
        %v9139 = vsub.s32 0, %v9138
        %v9140 = vrot.slane %v8762, %v9139
        %v9141 = vlaneseq
        %v9142 = vshrl.u32 %v9141, 7
        %v9143 = vsub.s32 1, %v9142
        %v9144 = vrot.slane %v8762, %v9143
        %v9145 = vlaneseq
        %v9146 = vshrl.u32 %v9145, 7
        %v9147 = vsub.s32 2, %v9146
        %v9148 = vrot.slane %v8762, %v9147
        %v9149 = vlaneseq
        %v9150 = vshrl.u32 %v9149, 7
        %v9151 = vsub.s32 3, %v9150
        %v9152 = vrot.slane %v8762, %v9151
        %v9153 = vlaneseq
        %v9154 = vshrl.u32 %v9153, 7
        %v9155 = vsub.s32 4, %v9154
        %v9156 = vrot.slane %v8762, %v9155
        %v9157 = vlaneseq
        %v9158 = vshrl.u32 %v9157, 7
        %v9159 = vsub.s32 5, %v9158
        %v9160 = vrot.slane %v8762, %v9159
        %v9161 = vlaneseq
        %v9162 = vshrl.u32 %v9161, 7
        %v9163 = vsub.s32 6, %v9162
        %v9164 = vrot.slane %v8762, %v9163
        %v9165 = vlaneseq
        %v9166 = vshrl.u32 %v9165, 7
        %v9167 = vsub.s32 7, %v9166
        %v9168 = vrot.slane %v8762, %v9167
        %v9169 = vlaneseq
        %v9170 = vshrl.u32 %v9169, 7
        %v9171 = vsub.s32 0, %v9170
        %v9172 = vrot.slane %v8769, %v9171
        %v9173 = vlaneseq
        %v9174 = vshrl.u32 %v9173, 7
        %v9175 = vsub.s32 1, %v9174
        %v9176 = vrot.slane %v8769, %v9175
        %v9177 = vlaneseq
        %v9178 = vshrl.u32 %v9177, 7
        %v9179 = vsub.s32 2, %v9178
        %v9180 = vrot.slane %v8769, %v9179
        %v9181 = vlaneseq
        %v9182 = vshrl.u32 %v9181, 7
        %v9183 = vsub.s32 3, %v9182
        %v9184 = vrot.slane %v8769, %v9183
        %v9185 = vlaneseq
        %v9186 = vshrl.u32 %v9185, 7
        %v9187 = vsub.s32 4, %v9186
        %v9188 = vrot.slane %v8769, %v9187
        %v9189 = vlaneseq
        %v9190 = vshrl.u32 %v9189, 7
        %v9191 = vsub.s32 5, %v9190
        %v9192 = vrot.slane %v8769, %v9191
        %v9193 = vlaneseq
        %v9194 = vshrl.u32 %v9193, 7
        %v9195 = vsub.s32 6, %v9194
        %v9196 = vrot.slane %v8769, %v9195
        %v9197 = vlaneseq
        %v9198 = vshrl.u32 %v9197, 7
        %v9199 = vsub.s32 7, %v9198
        %v9200 = vrot.slane %v8769, %v9199
        %v9201 = vlaneseq
        %v9202 = vshrl.u32 %v9201, 7
        %v9203 = vsub.s32 0, %v9202
        %v9204 = vrot.slane %v8776, %v9203
        %v9205 = vlaneseq
        %v9206 = vshrl.u32 %v9205, 7
        %v9207 = vsub.s32 1, %v9206
        %v9208 = vrot.slane %v8776, %v9207
        %v9209 = vlaneseq
        %v9210 = vshrl.u32 %v9209, 7
        %v9211 = vsub.s32 2, %v9210
        %v9212 = vrot.slane %v8776, %v9211
        %v9213 = vlaneseq
        %v9214 = vshrl.u32 %v9213, 7
        %v9215 = vsub.s32 3, %v9214
        %v9216 = vrot.slane %v8776, %v9215
        %v9217 = vlaneseq
        %v9218 = vshrl.u32 %v9217, 7
        %v9219 = vsub.s32 4, %v9218
        %v9220 = vrot.slane %v8776, %v9219
        %v9221 = vlaneseq
        %v9222 = vshrl.u32 %v9221, 7
        %v9223 = vsub.s32 5, %v9222
        %v9224 = vrot.slane %v8776, %v9223
        %v9225 = vlaneseq
        %v9226 = vshrl.u32 %v9225, 7
        %v9227 = vsub.s32 6, %v9226
        %v9228 = vrot.slane %v8776, %v9227
        %v9229 = vlaneseq
        %v9230 = vshrl.u32 %v9229, 7
        %v9231 = vsub.s32 7, %v9230
        %v9232 = vrot.slane %v8776, %v9231
        %v9233 = vlaneseq
        %v9234 = vshrl.u32 %v9233, 7
        %v9235 = vsub.s32 0, %v9234
        %v9236 = vrot.slane %v8783, %v9235
        %v9237 = vlaneseq
        %v9238 = vshrl.u32 %v9237, 7
        %v9239 = vsub.s32 1, %v9238
        %v9240 = vrot.slane %v8783, %v9239
        %v9241 = vlaneseq
        %v9242 = vshrl.u32 %v9241, 7
        %v9243 = vsub.s32 2, %v9242
        %v9244 = vrot.slane %v8783, %v9243
        %v9245 = vlaneseq
        %v9246 = vshrl.u32 %v9245, 7
        %v9247 = vsub.s32 3, %v9246
        %v9248 = vrot.slane %v8783, %v9247
        %v9249 = vlaneseq
        %v9250 = vshrl.u32 %v9249, 7
        %v9251 = vsub.s32 4, %v9250
        %v9252 = vrot.slane %v8783, %v9251
        %v9253 = vlaneseq
        %v9254 = vshrl.u32 %v9253, 7
        %v9255 = vsub.s32 5, %v9254
        %v9256 = vrot.slane %v8783, %v9255
        %v9257 = vlaneseq
        %v9258 = vshrl.u32 %v9257, 7
        %v9259 = vsub.s32 6, %v9258
        %v9260 = vrot.slane %v8783, %v9259
        %v9261 = vlaneseq
        %v9262 = vshrl.u32 %v9261, 7
        %v9263 = vsub.s32 7, %v9262
        %v9264 = vrot.slane %v8783, %v9263
        %v9265 = vlaneseq
        %v9266 = vshrl.u32 %v9265, 7
        %v9267 = vsub.s32 0, %v9266
        %v9268 = vrot.slane %v8790, %v9267
        %v9269 = vlaneseq
        %v9270 = vshrl.u32 %v9269, 7
        %v9271 = vsub.s32 1, %v9270
        %v9272 = vrot.slane %v8790, %v9271
        %v9273 = vlaneseq
        %v9274 = vshrl.u32 %v9273, 7
        %v9275 = vsub.s32 2, %v9274
        %v9276 = vrot.slane %v8790, %v9275
        %v9277 = vlaneseq
        %v9278 = vshrl.u32 %v9277, 7
        %v9279 = vsub.s32 3, %v9278
        %v9280 = vrot.slane %v8790, %v9279
        %v9281 = vlaneseq
        %v9282 = vshrl.u32 %v9281, 7
        %v9283 = vsub.s32 4, %v9282
        %v9284 = vrot.slane %v8790, %v9283
        %v9285 = vlaneseq
        %v9286 = vshrl.u32 %v9285, 7
        %v9287 = vsub.s32 5, %v9286
        %v9288 = vrot.slane %v8790, %v9287
        %v9289 = vlaneseq
        %v9290 = vshrl.u32 %v9289, 7
        %v9291 = vsub.s32 6, %v9290
        %v9292 = vrot.slane %v8790, %v9291
        %v9293 = vlaneseq
        %v9294 = vshrl.u32 %v9293, 7
        %v9295 = vsub.s32 7, %v9294
        %v9296 = vrot.slane %v8790, %v9295
        %v9297 = vlaneseq
        %v9298 = vshrl.u32 %v9297, 7
        %v9299 = vsub.s32 0, %v9298
        %v9300 = vrot.slane %v8797, %v9299
        %v9301 = vlaneseq
        %v9302 = vshrl.u32 %v9301, 7
        %v9303 = vsub.s32 1, %v9302
        %v9304 = vrot.slane %v8797, %v9303
        %v9305 = vlaneseq
        %v9306 = vshrl.u32 %v9305, 7
        %v9307 = vsub.s32 2, %v9306
        %v9308 = vrot.slane %v8797, %v9307
        %v9309 = vlaneseq
        %v9310 = vshrl.u32 %v9309, 7
        %v9311 = vsub.s32 3, %v9310
        %v9312 = vrot.slane %v8797, %v9311
        %v9313 = vlaneseq
        %v9314 = vshrl.u32 %v9313, 7
        %v9315 = vsub.s32 4, %v9314
        %v9316 = vrot.slane %v8797, %v9315
        %v9317 = vlaneseq
        %v9318 = vshrl.u32 %v9317, 7
        %v9319 = vsub.s32 5, %v9318
        %v9320 = vrot.slane %v8797, %v9319
        %v9321 = vlaneseq
        %v9322 = vshrl.u32 %v9321, 7
        %v9323 = vsub.s32 6, %v9322
        %v9324 = vrot.slane %v8797, %v9323
        %v9325 = vlaneseq
        %v9326 = vshrl.u32 %v9325, 7
        %v9327 = vsub.s32 7, %v9326
        %v9328 = vrot.slane %v8797, %v9327
        %v9329 = vlaneseq
        %v9330 = vshrl.u32 %v9329, 7
        %v9331 = vsub.s32 0, %v9330
        %v9332 = vrot.slane %v8804, %v9331
        %v9333 = vlaneseq
        %v9334 = vshrl.u32 %v9333, 7
        %v9335 = vsub.s32 1, %v9334
        %v9336 = vrot.slane %v8804, %v9335
        %v9337 = vlaneseq
        %v9338 = vshrl.u32 %v9337, 7
        %v9339 = vsub.s32 2, %v9338
        %v9340 = vrot.slane %v8804, %v9339
        %v9341 = vlaneseq
        %v9342 = vshrl.u32 %v9341, 7
        %v9343 = vsub.s32 3, %v9342
        %v9344 = vrot.slane %v8804, %v9343
        %v9345 = vlaneseq
        %v9346 = vshrl.u32 %v9345, 7
        %v9347 = vsub.s32 4, %v9346
        %v9348 = vrot.slane %v8804, %v9347
        %v9349 = vlaneseq
        %v9350 = vshrl.u32 %v9349, 7
        %v9351 = vsub.s32 5, %v9350
        %v9352 = vrot.slane %v8804, %v9351
        %v9353 = vlaneseq
        %v9354 = vshrl.u32 %v9353, 7
        %v9355 = vsub.s32 6, %v9354
        %v9356 = vrot.slane %v8804, %v9355
        %v9357 = vlaneseq
        %v9358 = vshrl.u32 %v9357, 7
        %v9359 = vsub.s32 7, %v9358
        %v9360 = vrot.slane %v8804, %v9359
        %v9361 = vlaneseq
        %v9362 = vshrl.u32 %v9361, 7
        %v9363 = vsub.s32 0, %v9362
        %v9364 = vrot.slane %v8811, %v9363
        %v9365 = vlaneseq
        %v9366 = vshrl.u32 %v9365, 7
        %v9367 = vsub.s32 1, %v9366
        %v9368 = vrot.slane %v8811, %v9367
        %v9369 = vlaneseq
        %v9370 = vshrl.u32 %v9369, 7
        %v9371 = vsub.s32 2, %v9370
        %v9372 = vrot.slane %v8811, %v9371
        %v9373 = vlaneseq
        %v9374 = vshrl.u32 %v9373, 7
        %v9375 = vsub.s32 3, %v9374
        %v9376 = vrot.slane %v8811, %v9375
        %v9377 = vlaneseq
        %v9378 = vshrl.u32 %v9377, 7
        %v9379 = vsub.s32 4, %v9378
        %v9380 = vrot.slane %v8811, %v9379
        %v9381 = vlaneseq
        %v9382 = vshrl.u32 %v9381, 7
        %v9383 = vsub.s32 5, %v9382
        %v9384 = vrot.slane %v8811, %v9383
        %v9385 = vlaneseq
        %v9386 = vshrl.u32 %v9385, 7
        %v9387 = vsub.s32 6, %v9386
        %v9388 = vrot.slane %v8811, %v9387
        %v9389 = vlaneseq
        %v9390 = vshrl.u32 %v9389, 7
        %v9391 = vsub.s32 7, %v9390
        %v9392 = vrot.slane %v8811, %v9391
        %v9393 = vlaneseq
        %v9394 = vshrl.u32 %v9393, 7
        %v9395 = vsub.s32 0, %v9394
        %v9396 = vrot.slane %v8818, %v9395
        %v9397 = vlaneseq
        %v9398 = vshrl.u32 %v9397, 7
        %v9399 = vsub.s32 1, %v9398
        %v9400 = vrot.slane %v8818, %v9399
        %v9401 = vlaneseq
        %v9402 = vshrl.u32 %v9401, 7
        %v9403 = vsub.s32 2, %v9402
        %v9404 = vrot.slane %v8818, %v9403
        %v9405 = vlaneseq
        %v9406 = vshrl.u32 %v9405, 7
        %v9407 = vsub.s32 3, %v9406
        %v9408 = vrot.slane %v8818, %v9407
        %v9409 = vlaneseq
        %v9410 = vshrl.u32 %v9409, 7
        %v9411 = vsub.s32 4, %v9410
        %v9412 = vrot.slane %v8818, %v9411
        %v9413 = vlaneseq
        %v9414 = vshrl.u32 %v9413, 7
        %v9415 = vsub.s32 5, %v9414
        %v9416 = vrot.slane %v8818, %v9415
        %v9417 = vlaneseq
        %v9418 = vshrl.u32 %v9417, 7
        %v9419 = vsub.s32 6, %v9418
        %v9420 = vrot.slane %v8818, %v9419
        %v9421 = vlaneseq
        %v9422 = vshrl.u32 %v9421, 7
        %v9423 = vsub.s32 7, %v9422
        %v9424 = vrot.slane %v8818, %v9423
        %v9425 = vlaneseq
        %v9426 = vshrl.u32 %v9425, 7
        %v9427 = vsub.s32 0, %v9426
        %v9428 = vrot.slane %v8825, %v9427
        %v9429 = vlaneseq
        %v9430 = vshrl.u32 %v9429, 7
        %v9431 = vsub.s32 1, %v9430
        %v9432 = vrot.slane %v8825, %v9431
        %v9433 = vlaneseq
        %v9434 = vshrl.u32 %v9433, 7
        %v9435 = vsub.s32 2, %v9434
        %v9436 = vrot.slane %v8825, %v9435
        %v9437 = vlaneseq
        %v9438 = vshrl.u32 %v9437, 7
        %v9439 = vsub.s32 3, %v9438
        %v9440 = vrot.slane %v8825, %v9439
        %v9441 = vlaneseq
        %v9442 = vshrl.u32 %v9441, 7
        %v9443 = vsub.s32 4, %v9442
        %v9444 = vrot.slane %v8825, %v9443
        %v9445 = vlaneseq
        %v9446 = vshrl.u32 %v9445, 7
        %v9447 = vsub.s32 5, %v9446
        %v9448 = vrot.slane %v8825, %v9447
        %v9449 = vlaneseq
        %v9450 = vshrl.u32 %v9449, 7
        %v9451 = vsub.s32 6, %v9450
        %v9452 = vrot.slane %v8825, %v9451
        %v9453 = vlaneseq
        %v9454 = vshrl.u32 %v9453, 7
        %v9455 = vsub.s32 7, %v9454
        %v9456 = vrot.slane %v8825, %v9455
        %v9457 = vlaneseq
        %v9458 = vshrl.u32 %v9457, 7
        %v9459 = vsub.s32 0, %v9458
        %v9460 = vrot.slane %v8832, %v9459
        %v9461 = vlaneseq
        %v9462 = vshrl.u32 %v9461, 7
        %v9463 = vsub.s32 1, %v9462
        %v9464 = vrot.slane %v8832, %v9463
        %v9465 = vlaneseq
        %v9466 = vshrl.u32 %v9465, 7
        %v9467 = vsub.s32 2, %v9466
        %v9468 = vrot.slane %v8832, %v9467
        %v9469 = vlaneseq
        %v9470 = vshrl.u32 %v9469, 7
        %v9471 = vsub.s32 3, %v9470
        %v9472 = vrot.slane %v8832, %v9471
        %v9473 = vlaneseq
        %v9474 = vshrl.u32 %v9473, 7
        %v9475 = vsub.s32 4, %v9474
        %v9476 = vrot.slane %v8832, %v9475
        %v9477 = vlaneseq
        %v9478 = vshrl.u32 %v9477, 7
        %v9479 = vsub.s32 5, %v9478
        %v9480 = vrot.slane %v8832, %v9479
        %v9481 = vlaneseq
        %v9482 = vshrl.u32 %v9481, 7
        %v9483 = vsub.s32 6, %v9482
        %v9484 = vrot.slane %v8832, %v9483
        %v9485 = vlaneseq
        %v9486 = vshrl.u32 %v9485, 7
        %v9487 = vsub.s32 7, %v9486
        %v9488 = vrot.slane %v8832, %v9487
        %v9489 = vlaneseq
        %v9490 = vshrl.u32 %v9489, 7
        %v9491 = vsub.s32 0, %v9490
        %v9492 = vrot.slane %v8839, %v9491
        %v9493 = vlaneseq
        %v9494 = vshrl.u32 %v9493, 7
        %v9495 = vsub.s32 1, %v9494
        %v9496 = vrot.slane %v8839, %v9495
        %v9497 = vlaneseq
        %v9498 = vshrl.u32 %v9497, 7
        %v9499 = vsub.s32 2, %v9498
        %v9500 = vrot.slane %v8839, %v9499
        %v9501 = vlaneseq
        %v9502 = vshrl.u32 %v9501, 7
        %v9503 = vsub.s32 3, %v9502
        %v9504 = vrot.slane %v8839, %v9503
        %v9505 = vlaneseq
        %v9506 = vshrl.u32 %v9505, 7
        %v9507 = vsub.s32 4, %v9506
        %v9508 = vrot.slane %v8839, %v9507
        %v9509 = vlaneseq
        %v9510 = vshrl.u32 %v9509, 7
        %v9511 = vsub.s32 5, %v9510
        %v9512 = vrot.slane %v8839, %v9511
        %v9513 = vlaneseq
        %v9514 = vshrl.u32 %v9513, 7
        %v9515 = vsub.s32 6, %v9514
        %v9516 = vrot.slane %v8839, %v9515
        %v9517 = vlaneseq
        %v9518 = vshrl.u32 %v9517, 7
        %v9519 = vsub.s32 7, %v9518
        %v9520 = vrot.slane %v8839, %v9519
        %v9521 = vlaneseq
        %v9522 = vshrl.u32 %v9521, 7
        %v9523 = vsub.s32 0, %v9522
        %v9524 = vrot.slane %v8846, %v9523
        %v9525 = vlaneseq
        %v9526 = vshrl.u32 %v9525, 7
        %v9527 = vsub.s32 1, %v9526
        %v9528 = vrot.slane %v8846, %v9527
        %v9529 = vlaneseq
        %v9530 = vshrl.u32 %v9529, 7
        %v9531 = vsub.s32 2, %v9530
        %v9532 = vrot.slane %v8846, %v9531
        %v9533 = vlaneseq
        %v9534 = vshrl.u32 %v9533, 7
        %v9535 = vsub.s32 3, %v9534
        %v9536 = vrot.slane %v8846, %v9535
        %v9537 = vlaneseq
        %v9538 = vshrl.u32 %v9537, 7
        %v9539 = vsub.s32 4, %v9538
        %v9540 = vrot.slane %v8846, %v9539
        %v9541 = vlaneseq
        %v9542 = vshrl.u32 %v9541, 7
        %v9543 = vsub.s32 5, %v9542
        %v9544 = vrot.slane %v8846, %v9543
        %v9545 = vlaneseq
        %v9546 = vshrl.u32 %v9545, 7
        %v9547 = vsub.s32 6, %v9546
        %v9548 = vrot.slane %v8846, %v9547
        %v9549 = vlaneseq
        %v9550 = vshrl.u32 %v9549, 7
        %v9551 = vsub.s32 7, %v9550
        %v9552 = vrot.slane %v8846, %v9551
        %v9553 = vlaneseq
        %v9554 = vshrl.u32 %v9553, 7
        %v9555 = vsub.s32 0, %v9554
        %v9556 = vrot.slane %v8853, %v9555
        %v9557 = vlaneseq
        %v9558 = vshrl.u32 %v9557, 7
        %v9559 = vsub.s32 1, %v9558
        %v9560 = vrot.slane %v8853, %v9559
        %v9561 = vlaneseq
        %v9562 = vshrl.u32 %v9561, 7
        %v9563 = vsub.s32 2, %v9562
        %v9564 = vrot.slane %v8853, %v9563
        %v9565 = vlaneseq
        %v9566 = vshrl.u32 %v9565, 7
        %v9567 = vsub.s32 3, %v9566
        %v9568 = vrot.slane %v8853, %v9567
        %v9569 = vlaneseq
        %v9570 = vshrl.u32 %v9569, 7
        %v9571 = vsub.s32 4, %v9570
        %v9572 = vrot.slane %v8853, %v9571
        %v9573 = vlaneseq
        %v9574 = vshrl.u32 %v9573, 7
        %v9575 = vsub.s32 5, %v9574
        %v9576 = vrot.slane %v8853, %v9575
        %v9577 = vlaneseq
        %v9578 = vshrl.u32 %v9577, 7
        %v9579 = vsub.s32 6, %v9578
        %v9580 = vrot.slane %v8853, %v9579
        %v9581 = vlaneseq
        %v9582 = vshrl.u32 %v9581, 7
        %v9583 = vsub.s32 7, %v9582
        %v9584 = vrot.slane %v8853, %v9583
        %v9585 = vlaneseq
        %v9586 = vshrl.u32 %v9585, 7
        %v9587 = vsub.s32 0, %v9586
        %v9588 = vrot.slane %v8860, %v9587
        %v9589 = vlaneseq
        %v9590 = vshrl.u32 %v9589, 7
        %v9591 = vsub.s32 1, %v9590
        %v9592 = vrot.slane %v8860, %v9591
        %v9593 = vlaneseq
        %v9594 = vshrl.u32 %v9593, 7
        %v9595 = vsub.s32 2, %v9594
        %v9596 = vrot.slane %v8860, %v9595
        %v9597 = vlaneseq
        %v9598 = vshrl.u32 %v9597, 7
        %v9599 = vsub.s32 3, %v9598
        %v9600 = vrot.slane %v8860, %v9599
        %v9601 = vlaneseq
        %v9602 = vshrl.u32 %v9601, 7
        %v9603 = vsub.s32 4, %v9602
        %v9604 = vrot.slane %v8860, %v9603
        %v9605 = vlaneseq
        %v9606 = vshrl.u32 %v9605, 7
        %v9607 = vsub.s32 5, %v9606
        %v9608 = vrot.slane %v8860, %v9607
        %v9609 = vlaneseq
        %v9610 = vshrl.u32 %v9609, 7
        %v9611 = vsub.s32 6, %v9610
        %v9612 = vrot.slane %v8860, %v9611
        %v9613 = vlaneseq
        %v9614 = vshrl.u32 %v9613, 7
        %v9615 = vsub.s32 7, %v9614
        %v9616 = vrot.slane %v8860, %v9615
        %v9617 = vlaneseq
        %v9618 = vshrl.u32 %v9617, 7
        %v9619 = vsub.s32 0, %v9618
        %v9620 = vrot.slane %v8867, %v9619
        %v9621 = vlaneseq
        %v9622 = vshrl.u32 %v9621, 7
        %v9623 = vsub.s32 1, %v9622
        %v9624 = vrot.slane %v8867, %v9623
        %v9625 = vlaneseq
        %v9626 = vshrl.u32 %v9625, 7
        %v9627 = vsub.s32 2, %v9626
        %v9628 = vrot.slane %v8867, %v9627
        %v9629 = vlaneseq
        %v9630 = vshrl.u32 %v9629, 7
        %v9631 = vsub.s32 3, %v9630
        %v9632 = vrot.slane %v8867, %v9631
        %v9633 = vlaneseq
        %v9634 = vshrl.u32 %v9633, 7
        %v9635 = vsub.s32 4, %v9634
        %v9636 = vrot.slane %v8867, %v9635
        %v9637 = vlaneseq
        %v9638 = vshrl.u32 %v9637, 7
        %v9639 = vsub.s32 5, %v9638
        %v9640 = vrot.slane %v8867, %v9639
        %v9641 = vlaneseq
        %v9642 = vshrl.u32 %v9641, 7
        %v9643 = vsub.s32 6, %v9642
        %v9644 = vrot.slane %v8867, %v9643
        %v9645 = vlaneseq
        %v9646 = vshrl.u32 %v9645, 7
        %v9647 = vsub.s32 7, %v9646
        %v9648 = vrot.slane %v8867, %v9647
        %v9649 = vlaneseq
        %v9650 = vshrl.u32 %v9649, 7
        %v9651 = vsub.s32 0, %v9650
        %v9652 = vrot.slane %v8874, %v9651
        %v9653 = vlaneseq
        %v9654 = vshrl.u32 %v9653, 7
        %v9655 = vsub.s32 1, %v9654
        %v9656 = vrot.slane %v8874, %v9655
        %v9657 = vlaneseq
        %v9658 = vshrl.u32 %v9657, 7
        %v9659 = vsub.s32 2, %v9658
        %v9660 = vrot.slane %v8874, %v9659
        %v9661 = vlaneseq
        %v9662 = vshrl.u32 %v9661, 7
        %v9663 = vsub.s32 3, %v9662
        %v9664 = vrot.slane %v8874, %v9663
        %v9665 = vlaneseq
        %v9666 = vshrl.u32 %v9665, 7
        %v9667 = vsub.s32 4, %v9666
        %v9668 = vrot.slane %v8874, %v9667
        %v9669 = vlaneseq
        %v9670 = vshrl.u32 %v9669, 7
        %v9671 = vsub.s32 5, %v9670
        %v9672 = vrot.slane %v8874, %v9671
        %v9673 = vlaneseq
        %v9674 = vshrl.u32 %v9673, 7
        %v9675 = vsub.s32 6, %v9674
        %v9676 = vrot.slane %v8874, %v9675
        %v9677 = vlaneseq
        %v9678 = vshrl.u32 %v9677, 7
        %v9679 = vsub.s32 7, %v9678
        %v9680 = vrot.slane %v8874, %v9679
        %v9681 = vlaneseq
        %v9682 = vshrl.u32 %v9681, 7
        %v9683 = vsub.s32 0, %v9682
        %v9684 = vrot.slane %v8881, %v9683
        %v9685 = vlaneseq
        %v9686 = vshrl.u32 %v9685, 7
        %v9687 = vsub.s32 1, %v9686
        %v9688 = vrot.slane %v8881, %v9687
        %v9689 = vlaneseq
        %v9690 = vshrl.u32 %v9689, 7
        %v9691 = vsub.s32 2, %v9690
        %v9692 = vrot.slane %v8881, %v9691
        %v9693 = vlaneseq
        %v9694 = vshrl.u32 %v9693, 7
        %v9695 = vsub.s32 3, %v9694
        %v9696 = vrot.slane %v8881, %v9695
        %v9697 = vlaneseq
        %v9698 = vshrl.u32 %v9697, 7
        %v9699 = vsub.s32 4, %v9698
        %v9700 = vrot.slane %v8881, %v9699
        %v9701 = vlaneseq
        %v9702 = vshrl.u32 %v9701, 7
        %v9703 = vsub.s32 5, %v9702
        %v9704 = vrot.slane %v8881, %v9703
        %v9705 = vlaneseq
        %v9706 = vshrl.u32 %v9705, 7
        %v9707 = vsub.s32 6, %v9706
        %v9708 = vrot.slane %v8881, %v9707
        %v9709 = vlaneseq
        %v9710 = vshrl.u32 %v9709, 7
        %v9711 = vsub.s32 7, %v9710
        %v9712 = vrot.slane %v8881, %v9711
        %v9713 = vlaneseq
        %v9714 = vshrl.u32 %v9713, 7
        %v9715 = vsub.s32 0, %v9714
        %v9716 = vrot.slane %v8888, %v9715
        %v9717 = vlaneseq
        %v9718 = vshrl.u32 %v9717, 7
        %v9719 = vsub.s32 1, %v9718
        %v9720 = vrot.slane %v8888, %v9719
        %v9721 = vlaneseq
        %v9722 = vshrl.u32 %v9721, 7
        %v9723 = vsub.s32 2, %v9722
        %v9724 = vrot.slane %v8888, %v9723
        %v9725 = vlaneseq
        %v9726 = vshrl.u32 %v9725, 7
        %v9727 = vsub.s32 3, %v9726
        %v9728 = vrot.slane %v8888, %v9727
        %v9729 = vlaneseq
        %v9730 = vshrl.u32 %v9729, 7
        %v9731 = vsub.s32 4, %v9730
        %v9732 = vrot.slane %v8888, %v9731
        %v9733 = vlaneseq
        %v9734 = vshrl.u32 %v9733, 7
        %v9735 = vsub.s32 5, %v9734
        %v9736 = vrot.slane %v8888, %v9735
        %v9737 = vlaneseq
        %v9738 = vshrl.u32 %v9737, 7
        %v9739 = vsub.s32 6, %v9738
        %v9740 = vrot.slane %v8888, %v9739
        %v9741 = vlaneseq
        %v9742 = vshrl.u32 %v9741, 7
        %v9743 = vsub.s32 7, %v9742
        %v9744 = vrot.slane %v8888, %v9743
        %v9745 = vlaneseq
        %v9746 = vshrl.u32 %v9745, 7
        %v9747 = vsub.s32 0, %v9746
        %v9748 = vrot.slane %v8895, %v9747
        %v9749 = vlaneseq
        %v9750 = vshrl.u32 %v9749, 7
        %v9751 = vsub.s32 1, %v9750
        %v9752 = vrot.slane %v8895, %v9751
        %v9753 = vlaneseq
        %v9754 = vshrl.u32 %v9753, 7
        %v9755 = vsub.s32 2, %v9754
        %v9756 = vrot.slane %v8895, %v9755
        %v9757 = vlaneseq
        %v9758 = vshrl.u32 %v9757, 7
        %v9759 = vsub.s32 3, %v9758
        %v9760 = vrot.slane %v8895, %v9759
        %v9761 = vlaneseq
        %v9762 = vshrl.u32 %v9761, 7
        %v9763 = vsub.s32 4, %v9762
        %v9764 = vrot.slane %v8895, %v9763
        %v9765 = vlaneseq
        %v9766 = vshrl.u32 %v9765, 7
        %v9767 = vsub.s32 5, %v9766
        %v9768 = vrot.slane %v8895, %v9767
        %v9769 = vlaneseq
        %v9770 = vshrl.u32 %v9769, 7
        %v9771 = vsub.s32 6, %v9770
        %v9772 = vrot.slane %v8895, %v9771
        %v9773 = vlaneseq
        %v9774 = vshrl.u32 %v9773, 7
        %v9775 = vsub.s32 7, %v9774
        %v9776 = vrot.slane %v8895, %v9775
        %v9777 = vlaneseq
        %v9778 = vshrl.u32 %v9777, 7
        %v9779 = vsub.s32 0, %v9778
        %v9780 = vrot.slane %v8902, %v9779
        %v9781 = vlaneseq
        %v9782 = vshrl.u32 %v9781, 7
        %v9783 = vsub.s32 1, %v9782
        %v9784 = vrot.slane %v8902, %v9783
        %v9785 = vlaneseq
        %v9786 = vshrl.u32 %v9785, 7
        %v9787 = vsub.s32 2, %v9786
        %v9788 = vrot.slane %v8902, %v9787
        %v9789 = vlaneseq
        %v9790 = vshrl.u32 %v9789, 7
        %v9791 = vsub.s32 3, %v9790
        %v9792 = vrot.slane %v8902, %v9791
        %v9793 = vlaneseq
        %v9794 = vshrl.u32 %v9793, 7
        %v9795 = vsub.s32 4, %v9794
        %v9796 = vrot.slane %v8902, %v9795
        %v9797 = vlaneseq
        %v9798 = vshrl.u32 %v9797, 7
        %v9799 = vsub.s32 5, %v9798
        %v9800 = vrot.slane %v8902, %v9799
        %v9801 = vlaneseq
        %v9802 = vshrl.u32 %v9801, 7
        %v9803 = vsub.s32 6, %v9802
        %v9804 = vrot.slane %v8902, %v9803
        %v9805 = vlaneseq
        %v9806 = vshrl.u32 %v9805, 7
        %v9807 = vsub.s32 7, %v9806
        %v9808 = vrot.slane %v8902, %v9807
        %v9809 = vlaneseq
        %v9810 = vshrl.u32 %v9809, 7
        %v9811 = vsub.s32 0, %v9810
        %v9812 = vrot.slane %v8909, %v9811
        %v9813 = vlaneseq
        %v9814 = vshrl.u32 %v9813, 7
        %v9815 = vsub.s32 1, %v9814
        %v9816 = vrot.slane %v8909, %v9815
        %v9817 = vlaneseq
        %v9818 = vshrl.u32 %v9817, 7
        %v9819 = vsub.s32 2, %v9818
        %v9820 = vrot.slane %v8909, %v9819
        %v9821 = vlaneseq
        %v9822 = vshrl.u32 %v9821, 7
        %v9823 = vsub.s32 3, %v9822
        %v9824 = vrot.slane %v8909, %v9823
        %v9825 = vlaneseq
        %v9826 = vshrl.u32 %v9825, 7
        %v9827 = vsub.s32 4, %v9826
        %v9828 = vrot.slane %v8909, %v9827
        %v9829 = vlaneseq
        %v9830 = vshrl.u32 %v9829, 7
        %v9831 = vsub.s32 5, %v9830
        %v9832 = vrot.slane %v8909, %v9831
        %v9833 = vlaneseq
        %v9834 = vshrl.u32 %v9833, 7
        %v9835 = vsub.s32 6, %v9834
        %v9836 = vrot.slane %v8909, %v9835
        %v9837 = vlaneseq
        %v9838 = vshrl.u32 %v9837, 7
        %v9839 = vsub.s32 7, %v9838
        %v9840 = vrot.slane %v8909, %v9839
        %v9841 = vlaneseq
        %v9842 = vshrl.u32 %v9841, 7
        %v9843 = vsub.s32 0, %v9842
        %v9844 = vrot.slane %v8916, %v9843
        %v9845 = vlaneseq
        %v9846 = vshrl.u32 %v9845, 7
        %v9847 = vsub.s32 1, %v9846
        %v9848 = vrot.slane %v8916, %v9847
        %v9849 = vlaneseq
        %v9850 = vshrl.u32 %v9849, 7
        %v9851 = vsub.s32 2, %v9850
        %v9852 = vrot.slane %v8916, %v9851
        %v9853 = vlaneseq
        %v9854 = vshrl.u32 %v9853, 7
        %v9855 = vsub.s32 3, %v9854
        %v9856 = vrot.slane %v8916, %v9855
        %v9857 = vlaneseq
        %v9858 = vshrl.u32 %v9857, 7
        %v9859 = vsub.s32 4, %v9858
        %v9860 = vrot.slane %v8916, %v9859
        %v9861 = vlaneseq
        %v9862 = vshrl.u32 %v9861, 7
        %v9863 = vsub.s32 5, %v9862
        %v9864 = vrot.slane %v8916, %v9863
        %v9865 = vlaneseq
        %v9866 = vshrl.u32 %v9865, 7
        %v9867 = vsub.s32 6, %v9866
        %v9868 = vrot.slane %v8916, %v9867
        %v9869 = vlaneseq
        %v9870 = vshrl.u32 %v9869, 7
        %v9871 = vsub.s32 7, %v9870
        %v9872 = vrot.slane %v8916, %v9871
        %v9873 = vlaneseq
        %v9874 = vshrl.u32 %v9873, 7
        %v9875 = vsub.s32 0, %v9874
        %v9876 = vrot.slane %v8923, %v9875
        %v9877 = vlaneseq
        %v9878 = vshrl.u32 %v9877, 7
        %v9879 = vsub.s32 1, %v9878
        %v9880 = vrot.slane %v8923, %v9879
        %v9881 = vlaneseq
        %v9882 = vshrl.u32 %v9881, 7
        %v9883 = vsub.s32 2, %v9882
        %v9884 = vrot.slane %v8923, %v9883
        %v9885 = vlaneseq
        %v9886 = vshrl.u32 %v9885, 7
        %v9887 = vsub.s32 3, %v9886
        %v9888 = vrot.slane %v8923, %v9887
        %v9889 = vlaneseq
        %v9890 = vshrl.u32 %v9889, 7
        %v9891 = vsub.s32 4, %v9890
        %v9892 = vrot.slane %v8923, %v9891
        %v9893 = vlaneseq
        %v9894 = vshrl.u32 %v9893, 7
        %v9895 = vsub.s32 5, %v9894
        %v9896 = vrot.slane %v8923, %v9895
        %v9897 = vlaneseq
        %v9898 = vshrl.u32 %v9897, 7
        %v9899 = vsub.s32 6, %v9898
        %v9900 = vrot.slane %v8923, %v9899
        %v9901 = vlaneseq
        %v9902 = vshrl.u32 %v9901, 7
        %v9903 = vsub.s32 7, %v9902
        %v9904 = vrot.slane %v8923, %v9903
        %v9905 = vlaneseq
        %v9906 = vshrl.u32 %v9905, 7
        %v9907 = vsub.s32 0, %v9906
        %v9908 = vrot.slane %v8930, %v9907
        %v9909 = vlaneseq
        %v9910 = vshrl.u32 %v9909, 7
        %v9911 = vsub.s32 1, %v9910
        %v9912 = vrot.slane %v8930, %v9911
        %v9913 = vlaneseq
        %v9914 = vshrl.u32 %v9913, 7
        %v9915 = vsub.s32 2, %v9914
        %v9916 = vrot.slane %v8930, %v9915
        %v9917 = vlaneseq
        %v9918 = vshrl.u32 %v9917, 7
        %v9919 = vsub.s32 3, %v9918
        %v9920 = vrot.slane %v8930, %v9919
        %v9921 = vlaneseq
        %v9922 = vshrl.u32 %v9921, 7
        %v9923 = vsub.s32 4, %v9922
        %v9924 = vrot.slane %v8930, %v9923
        %v9925 = vlaneseq
        %v9926 = vshrl.u32 %v9925, 7
        %v9927 = vsub.s32 5, %v9926
        %v9928 = vrot.slane %v8930, %v9927
        %v9929 = vlaneseq
        %v9930 = vshrl.u32 %v9929, 7
        %v9931 = vsub.s32 6, %v9930
        %v9932 = vrot.slane %v8930, %v9931
        %v9933 = vlaneseq
        %v9934 = vshrl.u32 %v9933, 7
        %v9935 = vsub.s32 7, %v9934
        %v9936 = vrot.slane %v8930, %v9935
        %v9937 = vlaneseq
        %v9938 = vshrl.u32 %v9937, 7
        %v9939 = vsub.s32 0, %v9938
        %v9940 = vrot.slane %v8937, %v9939
        %v9941 = vlaneseq
        %v9942 = vshrl.u32 %v9941, 7
        %v9943 = vsub.s32 1, %v9942
        %v9944 = vrot.slane %v8937, %v9943
        %v9945 = vlaneseq
        %v9946 = vshrl.u32 %v9945, 7
        %v9947 = vsub.s32 2, %v9946
        %v9948 = vrot.slane %v8937, %v9947
        %v9949 = vlaneseq
        %v9950 = vshrl.u32 %v9949, 7
        %v9951 = vsub.s32 3, %v9950
        %v9952 = vrot.slane %v8937, %v9951
        %v9953 = vlaneseq
        %v9954 = vshrl.u32 %v9953, 7
        %v9955 = vsub.s32 4, %v9954
        %v9956 = vrot.slane %v8937, %v9955
        %v9957 = vlaneseq
        %v9958 = vshrl.u32 %v9957, 7
        %v9959 = vsub.s32 5, %v9958
        %v9960 = vrot.slane %v8937, %v9959
        %v9961 = vlaneseq
        %v9962 = vshrl.u32 %v9961, 7
        %v9963 = vsub.s32 6, %v9962
        %v9964 = vrot.slane %v8937, %v9963
        %v9965 = vlaneseq
        %v9966 = vshrl.u32 %v9965, 7
        %v9967 = vsub.s32 7, %v9966
        %v9968 = vrot.slane %v8937, %v9967
        %v9969 = vlaneseq
        %v9970 = vshrl.u32 %v9969, 7
        %v9971 = vsub.s32 0, %v9970
        %v9972 = vrot.slane %v8944, %v9971
        %v9973 = vlaneseq
        %v9974 = vshrl.u32 %v9973, 7
        %v9975 = vsub.s32 1, %v9974
        %v9976 = vrot.slane %v8944, %v9975
        %v9977 = vlaneseq
        %v9978 = vshrl.u32 %v9977, 7
        %v9979 = vsub.s32 2, %v9978
        %v9980 = vrot.slane %v8944, %v9979
        %v9981 = vlaneseq
        %v9982 = vshrl.u32 %v9981, 7
        %v9983 = vsub.s32 3, %v9982
        %v9984 = vrot.slane %v8944, %v9983
        %v9985 = vlaneseq
        %v9986 = vshrl.u32 %v9985, 7
        %v9987 = vsub.s32 4, %v9986
        %v9988 = vrot.slane %v8944, %v9987
        %v9989 = vlaneseq
        %v9990 = vshrl.u32 %v9989, 7
        %v9991 = vsub.s32 5, %v9990
        %v9992 = vrot.slane %v8944, %v9991
        %v9993 = vlaneseq
        %v9994 = vshrl.u32 %v9993, 7
        %v9995 = vsub.s32 6, %v9994
        %v9996 = vrot.slane %v8944, %v9995
        %v9997 = vlaneseq
        %v9998 = vshrl.u32 %v9997, 7
        %v9999 = vsub.s32 7, %v9998
        %v10000 = vrot.slane %v8944, %v9999
        %v10001 = vcombine.low %v8980, %v8984
        %v10002 = vcombine.low %v8988, %v8992
        %v10003 = vcombine.low %v8996, %v9000
        %v10004 = vcombine.low %v9004, %v9008
        %v10006 = vunpack.c.l.s4 1966171168
        %v10007 = vunpack.c.0.s8 %v10006
        %v10008 = vlaneseq
        %v10009 = vshrl.u32 %v10008, 7
        %v10010 = vsub.s32 %v10007, %v10009
        %v10011 = vrot.slane %v10001, %v10010
        %v10013 = vunpack.c.l.s4 1966171168
        %v10014 = vunpack.c.0.s8 %v10013
        %v10015 = vlaneseq
        %v10016 = vshrl.u32 %v10015, 7
        %v10017 = vsub.s32 %v10014, %v10016
        %v10018 = vrot.slane %v10002, %v10017
        %v10020 = vunpack.c.l.s4 1966171168
        %v10021 = vunpack.c.0.s8 %v10020
        %v10022 = vlaneseq
        %v10023 = vshrl.u32 %v10022, 7
        %v10024 = vsub.s32 %v10021, %v10023
        %v10025 = vrot.slane %v10003, %v10024
        %v10027 = vunpack.c.l.s4 1966171168
        %v10028 = vunpack.c.0.s8 %v10027
        %v10029 = vlaneseq
        %v10030 = vshrl.u32 %v10029, 7
        %v10031 = vsub.s32 %v10028, %v10030
        %v10032 = vrot.slane %v10004, %v10031
        %v10033 = vcombine.low %v10011, %v10018
        %v10034 = vcombine.low %v10025, %v10032
        %v10036 = vunpack.c.l.s4 1966171168
        %v10037 = vunpack.c.0.s8 %v10036
        %v10038 = vlaneseq
        %v10039 = vshrl.u32 %v10038, 7
        %v10040 = vsub.s32 %v10037, %v10039
        %v10041 = vrot.slane %v10033, %v10040
        %v10043 = vunpack.c.l.s4 1966171168
        %v10044 = vunpack.c.0.s8 %v10043
        %v10045 = vlaneseq
        %v10046 = vshrl.u32 %v10045, 7
        %v10047 = vsub.s32 %v10044, %v10046
        %v10048 = vrot.slane %v10034, %v10047
        %v10049 = vcombine.low %v10041, %v10048
        %v10050 = vcombine.low %v9012, %v9016
        %v10051 = vcombine.low %v9020, %v9024
        %v10052 = vcombine.low %v9028, %v9032
        %v10053 = vcombine.low %v9036, %v9040
        %v10055 = vunpack.c.l.s4 1966171168
        %v10056 = vunpack.c.0.s8 %v10055
        %v10057 = vlaneseq
        %v10058 = vshrl.u32 %v10057, 7
        %v10059 = vsub.s32 %v10056, %v10058
        %v10060 = vrot.slane %v10050, %v10059
        %v10062 = vunpack.c.l.s4 1966171168
        %v10063 = vunpack.c.0.s8 %v10062
        %v10064 = vlaneseq
        %v10065 = vshrl.u32 %v10064, 7
        %v10066 = vsub.s32 %v10063, %v10065
        %v10067 = vrot.slane %v10051, %v10066
        %v10069 = vunpack.c.l.s4 1966171168
        %v10070 = vunpack.c.0.s8 %v10069
        %v10071 = vlaneseq
        %v10072 = vshrl.u32 %v10071, 7
        %v10073 = vsub.s32 %v10070, %v10072
        %v10074 = vrot.slane %v10052, %v10073
        %v10076 = vunpack.c.l.s4 1966171168
        %v10077 = vunpack.c.0.s8 %v10076
        %v10078 = vlaneseq
        %v10079 = vshrl.u32 %v10078, 7
        %v10080 = vsub.s32 %v10077, %v10079
        %v10081 = vrot.slane %v10053, %v10080
        %v10082 = vcombine.low %v10060, %v10067
        %v10083 = vcombine.low %v10074, %v10081
        %v10085 = vunpack.c.l.s4 1966171168
        %v10086 = vunpack.c.0.s8 %v10085
        %v10087 = vlaneseq
        %v10088 = vshrl.u32 %v10087, 7
        %v10089 = vsub.s32 %v10086, %v10088
        %v10090 = vrot.slane %v10082, %v10089
        %v10092 = vunpack.c.l.s4 1966171168
        %v10093 = vunpack.c.0.s8 %v10092
        %v10094 = vlaneseq
        %v10095 = vshrl.u32 %v10094, 7
        %v10096 = vsub.s32 %v10093, %v10095
        %v10097 = vrot.slane %v10083, %v10096
        %v10098 = vcombine.low %v10090, %v10097
        %v10099 = vcombine.low %v9044, %v9048
        %v10100 = vcombine.low %v9052, %v9056
        %v10101 = vcombine.low %v9060, %v9064
        %v10102 = vcombine.low %v9068, %v9072
        %v10104 = vunpack.c.l.s4 1966171168
        %v10105 = vunpack.c.0.s8 %v10104
        %v10106 = vlaneseq
        %v10107 = vshrl.u32 %v10106, 7
        %v10108 = vsub.s32 %v10105, %v10107
        %v10109 = vrot.slane %v10099, %v10108
        %v10111 = vunpack.c.l.s4 1966171168
        %v10112 = vunpack.c.0.s8 %v10111
        %v10113 = vlaneseq
        %v10114 = vshrl.u32 %v10113, 7
        %v10115 = vsub.s32 %v10112, %v10114
        %v10116 = vrot.slane %v10100, %v10115
        %v10118 = vunpack.c.l.s4 1966171168
        %v10119 = vunpack.c.0.s8 %v10118
        %v10120 = vlaneseq
        %v10121 = vshrl.u32 %v10120, 7
        %v10122 = vsub.s32 %v10119, %v10121
        %v10123 = vrot.slane %v10101, %v10122
        %v10125 = vunpack.c.l.s4 1966171168
        %v10126 = vunpack.c.0.s8 %v10125
        %v10127 = vlaneseq
        %v10128 = vshrl.u32 %v10127, 7
        %v10129 = vsub.s32 %v10126, %v10128
        %v10130 = vrot.slane %v10102, %v10129
        %v10131 = vcombine.low %v10109, %v10116
        %v10132 = vcombine.low %v10123, %v10130
        %v10134 = vunpack.c.l.s4 1966171168
        %v10135 = vunpack.c.0.s8 %v10134
        %v10136 = vlaneseq
        %v10137 = vshrl.u32 %v10136, 7
        %v10138 = vsub.s32 %v10135, %v10137
        %v10139 = vrot.slane %v10131, %v10138
        %v10141 = vunpack.c.l.s4 1966171168
        %v10142 = vunpack.c.0.s8 %v10141
        %v10143 = vlaneseq
        %v10144 = vshrl.u32 %v10143, 7
        %v10145 = vsub.s32 %v10142, %v10144
        %v10146 = vrot.slane %v10132, %v10145
        %v10147 = vcombine.low %v10139, %v10146
        %v10148 = vcombine.low %v9076, %v9080
        %v10149 = vcombine.low %v9084, %v9088
        %v10150 = vcombine.low %v9092, %v9096
        %v10151 = vcombine.low %v9100, %v9104
        %v10153 = vunpack.c.l.s4 1966171168
        %v10154 = vunpack.c.0.s8 %v10153
        %v10155 = vlaneseq
        %v10156 = vshrl.u32 %v10155, 7
        %v10157 = vsub.s32 %v10154, %v10156
        %v10158 = vrot.slane %v10148, %v10157
        %v10160 = vunpack.c.l.s4 1966171168
        %v10161 = vunpack.c.0.s8 %v10160
        %v10162 = vlaneseq
        %v10163 = vshrl.u32 %v10162, 7
        %v10164 = vsub.s32 %v10161, %v10163
        %v10165 = vrot.slane %v10149, %v10164
        %v10167 = vunpack.c.l.s4 1966171168
        %v10168 = vunpack.c.0.s8 %v10167
        %v10169 = vlaneseq
        %v10170 = vshrl.u32 %v10169, 7
        %v10171 = vsub.s32 %v10168, %v10170
        %v10172 = vrot.slane %v10150, %v10171
        %v10174 = vunpack.c.l.s4 1966171168
        %v10175 = vunpack.c.0.s8 %v10174
        %v10176 = vlaneseq
        %v10177 = vshrl.u32 %v10176, 7
        %v10178 = vsub.s32 %v10175, %v10177
        %v10179 = vrot.slane %v10151, %v10178
        %v10180 = vcombine.low %v10158, %v10165
        %v10181 = vcombine.low %v10172, %v10179
        %v10183 = vunpack.c.l.s4 1966171168
        %v10184 = vunpack.c.0.s8 %v10183
        %v10185 = vlaneseq
        %v10186 = vshrl.u32 %v10185, 7
        %v10187 = vsub.s32 %v10184, %v10186
        %v10188 = vrot.slane %v10180, %v10187
        %v10190 = vunpack.c.l.s4 1966171168
        %v10191 = vunpack.c.0.s8 %v10190
        %v10192 = vlaneseq
        %v10193 = vshrl.u32 %v10192, 7
        %v10194 = vsub.s32 %v10191, %v10193
        %v10195 = vrot.slane %v10181, %v10194
        %v10196 = vcombine.low %v10188, %v10195
        %v10197 = vcombine.low %v9108, %v9112
        %v10198 = vcombine.low %v9116, %v9120
        %v10199 = vcombine.low %v9124, %v9128
        %v10200 = vcombine.low %v9132, %v9136
        %v10202 = vunpack.c.l.s4 1966171168
        %v10203 = vunpack.c.0.s8 %v10202
        %v10204 = vlaneseq
        %v10205 = vshrl.u32 %v10204, 7
        %v10206 = vsub.s32 %v10203, %v10205
        %v10207 = vrot.slane %v10197, %v10206
        %v10209 = vunpack.c.l.s4 1966171168
        %v10210 = vunpack.c.0.s8 %v10209
        %v10211 = vlaneseq
        %v10212 = vshrl.u32 %v10211, 7
        %v10213 = vsub.s32 %v10210, %v10212
        %v10214 = vrot.slane %v10198, %v10213
        %v10216 = vunpack.c.l.s4 1966171168
        %v10217 = vunpack.c.0.s8 %v10216
        %v10218 = vlaneseq
        %v10219 = vshrl.u32 %v10218, 7
        %v10220 = vsub.s32 %v10217, %v10219
        %v10221 = vrot.slane %v10199, %v10220
        %v10223 = vunpack.c.l.s4 1966171168
        %v10224 = vunpack.c.0.s8 %v10223
        %v10225 = vlaneseq
        %v10226 = vshrl.u32 %v10225, 7
        %v10227 = vsub.s32 %v10224, %v10226
        %v10228 = vrot.slane %v10200, %v10227
        %v10229 = vcombine.low %v10207, %v10214
        %v10230 = vcombine.low %v10221, %v10228
        %v10232 = vunpack.c.l.s4 1966171168
        %v10233 = vunpack.c.0.s8 %v10232
        %v10234 = vlaneseq
        %v10235 = vshrl.u32 %v10234, 7
        %v10236 = vsub.s32 %v10233, %v10235
        %v10237 = vrot.slane %v10229, %v10236
        %v10239 = vunpack.c.l.s4 1966171168
        %v10240 = vunpack.c.0.s8 %v10239
        %v10241 = vlaneseq
        %v10242 = vshrl.u32 %v10241, 7
        %v10243 = vsub.s32 %v10240, %v10242
        %v10244 = vrot.slane %v10230, %v10243
        %v10245 = vcombine.low %v10237, %v10244
        %v10246 = vcombine.low %v9140, %v9144
        %v10247 = vcombine.low %v9148, %v9152
        %v10248 = vcombine.low %v9156, %v9160
        %v10249 = vcombine.low %v9164, %v9168
        %v10251 = vunpack.c.l.s4 1966171168
        %v10252 = vunpack.c.0.s8 %v10251
        %v10253 = vlaneseq
        %v10254 = vshrl.u32 %v10253, 7
        %v10255 = vsub.s32 %v10252, %v10254
        %v10256 = vrot.slane %v10246, %v10255
        %v10258 = vunpack.c.l.s4 1966171168
        %v10259 = vunpack.c.0.s8 %v10258
        %v10260 = vlaneseq
        %v10261 = vshrl.u32 %v10260, 7
        %v10262 = vsub.s32 %v10259, %v10261
        %v10263 = vrot.slane %v10247, %v10262
        %v10265 = vunpack.c.l.s4 1966171168
        %v10266 = vunpack.c.0.s8 %v10265
        %v10267 = vlaneseq
        %v10268 = vshrl.u32 %v10267, 7
        %v10269 = vsub.s32 %v10266, %v10268
        %v10270 = vrot.slane %v10248, %v10269
        %v10272 = vunpack.c.l.s4 1966171168
        %v10273 = vunpack.c.0.s8 %v10272
        %v10274 = vlaneseq
        %v10275 = vshrl.u32 %v10274, 7
        %v10276 = vsub.s32 %v10273, %v10275
        %v10277 = vrot.slane %v10249, %v10276
        %v10278 = vcombine.low %v10256, %v10263
        %v10279 = vcombine.low %v10270, %v10277
        %v10281 = vunpack.c.l.s4 1966171168
        %v10282 = vunpack.c.0.s8 %v10281
        %v10283 = vlaneseq
        %v10284 = vshrl.u32 %v10283, 7
        %v10285 = vsub.s32 %v10282, %v10284
        %v10286 = vrot.slane %v10278, %v10285
        %v10288 = vunpack.c.l.s4 1966171168
        %v10289 = vunpack.c.0.s8 %v10288
        %v10290 = vlaneseq
        %v10291 = vshrl.u32 %v10290, 7
        %v10292 = vsub.s32 %v10289, %v10291
        %v10293 = vrot.slane %v10279, %v10292
        %v10294 = vcombine.low %v10286, %v10293
        %v10295 = vcombine.low %v9172, %v9176
        %v10296 = vcombine.low %v9180, %v9184
        %v10297 = vcombine.low %v9188, %v9192
        %v10298 = vcombine.low %v9196, %v9200
        %v10300 = vunpack.c.l.s4 1966171168
        %v10301 = vunpack.c.0.s8 %v10300
        %v10302 = vlaneseq
        %v10303 = vshrl.u32 %v10302, 7
        %v10304 = vsub.s32 %v10301, %v10303
        %v10305 = vrot.slane %v10295, %v10304
        %v10307 = vunpack.c.l.s4 1966171168
        %v10308 = vunpack.c.0.s8 %v10307
        %v10309 = vlaneseq
        %v10310 = vshrl.u32 %v10309, 7
        %v10311 = vsub.s32 %v10308, %v10310
        %v10312 = vrot.slane %v10296, %v10311
        %v10314 = vunpack.c.l.s4 1966171168
        %v10315 = vunpack.c.0.s8 %v10314
        %v10316 = vlaneseq
        %v10317 = vshrl.u32 %v10316, 7
        %v10318 = vsub.s32 %v10315, %v10317
        %v10319 = vrot.slane %v10297, %v10318
        %v10321 = vunpack.c.l.s4 1966171168
        %v10322 = vunpack.c.0.s8 %v10321
        %v10323 = vlaneseq
        %v10324 = vshrl.u32 %v10323, 7
        %v10325 = vsub.s32 %v10322, %v10324
        %v10326 = vrot.slane %v10298, %v10325
        %v10327 = vcombine.low %v10305, %v10312
        %v10328 = vcombine.low %v10319, %v10326
        %v10330 = vunpack.c.l.s4 1966171168
        %v10331 = vunpack.c.0.s8 %v10330
        %v10332 = vlaneseq
        %v10333 = vshrl.u32 %v10332, 7
        %v10334 = vsub.s32 %v10331, %v10333
        %v10335 = vrot.slane %v10327, %v10334
        %v10337 = vunpack.c.l.s4 1966171168
        %v10338 = vunpack.c.0.s8 %v10337
        %v10339 = vlaneseq
        %v10340 = vshrl.u32 %v10339, 7
        %v10341 = vsub.s32 %v10338, %v10340
        %v10342 = vrot.slane %v10328, %v10341
        %v10343 = vcombine.low %v10335, %v10342
        %v10344 = vcombine.low %v9204, %v9208
        %v10345 = vcombine.low %v9212, %v9216
        %v10346 = vcombine.low %v9220, %v9224
        %v10347 = vcombine.low %v9228, %v9232
        %v10349 = vunpack.c.l.s4 1966171168
        %v10350 = vunpack.c.0.s8 %v10349
        %v10351 = vlaneseq
        %v10352 = vshrl.u32 %v10351, 7
        %v10353 = vsub.s32 %v10350, %v10352
        %v10354 = vrot.slane %v10344, %v10353
        %v10356 = vunpack.c.l.s4 1966171168
        %v10357 = vunpack.c.0.s8 %v10356
        %v10358 = vlaneseq
        %v10359 = vshrl.u32 %v10358, 7
        %v10360 = vsub.s32 %v10357, %v10359
        %v10361 = vrot.slane %v10345, %v10360
        %v10363 = vunpack.c.l.s4 1966171168
        %v10364 = vunpack.c.0.s8 %v10363
        %v10365 = vlaneseq
        %v10366 = vshrl.u32 %v10365, 7
        %v10367 = vsub.s32 %v10364, %v10366
        %v10368 = vrot.slane %v10346, %v10367
        %v10370 = vunpack.c.l.s4 1966171168
        %v10371 = vunpack.c.0.s8 %v10370
        %v10372 = vlaneseq
        %v10373 = vshrl.u32 %v10372, 7
        %v10374 = vsub.s32 %v10371, %v10373
        %v10375 = vrot.slane %v10347, %v10374
        %v10376 = vcombine.low %v10354, %v10361
        %v10377 = vcombine.low %v10368, %v10375
        %v10379 = vunpack.c.l.s4 1966171168
        %v10380 = vunpack.c.0.s8 %v10379
        %v10381 = vlaneseq
        %v10382 = vshrl.u32 %v10381, 7
        %v10383 = vsub.s32 %v10380, %v10382
        %v10384 = vrot.slane %v10376, %v10383
        %v10386 = vunpack.c.l.s4 1966171168
        %v10387 = vunpack.c.0.s8 %v10386
        %v10388 = vlaneseq
        %v10389 = vshrl.u32 %v10388, 7
        %v10390 = vsub.s32 %v10387, %v10389
        %v10391 = vrot.slane %v10377, %v10390
        %v10392 = vcombine.low %v10384, %v10391
        %v10393 = vcombine.low %v9236, %v9240
        %v10394 = vcombine.low %v9244, %v9248
        %v10395 = vcombine.low %v9252, %v9256
        %v10396 = vcombine.low %v9260, %v9264
        %v10398 = vunpack.c.l.s4 1966171168
        %v10399 = vunpack.c.0.s8 %v10398
        %v10400 = vlaneseq
        %v10401 = vshrl.u32 %v10400, 7
        %v10402 = vsub.s32 %v10399, %v10401
        %v10403 = vrot.slane %v10393, %v10402
        %v10405 = vunpack.c.l.s4 1966171168
        %v10406 = vunpack.c.0.s8 %v10405
        %v10407 = vlaneseq
        %v10408 = vshrl.u32 %v10407, 7
        %v10409 = vsub.s32 %v10406, %v10408
        %v10410 = vrot.slane %v10394, %v10409
        %v10412 = vunpack.c.l.s4 1966171168
        %v10413 = vunpack.c.0.s8 %v10412
        %v10414 = vlaneseq
        %v10415 = vshrl.u32 %v10414, 7
        %v10416 = vsub.s32 %v10413, %v10415
        %v10417 = vrot.slane %v10395, %v10416
        %v10419 = vunpack.c.l.s4 1966171168
        %v10420 = vunpack.c.0.s8 %v10419
        %v10421 = vlaneseq
        %v10422 = vshrl.u32 %v10421, 7
        %v10423 = vsub.s32 %v10420, %v10422
        %v10424 = vrot.slane %v10396, %v10423
        %v10425 = vcombine.low %v10403, %v10410
        %v10426 = vcombine.low %v10417, %v10424
        %v10428 = vunpack.c.l.s4 1966171168
        %v10429 = vunpack.c.0.s8 %v10428
        %v10430 = vlaneseq
        %v10431 = vshrl.u32 %v10430, 7
        %v10432 = vsub.s32 %v10429, %v10431
        %v10433 = vrot.slane %v10425, %v10432
        %v10435 = vunpack.c.l.s4 1966171168
        %v10436 = vunpack.c.0.s8 %v10435
        %v10437 = vlaneseq
        %v10438 = vshrl.u32 %v10437, 7
        %v10439 = vsub.s32 %v10436, %v10438
        %v10440 = vrot.slane %v10426, %v10439
        %v10441 = vcombine.low %v10433, %v10440
        %v10442 = vcombine.low %v9268, %v9272
        %v10443 = vcombine.low %v9276, %v9280
        %v10444 = vcombine.low %v9284, %v9288
        %v10445 = vcombine.low %v9292, %v9296
        %v10447 = vunpack.c.l.s4 1966171168
        %v10448 = vunpack.c.0.s8 %v10447
        %v10449 = vlaneseq
        %v10450 = vshrl.u32 %v10449, 7
        %v10451 = vsub.s32 %v10448, %v10450
        %v10452 = vrot.slane %v10442, %v10451
        %v10454 = vunpack.c.l.s4 1966171168
        %v10455 = vunpack.c.0.s8 %v10454
        %v10456 = vlaneseq
        %v10457 = vshrl.u32 %v10456, 7
        %v10458 = vsub.s32 %v10455, %v10457
        %v10459 = vrot.slane %v10443, %v10458
        %v10461 = vunpack.c.l.s4 1966171168
        %v10462 = vunpack.c.0.s8 %v10461
        %v10463 = vlaneseq
        %v10464 = vshrl.u32 %v10463, 7
        %v10465 = vsub.s32 %v10462, %v10464
        %v10466 = vrot.slane %v10444, %v10465
        %v10468 = vunpack.c.l.s4 1966171168
        %v10469 = vunpack.c.0.s8 %v10468
        %v10470 = vlaneseq
        %v10471 = vshrl.u32 %v10470, 7
        %v10472 = vsub.s32 %v10469, %v10471
        %v10473 = vrot.slane %v10445, %v10472
        %v10474 = vcombine.low %v10452, %v10459
        %v10475 = vcombine.low %v10466, %v10473
        %v10477 = vunpack.c.l.s4 1966171168
        %v10478 = vunpack.c.0.s8 %v10477
        %v10479 = vlaneseq
        %v10480 = vshrl.u32 %v10479, 7
        %v10481 = vsub.s32 %v10478, %v10480
        %v10482 = vrot.slane %v10474, %v10481
        %v10484 = vunpack.c.l.s4 1966171168
        %v10485 = vunpack.c.0.s8 %v10484
        %v10486 = vlaneseq
        %v10487 = vshrl.u32 %v10486, 7
        %v10488 = vsub.s32 %v10485, %v10487
        %v10489 = vrot.slane %v10475, %v10488
        %v10490 = vcombine.low %v10482, %v10489
        %v10491 = vcombine.low %v9300, %v9304
        %v10492 = vcombine.low %v9308, %v9312
        %v10493 = vcombine.low %v9316, %v9320
        %v10494 = vcombine.low %v9324, %v9328
        %v10496 = vunpack.c.l.s4 1966171168
        %v10497 = vunpack.c.0.s8 %v10496
        %v10498 = vlaneseq
        %v10499 = vshrl.u32 %v10498, 7
        %v10500 = vsub.s32 %v10497, %v10499
        %v10501 = vrot.slane %v10491, %v10500
        %v10503 = vunpack.c.l.s4 1966171168
        %v10504 = vunpack.c.0.s8 %v10503
        %v10505 = vlaneseq
        %v10506 = vshrl.u32 %v10505, 7
        %v10507 = vsub.s32 %v10504, %v10506
        %v10508 = vrot.slane %v10492, %v10507
        %v10510 = vunpack.c.l.s4 1966171168
        %v10511 = vunpack.c.0.s8 %v10510
        %v10512 = vlaneseq
        %v10513 = vshrl.u32 %v10512, 7
        %v10514 = vsub.s32 %v10511, %v10513
        %v10515 = vrot.slane %v10493, %v10514
        %v10517 = vunpack.c.l.s4 1966171168
        %v10518 = vunpack.c.0.s8 %v10517
        %v10519 = vlaneseq
        %v10520 = vshrl.u32 %v10519, 7
        %v10521 = vsub.s32 %v10518, %v10520
        %v10522 = vrot.slane %v10494, %v10521
        %v10523 = vcombine.low %v10501, %v10508
        %v10524 = vcombine.low %v10515, %v10522
        %v10526 = vunpack.c.l.s4 1966171168
        %v10527 = vunpack.c.0.s8 %v10526
        %v10528 = vlaneseq
        %v10529 = vshrl.u32 %v10528, 7
        %v10530 = vsub.s32 %v10527, %v10529
        %v10531 = vrot.slane %v10523, %v10530
        %v10533 = vunpack.c.l.s4 1966171168
        %v10534 = vunpack.c.0.s8 %v10533
        %v10535 = vlaneseq
        %v10536 = vshrl.u32 %v10535, 7
        %v10537 = vsub.s32 %v10534, %v10536
        %v10538 = vrot.slane %v10524, %v10537
        %v10539 = vcombine.low %v10531, %v10538
        %v10540 = vcombine.low %v9332, %v9336
        %v10541 = vcombine.low %v9340, %v9344
        %v10542 = vcombine.low %v9348, %v9352
        %v10543 = vcombine.low %v9356, %v9360
        %v10545 = vunpack.c.l.s4 1966171168
        %v10546 = vunpack.c.0.s8 %v10545
        %v10547 = vlaneseq
        %v10548 = vshrl.u32 %v10547, 7
        %v10549 = vsub.s32 %v10546, %v10548
        %v10550 = vrot.slane %v10540, %v10549
        %v10552 = vunpack.c.l.s4 1966171168
        %v10553 = vunpack.c.0.s8 %v10552
        %v10554 = vlaneseq
        %v10555 = vshrl.u32 %v10554, 7
        %v10556 = vsub.s32 %v10553, %v10555
        %v10557 = vrot.slane %v10541, %v10556
        %v10559 = vunpack.c.l.s4 1966171168
        %v10560 = vunpack.c.0.s8 %v10559
        %v10561 = vlaneseq
        %v10562 = vshrl.u32 %v10561, 7
        %v10563 = vsub.s32 %v10560, %v10562
        %v10564 = vrot.slane %v10542, %v10563
        %v10566 = vunpack.c.l.s4 1966171168
        %v10567 = vunpack.c.0.s8 %v10566
        %v10568 = vlaneseq
        %v10569 = vshrl.u32 %v10568, 7
        %v10570 = vsub.s32 %v10567, %v10569
        %v10571 = vrot.slane %v10543, %v10570
        %v10572 = vcombine.low %v10550, %v10557
        %v10573 = vcombine.low %v10564, %v10571
        %v10575 = vunpack.c.l.s4 1966171168
        %v10576 = vunpack.c.0.s8 %v10575
        %v10577 = vlaneseq
        %v10578 = vshrl.u32 %v10577, 7
        %v10579 = vsub.s32 %v10576, %v10578
        %v10580 = vrot.slane %v10572, %v10579
        %v10582 = vunpack.c.l.s4 1966171168
        %v10583 = vunpack.c.0.s8 %v10582
        %v10584 = vlaneseq
        %v10585 = vshrl.u32 %v10584, 7
        %v10586 = vsub.s32 %v10583, %v10585
        %v10587 = vrot.slane %v10573, %v10586
        %v10588 = vcombine.low %v10580, %v10587
        %v10589 = vcombine.low %v9364, %v9368
        %v10590 = vcombine.low %v9372, %v9376
        %v10591 = vcombine.low %v9380, %v9384
        %v10592 = vcombine.low %v9388, %v9392
        %v10594 = vunpack.c.l.s4 1966171168
        %v10595 = vunpack.c.0.s8 %v10594
        %v10596 = vlaneseq
        %v10597 = vshrl.u32 %v10596, 7
        %v10598 = vsub.s32 %v10595, %v10597
        %v10599 = vrot.slane %v10589, %v10598
        %v10601 = vunpack.c.l.s4 1966171168
        %v10602 = vunpack.c.0.s8 %v10601
        %v10603 = vlaneseq
        %v10604 = vshrl.u32 %v10603, 7
        %v10605 = vsub.s32 %v10602, %v10604
        %v10606 = vrot.slane %v10590, %v10605
        %v10608 = vunpack.c.l.s4 1966171168
        %v10609 = vunpack.c.0.s8 %v10608
        %v10610 = vlaneseq
        %v10611 = vshrl.u32 %v10610, 7
        %v10612 = vsub.s32 %v10609, %v10611
        %v10613 = vrot.slane %v10591, %v10612
        %v10615 = vunpack.c.l.s4 1966171168
        %v10616 = vunpack.c.0.s8 %v10615
        %v10617 = vlaneseq
        %v10618 = vshrl.u32 %v10617, 7
        %v10619 = vsub.s32 %v10616, %v10618
        %v10620 = vrot.slane %v10592, %v10619
        %v10621 = vcombine.low %v10599, %v10606
        %v10622 = vcombine.low %v10613, %v10620
        %v10624 = vunpack.c.l.s4 1966171168
        %v10625 = vunpack.c.0.s8 %v10624
        %v10626 = vlaneseq
        %v10627 = vshrl.u32 %v10626, 7
        %v10628 = vsub.s32 %v10625, %v10627
        %v10629 = vrot.slane %v10621, %v10628
        %v10631 = vunpack.c.l.s4 1966171168
        %v10632 = vunpack.c.0.s8 %v10631
        %v10633 = vlaneseq
        %v10634 = vshrl.u32 %v10633, 7
        %v10635 = vsub.s32 %v10632, %v10634
        %v10636 = vrot.slane %v10622, %v10635
        %v10637 = vcombine.low %v10629, %v10636
        %v10638 = vcombine.low %v9396, %v9400
        %v10639 = vcombine.low %v9404, %v9408
        %v10640 = vcombine.low %v9412, %v9416
        %v10641 = vcombine.low %v9420, %v9424
        %v10643 = vunpack.c.l.s4 1966171168
        %v10644 = vunpack.c.0.s8 %v10643
        %v10645 = vlaneseq
        %v10646 = vshrl.u32 %v10645, 7
        %v10647 = vsub.s32 %v10644, %v10646
        %v10648 = vrot.slane %v10638, %v10647
        %v10650 = vunpack.c.l.s4 1966171168
        %v10651 = vunpack.c.0.s8 %v10650
        %v10652 = vlaneseq
        %v10653 = vshrl.u32 %v10652, 7
        %v10654 = vsub.s32 %v10651, %v10653
        %v10655 = vrot.slane %v10639, %v10654
        %v10657 = vunpack.c.l.s4 1966171168
        %v10658 = vunpack.c.0.s8 %v10657
        %v10659 = vlaneseq
        %v10660 = vshrl.u32 %v10659, 7
        %v10661 = vsub.s32 %v10658, %v10660
        %v10662 = vrot.slane %v10640, %v10661
        %v10664 = vunpack.c.l.s4 1966171168
        %v10665 = vunpack.c.0.s8 %v10664
        %v10666 = vlaneseq
        %v10667 = vshrl.u32 %v10666, 7
        %v10668 = vsub.s32 %v10665, %v10667
        %v10669 = vrot.slane %v10641, %v10668
        %v10670 = vcombine.low %v10648, %v10655
        %v10671 = vcombine.low %v10662, %v10669
        %v10673 = vunpack.c.l.s4 1966171168
        %v10674 = vunpack.c.0.s8 %v10673
        %v10675 = vlaneseq
        %v10676 = vshrl.u32 %v10675, 7
        %v10677 = vsub.s32 %v10674, %v10676
        %v10678 = vrot.slane %v10670, %v10677
        %v10680 = vunpack.c.l.s4 1966171168
        %v10681 = vunpack.c.0.s8 %v10680
        %v10682 = vlaneseq
        %v10683 = vshrl.u32 %v10682, 7
        %v10684 = vsub.s32 %v10681, %v10683
        %v10685 = vrot.slane %v10671, %v10684
        %v10686 = vcombine.low %v10678, %v10685
        %v10687 = vcombine.low %v9428, %v9432
        %v10688 = vcombine.low %v9436, %v9440
        %v10689 = vcombine.low %v9444, %v9448
        %v10690 = vcombine.low %v9452, %v9456
        %v10692 = vunpack.c.l.s4 1966171168
        %v10693 = vunpack.c.0.s8 %v10692
        %v10694 = vlaneseq
        %v10695 = vshrl.u32 %v10694, 7
        %v10696 = vsub.s32 %v10693, %v10695
        %v10697 = vrot.slane %v10687, %v10696
        %v10699 = vunpack.c.l.s4 1966171168
        %v10700 = vunpack.c.0.s8 %v10699
        %v10701 = vlaneseq
        %v10702 = vshrl.u32 %v10701, 7
        %v10703 = vsub.s32 %v10700, %v10702
        %v10704 = vrot.slane %v10688, %v10703
        %v10706 = vunpack.c.l.s4 1966171168
        %v10707 = vunpack.c.0.s8 %v10706
        %v10708 = vlaneseq
        %v10709 = vshrl.u32 %v10708, 7
        %v10710 = vsub.s32 %v10707, %v10709
        %v10711 = vrot.slane %v10689, %v10710
        %v10713 = vunpack.c.l.s4 1966171168
        %v10714 = vunpack.c.0.s8 %v10713
        %v10715 = vlaneseq
        %v10716 = vshrl.u32 %v10715, 7
        %v10717 = vsub.s32 %v10714, %v10716
        %v10718 = vrot.slane %v10690, %v10717
        %v10719 = vcombine.low %v10697, %v10704
        %v10720 = vcombine.low %v10711, %v10718
        %v10722 = vunpack.c.l.s4 1966171168
        %v10723 = vunpack.c.0.s8 %v10722
        %v10724 = vlaneseq
        %v10725 = vshrl.u32 %v10724, 7
        %v10726 = vsub.s32 %v10723, %v10725
        %v10727 = vrot.slane %v10719, %v10726
        %v10729 = vunpack.c.l.s4 1966171168
        %v10730 = vunpack.c.0.s8 %v10729
        %v10731 = vlaneseq
        %v10732 = vshrl.u32 %v10731, 7
        %v10733 = vsub.s32 %v10730, %v10732
        %v10734 = vrot.slane %v10720, %v10733
        %v10735 = vcombine.low %v10727, %v10734
        %v10736 = vcombine.low %v9460, %v9464
        %v10737 = vcombine.low %v9468, %v9472
        %v10738 = vcombine.low %v9476, %v9480
        %v10739 = vcombine.low %v9484, %v9488
        %v10741 = vunpack.c.l.s4 1966171168
        %v10742 = vunpack.c.0.s8 %v10741
        %v10743 = vlaneseq
        %v10744 = vshrl.u32 %v10743, 7
        %v10745 = vsub.s32 %v10742, %v10744
        %v10746 = vrot.slane %v10736, %v10745
        %v10748 = vunpack.c.l.s4 1966171168
        %v10749 = vunpack.c.0.s8 %v10748
        %v10750 = vlaneseq
        %v10751 = vshrl.u32 %v10750, 7
        %v10752 = vsub.s32 %v10749, %v10751
        %v10753 = vrot.slane %v10737, %v10752
        %v10755 = vunpack.c.l.s4 1966171168
        %v10756 = vunpack.c.0.s8 %v10755
        %v10757 = vlaneseq
        %v10758 = vshrl.u32 %v10757, 7
        %v10759 = vsub.s32 %v10756, %v10758
        %v10760 = vrot.slane %v10738, %v10759
        %v10762 = vunpack.c.l.s4 1966171168
        %v10763 = vunpack.c.0.s8 %v10762
        %v10764 = vlaneseq
        %v10765 = vshrl.u32 %v10764, 7
        %v10766 = vsub.s32 %v10763, %v10765
        %v10767 = vrot.slane %v10739, %v10766
        %v10768 = vcombine.low %v10746, %v10753
        %v10769 = vcombine.low %v10760, %v10767
        %v10771 = vunpack.c.l.s4 1966171168
        %v10772 = vunpack.c.0.s8 %v10771
        %v10773 = vlaneseq
        %v10774 = vshrl.u32 %v10773, 7
        %v10775 = vsub.s32 %v10772, %v10774
        %v10776 = vrot.slane %v10768, %v10775
        %v10778 = vunpack.c.l.s4 1966171168
        %v10779 = vunpack.c.0.s8 %v10778
        %v10780 = vlaneseq
        %v10781 = vshrl.u32 %v10780, 7
        %v10782 = vsub.s32 %v10779, %v10781
        %v10783 = vrot.slane %v10769, %v10782
        %v10784 = vcombine.low %v10776, %v10783
        %v10785 = vcombine.low %v9492, %v9496
        %v10786 = vcombine.low %v9500, %v9504
        %v10787 = vcombine.low %v9508, %v9512
        %v10788 = vcombine.low %v9516, %v9520
        %v10790 = vunpack.c.l.s4 1966171168
        %v10791 = vunpack.c.0.s8 %v10790
        %v10792 = vlaneseq
        %v10793 = vshrl.u32 %v10792, 7
        %v10794 = vsub.s32 %v10791, %v10793
        %v10795 = vrot.slane %v10785, %v10794
        %v10797 = vunpack.c.l.s4 1966171168
        %v10798 = vunpack.c.0.s8 %v10797
        %v10799 = vlaneseq
        %v10800 = vshrl.u32 %v10799, 7
        %v10801 = vsub.s32 %v10798, %v10800
        %v10802 = vrot.slane %v10786, %v10801
        %v10804 = vunpack.c.l.s4 1966171168
        %v10805 = vunpack.c.0.s8 %v10804
        %v10806 = vlaneseq
        %v10807 = vshrl.u32 %v10806, 7
        %v10808 = vsub.s32 %v10805, %v10807
        %v10809 = vrot.slane %v10787, %v10808
        %v10811 = vunpack.c.l.s4 1966171168
        %v10812 = vunpack.c.0.s8 %v10811
        %v10813 = vlaneseq
        %v10814 = vshrl.u32 %v10813, 7
        %v10815 = vsub.s32 %v10812, %v10814
        %v10816 = vrot.slane %v10788, %v10815
        %v10817 = vcombine.low %v10795, %v10802
        %v10818 = vcombine.low %v10809, %v10816
        %v10820 = vunpack.c.l.s4 1966171168
        %v10821 = vunpack.c.0.s8 %v10820
        %v10822 = vlaneseq
        %v10823 = vshrl.u32 %v10822, 7
        %v10824 = vsub.s32 %v10821, %v10823
        %v10825 = vrot.slane %v10817, %v10824
        %v10827 = vunpack.c.l.s4 1966171168
        %v10828 = vunpack.c.0.s8 %v10827
        %v10829 = vlaneseq
        %v10830 = vshrl.u32 %v10829, 7
        %v10831 = vsub.s32 %v10828, %v10830
        %v10832 = vrot.slane %v10818, %v10831
        %v10833 = vcombine.low %v10825, %v10832
        %v10834 = vcombine.low %v9524, %v9528
        %v10835 = vcombine.low %v9532, %v9536
        %v10836 = vcombine.low %v9540, %v9544
        %v10837 = vcombine.low %v9548, %v9552
        %v10839 = vunpack.c.l.s4 1966171168
        %v10840 = vunpack.c.0.s8 %v10839
        %v10841 = vlaneseq
        %v10842 = vshrl.u32 %v10841, 7
        %v10843 = vsub.s32 %v10840, %v10842
        %v10844 = vrot.slane %v10834, %v10843
        %v10846 = vunpack.c.l.s4 1966171168
        %v10847 = vunpack.c.0.s8 %v10846
        %v10848 = vlaneseq
        %v10849 = vshrl.u32 %v10848, 7
        %v10850 = vsub.s32 %v10847, %v10849
        %v10851 = vrot.slane %v10835, %v10850
        %v10853 = vunpack.c.l.s4 1966171168
        %v10854 = vunpack.c.0.s8 %v10853
        %v10855 = vlaneseq
        %v10856 = vshrl.u32 %v10855, 7
        %v10857 = vsub.s32 %v10854, %v10856
        %v10858 = vrot.slane %v10836, %v10857
        %v10860 = vunpack.c.l.s4 1966171168
        %v10861 = vunpack.c.0.s8 %v10860
        %v10862 = vlaneseq
        %v10863 = vshrl.u32 %v10862, 7
        %v10864 = vsub.s32 %v10861, %v10863
        %v10865 = vrot.slane %v10837, %v10864
        %v10866 = vcombine.low %v10844, %v10851
        %v10867 = vcombine.low %v10858, %v10865
        %v10869 = vunpack.c.l.s4 1966171168
        %v10870 = vunpack.c.0.s8 %v10869
        %v10871 = vlaneseq
        %v10872 = vshrl.u32 %v10871, 7
        %v10873 = vsub.s32 %v10870, %v10872
        %v10874 = vrot.slane %v10866, %v10873
        %v10876 = vunpack.c.l.s4 1966171168
        %v10877 = vunpack.c.0.s8 %v10876
        %v10878 = vlaneseq
        %v10879 = vshrl.u32 %v10878, 7
        %v10880 = vsub.s32 %v10877, %v10879
        %v10881 = vrot.slane %v10867, %v10880
        %v10882 = vcombine.low %v10874, %v10881
        %v10883 = vcombine.low %v9556, %v9560
        %v10884 = vcombine.low %v9564, %v9568
        %v10885 = vcombine.low %v9572, %v9576
        %v10886 = vcombine.low %v9580, %v9584
        %v10888 = vunpack.c.l.s4 1966171168
        %v10889 = vunpack.c.0.s8 %v10888
        %v10890 = vlaneseq
        %v10891 = vshrl.u32 %v10890, 7
        %v10892 = vsub.s32 %v10889, %v10891
        %v10893 = vrot.slane %v10883, %v10892
        %v10895 = vunpack.c.l.s4 1966171168
        %v10896 = vunpack.c.0.s8 %v10895
        %v10897 = vlaneseq
        %v10898 = vshrl.u32 %v10897, 7
        %v10899 = vsub.s32 %v10896, %v10898
        %v10900 = vrot.slane %v10884, %v10899
        %v10902 = vunpack.c.l.s4 1966171168
        %v10903 = vunpack.c.0.s8 %v10902
        %v10904 = vlaneseq
        %v10905 = vshrl.u32 %v10904, 7
        %v10906 = vsub.s32 %v10903, %v10905
        %v10907 = vrot.slane %v10885, %v10906
        %v10909 = vunpack.c.l.s4 1966171168
        %v10910 = vunpack.c.0.s8 %v10909
        %v10911 = vlaneseq
        %v10912 = vshrl.u32 %v10911, 7
        %v10913 = vsub.s32 %v10910, %v10912
        %v10914 = vrot.slane %v10886, %v10913
        %v10915 = vcombine.low %v10893, %v10900
        %v10916 = vcombine.low %v10907, %v10914
        %v10918 = vunpack.c.l.s4 1966171168
        %v10919 = vunpack.c.0.s8 %v10918
        %v10920 = vlaneseq
        %v10921 = vshrl.u32 %v10920, 7
        %v10922 = vsub.s32 %v10919, %v10921
        %v10923 = vrot.slane %v10915, %v10922
        %v10925 = vunpack.c.l.s4 1966171168
        %v10926 = vunpack.c.0.s8 %v10925
        %v10927 = vlaneseq
        %v10928 = vshrl.u32 %v10927, 7
        %v10929 = vsub.s32 %v10926, %v10928
        %v10930 = vrot.slane %v10916, %v10929
        %v10931 = vcombine.low %v10923, %v10930
        %v10932 = vcombine.low %v9588, %v9592
        %v10933 = vcombine.low %v9596, %v9600
        %v10934 = vcombine.low %v9604, %v9608
        %v10935 = vcombine.low %v9612, %v9616
        %v10937 = vunpack.c.l.s4 1966171168
        %v10938 = vunpack.c.0.s8 %v10937
        %v10939 = vlaneseq
        %v10940 = vshrl.u32 %v10939, 7
        %v10941 = vsub.s32 %v10938, %v10940
        %v10942 = vrot.slane %v10932, %v10941
        %v10944 = vunpack.c.l.s4 1966171168
        %v10945 = vunpack.c.0.s8 %v10944
        %v10946 = vlaneseq
        %v10947 = vshrl.u32 %v10946, 7
        %v10948 = vsub.s32 %v10945, %v10947
        %v10949 = vrot.slane %v10933, %v10948
        %v10951 = vunpack.c.l.s4 1966171168
        %v10952 = vunpack.c.0.s8 %v10951
        %v10953 = vlaneseq
        %v10954 = vshrl.u32 %v10953, 7
        %v10955 = vsub.s32 %v10952, %v10954
        %v10956 = vrot.slane %v10934, %v10955
        %v10958 = vunpack.c.l.s4 1966171168
        %v10959 = vunpack.c.0.s8 %v10958
        %v10960 = vlaneseq
        %v10961 = vshrl.u32 %v10960, 7
        %v10962 = vsub.s32 %v10959, %v10961
        %v10963 = vrot.slane %v10935, %v10962
        %v10964 = vcombine.low %v10942, %v10949
        %v10965 = vcombine.low %v10956, %v10963
        %v10967 = vunpack.c.l.s4 1966171168
        %v10968 = vunpack.c.0.s8 %v10967
        %v10969 = vlaneseq
        %v10970 = vshrl.u32 %v10969, 7
        %v10971 = vsub.s32 %v10968, %v10970
        %v10972 = vrot.slane %v10964, %v10971
        %v10974 = vunpack.c.l.s4 1966171168
        %v10975 = vunpack.c.0.s8 %v10974
        %v10976 = vlaneseq
        %v10977 = vshrl.u32 %v10976, 7
        %v10978 = vsub.s32 %v10975, %v10977
        %v10979 = vrot.slane %v10965, %v10978
        %v10980 = vcombine.low %v10972, %v10979
        %v10981 = vcombine.low %v9620, %v9624
        %v10982 = vcombine.low %v9628, %v9632
        %v10983 = vcombine.low %v9636, %v9640
        %v10984 = vcombine.low %v9644, %v9648
        %v10986 = vunpack.c.l.s4 1966171168
        %v10987 = vunpack.c.0.s8 %v10986
        %v10988 = vlaneseq
        %v10989 = vshrl.u32 %v10988, 7
        %v10990 = vsub.s32 %v10987, %v10989
        %v10991 = vrot.slane %v10981, %v10990
        %v10993 = vunpack.c.l.s4 1966171168
        %v10994 = vunpack.c.0.s8 %v10993
        %v10995 = vlaneseq
        %v10996 = vshrl.u32 %v10995, 7
        %v10997 = vsub.s32 %v10994, %v10996
        %v10998 = vrot.slane %v10982, %v10997
        %v11000 = vunpack.c.l.s4 1966171168
        %v11001 = vunpack.c.0.s8 %v11000
        %v11002 = vlaneseq
        %v11003 = vshrl.u32 %v11002, 7
        %v11004 = vsub.s32 %v11001, %v11003
        %v11005 = vrot.slane %v10983, %v11004
        %v11007 = vunpack.c.l.s4 1966171168
        %v11008 = vunpack.c.0.s8 %v11007
        %v11009 = vlaneseq
        %v11010 = vshrl.u32 %v11009, 7
        %v11011 = vsub.s32 %v11008, %v11010
        %v11012 = vrot.slane %v10984, %v11011
        %v11013 = vcombine.low %v10991, %v10998
        %v11014 = vcombine.low %v11005, %v11012
        %v11016 = vunpack.c.l.s4 1966171168
        %v11017 = vunpack.c.0.s8 %v11016
        %v11018 = vlaneseq
        %v11019 = vshrl.u32 %v11018, 7
        %v11020 = vsub.s32 %v11017, %v11019
        %v11021 = vrot.slane %v11013, %v11020
        %v11023 = vunpack.c.l.s4 1966171168
        %v11024 = vunpack.c.0.s8 %v11023
        %v11025 = vlaneseq
        %v11026 = vshrl.u32 %v11025, 7
        %v11027 = vsub.s32 %v11024, %v11026
        %v11028 = vrot.slane %v11014, %v11027
        %v11029 = vcombine.low %v11021, %v11028
        %v11030 = vcombine.low %v9652, %v9656
        %v11031 = vcombine.low %v9660, %v9664
        %v11032 = vcombine.low %v9668, %v9672
        %v11033 = vcombine.low %v9676, %v9680
        %v11035 = vunpack.c.l.s4 1966171168
        %v11036 = vunpack.c.0.s8 %v11035
        %v11037 = vlaneseq
        %v11038 = vshrl.u32 %v11037, 7
        %v11039 = vsub.s32 %v11036, %v11038
        %v11040 = vrot.slane %v11030, %v11039
        %v11042 = vunpack.c.l.s4 1966171168
        %v11043 = vunpack.c.0.s8 %v11042
        %v11044 = vlaneseq
        %v11045 = vshrl.u32 %v11044, 7
        %v11046 = vsub.s32 %v11043, %v11045
        %v11047 = vrot.slane %v11031, %v11046
        %v11049 = vunpack.c.l.s4 1966171168
        %v11050 = vunpack.c.0.s8 %v11049
        %v11051 = vlaneseq
        %v11052 = vshrl.u32 %v11051, 7
        %v11053 = vsub.s32 %v11050, %v11052
        %v11054 = vrot.slane %v11032, %v11053
        %v11056 = vunpack.c.l.s4 1966171168
        %v11057 = vunpack.c.0.s8 %v11056
        %v11058 = vlaneseq
        %v11059 = vshrl.u32 %v11058, 7
        %v11060 = vsub.s32 %v11057, %v11059
        %v11061 = vrot.slane %v11033, %v11060
        %v11062 = vcombine.low %v11040, %v11047
        %v11063 = vcombine.low %v11054, %v11061
        %v11065 = vunpack.c.l.s4 1966171168
        %v11066 = vunpack.c.0.s8 %v11065
        %v11067 = vlaneseq
        %v11068 = vshrl.u32 %v11067, 7
        %v11069 = vsub.s32 %v11066, %v11068
        %v11070 = vrot.slane %v11062, %v11069
        %v11072 = vunpack.c.l.s4 1966171168
        %v11073 = vunpack.c.0.s8 %v11072
        %v11074 = vlaneseq
        %v11075 = vshrl.u32 %v11074, 7
        %v11076 = vsub.s32 %v11073, %v11075
        %v11077 = vrot.slane %v11063, %v11076
        %v11078 = vcombine.low %v11070, %v11077
        %v11079 = vcombine.low %v9684, %v9688
        %v11080 = vcombine.low %v9692, %v9696
        %v11081 = vcombine.low %v9700, %v9704
        %v11082 = vcombine.low %v9708, %v9712
        %v11084 = vunpack.c.l.s4 1966171168
        %v11085 = vunpack.c.0.s8 %v11084
        %v11086 = vlaneseq
        %v11087 = vshrl.u32 %v11086, 7
        %v11088 = vsub.s32 %v11085, %v11087
        %v11089 = vrot.slane %v11079, %v11088
        %v11091 = vunpack.c.l.s4 1966171168
        %v11092 = vunpack.c.0.s8 %v11091
        %v11093 = vlaneseq
        %v11094 = vshrl.u32 %v11093, 7
        %v11095 = vsub.s32 %v11092, %v11094
        %v11096 = vrot.slane %v11080, %v11095
        %v11098 = vunpack.c.l.s4 1966171168
        %v11099 = vunpack.c.0.s8 %v11098
        %v11100 = vlaneseq
        %v11101 = vshrl.u32 %v11100, 7
        %v11102 = vsub.s32 %v11099, %v11101
        %v11103 = vrot.slane %v11081, %v11102
        %v11105 = vunpack.c.l.s4 1966171168
        %v11106 = vunpack.c.0.s8 %v11105
        %v11107 = vlaneseq
        %v11108 = vshrl.u32 %v11107, 7
        %v11109 = vsub.s32 %v11106, %v11108
        %v11110 = vrot.slane %v11082, %v11109
        %v11111 = vcombine.low %v11089, %v11096
        %v11112 = vcombine.low %v11103, %v11110
        %v11114 = vunpack.c.l.s4 1966171168
        %v11115 = vunpack.c.0.s8 %v11114
        %v11116 = vlaneseq
        %v11117 = vshrl.u32 %v11116, 7
        %v11118 = vsub.s32 %v11115, %v11117
        %v11119 = vrot.slane %v11111, %v11118
        %v11121 = vunpack.c.l.s4 1966171168
        %v11122 = vunpack.c.0.s8 %v11121
        %v11123 = vlaneseq
        %v11124 = vshrl.u32 %v11123, 7
        %v11125 = vsub.s32 %v11122, %v11124
        %v11126 = vrot.slane %v11112, %v11125
        %v11127 = vcombine.low %v11119, %v11126
        %v11128 = vcombine.low %v9716, %v9720
        %v11129 = vcombine.low %v9724, %v9728
        %v11130 = vcombine.low %v9732, %v9736
        %v11131 = vcombine.low %v9740, %v9744
        %v11133 = vunpack.c.l.s4 1966171168
        %v11134 = vunpack.c.0.s8 %v11133
        %v11135 = vlaneseq
        %v11136 = vshrl.u32 %v11135, 7
        %v11137 = vsub.s32 %v11134, %v11136
        %v11138 = vrot.slane %v11128, %v11137
        %v11140 = vunpack.c.l.s4 1966171168
        %v11141 = vunpack.c.0.s8 %v11140
        %v11142 = vlaneseq
        %v11143 = vshrl.u32 %v11142, 7
        %v11144 = vsub.s32 %v11141, %v11143
        %v11145 = vrot.slane %v11129, %v11144
        %v11147 = vunpack.c.l.s4 1966171168
        %v11148 = vunpack.c.0.s8 %v11147
        %v11149 = vlaneseq
        %v11150 = vshrl.u32 %v11149, 7
        %v11151 = vsub.s32 %v11148, %v11150
        %v11152 = vrot.slane %v11130, %v11151
        %v11154 = vunpack.c.l.s4 1966171168
        %v11155 = vunpack.c.0.s8 %v11154
        %v11156 = vlaneseq
        %v11157 = vshrl.u32 %v11156, 7
        %v11158 = vsub.s32 %v11155, %v11157
        %v11159 = vrot.slane %v11131, %v11158
        %v11160 = vcombine.low %v11138, %v11145
        %v11161 = vcombine.low %v11152, %v11159
        %v11163 = vunpack.c.l.s4 1966171168
        %v11164 = vunpack.c.0.s8 %v11163
        %v11165 = vlaneseq
        %v11166 = vshrl.u32 %v11165, 7
        %v11167 = vsub.s32 %v11164, %v11166
        %v11168 = vrot.slane %v11160, %v11167
        %v11170 = vunpack.c.l.s4 1966171168
        %v11171 = vunpack.c.0.s8 %v11170
        %v11172 = vlaneseq
        %v11173 = vshrl.u32 %v11172, 7
        %v11174 = vsub.s32 %v11171, %v11173
        %v11175 = vrot.slane %v11161, %v11174
        %v11176 = vcombine.low %v11168, %v11175
        %v11177 = vcombine.low %v9748, %v9752
        %v11178 = vcombine.low %v9756, %v9760
        %v11179 = vcombine.low %v9764, %v9768
        %v11180 = vcombine.low %v9772, %v9776
        %v11182 = vunpack.c.l.s4 1966171168
        %v11183 = vunpack.c.0.s8 %v11182
        %v11184 = vlaneseq
        %v11185 = vshrl.u32 %v11184, 7
        %v11186 = vsub.s32 %v11183, %v11185
        %v11187 = vrot.slane %v11177, %v11186
        %v11189 = vunpack.c.l.s4 1966171168
        %v11190 = vunpack.c.0.s8 %v11189
        %v11191 = vlaneseq
        %v11192 = vshrl.u32 %v11191, 7
        %v11193 = vsub.s32 %v11190, %v11192
        %v11194 = vrot.slane %v11178, %v11193
        %v11196 = vunpack.c.l.s4 1966171168
        %v11197 = vunpack.c.0.s8 %v11196
        %v11198 = vlaneseq
        %v11199 = vshrl.u32 %v11198, 7
        %v11200 = vsub.s32 %v11197, %v11199
        %v11201 = vrot.slane %v11179, %v11200
        %v11203 = vunpack.c.l.s4 1966171168
        %v11204 = vunpack.c.0.s8 %v11203
        %v11205 = vlaneseq
        %v11206 = vshrl.u32 %v11205, 7
        %v11207 = vsub.s32 %v11204, %v11206
        %v11208 = vrot.slane %v11180, %v11207
        %v11209 = vcombine.low %v11187, %v11194
        %v11210 = vcombine.low %v11201, %v11208
        %v11212 = vunpack.c.l.s4 1966171168
        %v11213 = vunpack.c.0.s8 %v11212
        %v11214 = vlaneseq
        %v11215 = vshrl.u32 %v11214, 7
        %v11216 = vsub.s32 %v11213, %v11215
        %v11217 = vrot.slane %v11209, %v11216
        %v11219 = vunpack.c.l.s4 1966171168
        %v11220 = vunpack.c.0.s8 %v11219
        %v11221 = vlaneseq
        %v11222 = vshrl.u32 %v11221, 7
        %v11223 = vsub.s32 %v11220, %v11222
        %v11224 = vrot.slane %v11210, %v11223
        %v11225 = vcombine.low %v11217, %v11224
        %v11226 = vcombine.low %v9780, %v9784
        %v11227 = vcombine.low %v9788, %v9792
        %v11228 = vcombine.low %v9796, %v9800
        %v11229 = vcombine.low %v9804, %v9808
        %v11231 = vunpack.c.l.s4 1966171168
        %v11232 = vunpack.c.0.s8 %v11231
        %v11233 = vlaneseq
        %v11234 = vshrl.u32 %v11233, 7
        %v11235 = vsub.s32 %v11232, %v11234
        %v11236 = vrot.slane %v11226, %v11235
        %v11238 = vunpack.c.l.s4 1966171168
        %v11239 = vunpack.c.0.s8 %v11238
        %v11240 = vlaneseq
        %v11241 = vshrl.u32 %v11240, 7
        %v11242 = vsub.s32 %v11239, %v11241
        %v11243 = vrot.slane %v11227, %v11242
        %v11245 = vunpack.c.l.s4 1966171168
        %v11246 = vunpack.c.0.s8 %v11245
        %v11247 = vlaneseq
        %v11248 = vshrl.u32 %v11247, 7
        %v11249 = vsub.s32 %v11246, %v11248
        %v11250 = vrot.slane %v11228, %v11249
        %v11252 = vunpack.c.l.s4 1966171168
        %v11253 = vunpack.c.0.s8 %v11252
        %v11254 = vlaneseq
        %v11255 = vshrl.u32 %v11254, 7
        %v11256 = vsub.s32 %v11253, %v11255
        %v11257 = vrot.slane %v11229, %v11256
        %v11258 = vcombine.low %v11236, %v11243
        %v11259 = vcombine.low %v11250, %v11257
        %v11261 = vunpack.c.l.s4 1966171168
        %v11262 = vunpack.c.0.s8 %v11261
        %v11263 = vlaneseq
        %v11264 = vshrl.u32 %v11263, 7
        %v11265 = vsub.s32 %v11262, %v11264
        %v11266 = vrot.slane %v11258, %v11265
        %v11268 = vunpack.c.l.s4 1966171168
        %v11269 = vunpack.c.0.s8 %v11268
        %v11270 = vlaneseq
        %v11271 = vshrl.u32 %v11270, 7
        %v11272 = vsub.s32 %v11269, %v11271
        %v11273 = vrot.slane %v11259, %v11272
        %v11274 = vcombine.low %v11266, %v11273
        %v11275 = vcombine.low %v9812, %v9816
        %v11276 = vcombine.low %v9820, %v9824
        %v11277 = vcombine.low %v9828, %v9832
        %v11278 = vcombine.low %v9836, %v9840
        %v11280 = vunpack.c.l.s4 1966171168
        %v11281 = vunpack.c.0.s8 %v11280
        %v11282 = vlaneseq
        %v11283 = vshrl.u32 %v11282, 7
        %v11284 = vsub.s32 %v11281, %v11283
        %v11285 = vrot.slane %v11275, %v11284
        %v11287 = vunpack.c.l.s4 1966171168
        %v11288 = vunpack.c.0.s8 %v11287
        %v11289 = vlaneseq
        %v11290 = vshrl.u32 %v11289, 7
        %v11291 = vsub.s32 %v11288, %v11290
        %v11292 = vrot.slane %v11276, %v11291
        %v11294 = vunpack.c.l.s4 1966171168
        %v11295 = vunpack.c.0.s8 %v11294
        %v11296 = vlaneseq
        %v11297 = vshrl.u32 %v11296, 7
        %v11298 = vsub.s32 %v11295, %v11297
        %v11299 = vrot.slane %v11277, %v11298
        %v11301 = vunpack.c.l.s4 1966171168
        %v11302 = vunpack.c.0.s8 %v11301
        %v11303 = vlaneseq
        %v11304 = vshrl.u32 %v11303, 7
        %v11305 = vsub.s32 %v11302, %v11304
        %v11306 = vrot.slane %v11278, %v11305
        %v11307 = vcombine.low %v11285, %v11292
        %v11308 = vcombine.low %v11299, %v11306
        %v11310 = vunpack.c.l.s4 1966171168
        %v11311 = vunpack.c.0.s8 %v11310
        %v11312 = vlaneseq
        %v11313 = vshrl.u32 %v11312, 7
        %v11314 = vsub.s32 %v11311, %v11313
        %v11315 = vrot.slane %v11307, %v11314
        %v11317 = vunpack.c.l.s4 1966171168
        %v11318 = vunpack.c.0.s8 %v11317
        %v11319 = vlaneseq
        %v11320 = vshrl.u32 %v11319, 7
        %v11321 = vsub.s32 %v11318, %v11320
        %v11322 = vrot.slane %v11308, %v11321
        %v11323 = vcombine.low %v11315, %v11322
        %v11324 = vcombine.low %v9844, %v9848
        %v11325 = vcombine.low %v9852, %v9856
        %v11326 = vcombine.low %v9860, %v9864
        %v11327 = vcombine.low %v9868, %v9872
        %v11329 = vunpack.c.l.s4 1966171168
        %v11330 = vunpack.c.0.s8 %v11329
        %v11331 = vlaneseq
        %v11332 = vshrl.u32 %v11331, 7
        %v11333 = vsub.s32 %v11330, %v11332
        %v11334 = vrot.slane %v11324, %v11333
        %v11336 = vunpack.c.l.s4 1966171168
        %v11337 = vunpack.c.0.s8 %v11336
        %v11338 = vlaneseq
        %v11339 = vshrl.u32 %v11338, 7
        %v11340 = vsub.s32 %v11337, %v11339
        %v11341 = vrot.slane %v11325, %v11340
        %v11343 = vunpack.c.l.s4 1966171168
        %v11344 = vunpack.c.0.s8 %v11343
        %v11345 = vlaneseq
        %v11346 = vshrl.u32 %v11345, 7
        %v11347 = vsub.s32 %v11344, %v11346
        %v11348 = vrot.slane %v11326, %v11347
        %v11350 = vunpack.c.l.s4 1966171168
        %v11351 = vunpack.c.0.s8 %v11350
        %v11352 = vlaneseq
        %v11353 = vshrl.u32 %v11352, 7
        %v11354 = vsub.s32 %v11351, %v11353
        %v11355 = vrot.slane %v11327, %v11354
        %v11356 = vcombine.low %v11334, %v11341
        %v11357 = vcombine.low %v11348, %v11355
        %v11359 = vunpack.c.l.s4 1966171168
        %v11360 = vunpack.c.0.s8 %v11359
        %v11361 = vlaneseq
        %v11362 = vshrl.u32 %v11361, 7
        %v11363 = vsub.s32 %v11360, %v11362
        %v11364 = vrot.slane %v11356, %v11363
        %v11366 = vunpack.c.l.s4 1966171168
        %v11367 = vunpack.c.0.s8 %v11366
        %v11368 = vlaneseq
        %v11369 = vshrl.u32 %v11368, 7
        %v11370 = vsub.s32 %v11367, %v11369
        %v11371 = vrot.slane %v11357, %v11370
        %v11372 = vcombine.low %v11364, %v11371
        %v11373 = vcombine.low %v9876, %v9880
        %v11374 = vcombine.low %v9884, %v9888
        %v11375 = vcombine.low %v9892, %v9896
        %v11376 = vcombine.low %v9900, %v9904
        %v11378 = vunpack.c.l.s4 1966171168
        %v11379 = vunpack.c.0.s8 %v11378
        %v11380 = vlaneseq
        %v11381 = vshrl.u32 %v11380, 7
        %v11382 = vsub.s32 %v11379, %v11381
        %v11383 = vrot.slane %v11373, %v11382
        %v11385 = vunpack.c.l.s4 1966171168
        %v11386 = vunpack.c.0.s8 %v11385
        %v11387 = vlaneseq
        %v11388 = vshrl.u32 %v11387, 7
        %v11389 = vsub.s32 %v11386, %v11388
        %v11390 = vrot.slane %v11374, %v11389
        %v11392 = vunpack.c.l.s4 1966171168
        %v11393 = vunpack.c.0.s8 %v11392
        %v11394 = vlaneseq
        %v11395 = vshrl.u32 %v11394, 7
        %v11396 = vsub.s32 %v11393, %v11395
        %v11397 = vrot.slane %v11375, %v11396
        %v11399 = vunpack.c.l.s4 1966171168
        %v11400 = vunpack.c.0.s8 %v11399
        %v11401 = vlaneseq
        %v11402 = vshrl.u32 %v11401, 7
        %v11403 = vsub.s32 %v11400, %v11402
        %v11404 = vrot.slane %v11376, %v11403
        %v11405 = vcombine.low %v11383, %v11390
        %v11406 = vcombine.low %v11397, %v11404
        %v11408 = vunpack.c.l.s4 1966171168
        %v11409 = vunpack.c.0.s8 %v11408
        %v11410 = vlaneseq
        %v11411 = vshrl.u32 %v11410, 7
        %v11412 = vsub.s32 %v11409, %v11411
        %v11413 = vrot.slane %v11405, %v11412
        %v11415 = vunpack.c.l.s4 1966171168
        %v11416 = vunpack.c.0.s8 %v11415
        %v11417 = vlaneseq
        %v11418 = vshrl.u32 %v11417, 7
        %v11419 = vsub.s32 %v11416, %v11418
        %v11420 = vrot.slane %v11406, %v11419
        %v11421 = vcombine.low %v11413, %v11420
        %v11422 = vcombine.low %v9908, %v9912
        %v11423 = vcombine.low %v9916, %v9920
        %v11424 = vcombine.low %v9924, %v9928
        %v11425 = vcombine.low %v9932, %v9936
        %v11427 = vunpack.c.l.s4 1966171168
        %v11428 = vunpack.c.0.s8 %v11427
        %v11429 = vlaneseq
        %v11430 = vshrl.u32 %v11429, 7
        %v11431 = vsub.s32 %v11428, %v11430
        %v11432 = vrot.slane %v11422, %v11431
        %v11434 = vunpack.c.l.s4 1966171168
        %v11435 = vunpack.c.0.s8 %v11434
        %v11436 = vlaneseq
        %v11437 = vshrl.u32 %v11436, 7
        %v11438 = vsub.s32 %v11435, %v11437
        %v11439 = vrot.slane %v11423, %v11438
        %v11441 = vunpack.c.l.s4 1966171168
        %v11442 = vunpack.c.0.s8 %v11441
        %v11443 = vlaneseq
        %v11444 = vshrl.u32 %v11443, 7
        %v11445 = vsub.s32 %v11442, %v11444
        %v11446 = vrot.slane %v11424, %v11445
        %v11448 = vunpack.c.l.s4 1966171168
        %v11449 = vunpack.c.0.s8 %v11448
        %v11450 = vlaneseq
        %v11451 = vshrl.u32 %v11450, 7
        %v11452 = vsub.s32 %v11449, %v11451
        %v11453 = vrot.slane %v11425, %v11452
        %v11454 = vcombine.low %v11432, %v11439
        %v11455 = vcombine.low %v11446, %v11453
        %v11457 = vunpack.c.l.s4 1966171168
        %v11458 = vunpack.c.0.s8 %v11457
        %v11459 = vlaneseq
        %v11460 = vshrl.u32 %v11459, 7
        %v11461 = vsub.s32 %v11458, %v11460
        %v11462 = vrot.slane %v11454, %v11461
        %v11464 = vunpack.c.l.s4 1966171168
        %v11465 = vunpack.c.0.s8 %v11464
        %v11466 = vlaneseq
        %v11467 = vshrl.u32 %v11466, 7
        %v11468 = vsub.s32 %v11465, %v11467
        %v11469 = vrot.slane %v11455, %v11468
        %v11470 = vcombine.low %v11462, %v11469
        %v11471 = vcombine.low %v9940, %v9944
        %v11472 = vcombine.low %v9948, %v9952
        %v11473 = vcombine.low %v9956, %v9960
        %v11474 = vcombine.low %v9964, %v9968
        %v11476 = vunpack.c.l.s4 1966171168
        %v11477 = vunpack.c.0.s8 %v11476
        %v11478 = vlaneseq
        %v11479 = vshrl.u32 %v11478, 7
        %v11480 = vsub.s32 %v11477, %v11479
        %v11481 = vrot.slane %v11471, %v11480
        %v11483 = vunpack.c.l.s4 1966171168
        %v11484 = vunpack.c.0.s8 %v11483
        %v11485 = vlaneseq
        %v11486 = vshrl.u32 %v11485, 7
        %v11487 = vsub.s32 %v11484, %v11486
        %v11488 = vrot.slane %v11472, %v11487
        %v11490 = vunpack.c.l.s4 1966171168
        %v11491 = vunpack.c.0.s8 %v11490
        %v11492 = vlaneseq
        %v11493 = vshrl.u32 %v11492, 7
        %v11494 = vsub.s32 %v11491, %v11493
        %v11495 = vrot.slane %v11473, %v11494
        %v11497 = vunpack.c.l.s4 1966171168
        %v11498 = vunpack.c.0.s8 %v11497
        %v11499 = vlaneseq
        %v11500 = vshrl.u32 %v11499, 7
        %v11501 = vsub.s32 %v11498, %v11500
        %v11502 = vrot.slane %v11474, %v11501
        %v11503 = vcombine.low %v11481, %v11488
        %v11504 = vcombine.low %v11495, %v11502
        %v11506 = vunpack.c.l.s4 1966171168
        %v11507 = vunpack.c.0.s8 %v11506
        %v11508 = vlaneseq
        %v11509 = vshrl.u32 %v11508, 7
        %v11510 = vsub.s32 %v11507, %v11509
        %v11511 = vrot.slane %v11503, %v11510
        %v11513 = vunpack.c.l.s4 1966171168
        %v11514 = vunpack.c.0.s8 %v11513
        %v11515 = vlaneseq
        %v11516 = vshrl.u32 %v11515, 7
        %v11517 = vsub.s32 %v11514, %v11516
        %v11518 = vrot.slane %v11504, %v11517
        %v11519 = vcombine.low %v11511, %v11518
        %v11520 = vcombine.low %v9972, %v9976
        %v11521 = vcombine.low %v9980, %v9984
        %v11522 = vcombine.low %v9988, %v9992
        %v11523 = vcombine.low %v9996, %v10000
        %v11525 = vunpack.c.l.s4 1966171168
        %v11526 = vunpack.c.0.s8 %v11525
        %v11527 = vlaneseq
        %v11528 = vshrl.u32 %v11527, 7
        %v11529 = vsub.s32 %v11526, %v11528
        %v11530 = vrot.slane %v11520, %v11529
        %v11532 = vunpack.c.l.s4 1966171168
        %v11533 = vunpack.c.0.s8 %v11532
        %v11534 = vlaneseq
        %v11535 = vshrl.u32 %v11534, 7
        %v11536 = vsub.s32 %v11533, %v11535
        %v11537 = vrot.slane %v11521, %v11536
        %v11539 = vunpack.c.l.s4 1966171168
        %v11540 = vunpack.c.0.s8 %v11539
        %v11541 = vlaneseq
        %v11542 = vshrl.u32 %v11541, 7
        %v11543 = vsub.s32 %v11540, %v11542
        %v11544 = vrot.slane %v11522, %v11543
        %v11546 = vunpack.c.l.s4 1966171168
        %v11547 = vunpack.c.0.s8 %v11546
        %v11548 = vlaneseq
        %v11549 = vshrl.u32 %v11548, 7
        %v11550 = vsub.s32 %v11547, %v11549
        %v11551 = vrot.slane %v11523, %v11550
        %v11552 = vcombine.low %v11530, %v11537
        %v11553 = vcombine.low %v11544, %v11551
        %v11555 = vunpack.c.l.s4 1966171168
        %v11556 = vunpack.c.0.s8 %v11555
        %v11557 = vlaneseq
        %v11558 = vshrl.u32 %v11557, 7
        %v11559 = vsub.s32 %v11556, %v11558
        %v11560 = vrot.slane %v11552, %v11559
        %v11562 = vunpack.c.l.s4 1966171168
        %v11563 = vunpack.c.0.s8 %v11562
        %v11564 = vlaneseq
        %v11565 = vshrl.u32 %v11564, 7
        %v11566 = vsub.s32 %v11563, %v11565
        %v11567 = vrot.slane %v11553, %v11566
        %v11568 = vcombine.low %v11560, %v11567
        %11569 = vset.pattern.permute.xlu0 0
        %11570 = vperm.xlu0 %11569, %v10049
        %v11571 = vpop.permute.xlu0 %11570
        %11572 = vset.pattern.permute.xlu0 0
        %11573 = vperm.xlu0 %11572, %v10098
        %v11574 = vpop.permute.xlu0 %11573
        %11575 = vset.pattern.permute.xlu0 0
        %11576 = vperm.xlu0 %11575, %v10147
        %v11577 = vpop.permute.xlu0 %11576
        %11578 = vset.pattern.permute.xlu0 0
        %11579 = vperm.xlu0 %11578, %v10196
        %v11580 = vpop.permute.xlu0 %11579
        %11581 = vset.pattern.permute.xlu0 0
        %11582 = vperm.xlu0 %11581, %v10245
        %v11583 = vpop.permute.xlu0 %11582
        %11584 = vset.pattern.permute.xlu0 0
        %11585 = vperm.xlu0 %11584, %v10294
        %v11586 = vpop.permute.xlu0 %11585
        %11587 = vset.pattern.permute.xlu0 0
        %11588 = vperm.xlu0 %11587, %v10343
        %v11589 = vpop.permute.xlu0 %11588
        %11590 = vset.pattern.permute.xlu0 0
        %11591 = vperm.xlu0 %11590, %v10392
        %v11592 = vpop.permute.xlu0 %11591
        %11593 = vset.pattern.permute.xlu0 0
        %11594 = vperm.xlu0 %11593, %v10441
        %v11595 = vpop.permute.xlu0 %11594
        %11596 = vset.pattern.permute.xlu0 0
        %11597 = vperm.xlu0 %11596, %v10490
        %v11598 = vpop.permute.xlu0 %11597
        %11599 = vset.pattern.permute.xlu0 0
        %11600 = vperm.xlu0 %11599, %v10539
        %v11601 = vpop.permute.xlu0 %11600
        %11602 = vset.pattern.permute.xlu0 0
        %11603 = vperm.xlu0 %11602, %v10588
        %v11604 = vpop.permute.xlu0 %11603
        %11605 = vset.pattern.permute.xlu0 0
        %11606 = vperm.xlu0 %11605, %v10637
        %v11607 = vpop.permute.xlu0 %11606
        %11608 = vset.pattern.permute.xlu0 0
        %11609 = vperm.xlu0 %11608, %v10686
        %v11610 = vpop.permute.xlu0 %11609
        %11611 = vset.pattern.permute.xlu0 0
        %11612 = vperm.xlu0 %11611, %v10735
        %v11613 = vpop.permute.xlu0 %11612
        %11614 = vset.pattern.permute.xlu0 0
        %11615 = vperm.xlu0 %11614, %v10784
        %v11616 = vpop.permute.xlu0 %11615
        %11617 = vset.pattern.permute.xlu0 0
        %11618 = vperm.xlu0 %11617, %v10833
        %v11619 = vpop.permute.xlu0 %11618
        %11620 = vset.pattern.permute.xlu0 0
        %11621 = vperm.xlu0 %11620, %v10882
        %v11622 = vpop.permute.xlu0 %11621
        %11623 = vset.pattern.permute.xlu0 0
        %11624 = vperm.xlu0 %11623, %v10931
        %v11625 = vpop.permute.xlu0 %11624
        %11626 = vset.pattern.permute.xlu0 0
        %11627 = vperm.xlu0 %11626, %v10980
        %v11628 = vpop.permute.xlu0 %11627
        %11629 = vset.pattern.permute.xlu0 0
        %11630 = vperm.xlu0 %11629, %v11029
        %v11631 = vpop.permute.xlu0 %11630
        %11632 = vset.pattern.permute.xlu0 0
        %11633 = vperm.xlu0 %11632, %v11078
        %v11634 = vpop.permute.xlu0 %11633
        %11635 = vset.pattern.permute.xlu0 0
        %11636 = vperm.xlu0 %11635, %v11127
        %v11637 = vpop.permute.xlu0 %11636
        %11638 = vset.pattern.permute.xlu0 0
        %11639 = vperm.xlu0 %11638, %v11176
        %v11640 = vpop.permute.xlu0 %11639
        %11641 = vset.pattern.permute.xlu0 0
        %11642 = vperm.xlu0 %11641, %v11225
        %v11643 = vpop.permute.xlu0 %11642
        %11644 = vset.pattern.permute.xlu0 0
        %11645 = vperm.xlu0 %11644, %v11274
        %v11646 = vpop.permute.xlu0 %11645
        %11647 = vset.pattern.permute.xlu0 0
        %11648 = vperm.xlu0 %11647, %v11323
        %v11649 = vpop.permute.xlu0 %11648
        %11650 = vset.pattern.permute.xlu0 0
        %11651 = vperm.xlu0 %11650, %v11372
        %v11652 = vpop.permute.xlu0 %11651
        %11653 = vset.pattern.permute.xlu0 0
        %11654 = vperm.xlu0 %11653, %v11421
        %v11655 = vpop.permute.xlu0 %11654
        %11656 = vset.pattern.permute.xlu0 0
        %11657 = vperm.xlu0 %11656, %v11470
        %v11658 = vpop.permute.xlu0 %11657
        %11659 = vset.pattern.permute.xlu0 0
        %11660 = vperm.xlu0 %11659, %v11519
        %v11661 = vpop.permute.xlu0 %11660
        %11662 = vset.pattern.permute.xlu0 0
        %11663 = vperm.xlu0 %11662, %v11568
        %v11664 = vpop.permute.xlu0 %11663
        %v11665 = vlaneseq
        %v11666 = vand.u32 %v11665, 127
        %v11667 = vlaneseq
        %v11668 = vshrl.u32 %v11667, 7
        %v11669 = vsub.s32 %v11666, %v11668
        %v11670 = vrot.slane %v11571, %v11669
        %v11671 = vadd.s32 %v11666, 4294967288
        %v11672 = vlaneseq
        %v11673 = vshrl.u32 %v11672, 7
        %v11674 = vsub.s32 %v11671, %v11673
        %v11675 = vrot.slane %v11574, %v11674
        %vm11676 = vcmask 130112
        %v11677 = vsel %vm11676, %v11675, %v11670
        %v11678 = vadd.s32 %v11666, 4294967280
        %v11679 = vlaneseq
        %v11680 = vshrl.u32 %v11679, 7
        %v11681 = vsub.s32 %v11678, %v11680
        %v11682 = vrot.slane %v11577, %v11681
        %vm11683 = vcmask 195712
        %v11684 = vsel %vm11683, %v11682, %v11677
        %v11685 = vadd.s32 %v11666, 4294967272
        %v11686 = vlaneseq
        %v11687 = vshrl.u32 %v11686, 7
        %v11688 = vsub.s32 %v11685, %v11687
        %v11689 = vrot.slane %v11580, %v11688
        %vm11690 = vcmask 261312
        %v11691 = vsel %vm11690, %v11689, %v11684
        %v11692 = vadd.s32 %v11666, 4294967264
        %v11693 = vlaneseq
        %v11694 = vshrl.u32 %v11693, 7
        %v11695 = vsub.s32 %v11692, %v11694
        %v11696 = vrot.slane %v11583, %v11695
        %vm11697 = vcmask 326912
        %v11698 = vsel %vm11697, %v11696, %v11691
        %v11699 = vadd.s32 %v11666, 4294967256
        %v11700 = vlaneseq
        %v11701 = vshrl.u32 %v11700, 7
        %v11702 = vsub.s32 %v11699, %v11701
        %v11703 = vrot.slane %v11586, %v11702
        %vm11704 = vcmask 392512
        %v11705 = vsel %vm11704, %v11703, %v11698
        %v11706 = vadd.s32 %v11666, 4294967248
        %v11707 = vlaneseq
        %v11708 = vshrl.u32 %v11707, 7
        %v11709 = vsub.s32 %v11706, %v11708
        %v11710 = vrot.slane %v11589, %v11709
        %vm11711 = vcmask 458112
        %v11712 = vsel %vm11711, %v11710, %v11705
        %v11713 = vadd.s32 %v11666, 4294967240
        %v11714 = vlaneseq
        %v11715 = vshrl.u32 %v11714, 7
        %v11716 = vsub.s32 %v11713, %v11715
        %v11717 = vrot.slane %v11592, %v11716
        %vm11718 = vcmask 523712
        %v11719 = vsel %vm11718, %v11717, %v11712
        %v11720 = vadd.s32 %v11666, 4294967232
        %v11721 = vlaneseq
        %v11722 = vshrl.u32 %v11721, 7
        %v11723 = vsub.s32 %v11720, %v11722
        %v11724 = vrot.slane %v11595, %v11723
        %vm11725 = vcmask 589312
        %v11726 = vsel %vm11725, %v11724, %v11719
        %v11727 = vadd.s32 %v11666, 4294967224
        %v11728 = vlaneseq
        %v11729 = vshrl.u32 %v11728, 7
        %v11730 = vsub.s32 %v11727, %v11729
        %v11731 = vrot.slane %v11598, %v11730
        %vm11732 = vcmask 654912
        %v11733 = vsel %vm11732, %v11731, %v11726
        %v11734 = vadd.s32 %v11666, 4294967216
        %v11735 = vlaneseq
        %v11736 = vshrl.u32 %v11735, 7
        %v11737 = vsub.s32 %v11734, %v11736
        %v11738 = vrot.slane %v11601, %v11737
        %vm11739 = vcmask 720512
        %v11740 = vsel %vm11739, %v11738, %v11733
        %v11741 = vadd.s32 %v11666, 4294967208
        %v11742 = vlaneseq
        %v11743 = vshrl.u32 %v11742, 7
        %v11744 = vsub.s32 %v11741, %v11743
        %v11745 = vrot.slane %v11604, %v11744
        %vm11746 = vcmask 786112
        %v11747 = vsel %vm11746, %v11745, %v11740
        %v11748 = vadd.s32 %v11666, 4294967200
        %v11749 = vlaneseq
        %v11750 = vshrl.u32 %v11749, 7
        %v11751 = vsub.s32 %v11748, %v11750
        %v11752 = vrot.slane %v11607, %v11751
        %vm11753 = vcmask 851712
        %v11754 = vsel %vm11753, %v11752, %v11747
        %v11755 = vadd.s32 %v11666, 4294967192
        %v11756 = vlaneseq
        %v11757 = vshrl.u32 %v11756, 7
        %v11758 = vsub.s32 %v11755, %v11757
        %v11759 = vrot.slane %v11610, %v11758
        %vm11760 = vcmask 917312
        %v11761 = vsel %vm11760, %v11759, %v11754
        %v11762 = vadd.s32 %v11666, 4294967184
        %v11763 = vlaneseq
        %v11764 = vshrl.u32 %v11763, 7
        %v11765 = vsub.s32 %v11762, %v11764
        %v11766 = vrot.slane %v11613, %v11765
        %vm11767 = vcmask 982912
        %v11768 = vsel %vm11767, %v11766, %v11761
        %v11769 = vadd.s32 %v11666, 4294967176
        %v11770 = vlaneseq
        %v11771 = vshrl.u32 %v11770, 7
        %v11772 = vsub.s32 %v11769, %v11771
        %v11773 = vrot.slane %v11616, %v11772
        %vm11774 = vcmask 1048512
        %v11775 = vsel %vm11774, %v11773, %v11768
        %v11776 = vlaneseq
        %v11777 = vshrl.u32 %v11776, 7
        %v11778 = vsub.s32 %v11666, %v11777
        %v11779 = vrot.slane %v11619, %v11778
        %v11780 = vlaneseq
        %v11781 = vshrl.u32 %v11780, 7
        %v11782 = vsub.s32 %v11671, %v11781
        %v11783 = vrot.slane %v11622, %v11782
        %v11784 = vsel %vm11676, %v11783, %v11779
        %v11785 = vlaneseq
        %v11786 = vshrl.u32 %v11785, 7
        %v11787 = vsub.s32 %v11678, %v11786
        %v11788 = vrot.slane %v11625, %v11787
        %v11789 = vsel %vm11683, %v11788, %v11784
        %v11790 = vlaneseq
        %v11791 = vshrl.u32 %v11790, 7
        %v11792 = vsub.s32 %v11685, %v11791
        %v11793 = vrot.slane %v11628, %v11792
        %v11794 = vsel %vm11690, %v11793, %v11789
        %v11795 = vlaneseq
        %v11796 = vshrl.u32 %v11795, 7
        %v11797 = vsub.s32 %v11692, %v11796
        %v11798 = vrot.slane %v11631, %v11797
        %v11799 = vsel %vm11697, %v11798, %v11794
        %v11800 = vlaneseq
        %v11801 = vshrl.u32 %v11800, 7
        %v11802 = vsub.s32 %v11699, %v11801
        %v11803 = vrot.slane %v11634, %v11802
        %v11804 = vsel %vm11704, %v11803, %v11799
        %v11805 = vlaneseq
        %v11806 = vshrl.u32 %v11805, 7
        %v11807 = vsub.s32 %v11706, %v11806
        %v11808 = vrot.slane %v11637, %v11807
        %v11809 = vsel %vm11711, %v11808, %v11804
        %v11810 = vlaneseq
        %v11811 = vshrl.u32 %v11810, 7
        %v11812 = vsub.s32 %v11713, %v11811
        %v11813 = vrot.slane %v11640, %v11812
        %v11814 = vsel %vm11718, %v11813, %v11809
        %v11815 = vlaneseq
        %v11816 = vshrl.u32 %v11815, 7
        %v11817 = vsub.s32 %v11720, %v11816
        %v11818 = vrot.slane %v11643, %v11817
        %v11819 = vsel %vm11725, %v11818, %v11814
        %v11820 = vlaneseq
        %v11821 = vshrl.u32 %v11820, 7
        %v11822 = vsub.s32 %v11727, %v11821
        %v11823 = vrot.slane %v11646, %v11822
        %v11824 = vsel %vm11732, %v11823, %v11819
        %v11825 = vlaneseq
        %v11826 = vshrl.u32 %v11825, 7
        %v11827 = vsub.s32 %v11734, %v11826
        %v11828 = vrot.slane %v11649, %v11827
        %v11829 = vsel %vm11739, %v11828, %v11824
        %v11830 = vlaneseq
        %v11831 = vshrl.u32 %v11830, 7
        %v11832 = vsub.s32 %v11741, %v11831
        %v11833 = vrot.slane %v11652, %v11832
        %v11834 = vsel %vm11746, %v11833, %v11829
        %v11835 = vlaneseq
        %v11836 = vshrl.u32 %v11835, 7
        %v11837 = vsub.s32 %v11748, %v11836
        %v11838 = vrot.slane %v11655, %v11837
        %v11839 = vsel %vm11753, %v11838, %v11834
        %v11840 = vlaneseq
        %v11841 = vshrl.u32 %v11840, 7
        %v11842 = vsub.s32 %v11755, %v11841
        %v11843 = vrot.slane %v11658, %v11842
        %v11844 = vsel %vm11760, %v11843, %v11839
        %v11845 = vlaneseq
        %v11846 = vshrl.u32 %v11845, 7
        %v11847 = vsub.s32 %v11762, %v11846
        %v11848 = vrot.slane %v11661, %v11847
        %v11849 = vsel %vm11767, %v11848, %v11844
        %v11850 = vlaneseq
        %v11851 = vshrl.u32 %v11850, 7
        %v11852 = vsub.s32 %v11769, %v11851
        %v11853 = vrot.slane %v11664, %v11852
        %v11854 = vsel %vm11774, %v11853, %v11849
        %v11855 = vcombine.low %v11775, %v11854
        %v11857 = vunpack.c.l.s4 1966171168
        %v11858 = vunpack.c.0.s8 %v11857
        %v11859 = vlaneseq
        %v11860 = vshrl.u32 %v11859, 7
        %v11861 = vsub.s32 %v11858, %v11860
        %v11862 = vrot.slane %v11855, %v11861
        %v11864 = vunpack.c.l.s4 1966171168
        %v11865 = vunpack.c.0.s8 %v11864
        %v11866 = vlaneseq
        %v11867 = vshrl.u32 %v11866, 7
        %v11868 = vsub.s32 %v11865, %v11867
        %v11869 = vrot.slane %v11862, %v11868
        %v11871 = vlaneseq
        %vm11872 = vcmp.ge.s32.totalorder %v11871, 0
        %vm11873 = vcmp.lt.s32.totalorder %v11871, 256
        %vm11874 = vmand %vm11872, %vm11873
        %11875 = vst.msk [vmem:[%s370] sm:$0x3] %vm11874, %v11869
        %s11876 = sand.u32 %s227, 1
        %s11877 = scalar_lea.sflag [#allocation4], %s11876
        %s11878 = sand.u32 %s227, 1
        %s11879 = smul.addr %s11878, 2
        %s11880 = scalar_lea.vmem [#allocation8], %s11879
        // Predicated region
        $region69: #{tpu_custom_call.1} parent=55 // pred_check
          %p11881 = pneg %p237
        $region70: #{tpu_custom_call.1} parent=55 // pred_check_branch
          %11883 = sbr.rel (%p11881) target = $region72
        $region71: #{tpu_custom_call.1} parent=55 // pred_region
          %s11884 = smul.u32 2, %s25
          %s11886 = ssub.s32 32, 32
          %11887 = vsyncadd %s11877, %s11886
          %s11888 = smul.addr %s11884, 16
          %s11889 = scalar_lea.hbm %s9, %s11888
          %s11891 = sshll.u32 %s11880, 4
          %s11892 = int_to_ptr.vmem [resolvable:$true] %s11891
          %11894 = dma.vmem_to_hbm [thread:$0]  %s11892, 32, %s11889, %s11877
        $region72: #{tpu_custom_call.1} parent=55 // pred_fallthru
          _
      $region56: #{tpu_custom_call.1} parent=5 // pred_fallthru
        _
      %p11895 = scmp.le.s32.totalorder 2, %s20
      // Predicated region
      $region73: #{tpu_custom_call.1} parent=5 // pred_check
        %p11896 = pneg %p11895
      $region74: #{tpu_custom_call.1} parent=5 // pred_check_branch
        %11898 = sbr.rel (%p11896) target = $region76
      $region75: #{tpu_custom_call.1} parent=5 // pred_region
        %s11899 = ssub.s32 %s20, 2
        // Predicated region
        $region77: #{tpu_custom_call.1} parent=75 // pred_check
          %p11900 = pneg %p243
        $region78: #{tpu_custom_call.1} parent=75 // pred_check_branch
          %11902 = sbr.rel (%p11900) target = $region80
        $region79: #{tpu_custom_call.1} parent=75 // pred_region
          %s11903 = sand.u32 %s228, 1
          %s11904 = scalar_lea.sflag [#allocation4], %s11903
          %s11905 = sand.u32 %s228, 1
          %s11906 = smul.addr %s11905, 2
          %s11907 = scalar_lea.vmem [#allocation8], %s11906
          %11908 = dma.done %s11904, 32
        $region80: #{tpu_custom_call.1} parent=75 // pred_fallthru
          _
      $region76: #{tpu_custom_call.1} parent=5 // pred_fallthru
        _
    $region6: #{tpu_custom_call.1} parent=1 // loop_footer
      %s24 = sadd.s32 1, %s20
    $region7: #{tpu_custom_call.1} parent=1 // loop_footer_branch
      %19 = sbr.rel target = $region3
    $region8: #{tpu_custom_call.1} parent=1 // loop_exit
      _
    %11909 = vsyncpa [#allocation3], 1
    %s11910 = scalar_lea.sflag [#allocation3], 1
    %11911 = vsyncpa %s11910, 1
    %11912 = vsyncpa [#allocation6], 1
    %11913 = vsyncpa [#allocation4], 1
    %s11914 = scalar_lea.sflag [#allocation4], 1
    %11915 = vsyncpa %s11914, 1

</llo_original>
